<compile_context>
chip_gen: v6e
topology: v6e:2x2x1
jax: 0.10.0
libtpu: 0.0.40
codegen_flags: <defaults>
</compile_context>

<pallas_src>
import functools

import jax
import jax.numpy as jnp
import numpy as np
from jax.experimental import pallas as pl
from jax.experimental.pallas import tpu as pltpu


# ----------------------------- host-side weight packing -----------------------------

def _pack_gru_conv(w_hwio, cx, c_tap, dtype):
    """GRU conv weight HWIO [k,k,cx+ch,cout] -> [cout, k*k*c_tap + k*k*ch] matching the
    kernel's slab layout: x-tap block (input channels zero-padded to c_tap), then h-tap
    block.  Row order inside a block is tap-major, channel-minor."""
    k = w_hwio.shape[0]
    cout = w_hwio.shape[3]
    ch = w_hwio.shape[2] - cx
    assert ch == c_tap, "h-part channel count must equal the slab tap width"
    wx = jnp.pad(w_hwio[:, :, :cx, :], ((0, 0), (0, 0), (0, c_tap - cx), (0, 0)))
    wh = w_hwio[:, :, cx:, :]
    m = jnp.concatenate([wx.reshape(k * k * c_tap, cout),
                         wh.reshape(k * k * ch, cout)], axis=0)
    return m.T.astype(dtype)                      # [cout, K]


def _pack_plain_conv(w_hwio, dtype):
    """Plain conv weight HWIO [k,k,cin,cout] -> [cout, k*k*cin]."""
    k, _, cin, cout = w_hwio.shape
    return w_hwio.reshape(k * k * cin, cout).T.astype(dtype)


# ------------------------------------ kernel ----------------------------------------

def make_gru_block_kernel(H, W, Cin, Hh, k1, k2, mm_dtype):
    HW = H * W
    C_TAP = Hh                         # per-tap channel rows in the im2col slab
    p1, p2 = (k1 - 1) // 2, (k2 - 1) // 2
    pmax = max(p1, p2)
    M = pmax * (W + 1)                 # flat halo margin, covers both kernel sizes
    HWP = HW + 2 * M
    XBLK = k1 * k1 * C_TAP             # offset of the h-tap block inside the GRU slab
    K1 = 2 * XBLK                      # GRU conv contraction size
    K2 = k2 * k2 * C_TAP               # hidden / reshape conv contraction size
    KMAX = max(K1, K2)

    def kernel(x_ref, h_ref, wzr1_ref, wc1_ref, wh_ref, wzr2_ref, wc2_ref, wo_ref,
               xo_ref, h2o_ref, pad_ref, slab_ref):
        # Zero the (tiny) pad buffer once: its halo margins implement the 'same' zero
        # padding in flat-spatial space; the interior is overwritten before every conv.
        pad_ref[...] = jnp.zeros(pad_ref.shape, pad_ref.dtype)

        # Column-validity masks (one per horizontal tap shift), hoisted out of the
        # unrolled tap loops.  They kill values that wrapped across a row boundary;
        # vertical out-of-range taps land in the zero margins automatically.
        xcol = jax.lax.broadcasted_iota(jnp.int32, (1, HW), 1) % W
        col_ok = {d: (xcol >= -d) if d < 0 else (xcol < W - d)
                  for d in range(-pmax, pmax + 1) if d != 0}

        def set_pad(val, rows):
            pad_ref[0:rows, M:M + HW] = val.astype(mm_dtype)

        def build_taps(k, row0):
            """im2col: k*k shifted+masked windows of pad_ref -> slab rows
            [row0, row0 + k*k*C_TAP)."""
            p = (k - 1) // 2
            for dy in range(k):
                for dx in range(k):
                    off = M + (dy - p) * W + (dx - p)           # static flat shift
                    win = pad_ref[:, off:off + HW]              # [C_TAP, HW]
                    if dx != p:
                        win = jnp.where(col_ok[dx - p], win, jnp.zeros_like(win))
                    r0 = row0 + (dy * k + dx) * C_TAP
                    slab_ref[r0:r0 + C_TAP, :] = win

        def conv(w_ref, K):
            # one MXU matmul per conv: [cout, K] x [K, HW] -> [cout, HW], f32 accumulate
            return jnp.dot(w_ref[...], slab_ref[0:K, :],
                           preferred_element_type=jnp.float32)

        def gru(h_prev, wzr_ref, wc_ref):
            # precondition: x-tap block (slab rows [0, XBLK)) is already built
            set_pad(h_prev, Hh)
            build_taps(k1, XBLK)                                # h taps
            zr = jax.nn.sigmoid(conv(wzr_ref, K1))              # fused z|r gates
            z, r = zr[0:Hh, :], zr[Hh:2 * Hh, :]
            set_pad(r * h_prev, Hh)
            build_taps(k1, XBLK)                                # rebuild h taps with r*h
            c = jnp.tanh(conv(wc_ref, K1))
            return (1.0 - z) * h_prev + z * c                   # GRU returns (h', h')

        x = x_ref[0]                                            # [Cin, HW] f32
        hb = h_ref[0]                                           # [2*Hh, HW] f32
        h1, h2 = hb[0:Hh, :], hb[Hh:2 * Hh, :]

        # ---- h1_new, _ = gru1(x, h_1) ----
        set_pad(x, Cin)                 # rows [Cin, C_TAP) stay zero (weights 0-padded)
        build_taps(k1, 0)               # x taps (reused by both the z|r conv and c conv)
        h1n = gru(h1, wzr1_ref, wc1_ref)

        # ---- pre_h2 = tanh(hidden_layer(h1_new)) ----
        set_pad(h1n, Hh)
        build_taps(k2, 0)
        pre = jnp.tanh(conv(wh_ref, K2))

        # ---- x, h_2 = gru2(pre_h2, h_2) ----   (x output of gru2 == updated h_2)
        set_pad(pre, Hh)
        build_taps(k1, 0)               # x taps for gru2
        h2n = gru(h2, wzr2_ref, wc2_ref)

        # ---- x = reshape_layer(x) ----
        set_pad(h2n, Hh)
        build_taps(k2, 0)
        xo_ref[0] = conv(wo_ref, K2)                            # [Cin, HW], lane-dense
        h2o_ref[0] = h2n                                        # updated second half only

    return kernel, C_TAP, HWP, KMAX


# ------------------------------------ wrapper ----------------------------------------

def gru_block_forward(x_nchw, h_nchw, params, *, k1, k2, matmul_dtype=jnp.bfloat16):
    """Pallas GRUBlock forward.  x: [B, in_ch, H, W], h: [B, hidden_units, H, W]."""
    B, Cin, H, W = x_nchw.shape
    Hh2 = h_nchw.shape[1]
    Hh = Hh2 // 2
    HW = H * W

    # 'same' padding logic assumes odd kernel sizes (review correctness concern).
    assert k1 % 2 == 1 and k2 % 2 == 1, "odd kernel sizes required for 'same' conv here"
    assert Hh % 16 == 0, "hidden_units//2 must be a multiple of 16 (sublane tile)"
    assert Cin <= Hh, "in_ch must fit inside one slab tap block"
    assert HW % 128 == 0, "H*W must be a multiple of 128 for the lane-dense layout"

    # NCHW is already the per-batch [C, flat-spatial] layout: pure reshapes, no transpose.
    x3 = x_nchw.reshape(B, Cin, HW).astype(jnp.float32)
    h3 = h_nchw.reshape(B, Hh2, HW).astype(jnp.float32)

    # Host-side weight packing: fused z|r, x/h tap-block split, zero-padded x channels.
    dt = matmul_dtype
    wzr1 = jnp.concatenate([_pack_gru_conv(params['wz1'], Cin, Hh, dt),
                            _pack_gru_conv(params['wr1'], Cin, Hh, dt)], axis=0)
    wc1 = _pack_gru_conv(params['wc1'], Cin, Hh, dt)
    wzr2 = jnp.concatenate([_pack_gru_conv(params['wz2'], Hh, Hh, dt),
                            _pack_gru_conv(params['wr2'], Hh, Hh, dt)], axis=0)
    wc2 = _pack_gru_conv(params['wc2'], Hh, Hh, dt)
    wh = _pack_plain_conv(params['wh'], dt)
    wo = _pack_plain_conv(params['wo'], dt)

    kernel, C_TAP, HWP, KMAX = make_gru_block_kernel(H, W, Cin, Hh, k1, k2, dt)

    per_batch = lambda c: pl.BlockSpec((1, c, HW), lambda b: (b, 0, 0))
    full_w = lambda w: pl.BlockSpec(w.shape, lambda b: (0, 0))

    out_shapes = (jax.ShapeDtypeStruct((B, Cin, HW), jnp.float32),
                  jax.ShapeDtypeStruct((B, Hh, HW), jnp.float32))

    xo, h2o = pl.pallas_call(
        kernel,
        out_shape=out_shapes,
        grid=(B,),
        in_specs=[per_batch(Cin), per_batch(Hh2),
                  full_w(wzr1), full_w(wc1), full_w(wh),
                  full_w(wzr2), full_w(wc2), full_w(wo)],
        out_specs=(per_batch(Cin), per_batch(Hh)),
        scratch_shapes=[
            pltpu.VMEM((C_TAP, HWP), dt),     # flat, zero-margined conv input buffer
            pltpu.VMEM((KMAX, HW), dt),       # im2col slab (one matmul operand per conv)
        ],
        compiler_params=pltpu.CompilerParams(
            dimension_semantics=("parallel",),            # batch axis -> both v7x TCs
            vmem_limit_bytes=32 * 1024 * 1024,
        ),
    )(x3, h3, wzr1, wc1, wh, wzr2, wc2, wo)

    x_out = xo.reshape(B, Cin, H, W)
    # GRUBlock returns concat([ORIGINAL h_1, updated h_2]); h_1 never leaves HBM.
    h_out = jnp.concatenate([h_nchw[:, :Hh].astype(jnp.float32),
                             h2o.reshape(B, Hh, H, W)], axis=1)
    return x_out, h_out


# ---------------------- pure-JAX reference (correctness check only) -------------------

def _conv_same_ref(x_nhwc, w_hwio):
    return jax.lax.conv_general_dilated(
        x_nhwc, w_hwio, window_strides=(1, 1), padding='SAME',
        dimension_numbers=('NHWC', 'HWIO', 'NHWC'))


def gru_block_forward_ref(x_nchw, h_nchw, params):
    x = jnp.transpose(x_nchw, (0, 2, 3, 1))
    h = jnp.transpose(h_nchw, (0, 2, 3, 1))
    Hh = h.shape[-1] // 2
    h1, h2 = h[..., :Hh], h[..., Hh:]

    def gru(xx, hh, wz, wr, wc):
        s = jnp.concatenate([xx, hh], axis=-1)
        z = jax.nn.sigmoid(_conv_same_ref(s, wz))
        r = jax.nn.sigmoid(_conv_same_ref(s, wr))
        c = jnp.tanh(_conv_same_ref(jnp.concatenate([xx, r * hh], axis=-1), wc))
        hn = (1.0 - z) * hh + z * c
        return hn, hn

    h1n, _ = gru(x, h1, params['wz1'], params['wr1'], params['wc1'])
    pre = jnp.tanh(_conv_same_ref(h1n, params['wh']))
    xo, h2n = gru(pre, h2, params['wz2'], params['wr2'], params['wc2'])
    xo = _conv_same_ref(xo, params['wo'])
    ho = jnp.concatenate([h1, h2n], axis=-1)
    return (jnp.transpose(xo, (0, 3, 1, 2)), jnp.transpose(ho, (0, 3, 1, 2)))


if __name__ == "__main__":
    # GRUBlock(in_ch=4, hidden_units=32, kernel_size=3, dimensions=2, conv_kernel_size=5)
    B, in_ch, H, W = 2, 4, 16, 16
    hidden_units = 32
    Hh = hidden_units // 2
    k1 = 3   # GRU conv kernel_size
    k2 = 5   # hidden_layer / reshape_layer conv_kernel_size

    key = jax.random.PRNGKey(0)
    keys = jax.random.split(key, 10)

    def w_init(k, shape):
        fan_in = shape[0] * shape[1] * shape[2]
        return jax.random.normal(k, shape, jnp.float32) / jnp.sqrt(float(fan_in))

    params = {
        'wz1': w_init(keys[0], (k1, k1, in_ch + Hh, Hh)),
        'wr1': w_init(keys[1], (k1, k1, in_ch + Hh, Hh)),
        'wc1': w_init(keys[2], (k1, k1, in_ch + Hh, Hh)),
        'wz2': w_init(keys[3], (k1, k1, 2 * Hh, Hh)),
        'wr2': w_init(keys[4], (k1, k1, 2 * Hh, Hh)),
        'wc2': w_init(keys[5], (k1, k1, 2 * Hh, Hh)),
        'wh':  w_init(keys[6], (k2, k2, Hh, Hh)),
        'wo':  w_init(keys[7], (k2, k2, Hh, in_ch)),
    }

    x = jax.random.normal(keys[8], (B, in_ch, H, W), jnp.float32)
    h = jax.random.normal(keys[9], (B, hidden_units, H, W), jnp.float32)

    x_ref, h_ref = gru_block_forward_ref(x, h, params)

    # 1) Tight semantic check with f32 matmul operands.
    fwd_f32 = jax.jit(functools.partial(gru_block_forward, k1=k1, k2=k2,
                                        matmul_dtype=jnp.float32))
    x32, h32 = fwd_f32(x, h, params)
    jax.block_until_ready((x32, h32))
    np.testing.assert_allclose(np.asarray(x32), np.asarray(x_ref), rtol=1e-3, atol=1e-3)
    np.testing.assert_allclose(np.asarray(h32), np.asarray(h_ref), rtol=1e-3, atol=1e-3)

    # 2) Default performance path: bf16 MXU operands (f32 accumulate + f32 gate math).
    #    Tolerance loosened for bf16 rounding across the 6-conv chain (K up to 400).
    fwd = jax.jit(functools.partial(gru_block_forward, k1=k1, k2=k2,
                                    matmul_dtype=jnp.bfloat16))
    x_out, h_out = fwd(x, h, params)
    jax.block_until_ready((x_out, h_out))
    np.testing.assert_allclose(np.asarray(x_out), np.asarray(x_ref), rtol=5e-2, atol=5e-2)
    np.testing.assert_allclose(np.asarray(h_out), np.asarray(h_ref), rtol=5e-2, atol=5e-2)

    assert x_out.shape == (B, in_ch, H, W)
    assert h_out.shape == (B, hidden_units, H, W)
    print("KERNEL_OK")
</pallas_src>

<mosaic_0001>
module attributes {stable_mosaic.version = 11 : i64} {
  func.func @kernel(%arg0: i32, %arg1: memref<1x4x256xf32, #tpu.memory_space<vmem>>, %arg2: memref<1x32x256xf32, #tpu.memory_space<vmem>>, %arg3: memref<32x288xf32, #tpu.memory_space<vmem>>, %arg4: memref<16x288xf32, #tpu.memory_space<vmem>>, %arg5: memref<16x400xf32, #tpu.memory_space<vmem>>, %arg6: memref<32x288xf32, #tpu.memory_space<vmem>>, %arg7: memref<16x288xf32, #tpu.memory_space<vmem>>, %arg8: memref<4x400xf32, #tpu.memory_space<vmem>>, %arg9: memref<1x4x256xf32, #tpu.memory_space<vmem>>, %arg10: memref<1x16x256xf32, #tpu.memory_space<vmem>>, %arg11: memref<16x324xf32, #tpu.memory_space<vmem>>, %arg12: memref<400x256xf32, #tpu.memory_space<vmem>>) attributes {dimension_semantics = [#tpu.dimension_semantics<parallel>], iteration_bounds = array<i64: 2>, scalar_prefetch = 0 : i64, scratch_operands = 2 : i64, tpu.core_type = #tpu.core_type<tc>, window_params = [{transform_indices = @transform_0, window_bounds = array<i64: 1, 4, 256>}, {transform_indices = @transform_1, window_bounds = array<i64: 1, 32, 256>}, {pipeline_mode = #tpu.pipeline_mode<synchronous>, transform_indices = @transform_2, window_bounds = array<i64: 32, 288>}, {pipeline_mode = #tpu.pipeline_mode<synchronous>, transform_indices = @transform_3, window_bounds = array<i64: 16, 288>}, {pipeline_mode = #tpu.pipeline_mode<synchronous>, transform_indices = @transform_4, window_bounds = array<i64: 16, 400>}, {pipeline_mode = #tpu.pipeline_mode<synchronous>, transform_indices = @transform_5, window_bounds = array<i64: 32, 288>}, {pipeline_mode = #tpu.pipeline_mode<synchronous>, transform_indices = @transform_6, window_bounds = array<i64: 16, 288>}, {pipeline_mode = #tpu.pipeline_mode<synchronous>, transform_indices = @transform_7, window_bounds = array<i64: 4, 400>}, {transform_indices = @transform_8, window_bounds = array<i64: 1, 4, 256>}, {transform_indices = @transform_9, window_bounds = array<i64: 1, 16, 256>}]} {
    %cst = arith.constant 0.000000e+00 : f32
    %0 = vector.broadcast %cst : f32 to vector<16x324xf32>
    %c0 = arith.constant 0 : index
    %c0_0 = arith.constant 0 : index
    %1 = vector.load %arg11[%c0, %c0_0] : memref<16x324xf32, #tpu.memory_space<vmem>>, vector<16x324xf32>
    tpu.vector_store %arg11[%c0, %c0_0], %0 {strides = array<i32>} : memref<16x324xf32, #tpu.memory_space<vmem>>, vector<16x324xf32>,
    %2 = tpu.iota {dimensions = array<i32: 1>} : vector<1x256xi32>
    %c16_i32 = arith.constant 16 : i32
    %c0_i32 = arith.constant 0 : i32
    %3 = arith.cmpi eq, %c16_i32, %c0_i32 : i32
    %c1_i32 = arith.constant 1 : i32
    %4 = arith.select %3, %c1_i32, %c16_i32 : i32
    %5 = vector.broadcast %4 : i32 to vector<1x256xi32>
    %6 = arith.remsi %2, %5 : vector<1x256xi32>
    %c0_i32_1 = arith.constant 0 : i32
    %7 = vector.broadcast %c0_i32_1 : i32 to vector<1x256xi32>
    %8 = arith.cmpi ne, %6, %7 : vector<1x256xi32>
    %c0_i32_2 = arith.constant 0 : i32
    %9 = vector.broadcast %c0_i32_2 : i32 to vector<1x256xi32>
    %10 = arith.cmpi slt, %6, %9 : vector<1x256xi32>
    %c0_i32_3 = arith.constant 0 : i32
    %11 = arith.cmpi slt, %4, %c0_i32_3 : i32
    %12 = vector.broadcast %11 : i1 to vector<1x256xi1>
    %13 = vector.broadcast %12 : vector<1x256xi1> to vector<1x256xi1>
    %14 = arith.xori %10, %13 : vector<1x256xi1>
    %15 = arith.andi %14, %8 : vector<1x256xi1>
    %16 = vector.broadcast %4 : i32 to vector<1x256xi32>
    %17 = arith.addi %6, %16 : vector<1x256xi32>
    %18 = arith.select %15, %17, %6 : vector<1x256xi1>, vector<1x256xi32>
    %c2_i32 = arith.constant 2 : i32
    %19 = vector.broadcast %c2_i32 : i32 to vector<1x256xi32>
    %20 = arith.cmpi sge, %18, %19 : vector<1x256xi32>
    %c1_i32_4 = arith.constant 1 : i32
    %21 = vector.broadcast %c1_i32_4 : i32 to vector<1x256xi32>
    %22 = arith.cmpi sge, %18, %21 : vector<1x256xi32>
    %c15_i32 = arith.constant 15 : i32
    %23 = vector.broadcast %c15_i32 : i32 to vector<1x256xi32>
    %24 = arith.cmpi slt, %18, %23 : vector<1x256xi32>
    %c14_i32 = arith.constant 14 : i32
    %25 = vector.broadcast %c14_i32 : i32 to vector<1x256xi32>
    %26 = arith.cmpi slt, %18, %25 : vector<1x256xi32>
    %c0_5 = arith.constant 0 : index
    %c0_6 = arith.constant 0 : index
    %c0_7 = arith.constant 0 : index
    %27 = vector.load %arg1[%c0_5, %c0_6, %c0_7] : memref<1x4x256xf32, #tpu.memory_space<vmem>>, vector<1x4x256xf32>
    %28 = vector.shape_cast %27 : vector<1x4x256xf32> to vector<4x256xf32>
    %c0_8 = arith.constant 0 : index
    %c0_9 = arith.constant 0 : index
    %c0_10 = arith.constant 0 : index
    %29 = vector.load %arg2[%c0_8, %c0_9, %c0_10] : memref<1x32x256xf32, #tpu.memory_space<vmem>>, vector<1x32x256xf32>
    %30 = vector.shape_cast %29 : vector<1x32x256xf32> to vector<32x256xf32>
    %31 = vector.extract_strided_slice %30 {offsets = [0, 0], sizes = [16, 256], strides = [1, 1]} : vector<32x256xf32> to vector<16x256xf32>
    %32 = vector.extract_strided_slice %30 {offsets = [16, 0], sizes = [16, 256], strides = [1, 1]} : vector<32x256xf32> to vector<16x256xf32>
    %c0_11 = arith.constant 0 : index
    %c34 = arith.constant 34 : index
    %33 = vector.load %arg11[%c0_11, %c34] : memref<16x324xf32, #tpu.memory_space<vmem>>, vector<4x256xf32>
    tpu.vector_store %arg11[%c0_11, %c34], %28 {strides = array<i32>} : memref<16x324xf32, #tpu.memory_space<vmem>>, vector<4x256xf32>,
    %c0_12 = arith.constant 0 : index
    %c17 = arith.constant 17 : index
    %34 = vector.load %arg11[%c0_12, %c17] : memref<16x324xf32, #tpu.memory_space<vmem>>, vector<16x256xf32>
    %cst_13 = arith.constant 0.000000e+00 : f32
    %35 = vector.broadcast %cst_13 : f32 to vector<16x256xf32>
    %36 = vector.shape_cast %22 : vector<1x256xi1> to vector<1x256xi1>
    %37 = vector.broadcast %36 : vector<1x256xi1> to vector<16x256xi1>
    %38 = arith.select %37, %34, %35 : vector<16x256xi1>, vector<16x256xf32>
    %c0_14 = arith.constant 0 : index
    %c0_15 = arith.constant 0 : index
    %39 = vector.load %arg12[%c0_14, %c0_15] : memref<400x256xf32, #tpu.memory_space<vmem>>, vector<16x256xf32>
    tpu.vector_store %arg12[%c0_14, %c0_15], %38 {strides = array<i32>} : memref<400x256xf32, #tpu.memory_space<vmem>>, vector<16x256xf32>,
    %c0_16 = arith.constant 0 : index
    %c18 = arith.constant 18 : index
    %40 = vector.load %arg11[%c0_16, %c18] : memref<16x324xf32, #tpu.memory_space<vmem>>, vector<16x256xf32>
    %c16 = arith.constant 16 : index
    %c0_17 = arith.constant 0 : index
    %41 = vector.load %arg12[%c16, %c0_17] : memref<400x256xf32, #tpu.memory_space<vmem>>, vector<16x256xf32>
    tpu.vector_store %arg12[%c16, %c0_17], %40 {strides = array<i32>} : memref<400x256xf32, #tpu.memory_space<vmem>>, vector<16x256xf32>,
    %c0_18 = arith.constant 0 : index
    %c19 = arith.constant 19 : index
    %42 = vector.load %arg11[%c0_18, %c19] : memref<16x324xf32, #tpu.memory_space<vmem>>, vector<16x256xf32>
    %cst_19 = arith.constant 0.000000e+00 : f32
    %43 = vector.broadcast %cst_19 : f32 to vector<16x256xf32>
    %44 = vector.shape_cast %24 : vector<1x256xi1> to vector<1x256xi1>
    %45 = vector.broadcast %44 : vector<1x256xi1> to vector<16x256xi1>
    %46 = arith.select %45, %42, %43 : vector<16x256xi1>, vector<16x256xf32>
    %c32 = arith.constant 32 : index
    %c0_20 = arith.constant 0 : index
    %47 = vector.load %arg12[%c32, %c0_20] : memref<400x256xf32, #tpu.memory_space<vmem>>, vector<16x256xf32>
    tpu.vector_store %arg12[%c32, %c0_20], %46 {strides = array<i32>} : memref<400x256xf32, #tpu.memory_space<vmem>>, vector<16x256xf32>,
    %c0_21 = arith.constant 0 : index
    %c33 = arith.constant 33 : index
    %48 = vector.load %arg11[%c0_21, %c33] : memref<16x324xf32, #tpu.memory_space<vmem>>, vector<16x256xf32>
    %cst_22 = arith.constant 0.000000e+00 : f32
    %49 = vector.broadcast %cst_22 : f32 to vector<16x256xf32>
    %50 = vector.shape_cast %22 : vector<1x256xi1> to vector<1x256xi1>
    %51 = vector.broadcast %50 : vector<1x256xi1> to vector<16x256xi1>
    %52 = arith.select %51, %48, %49 : vector<16x256xi1>, vector<16x256xf32>
    %c48 = arith.constant 48 : index
    %c0_23 = arith.constant 0 : index
    %53 = vector.load %arg12[%c48, %c0_23] : memref<400x256xf32, #tpu.memory_space<vmem>>, vector<16x256xf32>
    tpu.vector_store %arg12[%c48, %c0_23], %52 {strides = array<i32>} : memref<400x256xf32, #tpu.memory_space<vmem>>, vector<16x256xf32>,
    %c0_24 = arith.constant 0 : index
    %c34_25 = arith.constant 34 : index
    %54 = vector.load %arg11[%c0_24, %c34_25] : memref<16x324xf32, #tpu.memory_space<vmem>>, vector<16x256xf32>
    %c64 = arith.constant 64 : index
    %c0_26 = arith.constant 0 : index
    %55 = vector.load %arg12[%c64, %c0_26] : memref<400x256xf32, #tpu.memory_space<vmem>>, vector<16x256xf32>
    tpu.vector_store %arg12[%c64, %c0_26], %54 {strides = array<i32>} : memref<400x256xf32, #tpu.memory_space<vmem>>, vector<16x256xf32>,
    %c0_27 = arith.constant 0 : index
    %c35 = arith.constant 35 : index
    %56 = vector.load %arg11[%c0_27, %c35] : memref<16x324xf32, #tpu.memory_space<vmem>>, vector<16x256xf32>
    %cst_28 = arith.constant 0.000000e+00 : f32
    %57 = vector.broadcast %cst_28 : f32 to vector<16x256xf32>
    %58 = vector.shape_cast %24 : vector<1x256xi1> to vector<1x256xi1>
    %59 = vector.broadcast %58 : vector<1x256xi1> to vector<16x256xi1>
    %60 = arith.select %59, %56, %57 : vector<16x256xi1>, vector<16x256xf32>
    %c80 = arith.constant 80 : index
    %c0_29 = arith.constant 0 : index
    %61 = vector.load %arg12[%c80, %c0_29] : memref<400x256xf32, #tpu.memory_space<vmem>>, vector<16x256xf32>
    tpu.vector_store %arg12[%c80, %c0_29], %60 {strides = array<i32>} : memref<400x256xf32, #tpu.memory_space<vmem>>, vector<16x256xf32>,
    %c0_30 = arith.constant 0 : index
    %c49 = arith.constant 49 : index
    %62 = vector.load %arg11[%c0_30, %c49] : memref<16x324xf32, #tpu.memory_space<vmem>>, vector<16x256xf32>
    %cst_31 = arith.constant 0.000000e+00 : f32
    %63 = vector.broadcast %cst_31 : f32 to vector<16x256xf32>
    %64 = vector.shape_cast %22 : vector<1x256xi1> to vector<1x256xi1>
    %65 = vector.broadcast %64 : vector<1x256xi1> to vector<16x256xi1>
    %66 = arith.select %65, %62, %63 : vector<16x256xi1>, vector<16x256xf32>
    %c96 = arith.constant 96 : index
    %c0_32 = arith.constant 0 : index
    %67 = vector.load %arg12[%c96, %c0_32] : memref<400x256xf32, #tpu.memory_space<vmem>>, vector<16x256xf32>
    tpu.vector_store %arg12[%c96, %c0_32], %66 {strides = array<i32>} : memref<400x256xf32, #tpu.memory_space<vmem>>, vector<16x256xf32>,
    %c0_33 = arith.constant 0 : index
    %c50 = arith.constant 50 : index
    %68 = vector.load %arg11[%c0_33, %c50] : memref<16x324xf32, #tpu.memory_space<vmem>>, vector<16x256xf32>
    %c112 = arith.constant 112 : index
    %c0_34 = arith.constant 0 : index
    %69 = vector.load %arg12[%c112, %c0_34] : memref<400x256xf32, #tpu.memory_space<vmem>>, vector<16x256xf32>
    tpu.vector_store %arg12[%c112, %c0_34], %68 {strides = array<i32>} : memref<400x256xf32, #tpu.memory_space<vmem>>, vector<16x256xf32>,
    %c0_35 = arith.constant 0 : index
    %c51 = arith.constant 51 : index
    %70 = vector.load %arg11[%c0_35, %c51] : memref<16x324xf32, #tpu.memory_space<vmem>>, vector<16x256xf32>
    %cst_36 = arith.constant 0.000000e+00 : f32
    %71 = vector.broadcast %cst_36 : f32 to vector<16x256xf32>
    %72 = vector.shape_cast %24 : vector<1x256xi1> to vector<1x256xi1>
    %73 = vector.broadcast %72 : vector<1x256xi1> to vector<16x256xi1>
    %74 = arith.select %73, %70, %71 : vector<16x256xi1>, vector<16x256xf32>
    %c128 = arith.constant 128 : index
    %c0_37 = arith.constant 0 : index
    %75 = vector.load %arg12[%c128, %c0_37] : memref<400x256xf32, #tpu.memory_space<vmem>>, vector<16x256xf32>
    tpu.vector_store %arg12[%c128, %c0_37], %74 {strides = array<i32>} : memref<400x256xf32, #tpu.memory_space<vmem>>, vector<16x256xf32>,
    %c0_38 = arith.constant 0 : index
    %c34_39 = arith.constant 34 : index
    %76 = vector.load %arg11[%c0_38, %c34_39] : memref<16x324xf32, #tpu.memory_space<vmem>>, vector<16x256xf32>
    tpu.vector_store %arg11[%c0_38, %c34_39], %31 {strides = array<i32>} : memref<16x324xf32, #tpu.memory_space<vmem>>, vector<16x256xf32>,
    %c0_40 = arith.constant 0 : index
    %c17_41 = arith.constant 17 : index
    %77 = vector.load %arg11[%c0_40, %c17_41] : memref<16x324xf32, #tpu.memory_space<vmem>>, vector<16x256xf32>
    %cst_42 = arith.constant 0.000000e+00 : f32
    %78 = vector.broadcast %cst_42 : f32 to vector<16x256xf32>
    %79 = vector.shape_cast %22 : vector<1x256xi1> to vector<1x256xi1>
    %80 = vector.broadcast %79 : vector<1x256xi1> to vector<16x256xi1>
    %81 = arith.select %80, %77, %78 : vector<16x256xi1>, vector<16x256xf32>
    %c144 = arith.constant 144 : index
    %c0_43 = arith.constant 0 : index
    %82 = vector.load %arg12[%c144, %c0_43] : memref<400x256xf32, #tpu.memory_space<vmem>>, vector<16x256xf32>
    tpu.vector_store %arg12[%c144, %c0_43], %81 {strides = array<i32>} : memref<400x256xf32, #tpu.memory_space<vmem>>, vector<16x256xf32>,
    %c0_44 = arith.constant 0 : index
    %c18_45 = arith.constant 18 : index
    %83 = vector.load %arg11[%c0_44, %c18_45] : memref<16x324xf32, #tpu.memory_space<vmem>>, vector<16x256xf32>
    %c160 = arith.constant 160 : index
    %c0_46 = arith.constant 0 : index
    %84 = vector.load %arg12[%c160, %c0_46] : memref<400x256xf32, #tpu.memory_space<vmem>>, vector<16x256xf32>
    tpu.vector_store %arg12[%c160, %c0_46], %83 {strides = array<i32>} : memref<400x256xf32, #tpu.memory_space<vmem>>, vector<16x256xf32>,
    %c0_47 = arith.constant 0 : index
    %c19_48 = arith.constant 19 : index
    %85 = vector.load %arg11[%c0_47, %c19_48] : memref<16x324xf32, #tpu.memory_space<vmem>>, vector<16x256xf32>
    %cst_49 = arith.constant 0.000000e+00 : f32
    %86 = vector.broadcast %cst_49 : f32 to vector<16x256xf32>
    %87 = vector.shape_cast %24 : vector<1x256xi1> to vector<1x256xi1>
    %88 = vector.broadcast %87 : vector<1x256xi1> to vector<16x256xi1>
    %89 = arith.select %88, %85, %86 : vector<16x256xi1>, vector<16x256xf32>
    %c176 = arith.constant 176 : index
    %c0_50 = arith.constant 0 : index
    %90 = vector.load %arg12[%c176, %c0_50] : memref<400x256xf32, #tpu.memory_space<vmem>>, vector<16x256xf32>
    tpu.vector_store %arg12[%c176, %c0_50], %89 {strides = array<i32>} : memref<400x256xf32, #tpu.memory_space<vmem>>, vector<16x256xf32>,
    %c0_51 = arith.constant 0 : index
    %c33_52 = arith.constant 33 : index
    %91 = vector.load %arg11[%c0_51, %c33_52] : memref<16x324xf32, #tpu.memory_space<vmem>>, vector<16x256xf32>
    %cst_53 = arith.constant 0.000000e+00 : f32
    %92 = vector.broadcast %cst_53 : f32 to vector<16x256xf32>
    %93 = vector.shape_cast %22 : vector<1x256xi1> to vector<1x256xi1>
    %94 = vector.broadcast %93 : vector<1x256xi1> to vector<16x256xi1>
    %95 = arith.select %94, %91, %92 : vector<16x256xi1>, vector<16x256xf32>
    %c192 = arith.constant 192 : index
    %c0_54 = arith.constant 0 : index
    %96 = vector.load %arg12[%c192, %c0_54] : memref<400x256xf32, #tpu.memory_space<vmem>>, vector<16x256xf32>
    tpu.vector_store %arg12[%c192, %c0_54], %95 {strides = array<i32>} : memref<400x256xf32, #tpu.memory_space<vmem>>, vector<16x256xf32>,
    %c0_55 = arith.constant 0 : index
    %c34_56 = arith.constant 34 : index
    %97 = vector.load %arg11[%c0_55, %c34_56] : memref<16x324xf32, #tpu.memory_space<vmem>>, vector<16x256xf32>
    %c208 = arith.constant 208 : index
    %c0_57 = arith.constant 0 : index
    %98 = vector.load %arg12[%c208, %c0_57] : memref<400x256xf32, #tpu.memory_space<vmem>>, vector<16x256xf32>
    tpu.vector_store %arg12[%c208, %c0_57], %97 {strides = array<i32>} : memref<400x256xf32, #tpu.memory_space<vmem>>, vector<16x256xf32>,
    %c0_58 = arith.constant 0 : index
    %c35_59 = arith.constant 35 : index
    %99 = vector.load %arg11[%c0_58, %c35_59] : memref<16x324xf32, #tpu.memory_space<vmem>>, vector<16x256xf32>
    %cst_60 = arith.constant 0.000000e+00 : f32
    %100 = vector.broadcast %cst_60 : f32 to vector<16x256xf32>
    %101 = vector.shape_cast %24 : vector<1x256xi1> to vector<1x256xi1>
    %102 = vector.broadcast %101 : vector<1x256xi1> to vector<16x256xi1>
    %103 = arith.select %102, %99, %100 : vector<16x256xi1>, vector<16x256xf32>
    %c224 = arith.constant 224 : index
    %c0_61 = arith.constant 0 : index
    %104 = vector.load %arg12[%c224, %c0_61] : memref<400x256xf32, #tpu.memory_space<vmem>>, vector<16x256xf32>
    tpu.vector_store %arg12[%c224, %c0_61], %103 {strides = array<i32>} : memref<400x256xf32, #tpu.memory_space<vmem>>, vector<16x256xf32>,
    %c0_62 = arith.constant 0 : index
    %c49_63 = arith.constant 49 : index
    %105 = vector.load %arg11[%c0_62, %c49_63] : memref<16x324xf32, #tpu.memory_space<vmem>>, vector<16x256xf32>
    %cst_64 = arith.constant 0.000000e+00 : f32
    %106 = vector.broadcast %cst_64 : f32 to vector<16x256xf32>
    %107 = vector.shape_cast %22 : vector<1x256xi1> to vector<1x256xi1>
    %108 = vector.broadcast %107 : vector<1x256xi1> to vector<16x256xi1>
    %109 = arith.select %108, %105, %106 : vector<16x256xi1>, vector<16x256xf32>
    %c240 = arith.constant 240 : index
    %c0_65 = arith.constant 0 : index
    %110 = vector.load %arg12[%c240, %c0_65] : memref<400x256xf32, #tpu.memory_space<vmem>>, vector<16x256xf32>
    tpu.vector_store %arg12[%c240, %c0_65], %109 {strides = array<i32>} : memref<400x256xf32, #tpu.memory_space<vmem>>, vector<16x256xf32>,
    %c0_66 = arith.constant 0 : index
    %c50_67 = arith.constant 50 : index
    %111 = vector.load %arg11[%c0_66, %c50_67] : memref<16x324xf32, #tpu.memory_space<vmem>>, vector<16x256xf32>
    %c256 = arith.constant 256 : index
    %c0_68 = arith.constant 0 : index
    %112 = vector.load %arg12[%c256, %c0_68] : memref<400x256xf32, #tpu.memory_space<vmem>>, vector<16x256xf32>
    tpu.vector_store %arg12[%c256, %c0_68], %111 {strides = array<i32>} : memref<400x256xf32, #tpu.memory_space<vmem>>, vector<16x256xf32>,
    %c0_69 = arith.constant 0 : index
    %c51_70 = arith.constant 51 : index
    %113 = vector.load %arg11[%c0_69, %c51_70] : memref<16x324xf32, #tpu.memory_space<vmem>>, vector<16x256xf32>
    %cst_71 = arith.constant 0.000000e+00 : f32
    %114 = vector.broadcast %cst_71 : f32 to vector<16x256xf32>
    %115 = vector.shape_cast %24 : vector<1x256xi1> to vector<1x256xi1>
    %116 = vector.broadcast %115 : vector<1x256xi1> to vector<16x256xi1>
    %117 = arith.select %116, %113, %114 : vector<16x256xi1>, vector<16x256xf32>
    %c272 = arith.constant 272 : index
    %c0_72 = arith.constant 0 : index
    %118 = vector.load %arg12[%c272, %c0_72] : memref<400x256xf32, #tpu.memory_space<vmem>>, vector<16x256xf32>
    tpu.vector_store %arg12[%c272, %c0_72], %117 {strides = array<i32>} : memref<400x256xf32, #tpu.memory_space<vmem>>, vector<16x256xf32>,
    %c0_73 = arith.constant 0 : index
    %c0_74 = arith.constant 0 : index
    %119 = vector.load %arg3[%c0_73, %c0_74] : memref<32x288xf32, #tpu.memory_space<vmem>>, vector<32x288xf32>
    %c0_75 = arith.constant 0 : index
    %c0_76 = arith.constant 0 : index
    %120 = vector.load %arg12[%c0_75, %c0_76] : memref<400x256xf32, #tpu.memory_space<vmem>>, vector<288x256xf32>
    %cst_77 = arith.constant dense<0.000000e+00> : vector<32x256xf32>
    %121 = tpu.matmul %119, %120, %cst_77 {dimension_numbers = #tpu.dot_dimension_numbers<[1], [0], [0], [1], [0, 0, 1, 1], [], []>} : vector<32x288xf32>, vector<288x256xf32>, vector<32x256xf32> -> vector<32x256xf32>
    %122 = arith.negf %121 : vector<32x256xf32>
    %123 = math.exp %122 : vector<32x256xf32>
    %cst_78 = arith.constant 1.000000e+00 : f32
    %124 = vector.broadcast %cst_78 : f32 to vector<32x256xf32>
    %125 = arith.addf %124, %123 : vector<32x256xf32>
    %126 = arith.divf %124, %125 : vector<32x256xf32>
    %127 = vector.extract_strided_slice %126 {offsets = [0, 0], sizes = [16, 256], strides = [1, 1]} : vector<32x256xf32> to vector<16x256xf32>
    %128 = vector.extract_strided_slice %126 {offsets = [16, 0], sizes = [16, 256], strides = [1, 1]} : vector<32x256xf32> to vector<16x256xf32>
    %129 = arith.mulf %128, %31 : vector<16x256xf32>
    %c0_79 = arith.constant 0 : index
    %c34_80 = arith.constant 34 : index
    %130 = vector.load %arg11[%c0_79, %c34_80] : memref<16x324xf32, #tpu.memory_space<vmem>>, vector<16x256xf32>
    tpu.vector_store %arg11[%c0_79, %c34_80], %129 {strides = array<i32>} : memref<16x324xf32, #tpu.memory_space<vmem>>, vector<16x256xf32>,
    %c0_81 = arith.constant 0 : index
    %c17_82 = arith.constant 17 : index
    %131 = vector.load %arg11[%c0_81, %c17_82] : memref<16x324xf32, #tpu.memory_space<vmem>>, vector<16x256xf32>
    %cst_83 = arith.constant 0.000000e+00 : f32
    %132 = vector.broadcast %cst_83 : f32 to vector<16x256xf32>
    %133 = vector.shape_cast %22 : vector<1x256xi1> to vector<1x256xi1>
    %134 = vector.broadcast %133 : vector<1x256xi1> to vector<16x256xi1>
    %135 = arith.select %134, %131, %132 : vector<16x256xi1>, vector<16x256xf32>
    %c144_84 = arith.constant 144 : index
    %c0_85 = arith.constant 0 : index
    %136 = vector.load %arg12[%c144_84, %c0_85] : memref<400x256xf32, #tpu.memory_space<vmem>>, vector<16x256xf32>
    tpu.vector_store %arg12[%c144_84, %c0_85], %135 {strides = array<i32>} : memref<400x256xf32, #tpu.memory_space<vmem>>, vector<16x256xf32>,
    %c0_86 = arith.constant 0 : index
    %c18_87 = arith.constant 18 : index
    %137 = vector.load %arg11[%c0_86, %c18_87] : memref<16x324xf32, #tpu.memory_space<vmem>>, vector<16x256xf32>
    %c160_88 = arith.constant 160 : index
    %c0_89 = arith.constant 0 : index
    %138 = vector.load %arg12[%c160_88, %c0_89] : memref<400x256xf32, #tpu.memory_space<vmem>>, vector<16x256xf32>
    tpu.vector_store %arg12[%c160_88, %c0_89], %137 {strides = array<i32>} : memref<400x256xf32, #tpu.memory_space<vmem>>, vector<16x256xf32>,
    %c0_90 = arith.constant 0 : index
    %c19_91 = arith.constant 19 : index
    %139 = vector.load %arg11[%c0_90, %c19_91] : memref<16x324xf32, #tpu.memory_space<vmem>>, vector<16x256xf32>
    %cst_92 = arith.constant 0.000000e+00 : f32
    %140 = vector.broadcast %cst_92 : f32 to vector<16x256xf32>
    %141 = vector.shape_cast %24 : vector<1x256xi1> to vector<1x256xi1>
    %142 = vector.broadcast %141 : vector<1x256xi1> to vector<16x256xi1>
    %143 = arith.select %142, %139, %140 : vector<16x256xi1>, vector<16x256xf32>
    %c176_93 = arith.constant 176 : index
    %c0_94 = arith.constant 0 : index
    %144 = vector.load %arg12[%c176_93, %c0_94] : memref<400x256xf32, #tpu.memory_space<vmem>>, vector<16x256xf32>
    tpu.vector_store %arg12[%c176_93, %c0_94], %143 {strides = array<i32>} : memref<400x256xf32, #tpu.memory_space<vmem>>, vector<16x256xf32>,
    %c0_95 = arith.constant 0 : index
    %c33_96 = arith.constant 33 : index
    %145 = vector.load %arg11[%c0_95, %c33_96] : memref<16x324xf32, #tpu.memory_space<vmem>>, vector<16x256xf32>
    %cst_97 = arith.constant 0.000000e+00 : f32
    %146 = vector.broadcast %cst_97 : f32 to vector<16x256xf32>
    %147 = vector.shape_cast %22 : vector<1x256xi1> to vector<1x256xi1>
    %148 = vector.broadcast %147 : vector<1x256xi1> to vector<16x256xi1>
    %149 = arith.select %148, %145, %146 : vector<16x256xi1>, vector<16x256xf32>
    %c192_98 = arith.constant 192 : index
    %c0_99 = arith.constant 0 : index
    %150 = vector.load %arg12[%c192_98, %c0_99] : memref<400x256xf32, #tpu.memory_space<vmem>>, vector<16x256xf32>
    tpu.vector_store %arg12[%c192_98, %c0_99], %149 {strides = array<i32>} : memref<400x256xf32, #tpu.memory_space<vmem>>, vector<16x256xf32>,
    %c0_100 = arith.constant 0 : index
    %c34_101 = arith.constant 34 : index
    %151 = vector.load %arg11[%c0_100, %c34_101] : memref<16x324xf32, #tpu.memory_space<vmem>>, vector<16x256xf32>
    %c208_102 = arith.constant 208 : index
    %c0_103 = arith.constant 0 : index
    %152 = vector.load %arg12[%c208_102, %c0_103] : memref<400x256xf32, #tpu.memory_space<vmem>>, vector<16x256xf32>
    tpu.vector_store %arg12[%c208_102, %c0_103], %151 {strides = array<i32>} : memref<400x256xf32, #tpu.memory_space<vmem>>, vector<16x256xf32>,
    %c0_104 = arith.constant 0 : index
    %c35_105 = arith.constant 35 : index
    %153 = vector.load %arg11[%c0_104, %c35_105] : memref<16x324xf32, #tpu.memory_space<vmem>>, vector<16x256xf32>
    %cst_106 = arith.constant 0.000000e+00 : f32
    %154 = vector.broadcast %cst_106 : f32 to vector<16x256xf32>
    %155 = vector.shape_cast %24 : vector<1x256xi1> to vector<1x256xi1>
    %156 = vector.broadcast %155 : vector<1x256xi1> to vector<16x256xi1>
    %157 = arith.select %156, %153, %154 : vector<16x256xi1>, vector<16x256xf32>
    %c224_107 = arith.constant 224 : index
    %c0_108 = arith.constant 0 : index
    %158 = vector.load %arg12[%c224_107, %c0_108] : memref<400x256xf32, #tpu.memory_space<vmem>>, vector<16x256xf32>
    tpu.vector_store %arg12[%c224_107, %c0_108], %157 {strides = array<i32>} : memref<400x256xf32, #tpu.memory_space<vmem>>, vector<16x256xf32>,
    %c0_109 = arith.constant 0 : index
    %c49_110 = arith.constant 49 : index
    %159 = vector.load %arg11[%c0_109, %c49_110] : memref<16x324xf32, #tpu.memory_space<vmem>>, vector<16x256xf32>
    %cst_111 = arith.constant 0.000000e+00 : f32
    %160 = vector.broadcast %cst_111 : f32 to vector<16x256xf32>
    %161 = vector.shape_cast %22 : vector<1x256xi1> to vector<1x256xi1>
    %162 = vector.broadcast %161 : vector<1x256xi1> to vector<16x256xi1>
    %163 = arith.select %162, %159, %160 : vector<16x256xi1>, vector<16x256xf32>
    %c240_112 = arith.constant 240 : index
    %c0_113 = arith.constant 0 : index
    %164 = vector.load %arg12[%c240_112, %c0_113] : memref<400x256xf32, #tpu.memory_space<vmem>>, vector<16x256xf32>
    tpu.vector_store %arg12[%c240_112, %c0_113], %163 {strides = array<i32>} : memref<400x256xf32, #tpu.memory_space<vmem>>, vector<16x256xf32>,
    %c0_114 = arith.constant 0 : index
    %c50_115 = arith.constant 50 : index
    %165 = vector.load %arg11[%c0_114, %c50_115] : memref<16x324xf32, #tpu.memory_space<vmem>>, vector<16x256xf32>
    %c256_116 = arith.constant 256 : index
    %c0_117 = arith.constant 0 : index
    %166 = vector.load %arg12[%c256_116, %c0_117] : memref<400x256xf32, #tpu.memory_space<vmem>>, vector<16x256xf32>
    tpu.vector_store %arg12[%c256_116, %c0_117], %165 {strides = array<i32>} : memref<400x256xf32, #tpu.memory_space<vmem>>, vector<16x256xf32>,
    %c0_118 = arith.constant 0 : index
    %c51_119 = arith.constant 51 : index
    %167 = vector.load %arg11[%c0_118, %c51_119] : memref<16x324xf32, #tpu.memory_space<vmem>>, vector<16x256xf32>
    %cst_120 = arith.constant 0.000000e+00 : f32
    %168 = vector.broadcast %cst_120 : f32 to vector<16x256xf32>
    %169 = vector.shape_cast %24 : vector<1x256xi1> to vector<1x256xi1>
    %170 = vector.broadcast %169 : vector<1x256xi1> to vector<16x256xi1>
    %171 = arith.select %170, %167, %168 : vector<16x256xi1>, vector<16x256xf32>
    %c272_121 = arith.constant 272 : index
    %c0_122 = arith.constant 0 : index
    %172 = vector.load %arg12[%c272_121, %c0_122] : memref<400x256xf32, #tpu.memory_space<vmem>>, vector<16x256xf32>
    tpu.vector_store %arg12[%c272_121, %c0_122], %171 {strides = array<i32>} : memref<400x256xf32, #tpu.memory_space<vmem>>, vector<16x256xf32>,
    %c0_123 = arith.constant 0 : index
    %c0_124 = arith.constant 0 : index
    %173 = vector.load %arg4[%c0_123, %c0_124] : memref<16x288xf32, #tpu.memory_space<vmem>>, vector<16x288xf32>
    %c0_125 = arith.constant 0 : index
    %c0_126 = arith.constant 0 : index
    %174 = vector.load %arg12[%c0_125, %c0_126] : memref<400x256xf32, #tpu.memory_space<vmem>>, vector<288x256xf32>
    %cst_127 = arith.constant dense<0.000000e+00> : vector<16x256xf32>
    %175 = tpu.matmul %173, %174, %cst_127 {dimension_numbers = #tpu.dot_dimension_numbers<[1], [0], [0], [1], [0, 0, 1, 1], [], []>} : vector<16x288xf32>, vector<288x256xf32>, vector<16x256xf32> -> vector<16x256xf32>
    %176 = math.tanh %175 : vector<16x256xf32>
    %cst_128 = arith.constant 1.000000e+00 : f32
    %177 = vector.broadcast %cst_128 : f32 to vector<16x256xf32>
    %178 = arith.subf %177, %127 : vector<16x256xf32>
    %179 = arith.mulf %178, %31 : vector<16x256xf32>
    %180 = arith.mulf %127, %176 : vector<16x256xf32>
    %181 = arith.addf %179, %180 : vector<16x256xf32>
    %c0_129 = arith.constant 0 : index
    %c34_130 = arith.constant 34 : index
    %182 = vector.load %arg11[%c0_129, %c34_130] : memref<16x324xf32, #tpu.memory_space<vmem>>, vector<16x256xf32>
    tpu.vector_store %arg11[%c0_129, %c34_130], %181 {strides = array<i32>} : memref<16x324xf32, #tpu.memory_space<vmem>>, vector<16x256xf32>,
    %c0_131 = arith.constant 0 : index
    %c0_132 = arith.constant 0 : index
    %183 = vector.load %arg11[%c0_131, %c0_132] : memref<16x324xf32, #tpu.memory_space<vmem>>, vector<16x256xf32>
    %cst_133 = arith.constant 0.000000e+00 : f32
    %184 = vector.broadcast %cst_133 : f32 to vector<16x256xf32>
    %185 = vector.shape_cast %20 : vector<1x256xi1> to vector<1x256xi1>
    %186 = vector.broadcast %185 : vector<1x256xi1> to vector<16x256xi1>
    %187 = arith.select %186, %183, %184 : vector<16x256xi1>, vector<16x256xf32>
    %c0_134 = arith.constant 0 : index
    %c0_135 = arith.constant 0 : index
    %188 = vector.load %arg12[%c0_134, %c0_135] : memref<400x256xf32, #tpu.memory_space<vmem>>, vector<16x256xf32>
    tpu.vector_store %arg12[%c0_134, %c0_135], %187 {strides = array<i32>} : memref<400x256xf32, #tpu.memory_space<vmem>>, vector<16x256xf32>,
    %c0_136 = arith.constant 0 : index
    %c1 = arith.constant 1 : index
    %189 = vector.load %arg11[%c0_136, %c1] : memref<16x324xf32, #tpu.memory_space<vmem>>, vector<16x256xf32>
    %cst_137 = arith.constant 0.000000e+00 : f32
    %190 = vector.broadcast %cst_137 : f32 to vector<16x256xf32>
    %191 = vector.shape_cast %22 : vector<1x256xi1> to vector<1x256xi1>
    %192 = vector.broadcast %191 : vector<1x256xi1> to vector<16x256xi1>
    %193 = arith.select %192, %189, %190 : vector<16x256xi1>, vector<16x256xf32>
    %c16_138 = arith.constant 16 : index
    %c0_139 = arith.constant 0 : index
    %194 = vector.load %arg12[%c16_138, %c0_139] : memref<400x256xf32, #tpu.memory_space<vmem>>, vector<16x256xf32>
    tpu.vector_store %arg12[%c16_138, %c0_139], %193 {strides = array<i32>} : memref<400x256xf32, #tpu.memory_space<vmem>>, vector<16x256xf32>,
    %c0_140 = arith.constant 0 : index
    %c2 = arith.constant 2 : index
    %195 = vector.load %arg11[%c0_140, %c2] : memref<16x324xf32, #tpu.memory_space<vmem>>, vector<16x256xf32>
    %c32_141 = arith.constant 32 : index
    %c0_142 = arith.constant 0 : index
    %196 = vector.load %arg12[%c32_141, %c0_142] : memref<400x256xf32, #tpu.memory_space<vmem>>, vector<16x256xf32>
    tpu.vector_store %arg12[%c32_141, %c0_142], %195 {strides = array<i32>} : memref<400x256xf32, #tpu.memory_space<vmem>>, vector<16x256xf32>,
    %c0_143 = arith.constant 0 : index
    %c3 = arith.constant 3 : index
    %197 = vector.load %arg11[%c0_143, %c3] : memref<16x324xf32, #tpu.memory_space<vmem>>, vector<16x256xf32>
    %cst_144 = arith.constant 0.000000e+00 : f32
    %198 = vector.broadcast %cst_144 : f32 to vector<16x256xf32>
    %199 = vector.shape_cast %24 : vector<1x256xi1> to vector<1x256xi1>
    %200 = vector.broadcast %199 : vector<1x256xi1> to vector<16x256xi1>
    %201 = arith.select %200, %197, %198 : vector<16x256xi1>, vector<16x256xf32>
    %c48_145 = arith.constant 48 : index
    %c0_146 = arith.constant 0 : index
    %202 = vector.load %arg12[%c48_145, %c0_146] : memref<400x256xf32, #tpu.memory_space<vmem>>, vector<16x256xf32>
    tpu.vector_store %arg12[%c48_145, %c0_146], %201 {strides = array<i32>} : memref<400x256xf32, #tpu.memory_space<vmem>>, vector<16x256xf32>,
    %c0_147 = arith.constant 0 : index
    %c4 = arith.constant 4 : index
    %203 = vector.load %arg11[%c0_147, %c4] : memref<16x324xf32, #tpu.memory_space<vmem>>, vector<16x256xf32>
    %cst_148 = arith.constant 0.000000e+00 : f32
    %204 = vector.broadcast %cst_148 : f32 to vector<16x256xf32>
    %205 = vector.shape_cast %26 : vector<1x256xi1> to vector<1x256xi1>
    %206 = vector.broadcast %205 : vector<1x256xi1> to vector<16x256xi1>
    %207 = arith.select %206, %203, %204 : vector<16x256xi1>, vector<16x256xf32>
    %c64_149 = arith.constant 64 : index
    %c0_150 = arith.constant 0 : index
    %208 = vector.load %arg12[%c64_149, %c0_150] : memref<400x256xf32, #tpu.memory_space<vmem>>, vector<16x256xf32>
    tpu.vector_store %arg12[%c64_149, %c0_150], %207 {strides = array<i32>} : memref<400x256xf32, #tpu.memory_space<vmem>>, vector<16x256xf32>,
    %c0_151 = arith.constant 0 : index
    %c16_152 = arith.constant 16 : index
    %209 = vector.load %arg11[%c0_151, %c16_152] : memref<16x324xf32, #tpu.memory_space<vmem>>, vector<16x256xf32>
    %cst_153 = arith.constant 0.000000e+00 : f32
    %210 = vector.broadcast %cst_153 : f32 to vector<16x256xf32>
    %211 = vector.shape_cast %20 : vector<1x256xi1> to vector<1x256xi1>
    %212 = vector.broadcast %211 : vector<1x256xi1> to vector<16x256xi1>
    %213 = arith.select %212, %209, %210 : vector<16x256xi1>, vector<16x256xf32>
    %c80_154 = arith.constant 80 : index
    %c0_155 = arith.constant 0 : index
    %214 = vector.load %arg12[%c80_154, %c0_155] : memref<400x256xf32, #tpu.memory_space<vmem>>, vector<16x256xf32>
    tpu.vector_store %arg12[%c80_154, %c0_155], %213 {strides = array<i32>} : memref<400x256xf32, #tpu.memory_space<vmem>>, vector<16x256xf32>,
    %c0_156 = arith.constant 0 : index
    %c17_157 = arith.constant 17 : index
    %215 = vector.load %arg11[%c0_156, %c17_157] : memref<16x324xf32, #tpu.memory_space<vmem>>, vector<16x256xf32>
    %cst_158 = arith.constant 0.000000e+00 : f32
    %216 = vector.broadcast %cst_158 : f32 to vector<16x256xf32>
    %217 = vector.shape_cast %22 : vector<1x256xi1> to vector<1x256xi1>
    %218 = vector.broadcast %217 : vector<1x256xi1> to vector<16x256xi1>
    %219 = arith.select %218, %215, %216 : vector<16x256xi1>, vector<16x256xf32>
    %c96_159 = arith.constant 96 : index
    %c0_160 = arith.constant 0 : index
    %220 = vector.load %arg12[%c96_159, %c0_160] : memref<400x256xf32, #tpu.memory_space<vmem>>, vector<16x256xf32>
    tpu.vector_store %arg12[%c96_159, %c0_160], %219 {strides = array<i32>} : memref<400x256xf32, #tpu.memory_space<vmem>>, vector<16x256xf32>,
    %c0_161 = arith.constant 0 : index
    %c18_162 = arith.constant 18 : index
    %221 = vector.load %arg11[%c0_161, %c18_162] : memref<16x324xf32, #tpu.memory_space<vmem>>, vector<16x256xf32>
    %c112_163 = arith.constant 112 : index
    %c0_164 = arith.constant 0 : index
    %222 = vector.load %arg12[%c112_163, %c0_164] : memref<400x256xf32, #tpu.memory_space<vmem>>, vector<16x256xf32>
    tpu.vector_store %arg12[%c112_163, %c0_164], %221 {strides = array<i32>} : memref<400x256xf32, #tpu.memory_space<vmem>>, vector<16x256xf32>,
    %c0_165 = arith.constant 0 : index
    %c19_166 = arith.constant 19 : index
    %223 = vector.load %arg11[%c0_165, %c19_166] : memref<16x324xf32, #tpu.memory_space<vmem>>, vector<16x256xf32>
    %cst_167 = arith.constant 0.000000e+00 : f32
    %224 = vector.broadcast %cst_167 : f32 to vector<16x256xf32>
    %225 = vector.shape_cast %24 : vector<1x256xi1> to vector<1x256xi1>
    %226 = vector.broadcast %225 : vector<1x256xi1> to vector<16x256xi1>
    %227 = arith.select %226, %223, %224 : vector<16x256xi1>, vector<16x256xf32>
    %c128_168 = arith.constant 128 : index
    %c0_169 = arith.constant 0 : index
    %228 = vector.load %arg12[%c128_168, %c0_169] : memref<400x256xf32, #tpu.memory_space<vmem>>, vector<16x256xf32>
    tpu.vector_store %arg12[%c128_168, %c0_169], %227 {strides = array<i32>} : memref<400x256xf32, #tpu.memory_space<vmem>>, vector<16x256xf32>,
    %c0_170 = arith.constant 0 : index
    %c20 = arith.constant 20 : index
    %229 = vector.load %arg11[%c0_170, %c20] : memref<16x324xf32, #tpu.memory_space<vmem>>, vector<16x256xf32>
    %cst_171 = arith.constant 0.000000e+00 : f32
    %230 = vector.broadcast %cst_171 : f32 to vector<16x256xf32>
    %231 = vector.shape_cast %26 : vector<1x256xi1> to vector<1x256xi1>
    %232 = vector.broadcast %231 : vector<1x256xi1> to vector<16x256xi1>
    %233 = arith.select %232, %229, %230 : vector<16x256xi1>, vector<16x256xf32>
    %c144_172 = arith.constant 144 : index
    %c0_173 = arith.constant 0 : index
    %234 = vector.load %arg12[%c144_172, %c0_173] : memref<400x256xf32, #tpu.memory_space<vmem>>, vector<16x256xf32>
    tpu.vector_store %arg12[%c144_172, %c0_173], %233 {strides = array<i32>} : memref<400x256xf32, #tpu.memory_space<vmem>>, vector<16x256xf32>,
    %c0_174 = arith.constant 0 : index
    %c32_175 = arith.constant 32 : index
    %235 = vector.load %arg11[%c0_174, %c32_175] : memref<16x324xf32, #tpu.memory_space<vmem>>, vector<16x256xf32>
    %cst_176 = arith.constant 0.000000e+00 : f32
    %236 = vector.broadcast %cst_176 : f32 to vector<16x256xf32>
    %237 = vector.shape_cast %20 : vector<1x256xi1> to vector<1x256xi1>
    %238 = vector.broadcast %237 : vector<1x256xi1> to vector<16x256xi1>
    %239 = arith.select %238, %235, %236 : vector<16x256xi1>, vector<16x256xf32>
    %c160_177 = arith.constant 160 : index
    %c0_178 = arith.constant 0 : index
    %240 = vector.load %arg12[%c160_177, %c0_178] : memref<400x256xf32, #tpu.memory_space<vmem>>, vector<16x256xf32>
    tpu.vector_store %arg12[%c160_177, %c0_178], %239 {strides = array<i32>} : memref<400x256xf32, #tpu.memory_space<vmem>>, vector<16x256xf32>,
    %c0_179 = arith.constant 0 : index
    %c33_180 = arith.constant 33 : index
    %241 = vector.load %arg11[%c0_179, %c33_180] : memref<16x324xf32, #tpu.memory_space<vmem>>, vector<16x256xf32>
    %cst_181 = arith.constant 0.000000e+00 : f32
    %242 = vector.broadcast %cst_181 : f32 to vector<16x256xf32>
    %243 = vector.shape_cast %22 : vector<1x256xi1> to vector<1x256xi1>
    %244 = vector.broadcast %243 : vector<1x256xi1> to vector<16x256xi1>
    %245 = arith.select %244, %241, %242 : vector<16x256xi1>, vector<16x256xf32>
    %c176_182 = arith.constant 176 : index
    %c0_183 = arith.constant 0 : index
    %246 = vector.load %arg12[%c176_182, %c0_183] : memref<400x256xf32, #tpu.memory_space<vmem>>, vector<16x256xf32>
    tpu.vector_store %arg12[%c176_182, %c0_183], %245 {strides = array<i32>} : memref<400x256xf32, #tpu.memory_space<vmem>>, vector<16x256xf32>,
    %c0_184 = arith.constant 0 : index
    %c34_185 = arith.constant 34 : index
    %247 = vector.load %arg11[%c0_184, %c34_185] : memref<16x324xf32, #tpu.memory_space<vmem>>, vector<16x256xf32>
    %c192_186 = arith.constant 192 : index
    %c0_187 = arith.constant 0 : index
    %248 = vector.load %arg12[%c192_186, %c0_187] : memref<400x256xf32, #tpu.memory_space<vmem>>, vector<16x256xf32>
    tpu.vector_store %arg12[%c192_186, %c0_187], %247 {strides = array<i32>} : memref<400x256xf32, #tpu.memory_space<vmem>>, vector<16x256xf32>,
    %c0_188 = arith.constant 0 : index
    %c35_189 = arith.constant 35 : index
    %249 = vector.load %arg11[%c0_188, %c35_189] : memref<16x324xf32, #tpu.memory_space<vmem>>, vector<16x256xf32>
    %cst_190 = arith.constant 0.000000e+00 : f32
    %250 = vector.broadcast %cst_190 : f32 to vector<16x256xf32>
    %251 = vector.shape_cast %24 : vector<1x256xi1> to vector<1x256xi1>
    %252 = vector.broadcast %251 : vector<1x256xi1> to vector<16x256xi1>
    %253 = arith.select %252, %249, %250 : vector<16x256xi1>, vector<16x256xf32>
    %c208_191 = arith.constant 208 : index
    %c0_192 = arith.constant 0 : index
    %254 = vector.load %arg12[%c208_191, %c0_192] : memref<400x256xf32, #tpu.memory_space<vmem>>, vector<16x256xf32>
    tpu.vector_store %arg12[%c208_191, %c0_192], %253 {strides = array<i32>} : memref<400x256xf32, #tpu.memory_space<vmem>>, vector<16x256xf32>,
    %c0_193 = arith.constant 0 : index
    %c36 = arith.constant 36 : index
    %255 = vector.load %arg11[%c0_193, %c36] : memref<16x324xf32, #tpu.memory_space<vmem>>, vector<16x256xf32>
    %cst_194 = arith.constant 0.000000e+00 : f32
    %256 = vector.broadcast %cst_194 : f32 to vector<16x256xf32>
    %257 = vector.shape_cast %26 : vector<1x256xi1> to vector<1x256xi1>
    %258 = vector.broadcast %257 : vector<1x256xi1> to vector<16x256xi1>
    %259 = arith.select %258, %255, %256 : vector<16x256xi1>, vector<16x256xf32>
    %c224_195 = arith.constant 224 : index
    %c0_196 = arith.constant 0 : index
    %260 = vector.load %arg12[%c224_195, %c0_196] : memref<400x256xf32, #tpu.memory_space<vmem>>, vector<16x256xf32>
    tpu.vector_store %arg12[%c224_195, %c0_196], %259 {strides = array<i32>} : memref<400x256xf32, #tpu.memory_space<vmem>>, vector<16x256xf32>,
    %c0_197 = arith.constant 0 : index
    %c48_198 = arith.constant 48 : index
    %261 = vector.load %arg11[%c0_197, %c48_198] : memref<16x324xf32, #tpu.memory_space<vmem>>, vector<16x256xf32>
    %cst_199 = arith.constant 0.000000e+00 : f32
    %262 = vector.broadcast %cst_199 : f32 to vector<16x256xf32>
    %263 = vector.shape_cast %20 : vector<1x256xi1> to vector<1x256xi1>
    %264 = vector.broadcast %263 : vector<1x256xi1> to vector<16x256xi1>
    %265 = arith.select %264, %261, %262 : vector<16x256xi1>, vector<16x256xf32>
    %c240_200 = arith.constant 240 : index
    %c0_201 = arith.constant 0 : index
    %266 = vector.load %arg12[%c240_200, %c0_201] : memref<400x256xf32, #tpu.memory_space<vmem>>, vector<16x256xf32>
    tpu.vector_store %arg12[%c240_200, %c0_201], %265 {strides = array<i32>} : memref<400x256xf32, #tpu.memory_space<vmem>>, vector<16x256xf32>,
    %c0_202 = arith.constant 0 : index
    %c49_203 = arith.constant 49 : index
    %267 = vector.load %arg11[%c0_202, %c49_203] : memref<16x324xf32, #tpu.memory_space<vmem>>, vector<16x256xf32>
    %cst_204 = arith.constant 0.000000e+00 : f32
    %268 = vector.broadcast %cst_204 : f32 to vector<16x256xf32>
    %269 = vector.shape_cast %22 : vector<1x256xi1> to vector<1x256xi1>
    %270 = vector.broadcast %269 : vector<1x256xi1> to vector<16x256xi1>
    %271 = arith.select %270, %267, %268 : vector<16x256xi1>, vector<16x256xf32>
    %c256_205 = arith.constant 256 : index
    %c0_206 = arith.constant 0 : index
    %272 = vector.load %arg12[%c256_205, %c0_206] : memref<400x256xf32, #tpu.memory_space<vmem>>, vector<16x256xf32>
    tpu.vector_store %arg12[%c256_205, %c0_206], %271 {strides = array<i32>} : memref<400x256xf32, #tpu.memory_space<vmem>>, vector<16x256xf32>,
    %c0_207 = arith.constant 0 : index
    %c50_208 = arith.constant 50 : index
    %273 = vector.load %arg11[%c0_207, %c50_208] : memref<16x324xf32, #tpu.memory_space<vmem>>, vector<16x256xf32>
    %c272_209 = arith.constant 272 : index
    %c0_210 = arith.constant 0 : index
    %274 = vector.load %arg12[%c272_209, %c0_210] : memref<400x256xf32, #tpu.memory_space<vmem>>, vector<16x256xf32>
    tpu.vector_store %arg12[%c272_209, %c0_210], %273 {strides = array<i32>} : memref<400x256xf32, #tpu.memory_space<vmem>>, vector<16x256xf32>,
    %c0_211 = arith.constant 0 : index
    %c51_212 = arith.constant 51 : index
    %275 = vector.load %arg11[%c0_211, %c51_212] : memref<16x324xf32, #tpu.memory_space<vmem>>, vector<16x256xf32>
    %cst_213 = arith.constant 0.000000e+00 : f32
    %276 = vector.broadcast %cst_213 : f32 to vector<16x256xf32>
    %277 = vector.shape_cast %24 : vector<1x256xi1> to vector<1x256xi1>
    %278 = vector.broadcast %277 : vector<1x256xi1> to vector<16x256xi1>
    %279 = arith.select %278, %275, %276 : vector<16x256xi1>, vector<16x256xf32>
    %c288 = arith.constant 288 : index
    %c0_214 = arith.constant 0 : index
    %280 = vector.load %arg12[%c288, %c0_214] : memref<400x256xf32, #tpu.memory_space<vmem>>, vector<16x256xf32>
    tpu.vector_store %arg12[%c288, %c0_214], %279 {strides = array<i32>} : memref<400x256xf32, #tpu.memory_space<vmem>>, vector<16x256xf32>,
    %c0_215 = arith.constant 0 : index
    %c52 = arith.constant 52 : index
    %281 = vector.load %arg11[%c0_215, %c52] : memref<16x324xf32, #tpu.memory_space<vmem>>, vector<16x256xf32>
    %cst_216 = arith.constant 0.000000e+00 : f32
    %282 = vector.broadcast %cst_216 : f32 to vector<16x256xf32>
    %283 = vector.shape_cast %26 : vector<1x256xi1> to vector<1x256xi1>
    %284 = vector.broadcast %283 : vector<1x256xi1> to vector<16x256xi1>
    %285 = arith.select %284, %281, %282 : vector<16x256xi1>, vector<16x256xf32>
    %c304 = arith.constant 304 : index
    %c0_217 = arith.constant 0 : index
    %286 = vector.load %arg12[%c304, %c0_217] : memref<400x256xf32, #tpu.memory_space<vmem>>, vector<16x256xf32>
    tpu.vector_store %arg12[%c304, %c0_217], %285 {strides = array<i32>} : memref<400x256xf32, #tpu.memory_space<vmem>>, vector<16x256xf32>,
    %c0_218 = arith.constant 0 : index
    %c64_219 = arith.constant 64 : index
    %287 = vector.load %arg11[%c0_218, %c64_219] : memref<16x324xf32, #tpu.memory_space<vmem>>, vector<16x256xf32>
    %cst_220 = arith.constant 0.000000e+00 : f32
    %288 = vector.broadcast %cst_220 : f32 to vector<16x256xf32>
    %289 = vector.shape_cast %20 : vector<1x256xi1> to vector<1x256xi1>
    %290 = vector.broadcast %289 : vector<1x256xi1> to vector<16x256xi1>
    %291 = arith.select %290, %287, %288 : vector<16x256xi1>, vector<16x256xf32>
    %c320 = arith.constant 320 : index
    %c0_221 = arith.constant 0 : index
    %292 = vector.load %arg12[%c320, %c0_221] : memref<400x256xf32, #tpu.memory_space<vmem>>, vector<16x256xf32>
    tpu.vector_store %arg12[%c320, %c0_221], %291 {strides = array<i32>} : memref<400x256xf32, #tpu.memory_space<vmem>>, vector<16x256xf32>,
    %c0_222 = arith.constant 0 : index
    %c65 = arith.constant 65 : index
    %293 = vector.load %arg11[%c0_222, %c65] : memref<16x324xf32, #tpu.memory_space<vmem>>, vector<16x256xf32>
    %cst_223 = arith.constant 0.000000e+00 : f32
    %294 = vector.broadcast %cst_223 : f32 to vector<16x256xf32>
    %295 = vector.shape_cast %22 : vector<1x256xi1> to vector<1x256xi1>
    %296 = vector.broadcast %295 : vector<1x256xi1> to vector<16x256xi1>
    %297 = arith.select %296, %293, %294 : vector<16x256xi1>, vector<16x256xf32>
    %c336 = arith.constant 336 : index
    %c0_224 = arith.constant 0 : index
    %298 = vector.load %arg12[%c336, %c0_224] : memref<400x256xf32, #tpu.memory_space<vmem>>, vector<16x256xf32>
    tpu.vector_store %arg12[%c336, %c0_224], %297 {strides = array<i32>} : memref<400x256xf32, #tpu.memory_space<vmem>>, vector<16x256xf32>,
    %c0_225 = arith.constant 0 : index
    %c66 = arith.constant 66 : index
    %299 = vector.load %arg11[%c0_225, %c66] : memref<16x324xf32, #tpu.memory_space<vmem>>, vector<16x256xf32>
    %c352 = arith.constant 352 : index
    %c0_226 = arith.constant 0 : index
    %300 = vector.load %arg12[%c352, %c0_226] : memref<400x256xf32, #tpu.memory_space<vmem>>, vector<16x256xf32>
    tpu.vector_store %arg12[%c352, %c0_226], %299 {strides = array<i32>} : memref<400x256xf32, #tpu.memory_space<vmem>>, vector<16x256xf32>,
    %c0_227 = arith.constant 0 : index
    %c67 = arith.constant 67 : index
    %301 = vector.load %arg11[%c0_227, %c67] : memref<16x324xf32, #tpu.memory_space<vmem>>, vector<16x256xf32>
    %cst_228 = arith.constant 0.000000e+00 : f32
    %302 = vector.broadcast %cst_228 : f32 to vector<16x256xf32>
    %303 = vector.shape_cast %24 : vector<1x256xi1> to vector<1x256xi1>
    %304 = vector.broadcast %303 : vector<1x256xi1> to vector<16x256xi1>
    %305 = arith.select %304, %301, %302 : vector<16x256xi1>, vector<16x256xf32>
    %c368 = arith.constant 368 : index
    %c0_229 = arith.constant 0 : index
    %306 = vector.load %arg12[%c368, %c0_229] : memref<400x256xf32, #tpu.memory_space<vmem>>, vector<16x256xf32>
    tpu.vector_store %arg12[%c368, %c0_229], %305 {strides = array<i32>} : memref<400x256xf32, #tpu.memory_space<vmem>>, vector<16x256xf32>,
    %c0_230 = arith.constant 0 : index
    %c68 = arith.constant 68 : index
    %307 = vector.load %arg11[%c0_230, %c68] : memref<16x324xf32, #tpu.memory_space<vmem>>, vector<16x256xf32>
    %cst_231 = arith.constant 0.000000e+00 : f32
    %308 = vector.broadcast %cst_231 : f32 to vector<16x256xf32>
    %309 = vector.shape_cast %26 : vector<1x256xi1> to vector<1x256xi1>
    %310 = vector.broadcast %309 : vector<1x256xi1> to vector<16x256xi1>
    %311 = arith.select %310, %307, %308 : vector<16x256xi1>, vector<16x256xf32>
    %c384 = arith.constant 384 : index
    %c0_232 = arith.constant 0 : index
    %312 = vector.load %arg12[%c384, %c0_232] : memref<400x256xf32, #tpu.memory_space<vmem>>, vector<16x256xf32>
    tpu.vector_store %arg12[%c384, %c0_232], %311 {strides = array<i32>} : memref<400x256xf32, #tpu.memory_space<vmem>>, vector<16x256xf32>,
    %c0_233 = arith.constant 0 : index
    %c0_234 = arith.constant 0 : index
    %313 = vector.load %arg5[%c0_233, %c0_234] : memref<16x400xf32, #tpu.memory_space<vmem>>, vector<16x400xf32>
    %c0_235 = arith.constant 0 : index
    %c0_236 = arith.constant 0 : index
    %314 = vector.load %arg12[%c0_235, %c0_236] : memref<400x256xf32, #tpu.memory_space<vmem>>, vector<400x256xf32>
    %cst_237 = arith.constant dense<0.000000e+00> : vector<16x256xf32>
    %315 = tpu.matmul %313, %314, %cst_237 {dimension_numbers = #tpu.dot_dimension_numbers<[1], [0], [0], [1], [0, 0, 1, 1], [], []>} : vector<16x400xf32>, vector<400x256xf32>, vector<16x256xf32> -> vector<16x256xf32>
    %316 = math.tanh %315 : vector<16x256xf32>
    %c0_238 = arith.constant 0 : index
    %c34_239 = arith.constant 34 : index
    %317 = vector.load %arg11[%c0_238, %c34_239] : memref<16x324xf32, #tpu.memory_space<vmem>>, vector<16x256xf32>
    tpu.vector_store %arg11[%c0_238, %c34_239], %316 {strides = array<i32>} : memref<16x324xf32, #tpu.memory_space<vmem>>, vector<16x256xf32>,
    %c0_240 = arith.constant 0 : index
    %c17_241 = arith.constant 17 : index
    %318 = vector.load %arg11[%c0_240, %c17_241] : memref<16x324xf32, #tpu.memory_space<vmem>>, vector<16x256xf32>
    %cst_242 = arith.constant 0.000000e+00 : f32
    %319 = vector.broadcast %cst_242 : f32 to vector<16x256xf32>
    %320 = vector.shape_cast %22 : vector<1x256xi1> to vector<1x256xi1>
    %321 = vector.broadcast %320 : vector<1x256xi1> to vector<16x256xi1>
    %322 = arith.select %321, %318, %319 : vector<16x256xi1>, vector<16x256xf32>
    %c0_243 = arith.constant 0 : index
    %c0_244 = arith.constant 0 : index
    %323 = vector.load %arg12[%c0_243, %c0_244] : memref<400x256xf32, #tpu.memory_space<vmem>>, vector<16x256xf32>
    tpu.vector_store %arg12[%c0_243, %c0_244], %322 {strides = array<i32>} : memref<400x256xf32, #tpu.memory_space<vmem>>, vector<16x256xf32>,
    %c0_245 = arith.constant 0 : index
    %c18_246 = arith.constant 18 : index
    %324 = vector.load %arg11[%c0_245, %c18_246] : memref<16x324xf32, #tpu.memory_space<vmem>>, vector<16x256xf32>
    %c16_247 = arith.constant 16 : index
    %c0_248 = arith.constant 0 : index
    %325 = vector.load %arg12[%c16_247, %c0_248] : memref<400x256xf32, #tpu.memory_space<vmem>>, vector<16x256xf32>
    tpu.vector_store %arg12[%c16_247, %c0_248], %324 {strides = array<i32>} : memref<400x256xf32, #tpu.memory_space<vmem>>, vector<16x256xf32>,
    %c0_249 = arith.constant 0 : index
    %c19_250 = arith.constant 19 : index
    %326 = vector.load %arg11[%c0_249, %c19_250] : memref<16x324xf32, #tpu.memory_space<vmem>>, vector<16x256xf32>
    %cst_251 = arith.constant 0.000000e+00 : f32
    %327 = vector.broadcast %cst_251 : f32 to vector<16x256xf32>
    %328 = vector.shape_cast %24 : vector<1x256xi1> to vector<1x256xi1>
    %329 = vector.broadcast %328 : vector<1x256xi1> to vector<16x256xi1>
    %330 = arith.select %329, %326, %327 : vector<16x256xi1>, vector<16x256xf32>
    %c32_252 = arith.constant 32 : index
    %c0_253 = arith.constant 0 : index
    %331 = vector.load %arg12[%c32_252, %c0_253] : memref<400x256xf32, #tpu.memory_space<vmem>>, vector<16x256xf32>
    tpu.vector_store %arg12[%c32_252, %c0_253], %330 {strides = array<i32>} : memref<400x256xf32, #tpu.memory_space<vmem>>, vector<16x256xf32>,
    %c0_254 = arith.constant 0 : index
    %c33_255 = arith.constant 33 : index
    %332 = vector.load %arg11[%c0_254, %c33_255] : memref<16x324xf32, #tpu.memory_space<vmem>>, vector<16x256xf32>
    %cst_256 = arith.constant 0.000000e+00 : f32
    %333 = vector.broadcast %cst_256 : f32 to vector<16x256xf32>
    %334 = vector.shape_cast %22 : vector<1x256xi1> to vector<1x256xi1>
    %335 = vector.broadcast %334 : vector<1x256xi1> to vector<16x256xi1>
    %336 = arith.select %335, %332, %333 : vector<16x256xi1>, vector<16x256xf32>
    %c48_257 = arith.constant 48 : index
    %c0_258 = arith.constant 0 : index
    %337 = vector.load %arg12[%c48_257, %c0_258] : memref<400x256xf32, #tpu.memory_space<vmem>>, vector<16x256xf32>
    tpu.vector_store %arg12[%c48_257, %c0_258], %336 {strides = array<i32>} : memref<400x256xf32, #tpu.memory_space<vmem>>, vector<16x256xf32>,
    %c0_259 = arith.constant 0 : index
    %c34_260 = arith.constant 34 : index
    %338 = vector.load %arg11[%c0_259, %c34_260] : memref<16x324xf32, #tpu.memory_space<vmem>>, vector<16x256xf32>
    %c64_261 = arith.constant 64 : index
    %c0_262 = arith.constant 0 : index
    %339 = vector.load %arg12[%c64_261, %c0_262] : memref<400x256xf32, #tpu.memory_space<vmem>>, vector<16x256xf32>
    tpu.vector_store %arg12[%c64_261, %c0_262], %338 {strides = array<i32>} : memref<400x256xf32, #tpu.memory_space<vmem>>, vector<16x256xf32>,
    %c0_263 = arith.constant 0 : index
    %c35_264 = arith.constant 35 : index
    %340 = vector.load %arg11[%c0_263, %c35_264] : memref<16x324xf32, #tpu.memory_space<vmem>>, vector<16x256xf32>
    %cst_265 = arith.constant 0.000000e+00 : f32
    %341 = vector.broadcast %cst_265 : f32 to vector<16x256xf32>
    %342 = vector.shape_cast %24 : vector<1x256xi1> to vector<1x256xi1>
    %343 = vector.broadcast %342 : vector<1x256xi1> to vector<16x256xi1>
    %344 = arith.select %343, %340, %341 : vector<16x256xi1>, vector<16x256xf32>
    %c80_266 = arith.constant 80 : index
    %c0_267 = arith.constant 0 : index
    %345 = vector.load %arg12[%c80_266, %c0_267] : memref<400x256xf32, #tpu.memory_space<vmem>>, vector<16x256xf32>
    tpu.vector_store %arg12[%c80_266, %c0_267], %344 {strides = array<i32>} : memref<400x256xf32, #tpu.memory_space<vmem>>, vector<16x256xf32>,
    %c0_268 = arith.constant 0 : index
    %c49_269 = arith.constant 49 : index
    %346 = vector.load %arg11[%c0_268, %c49_269] : memref<16x324xf32, #tpu.memory_space<vmem>>, vector<16x256xf32>
    %cst_270 = arith.constant 0.000000e+00 : f32
    %347 = vector.broadcast %cst_270 : f32 to vector<16x256xf32>
    %348 = vector.shape_cast %22 : vector<1x256xi1> to vector<1x256xi1>
    %349 = vector.broadcast %348 : vector<1x256xi1> to vector<16x256xi1>
    %350 = arith.select %349, %346, %347 : vector<16x256xi1>, vector<16x256xf32>
    %c96_271 = arith.constant 96 : index
    %c0_272 = arith.constant 0 : index
    %351 = vector.load %arg12[%c96_271, %c0_272] : memref<400x256xf32, #tpu.memory_space<vmem>>, vector<16x256xf32>
    tpu.vector_store %arg12[%c96_271, %c0_272], %350 {strides = array<i32>} : memref<400x256xf32, #tpu.memory_space<vmem>>, vector<16x256xf32>,
    %c0_273 = arith.constant 0 : index
    %c50_274 = arith.constant 50 : index
    %352 = vector.load %arg11[%c0_273, %c50_274] : memref<16x324xf32, #tpu.memory_space<vmem>>, vector<16x256xf32>
    %c112_275 = arith.constant 112 : index
    %c0_276 = arith.constant 0 : index
    %353 = vector.load %arg12[%c112_275, %c0_276] : memref<400x256xf32, #tpu.memory_space<vmem>>, vector<16x256xf32>
    tpu.vector_store %arg12[%c112_275, %c0_276], %352 {strides = array<i32>} : memref<400x256xf32, #tpu.memory_space<vmem>>, vector<16x256xf32>,
    %c0_277 = arith.constant 0 : index
    %c51_278 = arith.constant 51 : index
    %354 = vector.load %arg11[%c0_277, %c51_278] : memref<16x324xf32, #tpu.memory_space<vmem>>, vector<16x256xf32>
    %cst_279 = arith.constant 0.000000e+00 : f32
    %355 = vector.broadcast %cst_279 : f32 to vector<16x256xf32>
    %356 = vector.shape_cast %24 : vector<1x256xi1> to vector<1x256xi1>
    %357 = vector.broadcast %356 : vector<1x256xi1> to vector<16x256xi1>
    %358 = arith.select %357, %354, %355 : vector<16x256xi1>, vector<16x256xf32>
    %c128_280 = arith.constant 128 : index
    %c0_281 = arith.constant 0 : index
    %359 = vector.load %arg12[%c128_280, %c0_281] : memref<400x256xf32, #tpu.memory_space<vmem>>, vector<16x256xf32>
    tpu.vector_store %arg12[%c128_280, %c0_281], %358 {strides = array<i32>} : memref<400x256xf32, #tpu.memory_space<vmem>>, vector<16x256xf32>,
    %c0_282 = arith.constant 0 : index
    %c34_283 = arith.constant 34 : index
    %360 = vector.load %arg11[%c0_282, %c34_283] : memref<16x324xf32, #tpu.memory_space<vmem>>, vector<16x256xf32>
    tpu.vector_store %arg11[%c0_282, %c34_283], %32 {strides = array<i32>} : memref<16x324xf32, #tpu.memory_space<vmem>>, vector<16x256xf32>,
    %c0_284 = arith.constant 0 : index
    %c17_285 = arith.constant 17 : index
    %361 = vector.load %arg11[%c0_284, %c17_285] : memref<16x324xf32, #tpu.memory_space<vmem>>, vector<16x256xf32>
    %cst_286 = arith.constant 0.000000e+00 : f32
    %362 = vector.broadcast %cst_286 : f32 to vector<16x256xf32>
    %363 = vector.shape_cast %22 : vector<1x256xi1> to vector<1x256xi1>
    %364 = vector.broadcast %363 : vector<1x256xi1> to vector<16x256xi1>
    %365 = arith.select %364, %361, %362 : vector<16x256xi1>, vector<16x256xf32>
    %c144_287 = arith.constant 144 : index
    %c0_288 = arith.constant 0 : index
    %366 = vector.load %arg12[%c144_287, %c0_288] : memref<400x256xf32, #tpu.memory_space<vmem>>, vector<16x256xf32>
    tpu.vector_store %arg12[%c144_287, %c0_288], %365 {strides = array<i32>} : memref<400x256xf32, #tpu.memory_space<vmem>>, vector<16x256xf32>,
    %c0_289 = arith.constant 0 : index
    %c18_290 = arith.constant 18 : index
    %367 = vector.load %arg11[%c0_289, %c18_290] : memref<16x324xf32, #tpu.memory_space<vmem>>, vector<16x256xf32>
    %c160_291 = arith.constant 160 : index
    %c0_292 = arith.constant 0 : index
    %368 = vector.load %arg12[%c160_291, %c0_292] : memref<400x256xf32, #tpu.memory_space<vmem>>, vector<16x256xf32>
    tpu.vector_store %arg12[%c160_291, %c0_292], %367 {strides = array<i32>} : memref<400x256xf32, #tpu.memory_space<vmem>>, vector<16x256xf32>,
    %c0_293 = arith.constant 0 : index
    %c19_294 = arith.constant 19 : index
    %369 = vector.load %arg11[%c0_293, %c19_294] : memref<16x324xf32, #tpu.memory_space<vmem>>, vector<16x256xf32>
    %cst_295 = arith.constant 0.000000e+00 : f32
    %370 = vector.broadcast %cst_295 : f32 to vector<16x256xf32>
    %371 = vector.shape_cast %24 : vector<1x256xi1> to vector<1x256xi1>
    %372 = vector.broadcast %371 : vector<1x256xi1> to vector<16x256xi1>
    %373 = arith.select %372, %369, %370 : vector<16x256xi1>, vector<16x256xf32>
    %c176_296 = arith.constant 176 : index
    %c0_297 = arith.constant 0 : index
    %374 = vector.load %arg12[%c176_296, %c0_297] : memref<400x256xf32, #tpu.memory_space<vmem>>, vector<16x256xf32>
    tpu.vector_store %arg12[%c176_296, %c0_297], %373 {strides = array<i32>} : memref<400x256xf32, #tpu.memory_space<vmem>>, vector<16x256xf32>,
    %c0_298 = arith.constant 0 : index
    %c33_299 = arith.constant 33 : index
    %375 = vector.load %arg11[%c0_298, %c33_299] : memref<16x324xf32, #tpu.memory_space<vmem>>, vector<16x256xf32>
    %cst_300 = arith.constant 0.000000e+00 : f32
    %376 = vector.broadcast %cst_300 : f32 to vector<16x256xf32>
    %377 = vector.shape_cast %22 : vector<1x256xi1> to vector<1x256xi1>
    %378 = vector.broadcast %377 : vector<1x256xi1> to vector<16x256xi1>
    %379 = arith.select %378, %375, %376 : vector<16x256xi1>, vector<16x256xf32>
    %c192_301 = arith.constant 192 : index
    %c0_302 = arith.constant 0 : index
    %380 = vector.load %arg12[%c192_301, %c0_302] : memref<400x256xf32, #tpu.memory_space<vmem>>, vector<16x256xf32>
    tpu.vector_store %arg12[%c192_301, %c0_302], %379 {strides = array<i32>} : memref<400x256xf32, #tpu.memory_space<vmem>>, vector<16x256xf32>,
    %c0_303 = arith.constant 0 : index
    %c34_304 = arith.constant 34 : index
    %381 = vector.load %arg11[%c0_303, %c34_304] : memref<16x324xf32, #tpu.memory_space<vmem>>, vector<16x256xf32>
    %c208_305 = arith.constant 208 : index
    %c0_306 = arith.constant 0 : index
    %382 = vector.load %arg12[%c208_305, %c0_306] : memref<400x256xf32, #tpu.memory_space<vmem>>, vector<16x256xf32>
    tpu.vector_store %arg12[%c208_305, %c0_306], %381 {strides = array<i32>} : memref<400x256xf32, #tpu.memory_space<vmem>>, vector<16x256xf32>,
    %c0_307 = arith.constant 0 : index
    %c35_308 = arith.constant 35 : index
    %383 = vector.load %arg11[%c0_307, %c35_308] : memref<16x324xf32, #tpu.memory_space<vmem>>, vector<16x256xf32>
    %cst_309 = arith.constant 0.000000e+00 : f32
    %384 = vector.broadcast %cst_309 : f32 to vector<16x256xf32>
    %385 = vector.shape_cast %24 : vector<1x256xi1> to vector<1x256xi1>
    %386 = vector.broadcast %385 : vector<1x256xi1> to vector<16x256xi1>
    %387 = arith.select %386, %383, %384 : vector<16x256xi1>, vector<16x256xf32>
    %c224_310 = arith.constant 224 : index
    %c0_311 = arith.constant 0 : index
    %388 = vector.load %arg12[%c224_310, %c0_311] : memref<400x256xf32, #tpu.memory_space<vmem>>, vector<16x256xf32>
    tpu.vector_store %arg12[%c224_310, %c0_311], %387 {strides = array<i32>} : memref<400x256xf32, #tpu.memory_space<vmem>>, vector<16x256xf32>,
    %c0_312 = arith.constant 0 : index
    %c49_313 = arith.constant 49 : index
    %389 = vector.load %arg11[%c0_312, %c49_313] : memref<16x324xf32, #tpu.memory_space<vmem>>, vector<16x256xf32>
    %cst_314 = arith.constant 0.000000e+00 : f32
    %390 = vector.broadcast %cst_314 : f32 to vector<16x256xf32>
    %391 = vector.shape_cast %22 : vector<1x256xi1> to vector<1x256xi1>
    %392 = vector.broadcast %391 : vector<1x256xi1> to vector<16x256xi1>
    %393 = arith.select %392, %389, %390 : vector<16x256xi1>, vector<16x256xf32>
    %c240_315 = arith.constant 240 : index
    %c0_316 = arith.constant 0 : index
    %394 = vector.load %arg12[%c240_315, %c0_316] : memref<400x256xf32, #tpu.memory_space<vmem>>, vector<16x256xf32>
    tpu.vector_store %arg12[%c240_315, %c0_316], %393 {strides = array<i32>} : memref<400x256xf32, #tpu.memory_space<vmem>>, vector<16x256xf32>,
    %c0_317 = arith.constant 0 : index
    %c50_318 = arith.constant 50 : index
    %395 = vector.load %arg11[%c0_317, %c50_318] : memref<16x324xf32, #tpu.memory_space<vmem>>, vector<16x256xf32>
    %c256_319 = arith.constant 256 : index
    %c0_320 = arith.constant 0 : index
    %396 = vector.load %arg12[%c256_319, %c0_320] : memref<400x256xf32, #tpu.memory_space<vmem>>, vector<16x256xf32>
    tpu.vector_store %arg12[%c256_319, %c0_320], %395 {strides = array<i32>} : memref<400x256xf32, #tpu.memory_space<vmem>>, vector<16x256xf32>,
    %c0_321 = arith.constant 0 : index
    %c51_322 = arith.constant 51 : index
    %397 = vector.load %arg11[%c0_321, %c51_322] : memref<16x324xf32, #tpu.memory_space<vmem>>, vector<16x256xf32>
    %cst_323 = arith.constant 0.000000e+00 : f32
    %398 = vector.broadcast %cst_323 : f32 to vector<16x256xf32>
    %399 = vector.shape_cast %24 : vector<1x256xi1> to vector<1x256xi1>
    %400 = vector.broadcast %399 : vector<1x256xi1> to vector<16x256xi1>
    %401 = arith.select %400, %397, %398 : vector<16x256xi1>, vector<16x256xf32>
    %c272_324 = arith.constant 272 : index
    %c0_325 = arith.constant 0 : index
    %402 = vector.load %arg12[%c272_324, %c0_325] : memref<400x256xf32, #tpu.memory_space<vmem>>, vector<16x256xf32>
    tpu.vector_store %arg12[%c272_324, %c0_325], %401 {strides = array<i32>} : memref<400x256xf32, #tpu.memory_space<vmem>>, vector<16x256xf32>,
    %c0_326 = arith.constant 0 : index
    %c0_327 = arith.constant 0 : index
    %403 = vector.load %arg6[%c0_326, %c0_327] : memref<32x288xf32, #tpu.memory_space<vmem>>, vector<32x288xf32>
    %c0_328 = arith.constant 0 : index
    %c0_329 = arith.constant 0 : index
    %404 = vector.load %arg12[%c0_328, %c0_329] : memref<400x256xf32, #tpu.memory_space<vmem>>, vector<288x256xf32>
    %cst_330 = arith.constant dense<0.000000e+00> : vector<32x256xf32>
    %405 = tpu.matmul %403, %404, %cst_330 {dimension_numbers = #tpu.dot_dimension_numbers<[1], [0], [0], [1], [0, 0, 1, 1], [], []>} : vector<32x288xf32>, vector<288x256xf32>, vector<32x256xf32> -> vector<32x256xf32>
    %406 = arith.negf %405 : vector<32x256xf32>
    %407 = math.exp %406 : vector<32x256xf32>
    %cst_331 = arith.constant 1.000000e+00 : f32
    %408 = vector.broadcast %cst_331 : f32 to vector<32x256xf32>
    %409 = arith.addf %408, %407 : vector<32x256xf32>
    %410 = arith.divf %408, %409 : vector<32x256xf32>
    %411 = vector.extract_strided_slice %410 {offsets = [0, 0], sizes = [16, 256], strides = [1, 1]} : vector<32x256xf32> to vector<16x256xf32>
    %412 = vector.extract_strided_slice %410 {offsets = [16, 0], sizes = [16, 256], strides = [1, 1]} : vector<32x256xf32> to vector<16x256xf32>
    %413 = arith.mulf %412, %32 : vector<16x256xf32>
    %c0_332 = arith.constant 0 : index
    %c34_333 = arith.constant 34 : index
    %414 = vector.load %arg11[%c0_332, %c34_333] : memref<16x324xf32, #tpu.memory_space<vmem>>, vector<16x256xf32>
    tpu.vector_store %arg11[%c0_332, %c34_333], %413 {strides = array<i32>} : memref<16x324xf32, #tpu.memory_space<vmem>>, vector<16x256xf32>,
    %c0_334 = arith.constant 0 : index
    %c17_335 = arith.constant 17 : index
    %415 = vector.load %arg11[%c0_334, %c17_335] : memref<16x324xf32, #tpu.memory_space<vmem>>, vector<16x256xf32>
    %cst_336 = arith.constant 0.000000e+00 : f32
    %416 = vector.broadcast %cst_336 : f32 to vector<16x256xf32>
    %417 = vector.shape_cast %22 : vector<1x256xi1> to vector<1x256xi1>
    %418 = vector.broadcast %417 : vector<1x256xi1> to vector<16x256xi1>
    %419 = arith.select %418, %415, %416 : vector<16x256xi1>, vector<16x256xf32>
    %c144_337 = arith.constant 144 : index
    %c0_338 = arith.constant 0 : index
    %420 = vector.load %arg12[%c144_337, %c0_338] : memref<400x256xf32, #tpu.memory_space<vmem>>, vector<16x256xf32>
    tpu.vector_store %arg12[%c144_337, %c0_338], %419 {strides = array<i32>} : memref<400x256xf32, #tpu.memory_space<vmem>>, vector<16x256xf32>,
    %c0_339 = arith.constant 0 : index
    %c18_340 = arith.constant 18 : index
    %421 = vector.load %arg11[%c0_339, %c18_340] : memref<16x324xf32, #tpu.memory_space<vmem>>, vector<16x256xf32>
    %c160_341 = arith.constant 160 : index
    %c0_342 = arith.constant 0 : index
    %422 = vector.load %arg12[%c160_341, %c0_342] : memref<400x256xf32, #tpu.memory_space<vmem>>, vector<16x256xf32>
    tpu.vector_store %arg12[%c160_341, %c0_342], %421 {strides = array<i32>} : memref<400x256xf32, #tpu.memory_space<vmem>>, vector<16x256xf32>,
    %c0_343 = arith.constant 0 : index
    %c19_344 = arith.constant 19 : index
    %423 = vector.load %arg11[%c0_343, %c19_344] : memref<16x324xf32, #tpu.memory_space<vmem>>, vector<16x256xf32>
    %cst_345 = arith.constant 0.000000e+00 : f32
    %424 = vector.broadcast %cst_345 : f32 to vector<16x256xf32>
    %425 = vector.shape_cast %24 : vector<1x256xi1> to vector<1x256xi1>
    %426 = vector.broadcast %425 : vector<1x256xi1> to vector<16x256xi1>
    %427 = arith.select %426, %423, %424 : vector<16x256xi1>, vector<16x256xf32>
    %c176_346 = arith.constant 176 : index
    %c0_347 = arith.constant 0 : index
    %428 = vector.load %arg12[%c176_346, %c0_347] : memref<400x256xf32, #tpu.memory_space<vmem>>, vector<16x256xf32>
    tpu.vector_store %arg12[%c176_346, %c0_347], %427 {strides = array<i32>} : memref<400x256xf32, #tpu.memory_space<vmem>>, vector<16x256xf32>,
    %c0_348 = arith.constant 0 : index
    %c33_349 = arith.constant 33 : index
    %429 = vector.load %arg11[%c0_348, %c33_349] : memref<16x324xf32, #tpu.memory_space<vmem>>, vector<16x256xf32>
    %cst_350 = arith.constant 0.000000e+00 : f32
    %430 = vector.broadcast %cst_350 : f32 to vector<16x256xf32>
    %431 = vector.shape_cast %22 : vector<1x256xi1> to vector<1x256xi1>
    %432 = vector.broadcast %431 : vector<1x256xi1> to vector<16x256xi1>
    %433 = arith.select %432, %429, %430 : vector<16x256xi1>, vector<16x256xf32>
    %c192_351 = arith.constant 192 : index
    %c0_352 = arith.constant 0 : index
    %434 = vector.load %arg12[%c192_351, %c0_352] : memref<400x256xf32, #tpu.memory_space<vmem>>, vector<16x256xf32>
    tpu.vector_store %arg12[%c192_351, %c0_352], %433 {strides = array<i32>} : memref<400x256xf32, #tpu.memory_space<vmem>>, vector<16x256xf32>,
    %c0_353 = arith.constant 0 : index
    %c34_354 = arith.constant 34 : index
    %435 = vector.load %arg11[%c0_353, %c34_354] : memref<16x324xf32, #tpu.memory_space<vmem>>, vector<16x256xf32>
    %c208_355 = arith.constant 208 : index
    %c0_356 = arith.constant 0 : index
    %436 = vector.load %arg12[%c208_355, %c0_356] : memref<400x256xf32, #tpu.memory_space<vmem>>, vector<16x256xf32>
    tpu.vector_store %arg12[%c208_355, %c0_356], %435 {strides = array<i32>} : memref<400x256xf32, #tpu.memory_space<vmem>>, vector<16x256xf32>,
    %c0_357 = arith.constant 0 : index
    %c35_358 = arith.constant 35 : index
    %437 = vector.load %arg11[%c0_357, %c35_358] : memref<16x324xf32, #tpu.memory_space<vmem>>, vector<16x256xf32>
    %cst_359 = arith.constant 0.000000e+00 : f32
    %438 = vector.broadcast %cst_359 : f32 to vector<16x256xf32>
    %439 = vector.shape_cast %24 : vector<1x256xi1> to vector<1x256xi1>
    %440 = vector.broadcast %439 : vector<1x256xi1> to vector<16x256xi1>
    %441 = arith.select %440, %437, %438 : vector<16x256xi1>, vector<16x256xf32>
    %c224_360 = arith.constant 224 : index
    %c0_361 = arith.constant 0 : index
    %442 = vector.load %arg12[%c224_360, %c0_361] : memref<400x256xf32, #tpu.memory_space<vmem>>, vector<16x256xf32>
    tpu.vector_store %arg12[%c224_360, %c0_361], %441 {strides = array<i32>} : memref<400x256xf32, #tpu.memory_space<vmem>>, vector<16x256xf32>,
    %c0_362 = arith.constant 0 : index
    %c49_363 = arith.constant 49 : index
    %443 = vector.load %arg11[%c0_362, %c49_363] : memref<16x324xf32, #tpu.memory_space<vmem>>, vector<16x256xf32>
    %cst_364 = arith.constant 0.000000e+00 : f32
    %444 = vector.broadcast %cst_364 : f32 to vector<16x256xf32>
    %445 = vector.shape_cast %22 : vector<1x256xi1> to vector<1x256xi1>
    %446 = vector.broadcast %445 : vector<1x256xi1> to vector<16x256xi1>
    %447 = arith.select %446, %443, %444 : vector<16x256xi1>, vector<16x256xf32>
    %c240_365 = arith.constant 240 : index
    %c0_366 = arith.constant 0 : index
    %448 = vector.load %arg12[%c240_365, %c0_366] : memref<400x256xf32, #tpu.memory_space<vmem>>, vector<16x256xf32>
    tpu.vector_store %arg12[%c240_365, %c0_366], %447 {strides = array<i32>} : memref<400x256xf32, #tpu.memory_space<vmem>>, vector<16x256xf32>,
    %c0_367 = arith.constant 0 : index
    %c50_368 = arith.constant 50 : index
    %449 = vector.load %arg11[%c0_367, %c50_368] : memref<16x324xf32, #tpu.memory_space<vmem>>, vector<16x256xf32>
    %c256_369 = arith.constant 256 : index
    %c0_370 = arith.constant 0 : index
    %450 = vector.load %arg12[%c256_369, %c0_370] : memref<400x256xf32, #tpu.memory_space<vmem>>, vector<16x256xf32>
    tpu.vector_store %arg12[%c256_369, %c0_370], %449 {strides = array<i32>} : memref<400x256xf32, #tpu.memory_space<vmem>>, vector<16x256xf32>,
    %c0_371 = arith.constant 0 : index
    %c51_372 = arith.constant 51 : index
    %451 = vector.load %arg11[%c0_371, %c51_372] : memref<16x324xf32, #tpu.memory_space<vmem>>, vector<16x256xf32>
    %cst_373 = arith.constant 0.000000e+00 : f32
    %452 = vector.broadcast %cst_373 : f32 to vector<16x256xf32>
    %453 = vector.shape_cast %24 : vector<1x256xi1> to vector<1x256xi1>
    %454 = vector.broadcast %453 : vector<1x256xi1> to vector<16x256xi1>
    %455 = arith.select %454, %451, %452 : vector<16x256xi1>, vector<16x256xf32>
    %c272_374 = arith.constant 272 : index
    %c0_375 = arith.constant 0 : index
    %456 = vector.load %arg12[%c272_374, %c0_375] : memref<400x256xf32, #tpu.memory_space<vmem>>, vector<16x256xf32>
    tpu.vector_store %arg12[%c272_374, %c0_375], %455 {strides = array<i32>} : memref<400x256xf32, #tpu.memory_space<vmem>>, vector<16x256xf32>,
    %c0_376 = arith.constant 0 : index
    %c0_377 = arith.constant 0 : index
    %457 = vector.load %arg7[%c0_376, %c0_377] : memref<16x288xf32, #tpu.memory_space<vmem>>, vector<16x288xf32>
    %c0_378 = arith.constant 0 : index
    %c0_379 = arith.constant 0 : index
    %458 = vector.load %arg12[%c0_378, %c0_379] : memref<400x256xf32, #tpu.memory_space<vmem>>, vector<288x256xf32>
    %cst_380 = arith.constant dense<0.000000e+00> : vector<16x256xf32>
    %459 = tpu.matmul %457, %458, %cst_380 {dimension_numbers = #tpu.dot_dimension_numbers<[1], [0], [0], [1], [0, 0, 1, 1], [], []>} : vector<16x288xf32>, vector<288x256xf32>, vector<16x256xf32> -> vector<16x256xf32>
    %460 = math.tanh %459 : vector<16x256xf32>
    %cst_381 = arith.constant 1.000000e+00 : f32
    %461 = vector.broadcast %cst_381 : f32 to vector<16x256xf32>
    %462 = arith.subf %461, %411 : vector<16x256xf32>
    %463 = arith.mulf %462, %32 : vector<16x256xf32>
    %464 = arith.mulf %411, %460 : vector<16x256xf32>
    %465 = arith.addf %463, %464 : vector<16x256xf32>
    %c0_382 = arith.constant 0 : index
    %c34_383 = arith.constant 34 : index
    %466 = vector.load %arg11[%c0_382, %c34_383] : memref<16x324xf32, #tpu.memory_space<vmem>>, vector<16x256xf32>
    tpu.vector_store %arg11[%c0_382, %c34_383], %465 {strides = array<i32>} : memref<16x324xf32, #tpu.memory_space<vmem>>, vector<16x256xf32>,
    %c0_384 = arith.constant 0 : index
    %c0_385 = arith.constant 0 : index
    %467 = vector.load %arg11[%c0_384, %c0_385] : memref<16x324xf32, #tpu.memory_space<vmem>>, vector<16x256xf32>
    %cst_386 = arith.constant 0.000000e+00 : f32
    %468 = vector.broadcast %cst_386 : f32 to vector<16x256xf32>
    %469 = vector.shape_cast %20 : vector<1x256xi1> to vector<1x256xi1>
    %470 = vector.broadcast %469 : vector<1x256xi1> to vector<16x256xi1>
    %471 = arith.select %470, %467, %468 : vector<16x256xi1>, vector<16x256xf32>
    %c0_387 = arith.constant 0 : index
    %c0_388 = arith.constant 0 : index
    %472 = vector.load %arg12[%c0_387, %c0_388] : memref<400x256xf32, #tpu.memory_space<vmem>>, vector<16x256xf32>
    tpu.vector_store %arg12[%c0_387, %c0_388], %471 {strides = array<i32>} : memref<400x256xf32, #tpu.memory_space<vmem>>, vector<16x256xf32>,
    %c0_389 = arith.constant 0 : index
    %c1_390 = arith.constant 1 : index
    %473 = vector.load %arg11[%c0_389, %c1_390] : memref<16x324xf32, #tpu.memory_space<vmem>>, vector<16x256xf32>
    %cst_391 = arith.constant 0.000000e+00 : f32
    %474 = vector.broadcast %cst_391 : f32 to vector<16x256xf32>
    %475 = vector.shape_cast %22 : vector<1x256xi1> to vector<1x256xi1>
    %476 = vector.broadcast %475 : vector<1x256xi1> to vector<16x256xi1>
    %477 = arith.select %476, %473, %474 : vector<16x256xi1>, vector<16x256xf32>
    %c16_392 = arith.constant 16 : index
    %c0_393 = arith.constant 0 : index
    %478 = vector.load %arg12[%c16_392, %c0_393] : memref<400x256xf32, #tpu.memory_space<vmem>>, vector<16x256xf32>
    tpu.vector_store %arg12[%c16_392, %c0_393], %477 {strides = array<i32>} : memref<400x256xf32, #tpu.memory_space<vmem>>, vector<16x256xf32>,
    %c0_394 = arith.constant 0 : index
    %c2_395 = arith.constant 2 : index
    %479 = vector.load %arg11[%c0_394, %c2_395] : memref<16x324xf32, #tpu.memory_space<vmem>>, vector<16x256xf32>
    %c32_396 = arith.constant 32 : index
    %c0_397 = arith.constant 0 : index
    %480 = vector.load %arg12[%c32_396, %c0_397] : memref<400x256xf32, #tpu.memory_space<vmem>>, vector<16x256xf32>
    tpu.vector_store %arg12[%c32_396, %c0_397], %479 {strides = array<i32>} : memref<400x256xf32, #tpu.memory_space<vmem>>, vector<16x256xf32>,
    %c0_398 = arith.constant 0 : index
    %c3_399 = arith.constant 3 : index
    %481 = vector.load %arg11[%c0_398, %c3_399] : memref<16x324xf32, #tpu.memory_space<vmem>>, vector<16x256xf32>
    %cst_400 = arith.constant 0.000000e+00 : f32
    %482 = vector.broadcast %cst_400 : f32 to vector<16x256xf32>
    %483 = vector.shape_cast %24 : vector<1x256xi1> to vector<1x256xi1>
    %484 = vector.broadcast %483 : vector<1x256xi1> to vector<16x256xi1>
    %485 = arith.select %484, %481, %482 : vector<16x256xi1>, vector<16x256xf32>
    %c48_401 = arith.constant 48 : index
    %c0_402 = arith.constant 0 : index
    %486 = vector.load %arg12[%c48_401, %c0_402] : memref<400x256xf32, #tpu.memory_space<vmem>>, vector<16x256xf32>
    tpu.vector_store %arg12[%c48_401, %c0_402], %485 {strides = array<i32>} : memref<400x256xf32, #tpu.memory_space<vmem>>, vector<16x256xf32>,
    %c0_403 = arith.constant 0 : index
    %c4_404 = arith.constant 4 : index
    %487 = vector.load %arg11[%c0_403, %c4_404] : memref<16x324xf32, #tpu.memory_space<vmem>>, vector<16x256xf32>
    %cst_405 = arith.constant 0.000000e+00 : f32
    %488 = vector.broadcast %cst_405 : f32 to vector<16x256xf32>
    %489 = vector.shape_cast %26 : vector<1x256xi1> to vector<1x256xi1>
    %490 = vector.broadcast %489 : vector<1x256xi1> to vector<16x256xi1>
    %491 = arith.select %490, %487, %488 : vector<16x256xi1>, vector<16x256xf32>
    %c64_406 = arith.constant 64 : index
    %c0_407 = arith.constant 0 : index
    %492 = vector.load %arg12[%c64_406, %c0_407] : memref<400x256xf32, #tpu.memory_space<vmem>>, vector<16x256xf32>
    tpu.vector_store %arg12[%c64_406, %c0_407], %491 {strides = array<i32>} : memref<400x256xf32, #tpu.memory_space<vmem>>, vector<16x256xf32>,
    %c0_408 = arith.constant 0 : index
    %c16_409 = arith.constant 16 : index
    %493 = vector.load %arg11[%c0_408, %c16_409] : memref<16x324xf32, #tpu.memory_space<vmem>>, vector<16x256xf32>
    %cst_410 = arith.constant 0.000000e+00 : f32
    %494 = vector.broadcast %cst_410 : f32 to vector<16x256xf32>
    %495 = vector.shape_cast %20 : vector<1x256xi1> to vector<1x256xi1>
    %496 = vector.broadcast %495 : vector<1x256xi1> to vector<16x256xi1>
    %497 = arith.select %496, %493, %494 : vector<16x256xi1>, vector<16x256xf32>
    %c80_411 = arith.constant 80 : index
    %c0_412 = arith.constant 0 : index
    %498 = vector.load %arg12[%c80_411, %c0_412] : memref<400x256xf32, #tpu.memory_space<vmem>>, vector<16x256xf32>
    tpu.vector_store %arg12[%c80_411, %c0_412], %497 {strides = array<i32>} : memref<400x256xf32, #tpu.memory_space<vmem>>, vector<16x256xf32>,
    %c0_413 = arith.constant 0 : index
    %c17_414 = arith.constant 17 : index
    %499 = vector.load %arg11[%c0_413, %c17_414] : memref<16x324xf32, #tpu.memory_space<vmem>>, vector<16x256xf32>
    %cst_415 = arith.constant 0.000000e+00 : f32
    %500 = vector.broadcast %cst_415 : f32 to vector<16x256xf32>
    %501 = vector.shape_cast %22 : vector<1x256xi1> to vector<1x256xi1>
    %502 = vector.broadcast %501 : vector<1x256xi1> to vector<16x256xi1>
    %503 = arith.select %502, %499, %500 : vector<16x256xi1>, vector<16x256xf32>
    %c96_416 = arith.constant 96 : index
    %c0_417 = arith.constant 0 : index
    %504 = vector.load %arg12[%c96_416, %c0_417] : memref<400x256xf32, #tpu.memory_space<vmem>>, vector<16x256xf32>
    tpu.vector_store %arg12[%c96_416, %c0_417], %503 {strides = array<i32>} : memref<400x256xf32, #tpu.memory_space<vmem>>, vector<16x256xf32>,
    %c0_418 = arith.constant 0 : index
    %c18_419 = arith.constant 18 : index
    %505 = vector.load %arg11[%c0_418, %c18_419] : memref<16x324xf32, #tpu.memory_space<vmem>>, vector<16x256xf32>
    %c112_420 = arith.constant 112 : index
    %c0_421 = arith.constant 0 : index
    %506 = vector.load %arg12[%c112_420, %c0_421] : memref<400x256xf32, #tpu.memory_space<vmem>>, vector<16x256xf32>
    tpu.vector_store %arg12[%c112_420, %c0_421], %505 {strides = array<i32>} : memref<400x256xf32, #tpu.memory_space<vmem>>, vector<16x256xf32>,
    %c0_422 = arith.constant 0 : index
    %c19_423 = arith.constant 19 : index
    %507 = vector.load %arg11[%c0_422, %c19_423] : memref<16x324xf32, #tpu.memory_space<vmem>>, vector<16x256xf32>
    %cst_424 = arith.constant 0.000000e+00 : f32
    %508 = vector.broadcast %cst_424 : f32 to vector<16x256xf32>
    %509 = vector.shape_cast %24 : vector<1x256xi1> to vector<1x256xi1>
    %510 = vector.broadcast %509 : vector<1x256xi1> to vector<16x256xi1>
    %511 = arith.select %510, %507, %508 : vector<16x256xi1>, vector<16x256xf32>
    %c128_425 = arith.constant 128 : index
    %c0_426 = arith.constant 0 : index
    %512 = vector.load %arg12[%c128_425, %c0_426] : memref<400x256xf32, #tpu.memory_space<vmem>>, vector<16x256xf32>
    tpu.vector_store %arg12[%c128_425, %c0_426], %511 {strides = array<i32>} : memref<400x256xf32, #tpu.memory_space<vmem>>, vector<16x256xf32>,
    %c0_427 = arith.constant 0 : index
    %c20_428 = arith.constant 20 : index
    %513 = vector.load %arg11[%c0_427, %c20_428] : memref<16x324xf32, #tpu.memory_space<vmem>>, vector<16x256xf32>
    %cst_429 = arith.constant 0.000000e+00 : f32
    %514 = vector.broadcast %cst_429 : f32 to vector<16x256xf32>
    %515 = vector.shape_cast %26 : vector<1x256xi1> to vector<1x256xi1>
    %516 = vector.broadcast %515 : vector<1x256xi1> to vector<16x256xi1>
    %517 = arith.select %516, %513, %514 : vector<16x256xi1>, vector<16x256xf32>
    %c144_430 = arith.constant 144 : index
    %c0_431 = arith.constant 0 : index
    %518 = vector.load %arg12[%c144_430, %c0_431] : memref<400x256xf32, #tpu.memory_space<vmem>>, vector<16x256xf32>
    tpu.vector_store %arg12[%c144_430, %c0_431], %517 {strides = array<i32>} : memref<400x256xf32, #tpu.memory_space<vmem>>, vector<16x256xf32>,
    %c0_432 = arith.constant 0 : index
    %c32_433 = arith.constant 32 : index
    %519 = vector.load %arg11[%c0_432, %c32_433] : memref<16x324xf32, #tpu.memory_space<vmem>>, vector<16x256xf32>
    %cst_434 = arith.constant 0.000000e+00 : f32
    %520 = vector.broadcast %cst_434 : f32 to vector<16x256xf32>
    %521 = vector.shape_cast %20 : vector<1x256xi1> to vector<1x256xi1>
    %522 = vector.broadcast %521 : vector<1x256xi1> to vector<16x256xi1>
    %523 = arith.select %522, %519, %520 : vector<16x256xi1>, vector<16x256xf32>
    %c160_435 = arith.constant 160 : index
    %c0_436 = arith.constant 0 : index
    %524 = vector.load %arg12[%c160_435, %c0_436] : memref<400x256xf32, #tpu.memory_space<vmem>>, vector<16x256xf32>
    tpu.vector_store %arg12[%c160_435, %c0_436], %523 {strides = array<i32>} : memref<400x256xf32, #tpu.memory_space<vmem>>, vector<16x256xf32>,
    %c0_437 = arith.constant 0 : index
    %c33_438 = arith.constant 33 : index
    %525 = vector.load %arg11[%c0_437, %c33_438] : memref<16x324xf32, #tpu.memory_space<vmem>>, vector<16x256xf32>
    %cst_439 = arith.constant 0.000000e+00 : f32
    %526 = vector.broadcast %cst_439 : f32 to vector<16x256xf32>
    %527 = vector.shape_cast %22 : vector<1x256xi1> to vector<1x256xi1>
    %528 = vector.broadcast %527 : vector<1x256xi1> to vector<16x256xi1>
    %529 = arith.select %528, %525, %526 : vector<16x256xi1>, vector<16x256xf32>
    %c176_440 = arith.constant 176 : index
    %c0_441 = arith.constant 0 : index
    %530 = vector.load %arg12[%c176_440, %c0_441] : memref<400x256xf32, #tpu.memory_space<vmem>>, vector<16x256xf32>
    tpu.vector_store %arg12[%c176_440, %c0_441], %529 {strides = array<i32>} : memref<400x256xf32, #tpu.memory_space<vmem>>, vector<16x256xf32>,
    %c0_442 = arith.constant 0 : index
    %c34_443 = arith.constant 34 : index
    %531 = vector.load %arg11[%c0_442, %c34_443] : memref<16x324xf32, #tpu.memory_space<vmem>>, vector<16x256xf32>
    %c192_444 = arith.constant 192 : index
    %c0_445 = arith.constant 0 : index
    %532 = vector.load %arg12[%c192_444, %c0_445] : memref<400x256xf32, #tpu.memory_space<vmem>>, vector<16x256xf32>
    tpu.vector_store %arg12[%c192_444, %c0_445], %531 {strides = array<i32>} : memref<400x256xf32, #tpu.memory_space<vmem>>, vector<16x256xf32>,
    %c0_446 = arith.constant 0 : index
    %c35_447 = arith.constant 35 : index
    %533 = vector.load %arg11[%c0_446, %c35_447] : memref<16x324xf32, #tpu.memory_space<vmem>>, vector<16x256xf32>
    %cst_448 = arith.constant 0.000000e+00 : f32
    %534 = vector.broadcast %cst_448 : f32 to vector<16x256xf32>
    %535 = vector.shape_cast %24 : vector<1x256xi1> to vector<1x256xi1>
    %536 = vector.broadcast %535 : vector<1x256xi1> to vector<16x256xi1>
    %537 = arith.select %536, %533, %534 : vector<16x256xi1>, vector<16x256xf32>
    %c208_449 = arith.constant 208 : index
    %c0_450 = arith.constant 0 : index
    %538 = vector.load %arg12[%c208_449, %c0_450] : memref<400x256xf32, #tpu.memory_space<vmem>>, vector<16x256xf32>
    tpu.vector_store %arg12[%c208_449, %c0_450], %537 {strides = array<i32>} : memref<400x256xf32, #tpu.memory_space<vmem>>, vector<16x256xf32>,
    %c0_451 = arith.constant 0 : index
    %c36_452 = arith.constant 36 : index
    %539 = vector.load %arg11[%c0_451, %c36_452] : memref<16x324xf32, #tpu.memory_space<vmem>>, vector<16x256xf32>
    %cst_453 = arith.constant 0.000000e+00 : f32
    %540 = vector.broadcast %cst_453 : f32 to vector<16x256xf32>
    %541 = vector.shape_cast %26 : vector<1x256xi1> to vector<1x256xi1>
    %542 = vector.broadcast %541 : vector<1x256xi1> to vector<16x256xi1>
    %543 = arith.select %542, %539, %540 : vector<16x256xi1>, vector<16x256xf32>
    %c224_454 = arith.constant 224 : index
    %c0_455 = arith.constant 0 : index
    %544 = vector.load %arg12[%c224_454, %c0_455] : memref<400x256xf32, #tpu.memory_space<vmem>>, vector<16x256xf32>
    tpu.vector_store %arg12[%c224_454, %c0_455], %543 {strides = array<i32>} : memref<400x256xf32, #tpu.memory_space<vmem>>, vector<16x256xf32>,
    %c0_456 = arith.constant 0 : index
    %c48_457 = arith.constant 48 : index
    %545 = vector.load %arg11[%c0_456, %c48_457] : memref<16x324xf32, #tpu.memory_space<vmem>>, vector<16x256xf32>
    %cst_458 = arith.constant 0.000000e+00 : f32
    %546 = vector.broadcast %cst_458 : f32 to vector<16x256xf32>
    %547 = vector.shape_cast %20 : vector<1x256xi1> to vector<1x256xi1>
    %548 = vector.broadcast %547 : vector<1x256xi1> to vector<16x256xi1>
    %549 = arith.select %548, %545, %546 : vector<16x256xi1>, vector<16x256xf32>
    %c240_459 = arith.constant 240 : index
    %c0_460 = arith.constant 0 : index
    %550 = vector.load %arg12[%c240_459, %c0_460] : memref<400x256xf32, #tpu.memory_space<vmem>>, vector<16x256xf32>
    tpu.vector_store %arg12[%c240_459, %c0_460], %549 {strides = array<i32>} : memref<400x256xf32, #tpu.memory_space<vmem>>, vector<16x256xf32>,
    %c0_461 = arith.constant 0 : index
    %c49_462 = arith.constant 49 : index
    %551 = vector.load %arg11[%c0_461, %c49_462] : memref<16x324xf32, #tpu.memory_space<vmem>>, vector<16x256xf32>
    %cst_463 = arith.constant 0.000000e+00 : f32
    %552 = vector.broadcast %cst_463 : f32 to vector<16x256xf32>
    %553 = vector.shape_cast %22 : vector<1x256xi1> to vector<1x256xi1>
    %554 = vector.broadcast %553 : vector<1x256xi1> to vector<16x256xi1>
    %555 = arith.select %554, %551, %552 : vector<16x256xi1>, vector<16x256xf32>
    %c256_464 = arith.constant 256 : index
    %c0_465 = arith.constant 0 : index
    %556 = vector.load %arg12[%c256_464, %c0_465] : memref<400x256xf32, #tpu.memory_space<vmem>>, vector<16x256xf32>
    tpu.vector_store %arg12[%c256_464, %c0_465], %555 {strides = array<i32>} : memref<400x256xf32, #tpu.memory_space<vmem>>, vector<16x256xf32>,
    %c0_466 = arith.constant 0 : index
    %c50_467 = arith.constant 50 : index
    %557 = vector.load %arg11[%c0_466, %c50_467] : memref<16x324xf32, #tpu.memory_space<vmem>>, vector<16x256xf32>
    %c272_468 = arith.constant 272 : index
    %c0_469 = arith.constant 0 : index
    %558 = vector.load %arg12[%c272_468, %c0_469] : memref<400x256xf32, #tpu.memory_space<vmem>>, vector<16x256xf32>
    tpu.vector_store %arg12[%c272_468, %c0_469], %557 {strides = array<i32>} : memref<400x256xf32, #tpu.memory_space<vmem>>, vector<16x256xf32>,
    %c0_470 = arith.constant 0 : index
    %c51_471 = arith.constant 51 : index
    %559 = vector.load %arg11[%c0_470, %c51_471] : memref<16x324xf32, #tpu.memory_space<vmem>>, vector<16x256xf32>
    %cst_472 = arith.constant 0.000000e+00 : f32
    %560 = vector.broadcast %cst_472 : f32 to vector<16x256xf32>
    %561 = vector.shape_cast %24 : vector<1x256xi1> to vector<1x256xi1>
    %562 = vector.broadcast %561 : vector<1x256xi1> to vector<16x256xi1>
    %563 = arith.select %562, %559, %560 : vector<16x256xi1>, vector<16x256xf32>
    %c288_473 = arith.constant 288 : index
    %c0_474 = arith.constant 0 : index
    %564 = vector.load %arg12[%c288_473, %c0_474] : memref<400x256xf32, #tpu.memory_space<vmem>>, vector<16x256xf32>
    tpu.vector_store %arg12[%c288_473, %c0_474], %563 {strides = array<i32>} : memref<400x256xf32, #tpu.memory_space<vmem>>, vector<16x256xf32>,
    %c0_475 = arith.constant 0 : index
    %c52_476 = arith.constant 52 : index
    %565 = vector.load %arg11[%c0_475, %c52_476] : memref<16x324xf32, #tpu.memory_space<vmem>>, vector<16x256xf32>
    %cst_477 = arith.constant 0.000000e+00 : f32
    %566 = vector.broadcast %cst_477 : f32 to vector<16x256xf32>
    %567 = vector.shape_cast %26 : vector<1x256xi1> to vector<1x256xi1>
    %568 = vector.broadcast %567 : vector<1x256xi1> to vector<16x256xi1>
    %569 = arith.select %568, %565, %566 : vector<16x256xi1>, vector<16x256xf32>
    %c304_478 = arith.constant 304 : index
    %c0_479 = arith.constant 0 : index
    %570 = vector.load %arg12[%c304_478, %c0_479] : memref<400x256xf32, #tpu.memory_space<vmem>>, vector<16x256xf32>
    tpu.vector_store %arg12[%c304_478, %c0_479], %569 {strides = array<i32>} : memref<400x256xf32, #tpu.memory_space<vmem>>, vector<16x256xf32>,
    %c0_480 = arith.constant 0 : index
    %c64_481 = arith.constant 64 : index
    %571 = vector.load %arg11[%c0_480, %c64_481] : memref<16x324xf32, #tpu.memory_space<vmem>>, vector<16x256xf32>
    %cst_482 = arith.constant 0.000000e+00 : f32
    %572 = vector.broadcast %cst_482 : f32 to vector<16x256xf32>
    %573 = vector.shape_cast %20 : vector<1x256xi1> to vector<1x256xi1>
    %574 = vector.broadcast %573 : vector<1x256xi1> to vector<16x256xi1>
    %575 = arith.select %574, %571, %572 : vector<16x256xi1>, vector<16x256xf32>
    %c320_483 = arith.constant 320 : index
    %c0_484 = arith.constant 0 : index
    %576 = vector.load %arg12[%c320_483, %c0_484] : memref<400x256xf32, #tpu.memory_space<vmem>>, vector<16x256xf32>
    tpu.vector_store %arg12[%c320_483, %c0_484], %575 {strides = array<i32>} : memref<400x256xf32, #tpu.memory_space<vmem>>, vector<16x256xf32>,
    %c0_485 = arith.constant 0 : index
    %c65_486 = arith.constant 65 : index
    %577 = vector.load %arg11[%c0_485, %c65_486] : memref<16x324xf32, #tpu.memory_space<vmem>>, vector<16x256xf32>
    %cst_487 = arith.constant 0.000000e+00 : f32
    %578 = vector.broadcast %cst_487 : f32 to vector<16x256xf32>
    %579 = vector.shape_cast %22 : vector<1x256xi1> to vector<1x256xi1>
    %580 = vector.broadcast %579 : vector<1x256xi1> to vector<16x256xi1>
    %581 = arith.select %580, %577, %578 : vector<16x256xi1>, vector<16x256xf32>
    %c336_488 = arith.constant 336 : index
    %c0_489 = arith.constant 0 : index
    %582 = vector.load %arg12[%c336_488, %c0_489] : memref<400x256xf32, #tpu.memory_space<vmem>>, vector<16x256xf32>
    tpu.vector_store %arg12[%c336_488, %c0_489], %581 {strides = array<i32>} : memref<400x256xf32, #tpu.memory_space<vmem>>, vector<16x256xf32>,
    %c0_490 = arith.constant 0 : index
    %c66_491 = arith.constant 66 : index
    %583 = vector.load %arg11[%c0_490, %c66_491] : memref<16x324xf32, #tpu.memory_space<vmem>>, vector<16x256xf32>
    %c352_492 = arith.constant 352 : index
    %c0_493 = arith.constant 0 : index
    %584 = vector.load %arg12[%c352_492, %c0_493] : memref<400x256xf32, #tpu.memory_space<vmem>>, vector<16x256xf32>
    tpu.vector_store %arg12[%c352_492, %c0_493], %583 {strides = array<i32>} : memref<400x256xf32, #tpu.memory_space<vmem>>, vector<16x256xf32>,
    %c0_494 = arith.constant 0 : index
    %c67_495 = arith.constant 67 : index
    %585 = vector.load %arg11[%c0_494, %c67_495] : memref<16x324xf32, #tpu.memory_space<vmem>>, vector<16x256xf32>
    %cst_496 = arith.constant 0.000000e+00 : f32
    %586 = vector.broadcast %cst_496 : f32 to vector<16x256xf32>
    %587 = vector.shape_cast %24 : vector<1x256xi1> to vector<1x256xi1>
    %588 = vector.broadcast %587 : vector<1x256xi1> to vector<16x256xi1>
    %589 = arith.select %588, %585, %586 : vector<16x256xi1>, vector<16x256xf32>
    %c368_497 = arith.constant 368 : index
    %c0_498 = arith.constant 0 : index
    %590 = vector.load %arg12[%c368_497, %c0_498] : memref<400x256xf32, #tpu.memory_space<vmem>>, vector<16x256xf32>
    tpu.vector_store %arg12[%c368_497, %c0_498], %589 {strides = array<i32>} : memref<400x256xf32, #tpu.memory_space<vmem>>, vector<16x256xf32>,
    %c0_499 = arith.constant 0 : index
    %c68_500 = arith.constant 68 : index
    %591 = vector.load %arg11[%c0_499, %c68_500] : memref<16x324xf32, #tpu.memory_space<vmem>>, vector<16x256xf32>
    %cst_501 = arith.constant 0.000000e+00 : f32
    %592 = vector.broadcast %cst_501 : f32 to vector<16x256xf32>
    %593 = vector.shape_cast %26 : vector<1x256xi1> to vector<1x256xi1>
    %594 = vector.broadcast %593 : vector<1x256xi1> to vector<16x256xi1>
    %595 = arith.select %594, %591, %592 : vector<16x256xi1>, vector<16x256xf32>
    %c384_502 = arith.constant 384 : index
    %c0_503 = arith.constant 0 : index
    %596 = vector.load %arg12[%c384_502, %c0_503] : memref<400x256xf32, #tpu.memory_space<vmem>>, vector<16x256xf32>
    tpu.vector_store %arg12[%c384_502, %c0_503], %595 {strides = array<i32>} : memref<400x256xf32, #tpu.memory_space<vmem>>, vector<16x256xf32>,
    %c0_504 = arith.constant 0 : index
    %c0_505 = arith.constant 0 : index
    %597 = vector.load %arg8[%c0_504, %c0_505] : memref<4x400xf32, #tpu.memory_space<vmem>>, vector<4x400xf32>
    %c0_506 = arith.constant 0 : index
    %c0_507 = arith.constant 0 : index
    %598 = vector.load %arg12[%c0_506, %c0_507] : memref<400x256xf32, #tpu.memory_space<vmem>>, vector<400x256xf32>
    %cst_508 = arith.constant dense<0.000000e+00> : vector<4x256xf32>
    %599 = tpu.matmul %597, %598, %cst_508 {dimension_numbers = #tpu.dot_dimension_numbers<[1], [0], [0], [1], [0, 0, 1, 1], [], []>} : vector<4x400xf32>, vector<400x256xf32>, vector<4x256xf32> -> vector<4x256xf32>
    %c0_509 = arith.constant 0 : index
    %c0_510 = arith.constant 0 : index
    %c0_511 = arith.constant 0 : index
    %600 = vector.load %arg9[%c0_509, %c0_510, %c0_511] : memref<1x4x256xf32, #tpu.memory_space<vmem>>, vector<1x4x256xf32>
    %601 = vector.shape_cast %600 : vector<1x4x256xf32> to vector<4x256xf32>
    %602 = vector.shape_cast %599 : vector<4x256xf32> to vector<1x4x256xf32>
    tpu.vector_store %arg9[%c0_509, %c0_510, %c0_511], %602 {strides = array<i32>} : memref<1x4x256xf32, #tpu.memory_space<vmem>>, vector<1x4x256xf32>,
    %c0_512 = arith.constant 0 : index
    %c0_513 = arith.constant 0 : index
    %c0_514 = arith.constant 0 : index
    %603 = vector.load %arg10[%c0_512, %c0_513, %c0_514] : memref<1x16x256xf32, #tpu.memory_space<vmem>>, vector<1x16x256xf32>
    %604 = vector.shape_cast %603 : vector<1x16x256xf32> to vector<16x256xf32>
    %605 = vector.shape_cast %465 : vector<16x256xf32> to vector<1x16x256xf32>
    tpu.vector_store %arg10[%c0_512, %c0_513, %c0_514], %605 {strides = array<i32>} : memref<1x16x256xf32, #tpu.memory_space<vmem>>, vector<1x16x256xf32>,
    return
  }
  func.func @transform_0(%arg0: i32) -> (i32, i32, i32) {
    %c0_i32 = arith.constant 0 : i32
    %c0_i32_0 = arith.constant 0 : i32
    %c0_i32_1 = arith.constant 0 : i32
    return %arg0, %c0_i32, %c0_i32_0 : i32, i32, i32
  }
  func.func @transform_1(%arg0: i32) -> (i32, i32, i32) {
    %c0_i32 = arith.constant 0 : i32
    %c0_i32_0 = arith.constant 0 : i32
    %c0_i32_1 = arith.constant 0 : i32
    return %arg0, %c0_i32, %c0_i32_0 : i32, i32, i32
  }
  func.func @transform_2(%arg0: i32) -> (i32, i32) {
    %c0_i32 = arith.constant 0 : i32
    %c0_i32_0 = arith.constant 0 : i32
    %c0_i32_1 = arith.constant 0 : i32
    return %c0_i32, %c0_i32_0 : i32, i32
  }
  func.func @transform_3(%arg0: i32) -> (i32, i32) {
    %c0_i32 = arith.constant 0 : i32
    %c0_i32_0 = arith.constant 0 : i32
    %c0_i32_1 = arith.constant 0 : i32
    return %c0_i32, %c0_i32_0 : i32, i32
  }
  func.func @transform_4(%arg0: i32) -> (i32, i32) {
    %c0_i32 = arith.constant 0 : i32
    %c0_i32_0 = arith.constant 0 : i32
    %c0_i32_1 = arith.constant 0 : i32
    return %c0_i32, %c0_i32_0 : i32, i32
  }
  func.func @transform_5(%arg0: i32) -> (i32, i32) {
    %c0_i32 = arith.constant 0 : i32
    %c0_i32_0 = arith.constant 0 : i32
    %c0_i32_1 = arith.constant 0 : i32
    return %c0_i32, %c0_i32_0 : i32, i32
  }
  func.func @transform_6(%arg0: i32) -> (i32, i32) {
    %c0_i32 = arith.constant 0 : i32
    %c0_i32_0 = arith.constant 0 : i32
    %c0_i32_1 = arith.constant 0 : i32
    return %c0_i32, %c0_i32_0 : i32, i32
  }
  func.func @transform_7(%arg0: i32) -> (i32, i32) {
    %c0_i32 = arith.constant 0 : i32
    %c0_i32_0 = arith.constant 0 : i32
    %c0_i32_1 = arith.constant 0 : i32
    return %c0_i32, %c0_i32_0 : i32, i32
  }
  func.func @transform_8(%arg0: i32) -> (i32, i32, i32) {
    %c0_i32 = arith.constant 0 : i32
    %c0_i32_0 = arith.constant 0 : i32
    %c0_i32_1 = arith.constant 0 : i32
    return %arg0, %c0_i32, %c0_i32_0 : i32, i32, i32
  }
  func.func @transform_9(%arg0: i32) -> (i32, i32, i32) {
    %c0_i32 = arith.constant 0 : i32
    %c0_i32_0 = arith.constant 0 : i32
    %c0_i32_1 = arith.constant 0 : i32
    return %arg0, %c0_i32, %c0_i32_0 : i32, i32, i32
  }
}

</mosaic_0001>

<llo_original>
// kernel: gru_block_forward.1
$region0: #{gru_block_forward.1}
  #allocation0 [shape = 'u32[]', space=smem, size = 0x4, offset = 0x4, fixed_abs, tag = 'smem constant byte address 0x4 - core index']
  #allocation1 [shape = 'u32[144,128]{1,0:T(1,128)}', space=vmem, size = 0x12000, scoped, tag = 'internal scratch']
  #allocation2 [shape = 'f32[16,324]{1,0:T(8,128)}', space=vmem, size = 0x6000, scoped, tag = 'scratch operand']
  #allocation3 [shape = 'f32[400,256]{1,0:T(8,128)}', space=vmem, size = 0x64000, scoped, tag = 'scratch operand']
  %s0 = inlined_call_operand.vmem [shape: f32[2,4,256], index: 0, kind: input, shape index: {}]
  %s1 = inlined_call_operand.vmem [shape: f32[2,32,256], index: 1, kind: input, shape index: {}]
  %s2 = inlined_call_operand.vmem [shape: f32[32,288], index: 2, kind: input, shape index: {}]
  %s3 = inlined_call_operand.vmem [shape: f32[16,288], index: 3, kind: input, shape index: {}]
  %s4 = inlined_call_operand.vmem [shape: f32[16,400], index: 4, kind: input, shape index: {}]
  %s5 = inlined_call_operand.vmem [shape: f32[32,288], index: 5, kind: input, shape index: {}]
  %s6 = inlined_call_operand.vmem [shape: f32[16,288], index: 6, kind: input, shape index: {}]
  %s7 = inlined_call_operand.vmem [shape: f32[4,400], index: 7, kind: input, shape index: {}]
  %s8 = inlined_call_operand.vmem [shape: f32[2,4,256], index: 8, kind: output, shape index: {0}]
  %s9 = inlined_call_operand.vmem [shape: f32[2,16,256], index: 9, kind: output, shape index: {1}]
  %10 = xla_tuple %s8, %s9
  %s11 = sld [smem:[#allocation0]]
  $region73: #{gru_block_forward.1} parent=0
    _
  %s13 = ssub.s32 1, %s11
  %s14 = scalar_select 0, %s13, %s11
  loop: start=0, step=1, limit=4
  $region2: #{gru_block_forward.1} parent=0 // loop_pre_header
    _
  $region3: #{gru_block_forward.1} parent=0 // loop_header
    %s16 = sphi 0, %s20
    %p17 = scmp.ge.s32.totalorder %s16, 4
    %s26 = sphi 0, %s28
    %s29 = sphi 0, %s26
    %s30 = sphi 0, %s29
    %s46 = sphi 0, %s30
    %s52 = sphi 0, %s54
    %s55 = sphi 0, %s52
    %s56 = sphi 0, %s55
    %s72 = sphi 0, %s56
    %s76 = sphi 0, %s76
    %s78 = sphi 0, %s76
    %s79 = sphi 0, %s78
    %s93 = sphi 0, %s79
    %s97 = sphi 0, %s97
    %s99 = sphi 0, %s97
    %s100 = sphi 0, %s99
    %s114 = sphi 0, %s100
    %s118 = sphi 0, %s118
    %s120 = sphi 0, %s118
    %s121 = sphi 0, %s120
    %s135 = sphi 0, %s121
    %s139 = sphi 0, %s139
    %s141 = sphi 0, %s139
    %s142 = sphi 0, %s141
    %s156 = sphi 0, %s142
    %s160 = sphi 0, %s160
    %s162 = sphi 0, %s160
    %s163 = sphi 0, %s162
    %s177 = sphi 0, %s163
    %s181 = sphi 0, %s181
    %s183 = sphi 0, %s181
    %s184 = sphi 0, %s183
    %s198 = sphi 0, %s184
    %s204 = sphi 0, %s206
    %s207 = sphi 0, %s204
    %s208 = sphi 0, %s207
    %s224 = sphi 0, %s208
    %s230 = sphi 0, %s232
    %s233 = sphi 0, %s230
    %s234 = sphi 0, %s233
    %s250 = sphi 0, %s234
  $region4: #{gru_block_forward.1} parent=0 // loop_header_branch
    %19 = sbr.rel (%p17) target = $region8
  $region5: #{gru_block_forward.1} parent=0 // loop_body
    %s21 = ssub.s32 %s16, 1
    %s22 = ssub.s32 %s16, 2
    %s23 = sadd.s32 %s16, 1
    %s24 = ssub.s32 %s16, %s23
    %p25 = scmp.eq.s32.totalorder %s24, 0
    %s27 = sadd.s32 %s26, 1
    %s28 = scalar_select %p25, %s26, %s27
    %p31 = pneg %p25
    %p32 = scmp.eq.s32.totalorder %s16, 1
    %p33 = por %p31, %p32
    %p34 = scmp.ne.s32.totalorder %s26, %s29
    %p35 = scmp.eq.s32.totalorder %s16, 0
    %p36 = por %p34, %p35
    %p37 = scmp.ne.s32.totalorder %s26, %s29
    %p38 = scmp.eq.s32.totalorder %s21, 1
    %p39 = por %p37, %p38
    %p40 = scmp.ne.s32.totalorder %s29, %s30
    %p41 = scmp.eq.s32.totalorder %s21, 0
    %p42 = por %p40, %p41
    %p43 = scmp.ne.s32.totalorder %s29, %s30
    %p44 = scmp.eq.s32.totalorder %s22, 1
    %p45 = por %p43, %p44
    %p47 = scmp.ne.s32.totalorder %s30, %s46
    %p48 = scmp.eq.s32.totalorder %s22, 0
    %p49 = por %p47, %p48
    %s50 = ssub.s32 %s16, %s23
    %p51 = scmp.eq.s32.totalorder %s50, 0
    %s53 = sadd.s32 %s52, 1
    %s54 = scalar_select %p51, %s52, %s53
    %p57 = pneg %p51
    %p58 = scmp.eq.s32.totalorder %s16, 1
    %p59 = por %p57, %p58
    %p60 = scmp.ne.s32.totalorder %s52, %s55
    %p61 = scmp.eq.s32.totalorder %s16, 0
    %p62 = por %p60, %p61
    %p63 = scmp.ne.s32.totalorder %s52, %s55
    %p64 = scmp.eq.s32.totalorder %s21, 1
    %p65 = por %p63, %p64
    %p66 = scmp.ne.s32.totalorder %s55, %s56
    %p67 = scmp.eq.s32.totalorder %s21, 0
    %p68 = por %p66, %p67
    %p69 = scmp.ne.s32.totalorder %s55, %s56
    %p70 = scmp.eq.s32.totalorder %s22, 1
    %p71 = por %p69, %p70
    %p73 = scmp.ne.s32.totalorder %s56, %s72
    %p74 = scmp.eq.s32.totalorder %s22, 0
    %p75 = por %p73, %p74
    %s77 = sadd.s32 %s76, 1
    %p80 = scmp.eq.s32.totalorder %s16, 1
    %p81 = scmp.ne.s32.totalorder %s76, %s78
    %p82 = scmp.eq.s32.totalorder %s16, 0
    %p83 = por %p81, %p82
    %p84 = scmp.ne.s32.totalorder %s76, %s78
    %p85 = scmp.eq.s32.totalorder %s21, 1
    %p86 = por %p84, %p85
    %p87 = scmp.ne.s32.totalorder %s78, %s79
    %p88 = scmp.eq.s32.totalorder %s21, 0
    %p89 = por %p87, %p88
    %p90 = scmp.ne.s32.totalorder %s78, %s79
    %p91 = scmp.eq.s32.totalorder %s22, 1
    %p92 = por %p90, %p91
    %p94 = scmp.ne.s32.totalorder %s79, %s93
    %p95 = scmp.eq.s32.totalorder %s22, 0
    %p96 = por %p94, %p95
    %s98 = sadd.s32 %s97, 1
    %p101 = scmp.eq.s32.totalorder %s16, 1
    %p102 = scmp.ne.s32.totalorder %s97, %s99
    %p103 = scmp.eq.s32.totalorder %s16, 0
    %p104 = por %p102, %p103
    %p105 = scmp.ne.s32.totalorder %s97, %s99
    %p106 = scmp.eq.s32.totalorder %s21, 1
    %p107 = por %p105, %p106
    %p108 = scmp.ne.s32.totalorder %s99, %s100
    %p109 = scmp.eq.s32.totalorder %s21, 0
    %p110 = por %p108, %p109
    %p111 = scmp.ne.s32.totalorder %s99, %s100
    %p112 = scmp.eq.s32.totalorder %s22, 1
    %p113 = por %p111, %p112
    %p115 = scmp.ne.s32.totalorder %s100, %s114
    %p116 = scmp.eq.s32.totalorder %s22, 0
    %p117 = por %p115, %p116
    %s119 = sadd.s32 %s118, 1
    %p122 = scmp.eq.s32.totalorder %s16, 1
    %p123 = scmp.ne.s32.totalorder %s118, %s120
    %p124 = scmp.eq.s32.totalorder %s16, 0
    %p125 = por %p123, %p124
    %p126 = scmp.ne.s32.totalorder %s118, %s120
    %p127 = scmp.eq.s32.totalorder %s21, 1
    %p128 = por %p126, %p127
    %p129 = scmp.ne.s32.totalorder %s120, %s121
    %p130 = scmp.eq.s32.totalorder %s21, 0
    %p131 = por %p129, %p130
    %p132 = scmp.ne.s32.totalorder %s120, %s121
    %p133 = scmp.eq.s32.totalorder %s22, 1
    %p134 = por %p132, %p133
    %p136 = scmp.ne.s32.totalorder %s121, %s135
    %p137 = scmp.eq.s32.totalorder %s22, 0
    %p138 = por %p136, %p137
    %s140 = sadd.s32 %s139, 1
    %p143 = scmp.eq.s32.totalorder %s16, 1
    %p144 = scmp.ne.s32.totalorder %s139, %s141
    %p145 = scmp.eq.s32.totalorder %s16, 0
    %p146 = por %p144, %p145
    %p147 = scmp.ne.s32.totalorder %s139, %s141
    %p148 = scmp.eq.s32.totalorder %s21, 1
    %p149 = por %p147, %p148
    %p150 = scmp.ne.s32.totalorder %s141, %s142
    %p151 = scmp.eq.s32.totalorder %s21, 0
    %p152 = por %p150, %p151
    %p153 = scmp.ne.s32.totalorder %s141, %s142
    %p154 = scmp.eq.s32.totalorder %s22, 1
    %p155 = por %p153, %p154
    %p157 = scmp.ne.s32.totalorder %s142, %s156
    %p158 = scmp.eq.s32.totalorder %s22, 0
    %p159 = por %p157, %p158
    %s161 = sadd.s32 %s160, 1
    %p164 = scmp.eq.s32.totalorder %s16, 1
    %p165 = scmp.ne.s32.totalorder %s160, %s162
    %p166 = scmp.eq.s32.totalorder %s16, 0
    %p167 = por %p165, %p166
    %p168 = scmp.ne.s32.totalorder %s160, %s162
    %p169 = scmp.eq.s32.totalorder %s21, 1
    %p170 = por %p168, %p169
    %p171 = scmp.ne.s32.totalorder %s162, %s163
    %p172 = scmp.eq.s32.totalorder %s21, 0
    %p173 = por %p171, %p172
    %p174 = scmp.ne.s32.totalorder %s162, %s163
    %p175 = scmp.eq.s32.totalorder %s22, 1
    %p176 = por %p174, %p175
    %p178 = scmp.ne.s32.totalorder %s163, %s177
    %p179 = scmp.eq.s32.totalorder %s22, 0
    %p180 = por %p178, %p179
    %s182 = sadd.s32 %s181, 1
    %p185 = scmp.eq.s32.totalorder %s16, 1
    %p186 = scmp.ne.s32.totalorder %s181, %s183
    %p187 = scmp.eq.s32.totalorder %s16, 0
    %p188 = por %p186, %p187
    %p189 = scmp.ne.s32.totalorder %s181, %s183
    %p190 = scmp.eq.s32.totalorder %s21, 1
    %p191 = por %p189, %p190
    %p192 = scmp.ne.s32.totalorder %s183, %s184
    %p193 = scmp.eq.s32.totalorder %s21, 0
    %p194 = por %p192, %p193
    %p195 = scmp.ne.s32.totalorder %s183, %s184
    %p196 = scmp.eq.s32.totalorder %s22, 1
    %p197 = por %p195, %p196
    %p199 = scmp.ne.s32.totalorder %s184, %s198
    %p200 = scmp.eq.s32.totalorder %s22, 0
    %p201 = por %p199, %p200
    %s202 = ssub.s32 %s16, %s23
    %p203 = scmp.eq.s32.totalorder %s202, 0
    %s205 = sadd.s32 %s204, 1
    %s206 = scalar_select %p203, %s204, %s205
    %p209 = pneg %p203
    %p210 = scmp.eq.s32.totalorder %s16, 1
    %p211 = por %p209, %p210
    %p212 = scmp.ne.s32.totalorder %s204, %s207
    %p213 = scmp.eq.s32.totalorder %s16, 0
    %p214 = por %p212, %p213
    %p215 = scmp.ne.s32.totalorder %s204, %s207
    %p216 = scmp.eq.s32.totalorder %s21, 1
    %p217 = por %p215, %p216
    %p218 = scmp.ne.s32.totalorder %s207, %s208
    %p219 = scmp.eq.s32.totalorder %s21, 0
    %p220 = por %p218, %p219
    %p221 = scmp.ne.s32.totalorder %s207, %s208
    %p222 = scmp.eq.s32.totalorder %s22, 1
    %p223 = por %p221, %p222
    %p225 = scmp.ne.s32.totalorder %s208, %s224
    %p226 = scmp.eq.s32.totalorder %s22, 0
    %p227 = por %p225, %p226
    %s228 = ssub.s32 %s16, %s23
    %p229 = scmp.eq.s32.totalorder %s228, 0
    %s231 = sadd.s32 %s230, 1
    %s232 = scalar_select %p229, %s230, %s231
    %p235 = pneg %p229
    %p236 = scmp.eq.s32.totalorder %s16, 1
    %p237 = por %p235, %p236
    %p238 = scmp.ne.s32.totalorder %s230, %s233
    %p239 = scmp.eq.s32.totalorder %s16, 0
    %p240 = por %p238, %p239
    %p241 = scmp.ne.s32.totalorder %s230, %s233
    %p242 = scmp.eq.s32.totalorder %s21, 1
    %p243 = por %p241, %p242
    %p244 = scmp.ne.s32.totalorder %s233, %s234
    %p245 = scmp.eq.s32.totalorder %s21, 0
    %p246 = por %p244, %p245
    %p247 = scmp.ne.s32.totalorder %s233, %s234
    %p248 = scmp.eq.s32.totalorder %s22, 1
    %p249 = por %p247, %p248
    %p251 = scmp.ne.s32.totalorder %s234, %s250
    %p252 = scmp.eq.s32.totalorder %s22, 0
    %p253 = por %p251, %p252
    %p254 = scmp.le.s32.totalorder 1, %s16
    %p255 = scmp.lt.s32.totalorder %s16, 3
    %p256 = pnand %p254, %p255
    %p257 = pneg %p256
    // Predicated region
    $region9: #{gru_block_forward.1} parent=5 // pred_check
      _
    $region10: #{gru_block_forward.1} parent=5 // pred_check_branch
      %259 = sbr.rel (%p256) target = $region12
    $region11: #{gru_block_forward.1} parent=5 // pred_region
      %s260 = ssub.s32 %s16, 1
      // Predicated region
      $region13: #{gru_block_forward.1} parent=11 // pred_check
        %p261 = pneg %p89
      $region14: #{gru_block_forward.1} parent=11 // pred_check_branch
        %263 = sbr.rel (%p261) target = $region16
      $region15: #{gru_block_forward.1} parent=11 // pred_region
        _
      $region16: #{gru_block_forward.1} parent=11 // pred_fallthru
        _
      // Predicated region
      $region17: #{gru_block_forward.1} parent=11 // pred_check
        %p264 = pneg %p110
      $region18: #{gru_block_forward.1} parent=11 // pred_check_branch
        %266 = sbr.rel (%p264) target = $region20
      $region19: #{gru_block_forward.1} parent=11 // pred_region
        _
      $region20: #{gru_block_forward.1} parent=11 // pred_fallthru
        _
      // Predicated region
      $region21: #{gru_block_forward.1} parent=11 // pred_check
        %p267 = pneg %p131
      $region22: #{gru_block_forward.1} parent=11 // pred_check_branch
        %269 = sbr.rel (%p267) target = $region24
      $region23: #{gru_block_forward.1} parent=11 // pred_region
        _
      $region24: #{gru_block_forward.1} parent=11 // pred_fallthru
        _
      // Predicated region
      $region25: #{gru_block_forward.1} parent=11 // pred_check
        %p270 = pneg %p152
      $region26: #{gru_block_forward.1} parent=11 // pred_check_branch
        %272 = sbr.rel (%p270) target = $region28
      $region27: #{gru_block_forward.1} parent=11 // pred_region
        _
      $region28: #{gru_block_forward.1} parent=11 // pred_fallthru
        _
      // Predicated region
      $region29: #{gru_block_forward.1} parent=11 // pred_check
        %p273 = pneg %p173
      $region30: #{gru_block_forward.1} parent=11 // pred_check_branch
        %275 = sbr.rel (%p273) target = $region32
      $region31: #{gru_block_forward.1} parent=11 // pred_region
        _
      $region32: #{gru_block_forward.1} parent=11 // pred_fallthru
        _
      // Predicated region
      $region33: #{gru_block_forward.1} parent=11 // pred_check
        %p276 = pneg %p194
      $region34: #{gru_block_forward.1} parent=11 // pred_check_branch
        %278 = sbr.rel (%p276) target = $region36
      $region35: #{gru_block_forward.1} parent=11 // pred_region
        _
      $region36: #{gru_block_forward.1} parent=11 // pred_fallthru
        _
    $region12: #{gru_block_forward.1} parent=5 // pred_fallthru
      _
    %p279 = scmp.lt.s32.totalorder %s16, 2
    // Predicated region
    $region37: #{gru_block_forward.1} parent=5 // pred_check
      %p280 = pneg %p279
    $region38: #{gru_block_forward.1} parent=5 // pred_check_branch
      %282 = sbr.rel (%p280) target = $region40
    $region39: #{gru_block_forward.1} parent=5 // pred_region
      // Predicated region
      $region41: #{gru_block_forward.1} parent=39 // pred_check
        %p283 = pneg %p36
      $region42: #{gru_block_forward.1} parent=39 // pred_check_branch
        %285 = sbr.rel (%p283) target = $region44
      $region43: #{gru_block_forward.1} parent=39 // pred_region
        %p286 = scmp.lt.s32.totalorder %s16, 1
        %s287 = scalar_select %p286, %s16, 1
        %s288 = smul.addr %s287, 2
        %s289 = smul.addr %s288, 4
        %s290 = scalar_lea.vmem %s0, %s289
      $region44: #{gru_block_forward.1} parent=39 // pred_fallthru
        _
      // Predicated region
      $region45: #{gru_block_forward.1} parent=39 // pred_check
        %p291 = pneg %p62
      $region46: #{gru_block_forward.1} parent=39 // pred_check_branch
        %293 = sbr.rel (%p291) target = $region48
      $region47: #{gru_block_forward.1} parent=39 // pred_region
        %p294 = scmp.lt.s32.totalorder %s16, 1
        %s295 = scalar_select %p294, %s16, 1
        %s296 = smul.addr %s295, 8
        %s297 = smul.addr %s296, 8
        %s298 = scalar_lea.vmem %s1, %s297
      $region48: #{gru_block_forward.1} parent=39 // pred_fallthru
        _
    $region40: #{gru_block_forward.1} parent=5 // pred_fallthru
      _
    %p299 = scmp.le.s32.totalorder 1, %s16
    %p300 = scmp.lt.s32.totalorder %s16, 3
    %p301 = pnand %p299, %p300
    %p302 = pneg %p301
    // Predicated region
    $region49: #{gru_block_forward.1} parent=5 // pred_check
      _
    $region50: #{gru_block_forward.1} parent=5 // pred_check_branch
      %304 = sbr.rel (%p301) target = $region52
    $region51: #{gru_block_forward.1} parent=5 // pred_region
      %s305 = ssub.s32 %s16, 1
      %p306 = scmp.lt.s32.totalorder %s21, 1
      %s307 = scalar_select %p306, %s21, 1
      %s308 = smul.addr %s307, 2
      %s309 = smul.addr %s308, 4
      %s310 = scalar_lea.vmem %s0, %s309
      %p311 = pneg %p42
      %p312 = pneg %p39
      %p313 = scmp.lt.s32.totalorder %s21, 1
      %s314 = scalar_select %p313, %s21, 1
      %s315 = smul.addr %s314, 8
      %s316 = smul.addr %s315, 8
      %s317 = scalar_lea.vmem %s1, %s316
      %p318 = pneg %p68
      %p319 = pneg %p65
      %p320 = pneg %p89
      %p321 = pneg %p86
      %p322 = pneg %p110
      %p323 = pneg %p107
      %p324 = pneg %p131
      %p325 = pneg %p128
      %p326 = pneg %p152
      %p327 = pneg %p149
      %p328 = pneg %p173
      %p329 = pneg %p170
      %p330 = pneg %p194
      %p331 = pneg %p191
      %p332 = pneg %p220
      %p333 = pneg %p217
      %p334 = scmp.lt.s32.totalorder %s21, 1
      %s335 = scalar_select %p334, %s21, 1
      %s336 = smul.addr %s335, 2
      %s337 = smul.addr %s336, 4
      %s338 = scalar_lea.vmem %s8, %s337
      %p339 = pneg %p246
      %p340 = pneg %p243
      %p341 = scmp.lt.s32.totalorder %s21, 1
      %s342 = scalar_select %p341, %s21, 1
      %s343 = smul.addr %s342, 4
      %s344 = smul.addr %s343, 8
      %s345 = scalar_lea.vmem %s9, %s344
      %p346 = scmp.lt.s32.totalorder %s21, 1
      %s347 = scalar_select %p346, %s21, 1
      %s348 = smul.addr %s347, 2
      %s349 = smul.addr %s348, 4
      %s350 = scalar_lea.vmem %s0, %s349
      %p351 = scmp.lt.s32.totalorder %s21, 1
      %s352 = scalar_select %p351, %s21, 1
      %s353 = smul.addr %s352, 8
      %s354 = smul.addr %s353, 8
      %s355 = scalar_lea.vmem %s1, %s354
      %p356 = scmp.lt.s32.totalorder %s21, 1
      %s357 = scalar_select %p356, %s21, 1
      %s358 = smul.addr %s357, 2
      %s359 = smul.addr %s358, 4
      %s360 = scalar_lea.vmem %s8, %s359
      %p361 = scmp.lt.s32.totalorder %s21, 1
      %s362 = scalar_select %p361, %s21, 1
      %s363 = smul.addr %s362, 4
      %s364 = smul.addr %s363, 8
      %s365 = scalar_lea.vmem %s9, %s364
      %366 = vst [vmem:[#allocation2] sm:$0xff] 0.0
      %367 = vst [vmem:[#allocation2 + $0x8] sm:$0xff] 0.0
      %vm368 = vcmask 556032
      %369 = vst.msk [vmem:[#allocation2 + $0x10] sm:$0xff] %vm368, 0.0
      %370 = vst [vmem:[#allocation2 + $0x18] sm:$0xff] 0.0
      %371 = vst [vmem:[#allocation2 + $0x20] sm:$0xff] 0.0
      %372 = vst.msk [vmem:[#allocation2 + $0x28] sm:$0xff] %vm368, 0.0
      %v373 = vlaneseq
      %v374 = vand.u32 %v373, 127
      %v375 = vadd.s32 %v374, 128
      %vm376 = vcmp.lt.s32.totalorder %v374, 0
      %v377 = vsub.s32 0, %v374
      %v378 = vsel %vm376, %v377, %v374
      %v379 = vshrl.u32 %v378, 4
      %v380 = vand.u32 %v378, 15
      %v381 = vsub.s32 0, %v380
      %v382 = vsel %vm376, %v381, %v380
      %vm383 = vcmp.lt.s32.totalorder %v375, 0
      %v384 = vsub.s32 0, %v375
      %v385 = vsel %vm383, %v384, %v375
      %v386 = vshrl.u32 %v385, 4
      %v387 = vand.u32 %v385, 15
      %v388 = vsub.s32 0, %v387
      %v389 = vsel %vm383, %v388, %v387
      %vm390 = vcmp.ne.s32.totalorder %v382, 0
      %vm391 = vcmp.ne.s32.totalorder %v389, 0
      %vm392 = vcmp.lt.s32.totalorder %v382, 0
      %vm393 = vcmp.lt.s32.totalorder %v389, 0
      %vm394 = vmand %vm392, %vm390
      %vm395 = vmand %vm393, %vm391
      %v396 = vadd.s32 %v382, 16
      %v397 = vadd.s32 %v389, 16
      %v398 = vsel %vm394, %v396, %v382
      %v399 = vsel %vm395, %v397, %v389
      %vm400 = vcmp.ge.s32.totalorder %v398, 2
      %vm401 = vcmp.ge.s32.totalorder %v399, 2
      %vm402 = vcmp.ge.s32.totalorder %v398, 1
      %vm403 = vcmp.ge.s32.totalorder %v399, 1
      %vm404 = vcmp.lt.s32.totalorder %v398, 15
      %vm405 = vcmp.lt.s32.totalorder %v399, 15
      %vm406 = vcmp.lt.s32.totalorder %v398, 14
      %vm407 = vcmp.lt.s32.totalorder %v399, 14
      %v408 = vld [vmem:[%s350] sm:$0xff]
      %v409 = vld [vmem:[%s355] sm:$0xff]
      %v410 = vld [vmem:[%s355 + $0x8] sm:$0xff]
      %v411 = vld [vmem:[%s355 + $0x10] sm:$0xff]
      %v412 = vld [vmem:[%s355 + $0x18] sm:$0xff]
      %v413 = vld [vmem:[%s355 + $0x20] sm:$0xff]
      %v414 = vld [vmem:[%s355 + $0x28] sm:$0xff]
      %v415 = vld [vmem:[%s355 + $0x30] sm:$0xff]
      %v416 = vld [vmem:[%s355 + $0x38] sm:$0xff]
      %v418 = vcombine.high %v408, %v408
      %419 = vrot.lane.b32.xlu0 %v408, 34
      %v420 = vpop.permute.xlu0 %419
      %421 = vrot.lane.b32.xlu0 %v418, 34
      %v422 = vpop.permute.xlu0 %421
      %vm423 = vcmask 277504
      %v424 = vsel %vm423, %v420, %v422
      %vm428 = vcmask 1043728
      %429 = vst.msk [vmem:[#allocation2] sm:$0xf] %vm428, %v420
      %430 = vst [vmem:[#allocation2 + $0x8] sm:$0xf] %v424
      %vm431 = vcmask 273408
      %432 = vst.msk [vmem:[#allocation2 + $0x10] sm:$0xf] %vm431, %v422
      %v433 = vld [vmem:[#allocation2] sm:$0xff]
      %v434 = vld [vmem:[#allocation2 + $0x8] sm:$0xff]
      %v435 = vld [vmem:[#allocation2 + $0x10] sm:$0xff]
      %v436 = vld [vmem:[#allocation2 + $0x18] sm:$0xff]
      %v437 = vld [vmem:[#allocation2 + $0x20] sm:$0xff]
      %v438 = vld [vmem:[#allocation2 + $0x28] sm:$0xff]
      %v439 = vsel %vm402, 1, 0
      %v440 = vsel %vm403, 1, 0
      %vm441 = vcmp.eq.s32.totalorder %v439, 1
      %vm442 = vcmp.eq.s32.totalorder %v440, 1
      %449 = vrot.lane.b32.xlu0 %v433, 111
      %v450 = vpop.permute.xlu0 %449
      %451 = vrot.lane.b32.xlu0 %v434, 111
      %v452 = vpop.permute.xlu0 %451
      %453 = vrot.lane.b32.xlu0 %v435, 111
      %v454 = vpop.permute.xlu0 %453
      %455 = vrot.lane.b32.xlu0 %v436, 111
      %v456 = vpop.permute.xlu0 %455
      %457 = vrot.lane.b32.xlu0 %v437, 111
      %v458 = vpop.permute.xlu0 %457
      %459 = vrot.lane.b32.xlu0 %v438, 111
      %v460 = vpop.permute.xlu0 %459
      %vm461 = vcmask 908288
      %v462 = vsel %vm461, %v450, %v452
      %v463 = vsel %vm461, %v452, %v454
      %v464 = vsel %vm461, %v456, %v458
      %v465 = vsel %vm461, %v458, %v460
      %v470 = vsel %vm441, %v462, 0.0
      %v471 = vsel %vm442, %v463, 0.0
      %v472 = vsel %vm441, %v464, 0.0
      %v473 = vsel %vm442, %v465, 0.0
      %474 = vst [vmem:[#allocation3] sm:$0xff] %v470
      %475 = vst [vmem:[#allocation3 + $0x8] sm:$0xff] %v471
      %476 = vst [vmem:[#allocation3 + $0x10] sm:$0xff] %v472
      %477 = vst [vmem:[#allocation3 + $0x18] sm:$0xff] %v473
      %v478 = vld [vmem:[#allocation2] sm:$0xff]
      %v479 = vld [vmem:[#allocation2 + $0x8] sm:$0xff]
      %v480 = vld [vmem:[#allocation2 + $0x10] sm:$0xff]
      %v481 = vld [vmem:[#allocation2 + $0x18] sm:$0xff]
      %v482 = vld [vmem:[#allocation2 + $0x20] sm:$0xff]
      %v483 = vld [vmem:[#allocation2 + $0x28] sm:$0xff]
      %490 = vrot.lane.b32.xlu0 %v478, 110
      %v491 = vpop.permute.xlu0 %490
      %492 = vrot.lane.b32.xlu0 %v479, 110
      %v493 = vpop.permute.xlu0 %492
      %494 = vrot.lane.b32.xlu0 %v480, 110
      %v495 = vpop.permute.xlu0 %494
      %496 = vrot.lane.b32.xlu0 %v481, 110
      %v497 = vpop.permute.xlu0 %496
      %498 = vrot.lane.b32.xlu0 %v482, 110
      %v499 = vpop.permute.xlu0 %498
      %500 = vrot.lane.b32.xlu0 %v483, 110
      %v501 = vpop.permute.xlu0 %500
      %vm502 = vcmask 900096
      %v503 = vsel %vm502, %v491, %v493
      %v504 = vsel %vm502, %v493, %v495
      %v505 = vsel %vm502, %v497, %v499
      %v506 = vsel %vm502, %v499, %v501
      %511 = vst [vmem:[#allocation3 + $0x20] sm:$0xff] %v503
      %512 = vst [vmem:[#allocation3 + $0x28] sm:$0xff] %v504
      %513 = vst [vmem:[#allocation3 + $0x30] sm:$0xff] %v505
      %514 = vst [vmem:[#allocation3 + $0x38] sm:$0xff] %v506
      %v515 = vld [vmem:[#allocation2] sm:$0xff]
      %v516 = vld [vmem:[#allocation2 + $0x8] sm:$0xff]
      %v517 = vld [vmem:[#allocation2 + $0x10] sm:$0xff]
      %v518 = vld [vmem:[#allocation2 + $0x18] sm:$0xff]
      %v519 = vld [vmem:[#allocation2 + $0x20] sm:$0xff]
      %v520 = vld [vmem:[#allocation2 + $0x28] sm:$0xff]
      %v521 = vsel %vm404, 1, 0
      %v522 = vsel %vm405, 1, 0
      %vm523 = vcmp.eq.s32.totalorder %v521, 1
      %vm524 = vcmp.eq.s32.totalorder %v522, 1
      %531 = vrot.lane.b32.xlu0 %v515, 109
      %v532 = vpop.permute.xlu0 %531
      %533 = vrot.lane.b32.xlu0 %v516, 109
      %v534 = vpop.permute.xlu0 %533
      %535 = vrot.lane.b32.xlu0 %v517, 109
      %v536 = vpop.permute.xlu0 %535
      %537 = vrot.lane.b32.xlu0 %v518, 109
      %v538 = vpop.permute.xlu0 %537
      %539 = vrot.lane.b32.xlu0 %v519, 109
      %v540 = vpop.permute.xlu0 %539
      %541 = vrot.lane.b32.xlu0 %v520, 109
      %v542 = vpop.permute.xlu0 %541
      %vm543 = vcmask 891904
      %v544 = vsel %vm543, %v532, %v534
      %v545 = vsel %vm543, %v534, %v536
      %v546 = vsel %vm543, %v538, %v540
      %v547 = vsel %vm543, %v540, %v542
      %v552 = vsel %vm523, %v544, 0.0
      %v553 = vsel %vm524, %v545, 0.0
      %v554 = vsel %vm523, %v546, 0.0
      %v555 = vsel %vm524, %v547, 0.0
      %556 = vst [vmem:[#allocation3 + $0x40] sm:$0xff] %v552
      %557 = vst [vmem:[#allocation3 + $0x48] sm:$0xff] %v553
      %558 = vst [vmem:[#allocation3 + $0x50] sm:$0xff] %v554
      %559 = vst [vmem:[#allocation3 + $0x58] sm:$0xff] %v555
      %v560 = vld [vmem:[#allocation2] sm:$0xff]
      %v561 = vld [vmem:[#allocation2 + $0x8] sm:$0xff]
      %v562 = vld [vmem:[#allocation2 + $0x10] sm:$0xff]
      %v563 = vld [vmem:[#allocation2 + $0x18] sm:$0xff]
      %v564 = vld [vmem:[#allocation2 + $0x20] sm:$0xff]
      %v565 = vld [vmem:[#allocation2 + $0x28] sm:$0xff]
      %572 = vrot.lane.b32.xlu0 %v560, 95
      %v573 = vpop.permute.xlu0 %572
      %574 = vrot.lane.b32.xlu0 %v561, 95
      %v575 = vpop.permute.xlu0 %574
      %576 = vrot.lane.b32.xlu0 %v562, 95
      %v577 = vpop.permute.xlu0 %576
      %578 = vrot.lane.b32.xlu0 %v563, 95
      %v579 = vpop.permute.xlu0 %578
      %580 = vrot.lane.b32.xlu0 %v564, 95
      %v581 = vpop.permute.xlu0 %580
      %582 = vrot.lane.b32.xlu0 %v565, 95
      %v583 = vpop.permute.xlu0 %582
      %vm584 = vcmask 777216
      %v585 = vsel %vm584, %v573, %v575
      %v586 = vsel %vm584, %v575, %v577
      %v587 = vsel %vm584, %v579, %v581
      %v588 = vsel %vm584, %v581, %v583
      %v593 = vsel %vm441, %v585, 0.0
      %v594 = vsel %vm442, %v586, 0.0
      %v595 = vsel %vm441, %v587, 0.0
      %v596 = vsel %vm442, %v588, 0.0
      %597 = vst [vmem:[#allocation3 + $0x60] sm:$0xff] %v593
      %598 = vst [vmem:[#allocation3 + $0x68] sm:$0xff] %v594
      %599 = vst [vmem:[#allocation3 + $0x70] sm:$0xff] %v595
      %600 = vst [vmem:[#allocation3 + $0x78] sm:$0xff] %v596
      %v601 = vld [vmem:[#allocation2] sm:$0xff]
      %v602 = vld [vmem:[#allocation2 + $0x8] sm:$0xff]
      %v603 = vld [vmem:[#allocation2 + $0x10] sm:$0xff]
      %v604 = vld [vmem:[#allocation2 + $0x18] sm:$0xff]
      %v605 = vld [vmem:[#allocation2 + $0x20] sm:$0xff]
      %v606 = vld [vmem:[#allocation2 + $0x28] sm:$0xff]
      %613 = vrot.lane.b32.xlu0 %v601, 94
      %v614 = vpop.permute.xlu0 %613
      %615 = vrot.lane.b32.xlu0 %v602, 94
      %v616 = vpop.permute.xlu0 %615
      %617 = vrot.lane.b32.xlu0 %v603, 94
      %v618 = vpop.permute.xlu0 %617
      %619 = vrot.lane.b32.xlu0 %v604, 94
      %v620 = vpop.permute.xlu0 %619
      %621 = vrot.lane.b32.xlu0 %v605, 94
      %v622 = vpop.permute.xlu0 %621
      %623 = vrot.lane.b32.xlu0 %v606, 94
      %v624 = vpop.permute.xlu0 %623
      %vm625 = vcmask 769024
      %v626 = vsel %vm625, %v614, %v616
      %v627 = vsel %vm625, %v616, %v618
      %v628 = vsel %vm625, %v620, %v622
      %v629 = vsel %vm625, %v622, %v624
      %634 = vst [vmem:[#allocation3 + $0x80] sm:$0xff] %v626
      %635 = vst [vmem:[#allocation3 + $0x88] sm:$0xff] %v627
      %636 = vst [vmem:[#allocation3 + $0x90] sm:$0xff] %v628
      %637 = vst [vmem:[#allocation3 + $0x98] sm:$0xff] %v629
      %v638 = vld [vmem:[#allocation2] sm:$0xff]
      %v639 = vld [vmem:[#allocation2 + $0x8] sm:$0xff]
      %v640 = vld [vmem:[#allocation2 + $0x10] sm:$0xff]
      %v641 = vld [vmem:[#allocation2 + $0x18] sm:$0xff]
      %v642 = vld [vmem:[#allocation2 + $0x20] sm:$0xff]
      %v643 = vld [vmem:[#allocation2 + $0x28] sm:$0xff]
      %650 = vrot.lane.b32.xlu0 %v638, 93
      %v651 = vpop.permute.xlu0 %650
      %652 = vrot.lane.b32.xlu0 %v639, 93
      %v653 = vpop.permute.xlu0 %652
      %654 = vrot.lane.b32.xlu0 %v640, 93
      %v655 = vpop.permute.xlu0 %654
      %656 = vrot.lane.b32.xlu0 %v641, 93
      %v657 = vpop.permute.xlu0 %656
      %658 = vrot.lane.b32.xlu0 %v642, 93
      %v659 = vpop.permute.xlu0 %658
      %660 = vrot.lane.b32.xlu0 %v643, 93
      %v661 = vpop.permute.xlu0 %660
      %vm662 = vcmask 760832
      %v663 = vsel %vm662, %v651, %v653
      %v664 = vsel %vm662, %v653, %v655
      %v665 = vsel %vm662, %v657, %v659
      %v666 = vsel %vm662, %v659, %v661
      %v671 = vsel %vm523, %v663, 0.0
      %v672 = vsel %vm524, %v664, 0.0
      %v673 = vsel %vm523, %v665, 0.0
      %v674 = vsel %vm524, %v666, 0.0
      %675 = vst [vmem:[#allocation3 + $0xa0] sm:$0xff] %v671
      %676 = vst [vmem:[#allocation3 + $0xa8] sm:$0xff] %v672
      %677 = vst [vmem:[#allocation3 + $0xb0] sm:$0xff] %v673
      %678 = vst [vmem:[#allocation3 + $0xb8] sm:$0xff] %v674
      %v679 = vld [vmem:[#allocation2] sm:$0xff]
      %v680 = vld [vmem:[#allocation2 + $0x8] sm:$0xff]
      %v681 = vld [vmem:[#allocation2 + $0x10] sm:$0xff]
      %v682 = vld [vmem:[#allocation2 + $0x18] sm:$0xff]
      %v683 = vld [vmem:[#allocation2 + $0x20] sm:$0xff]
      %v684 = vld [vmem:[#allocation2 + $0x28] sm:$0xff]
      %691 = vrot.lane.b32.xlu0 %v679, 79
      %v692 = vpop.permute.xlu0 %691
      %693 = vrot.lane.b32.xlu0 %v680, 79
      %v694 = vpop.permute.xlu0 %693
      %695 = vrot.lane.b32.xlu0 %v681, 79
      %v696 = vpop.permute.xlu0 %695
      %697 = vrot.lane.b32.xlu0 %v682, 79
      %v698 = vpop.permute.xlu0 %697
      %699 = vrot.lane.b32.xlu0 %v683, 79
      %v700 = vpop.permute.xlu0 %699
      %701 = vrot.lane.b32.xlu0 %v684, 79
      %v702 = vpop.permute.xlu0 %701
      %vm703 = vcmask 646144
      %v704 = vsel %vm703, %v692, %v694
      %v705 = vsel %vm703, %v694, %v696
      %v706 = vsel %vm703, %v698, %v700
      %v707 = vsel %vm703, %v700, %v702
      %v712 = vsel %vm441, %v704, 0.0
      %v713 = vsel %vm442, %v705, 0.0
      %v714 = vsel %vm441, %v706, 0.0
      %v715 = vsel %vm442, %v707, 0.0
      %716 = vst [vmem:[#allocation3 + $0xc0] sm:$0xff] %v712
      %717 = vst [vmem:[#allocation3 + $0xc8] sm:$0xff] %v713
      %718 = vst [vmem:[#allocation3 + $0xd0] sm:$0xff] %v714
      %719 = vst [vmem:[#allocation3 + $0xd8] sm:$0xff] %v715
      %v720 = vld [vmem:[#allocation2] sm:$0xff]
      %v721 = vld [vmem:[#allocation2 + $0x8] sm:$0xff]
      %v722 = vld [vmem:[#allocation2 + $0x10] sm:$0xff]
      %v723 = vld [vmem:[#allocation2 + $0x18] sm:$0xff]
      %v724 = vld [vmem:[#allocation2 + $0x20] sm:$0xff]
      %v725 = vld [vmem:[#allocation2 + $0x28] sm:$0xff]
      %732 = vrot.lane.b32.xlu0 %v720, 78
      %v733 = vpop.permute.xlu0 %732
      %734 = vrot.lane.b32.xlu0 %v721, 78
      %v735 = vpop.permute.xlu0 %734
      %736 = vrot.lane.b32.xlu0 %v722, 78
      %v737 = vpop.permute.xlu0 %736
      %738 = vrot.lane.b32.xlu0 %v723, 78
      %v739 = vpop.permute.xlu0 %738
      %740 = vrot.lane.b32.xlu0 %v724, 78
      %v741 = vpop.permute.xlu0 %740
      %742 = vrot.lane.b32.xlu0 %v725, 78
      %v743 = vpop.permute.xlu0 %742
      %vm744 = vcmask 637952
      %v745 = vsel %vm744, %v733, %v735
      %v746 = vsel %vm744, %v735, %v737
      %v747 = vsel %vm744, %v739, %v741
      %v748 = vsel %vm744, %v741, %v743
      %753 = vst [vmem:[#allocation3 + $0xe0] sm:$0xff] %v745
      %754 = vst [vmem:[#allocation3 + $0xe8] sm:$0xff] %v746
      %755 = vst [vmem:[#allocation3 + $0xf0] sm:$0xff] %v747
      %756 = vst [vmem:[#allocation3 + $0xf8] sm:$0xff] %v748
      %v757 = vld [vmem:[#allocation2] sm:$0xff]
      %v758 = vld [vmem:[#allocation2 + $0x8] sm:$0xff]
      %v759 = vld [vmem:[#allocation2 + $0x10] sm:$0xff]
      %v760 = vld [vmem:[#allocation2 + $0x18] sm:$0xff]
      %v761 = vld [vmem:[#allocation2 + $0x20] sm:$0xff]
      %v762 = vld [vmem:[#allocation2 + $0x28] sm:$0xff]
      %769 = vrot.lane.b32.xlu0 %v757, 77
      %v770 = vpop.permute.xlu0 %769
      %771 = vrot.lane.b32.xlu0 %v758, 77
      %v772 = vpop.permute.xlu0 %771
      %773 = vrot.lane.b32.xlu0 %v759, 77
      %v774 = vpop.permute.xlu0 %773
      %775 = vrot.lane.b32.xlu0 %v760, 77
      %v776 = vpop.permute.xlu0 %775
      %777 = vrot.lane.b32.xlu0 %v761, 77
      %v778 = vpop.permute.xlu0 %777
      %779 = vrot.lane.b32.xlu0 %v762, 77
      %v780 = vpop.permute.xlu0 %779
      %vm781 = vcmask 629760
      %v782 = vsel %vm781, %v770, %v772
      %v783 = vsel %vm781, %v772, %v774
      %v784 = vsel %vm781, %v776, %v778
      %v785 = vsel %vm781, %v778, %v780
      %v790 = vsel %vm523, %v782, 0.0
      %v791 = vsel %vm524, %v783, 0.0
      %v792 = vsel %vm523, %v784, 0.0
      %v793 = vsel %vm524, %v785, 0.0
      %794 = vst [vmem:[#allocation3 + $0x100] sm:$0xff] %v790
      %795 = vst [vmem:[#allocation3 + $0x108] sm:$0xff] %v791
      %796 = vst [vmem:[#allocation3 + $0x110] sm:$0xff] %v792
      %797 = vst [vmem:[#allocation3 + $0x118] sm:$0xff] %v793
      %802 = vrot.lane.b32.xlu0 %v409, 34
      %v803 = vpop.permute.xlu0 %802
      %804 = vrot.lane.b32.xlu0 %v410, 34
      %v805 = vpop.permute.xlu0 %804
      %806 = vrot.lane.b32.xlu0 %v411, 34
      %v807 = vpop.permute.xlu0 %806
      %808 = vrot.lane.b32.xlu0 %v412, 34
      %v809 = vpop.permute.xlu0 %808
      %v810 = vsel %vm423, %v803, %v805
      %v811 = vsel %vm423, %v807, %v809
      %vm818 = vcmask 1047824
      %819 = vst.msk [vmem:[#allocation2] sm:$0xff] %vm818, %v803
      %820 = vst [vmem:[#allocation2 + $0x8] sm:$0xff] %v810
      %821 = vst.msk [vmem:[#allocation2 + $0x10] sm:$0xff] %vm423, %v805
      %822 = vst.msk [vmem:[#allocation2 + $0x18] sm:$0xff] %vm818, %v807
      %823 = vst [vmem:[#allocation2 + $0x20] sm:$0xff] %v811
      %824 = vst.msk [vmem:[#allocation2 + $0x28] sm:$0xff] %vm423, %v809
      %v825 = vld [vmem:[#allocation2] sm:$0xff]
      %v826 = vld [vmem:[#allocation2 + $0x8] sm:$0xff]
      %v827 = vld [vmem:[#allocation2 + $0x10] sm:$0xff]
      %v828 = vld [vmem:[#allocation2 + $0x18] sm:$0xff]
      %v829 = vld [vmem:[#allocation2 + $0x20] sm:$0xff]
      %v830 = vld [vmem:[#allocation2 + $0x28] sm:$0xff]
      %837 = vrot.lane.b32.xlu0 %v825, 111
      %v838 = vpop.permute.xlu0 %837
      %839 = vrot.lane.b32.xlu0 %v826, 111
      %v840 = vpop.permute.xlu0 %839
      %841 = vrot.lane.b32.xlu0 %v827, 111
      %v842 = vpop.permute.xlu0 %841
      %843 = vrot.lane.b32.xlu0 %v828, 111
      %v844 = vpop.permute.xlu0 %843
      %845 = vrot.lane.b32.xlu0 %v829, 111
      %v846 = vpop.permute.xlu0 %845
      %847 = vrot.lane.b32.xlu0 %v830, 111
      %v848 = vpop.permute.xlu0 %847
      %v849 = vsel %vm461, %v838, %v840
      %v850 = vsel %vm461, %v840, %v842
      %v851 = vsel %vm461, %v844, %v846
      %v852 = vsel %vm461, %v846, %v848
      %v857 = vsel %vm441, %v849, 0.0
      %v858 = vsel %vm442, %v850, 0.0
      %v859 = vsel %vm441, %v851, 0.0
      %v860 = vsel %vm442, %v852, 0.0
      %861 = vst [vmem:[#allocation3 + $0x120] sm:$0xff] %v857
      %862 = vst [vmem:[#allocation3 + $0x128] sm:$0xff] %v858
      %863 = vst [vmem:[#allocation3 + $0x130] sm:$0xff] %v859
      %864 = vst [vmem:[#allocation3 + $0x138] sm:$0xff] %v860
      %v865 = vld [vmem:[#allocation2] sm:$0xff]
      %v866 = vld [vmem:[#allocation2 + $0x8] sm:$0xff]
      %v867 = vld [vmem:[#allocation2 + $0x10] sm:$0xff]
      %v868 = vld [vmem:[#allocation2 + $0x18] sm:$0xff]
      %v869 = vld [vmem:[#allocation2 + $0x20] sm:$0xff]
      %v870 = vld [vmem:[#allocation2 + $0x28] sm:$0xff]
      %877 = vrot.lane.b32.xlu0 %v865, 110
      %v878 = vpop.permute.xlu0 %877
      %879 = vrot.lane.b32.xlu0 %v866, 110
      %v880 = vpop.permute.xlu0 %879
      %881 = vrot.lane.b32.xlu0 %v867, 110
      %v882 = vpop.permute.xlu0 %881
      %883 = vrot.lane.b32.xlu0 %v868, 110
      %v884 = vpop.permute.xlu0 %883
      %885 = vrot.lane.b32.xlu0 %v869, 110
      %v886 = vpop.permute.xlu0 %885
      %887 = vrot.lane.b32.xlu0 %v870, 110
      %v888 = vpop.permute.xlu0 %887
      %v889 = vsel %vm502, %v878, %v880
      %v890 = vsel %vm502, %v880, %v882
      %v891 = vsel %vm502, %v884, %v886
      %v892 = vsel %vm502, %v886, %v888
      %897 = vst [vmem:[#allocation3 + $0x140] sm:$0xff] %v889
      %898 = vst [vmem:[#allocation3 + $0x148] sm:$0xff] %v890
      %899 = vst [vmem:[#allocation3 + $0x150] sm:$0xff] %v891
      %900 = vst [vmem:[#allocation3 + $0x158] sm:$0xff] %v892
      %v901 = vld [vmem:[#allocation2] sm:$0xff]
      %v902 = vld [vmem:[#allocation2 + $0x8] sm:$0xff]
      %v903 = vld [vmem:[#allocation2 + $0x10] sm:$0xff]
      %v904 = vld [vmem:[#allocation2 + $0x18] sm:$0xff]
      %v905 = vld [vmem:[#allocation2 + $0x20] sm:$0xff]
      %v906 = vld [vmem:[#allocation2 + $0x28] sm:$0xff]
      %913 = vrot.lane.b32.xlu0 %v901, 109
      %v914 = vpop.permute.xlu0 %913
      %915 = vrot.lane.b32.xlu0 %v902, 109
      %v916 = vpop.permute.xlu0 %915
      %917 = vrot.lane.b32.xlu0 %v903, 109
      %v918 = vpop.permute.xlu0 %917
      %919 = vrot.lane.b32.xlu0 %v904, 109
      %v920 = vpop.permute.xlu0 %919
      %921 = vrot.lane.b32.xlu0 %v905, 109
      %v922 = vpop.permute.xlu0 %921
      %923 = vrot.lane.b32.xlu0 %v906, 109
      %v924 = vpop.permute.xlu0 %923
      %v925 = vsel %vm543, %v914, %v916
      %v926 = vsel %vm543, %v916, %v918
      %v927 = vsel %vm543, %v920, %v922
      %v928 = vsel %vm543, %v922, %v924
      %v933 = vsel %vm523, %v925, 0.0
      %v934 = vsel %vm524, %v926, 0.0
      %v935 = vsel %vm523, %v927, 0.0
      %v936 = vsel %vm524, %v928, 0.0
      %937 = vst [vmem:[#allocation3 + $0x160] sm:$0xff] %v933
      %938 = vst [vmem:[#allocation3 + $0x168] sm:$0xff] %v934
      %939 = vst [vmem:[#allocation3 + $0x170] sm:$0xff] %v935
      %940 = vst [vmem:[#allocation3 + $0x178] sm:$0xff] %v936
      %v941 = vld [vmem:[#allocation2] sm:$0xff]
      %v942 = vld [vmem:[#allocation2 + $0x8] sm:$0xff]
      %v943 = vld [vmem:[#allocation2 + $0x10] sm:$0xff]
      %v944 = vld [vmem:[#allocation2 + $0x18] sm:$0xff]
      %v945 = vld [vmem:[#allocation2 + $0x20] sm:$0xff]
      %v946 = vld [vmem:[#allocation2 + $0x28] sm:$0xff]
      %953 = vrot.lane.b32.xlu0 %v941, 95
      %v954 = vpop.permute.xlu0 %953
      %955 = vrot.lane.b32.xlu0 %v942, 95
      %v956 = vpop.permute.xlu0 %955
      %957 = vrot.lane.b32.xlu0 %v943, 95
      %v958 = vpop.permute.xlu0 %957
      %959 = vrot.lane.b32.xlu0 %v944, 95
      %v960 = vpop.permute.xlu0 %959
      %961 = vrot.lane.b32.xlu0 %v945, 95
      %v962 = vpop.permute.xlu0 %961
      %963 = vrot.lane.b32.xlu0 %v946, 95
      %v964 = vpop.permute.xlu0 %963
      %v965 = vsel %vm584, %v954, %v956
      %v966 = vsel %vm584, %v956, %v958
      %v967 = vsel %vm584, %v960, %v962
      %v968 = vsel %vm584, %v962, %v964
      %v973 = vsel %vm441, %v965, 0.0
      %v974 = vsel %vm442, %v966, 0.0
      %v975 = vsel %vm441, %v967, 0.0
      %v976 = vsel %vm442, %v968, 0.0
      %977 = vst [vmem:[#allocation3 + $0x180] sm:$0xff] %v973
      %978 = vst [vmem:[#allocation3 + $0x188] sm:$0xff] %v974
      %979 = vst [vmem:[#allocation3 + $0x190] sm:$0xff] %v975
      %980 = vst [vmem:[#allocation3 + $0x198] sm:$0xff] %v976
      %v981 = vld [vmem:[#allocation2] sm:$0xff]
      %v982 = vld [vmem:[#allocation2 + $0x8] sm:$0xff]
      %v983 = vld [vmem:[#allocation2 + $0x10] sm:$0xff]
      %v984 = vld [vmem:[#allocation2 + $0x18] sm:$0xff]
      %v985 = vld [vmem:[#allocation2 + $0x20] sm:$0xff]
      %v986 = vld [vmem:[#allocation2 + $0x28] sm:$0xff]
      %993 = vrot.lane.b32.xlu0 %v981, 94
      %v994 = vpop.permute.xlu0 %993
      %995 = vrot.lane.b32.xlu0 %v982, 94
      %v996 = vpop.permute.xlu0 %995
      %997 = vrot.lane.b32.xlu0 %v983, 94
      %v998 = vpop.permute.xlu0 %997
      %999 = vrot.lane.b32.xlu0 %v984, 94
      %v1000 = vpop.permute.xlu0 %999
      %1001 = vrot.lane.b32.xlu0 %v985, 94
      %v1002 = vpop.permute.xlu0 %1001
      %1003 = vrot.lane.b32.xlu0 %v986, 94
      %v1004 = vpop.permute.xlu0 %1003
      %v1005 = vsel %vm625, %v994, %v996
      %v1006 = vsel %vm625, %v996, %v998
      %v1007 = vsel %vm625, %v1000, %v1002
      %v1008 = vsel %vm625, %v1002, %v1004
      %1013 = vst [vmem:[#allocation3 + $0x1a0] sm:$0xff] %v1005
      %1014 = vst [vmem:[#allocation3 + $0x1a8] sm:$0xff] %v1006
      %1015 = vst [vmem:[#allocation3 + $0x1b0] sm:$0xff] %v1007
      %1016 = vst [vmem:[#allocation3 + $0x1b8] sm:$0xff] %v1008
      %v1017 = vld [vmem:[#allocation2] sm:$0xff]
      %v1018 = vld [vmem:[#allocation2 + $0x8] sm:$0xff]
      %v1019 = vld [vmem:[#allocation2 + $0x10] sm:$0xff]
      %v1020 = vld [vmem:[#allocation2 + $0x18] sm:$0xff]
      %v1021 = vld [vmem:[#allocation2 + $0x20] sm:$0xff]
      %v1022 = vld [vmem:[#allocation2 + $0x28] sm:$0xff]
      %1029 = vrot.lane.b32.xlu0 %v1017, 93
      %v1030 = vpop.permute.xlu0 %1029
      %1031 = vrot.lane.b32.xlu0 %v1018, 93
      %v1032 = vpop.permute.xlu0 %1031
      %1033 = vrot.lane.b32.xlu0 %v1019, 93
      %v1034 = vpop.permute.xlu0 %1033
      %1035 = vrot.lane.b32.xlu0 %v1020, 93
      %v1036 = vpop.permute.xlu0 %1035
      %1037 = vrot.lane.b32.xlu0 %v1021, 93
      %v1038 = vpop.permute.xlu0 %1037
      %1039 = vrot.lane.b32.xlu0 %v1022, 93
      %v1040 = vpop.permute.xlu0 %1039
      %v1041 = vsel %vm662, %v1030, %v1032
      %v1042 = vsel %vm662, %v1032, %v1034
      %v1043 = vsel %vm662, %v1036, %v1038
      %v1044 = vsel %vm662, %v1038, %v1040
      %v1049 = vsel %vm523, %v1041, 0.0
      %v1050 = vsel %vm524, %v1042, 0.0
      %v1051 = vsel %vm523, %v1043, 0.0
      %v1052 = vsel %vm524, %v1044, 0.0
      %1053 = vst [vmem:[#allocation3 + $0x1c0] sm:$0xff] %v1049
      %1054 = vst [vmem:[#allocation3 + $0x1c8] sm:$0xff] %v1050
      %1055 = vst [vmem:[#allocation3 + $0x1d0] sm:$0xff] %v1051
      %1056 = vst [vmem:[#allocation3 + $0x1d8] sm:$0xff] %v1052
      %v1057 = vld [vmem:[#allocation2] sm:$0xff]
      %v1058 = vld [vmem:[#allocation2 + $0x8] sm:$0xff]
      %v1059 = vld [vmem:[#allocation2 + $0x10] sm:$0xff]
      %v1060 = vld [vmem:[#allocation2 + $0x18] sm:$0xff]
      %v1061 = vld [vmem:[#allocation2 + $0x20] sm:$0xff]
      %v1062 = vld [vmem:[#allocation2 + $0x28] sm:$0xff]
      %1069 = vrot.lane.b32.xlu0 %v1057, 79
      %v1070 = vpop.permute.xlu0 %1069
      %1071 = vrot.lane.b32.xlu0 %v1058, 79
      %v1072 = vpop.permute.xlu0 %1071
      %1073 = vrot.lane.b32.xlu0 %v1059, 79
      %v1074 = vpop.permute.xlu0 %1073
      %1075 = vrot.lane.b32.xlu0 %v1060, 79
      %v1076 = vpop.permute.xlu0 %1075
      %1077 = vrot.lane.b32.xlu0 %v1061, 79
      %v1078 = vpop.permute.xlu0 %1077
      %1079 = vrot.lane.b32.xlu0 %v1062, 79
      %v1080 = vpop.permute.xlu0 %1079
      %v1081 = vsel %vm703, %v1070, %v1072
      %v1082 = vsel %vm703, %v1072, %v1074
      %v1083 = vsel %vm703, %v1076, %v1078
      %v1084 = vsel %vm703, %v1078, %v1080
      %v1089 = vsel %vm441, %v1081, 0.0
      %v1090 = vsel %vm442, %v1082, 0.0
      %v1091 = vsel %vm441, %v1083, 0.0
      %v1092 = vsel %vm442, %v1084, 0.0
      %1093 = vst [vmem:[#allocation3 + $0x1e0] sm:$0xff] %v1089
      %1094 = vst [vmem:[#allocation3 + $0x1e8] sm:$0xff] %v1090
      %1095 = vst [vmem:[#allocation3 + $0x1f0] sm:$0xff] %v1091
      %1096 = vst [vmem:[#allocation3 + $0x1f8] sm:$0xff] %v1092
      %v1097 = vld [vmem:[#allocation2] sm:$0xff]
      %v1098 = vld [vmem:[#allocation2 + $0x8] sm:$0xff]
      %v1099 = vld [vmem:[#allocation2 + $0x10] sm:$0xff]
      %v1100 = vld [vmem:[#allocation2 + $0x18] sm:$0xff]
      %v1101 = vld [vmem:[#allocation2 + $0x20] sm:$0xff]
      %v1102 = vld [vmem:[#allocation2 + $0x28] sm:$0xff]
      %1109 = vrot.lane.b32.xlu0 %v1097, 78
      %v1110 = vpop.permute.xlu0 %1109
      %1111 = vrot.lane.b32.xlu0 %v1098, 78
      %v1112 = vpop.permute.xlu0 %1111
      %1113 = vrot.lane.b32.xlu0 %v1099, 78
      %v1114 = vpop.permute.xlu0 %1113
      %1115 = vrot.lane.b32.xlu0 %v1100, 78
      %v1116 = vpop.permute.xlu0 %1115
      %1117 = vrot.lane.b32.xlu0 %v1101, 78
      %v1118 = vpop.permute.xlu0 %1117
      %1119 = vrot.lane.b32.xlu0 %v1102, 78
      %v1120 = vpop.permute.xlu0 %1119
      %v1121 = vsel %vm744, %v1110, %v1112
      %v1122 = vsel %vm744, %v1112, %v1114
      %v1123 = vsel %vm744, %v1116, %v1118
      %v1124 = vsel %vm744, %v1118, %v1120
      %1129 = vst [vmem:[#allocation3 + $0x200] sm:$0xff] %v1121
      %1130 = vst [vmem:[#allocation3 + $0x208] sm:$0xff] %v1122
      %1131 = vst [vmem:[#allocation3 + $0x210] sm:$0xff] %v1123
      %1132 = vst [vmem:[#allocation3 + $0x218] sm:$0xff] %v1124
      %v1133 = vld [vmem:[#allocation2] sm:$0xff]
      %v1134 = vld [vmem:[#allocation2 + $0x8] sm:$0xff]
      %v1135 = vld [vmem:[#allocation2 + $0x10] sm:$0xff]
      %v1136 = vld [vmem:[#allocation2 + $0x18] sm:$0xff]
      %v1137 = vld [vmem:[#allocation2 + $0x20] sm:$0xff]
      %v1138 = vld [vmem:[#allocation2 + $0x28] sm:$0xff]
      %1145 = vrot.lane.b32.xlu0 %v1133, 77
      %v1146 = vpop.permute.xlu0 %1145
      %1147 = vrot.lane.b32.xlu0 %v1134, 77
      %v1148 = vpop.permute.xlu0 %1147
      %1149 = vrot.lane.b32.xlu0 %v1135, 77
      %v1150 = vpop.permute.xlu0 %1149
      %1151 = vrot.lane.b32.xlu0 %v1136, 77
      %v1152 = vpop.permute.xlu0 %1151
      %1153 = vrot.lane.b32.xlu0 %v1137, 77
      %v1154 = vpop.permute.xlu0 %1153
      %1155 = vrot.lane.b32.xlu0 %v1138, 77
      %v1156 = vpop.permute.xlu0 %1155
      %v1157 = vsel %vm781, %v1146, %v1148
      %v1158 = vsel %vm781, %v1148, %v1150
      %v1159 = vsel %vm781, %v1152, %v1154
      %v1160 = vsel %vm781, %v1154, %v1156
      %v1165 = vsel %vm523, %v1157, 0.0
      %v1166 = vsel %vm524, %v1158, 0.0
      %v1167 = vsel %vm523, %v1159, 0.0
      %v1168 = vsel %vm524, %v1160, 0.0
      %1169 = vst [vmem:[#allocation3 + $0x220] sm:$0xff] %v1165
      %1170 = vst [vmem:[#allocation3 + $0x228] sm:$0xff] %v1166
      %1171 = vst [vmem:[#allocation3 + $0x230] sm:$0xff] %v1167
      %1172 = vst [vmem:[#allocation3 + $0x238] sm:$0xff] %v1168
      %v1173 = vld [vmem:[%s2] sm:$0xff]
      %v1174 = vld [vmem:[%s2 + $0x8] sm:$0xff]
      %v1175 = vld [vmem:[%s2 + $0x10] sm:$0xff]
      %v1176 = vld [vmem:[%s2 + $0x18] sm:$0xff]
      %v1177 = vld [vmem:[%s2 + $0x20] sm:$0xff]
      %v1178 = vld [vmem:[%s2 + $0x28] sm:$0xff]
      %v1179 = vld [vmem:[%s2 + $0x30] sm:$0xff]
      %v1180 = vld [vmem:[%s2 + $0x38] sm:$0xff]
      %v1181 = vld [vmem:[%s2 + $0x40] sm:$0xff]
      %v1182 = vld [vmem:[%s2 + $0x48] sm:$0xff]
      %v1183 = vld [vmem:[%s2 + $0x50] sm:$0xff]
      %v1184 = vld [vmem:[%s2 + $0x58] sm:$0xff]
      %v1185 = vld [vmem:[#allocation3] sm:$0xff]
      %v1186 = vld [vmem:[#allocation3 + $0x8] sm:$0xff]
      %v1187 = vld [vmem:[#allocation3 + $0x10] sm:$0xff]
      %v1188 = vld [vmem:[#allocation3 + $0x18] sm:$0xff]
      %v1189 = vld [vmem:[#allocation3 + $0x20] sm:$0xff]
      %v1190 = vld [vmem:[#allocation3 + $0x28] sm:$0xff]
      %v1191 = vld [vmem:[#allocation3 + $0x30] sm:$0xff]
      %v1192 = vld [vmem:[#allocation3 + $0x38] sm:$0xff]
      %v1193 = vld [vmem:[#allocation3 + $0x40] sm:$0xff]
      %v1194 = vld [vmem:[#allocation3 + $0x48] sm:$0xff]
      %v1195 = vld [vmem:[#allocation3 + $0x50] sm:$0xff]
      %v1196 = vld [vmem:[#allocation3 + $0x58] sm:$0xff]
      %v1197 = vld [vmem:[#allocation3 + $0x60] sm:$0xff]
      %v1198 = vld [vmem:[#allocation3 + $0x68] sm:$0xff]
      %v1199 = vld [vmem:[#allocation3 + $0x70] sm:$0xff]
      %v1200 = vld [vmem:[#allocation3 + $0x78] sm:$0xff]
      %v1201 = vld [vmem:[#allocation3 + $0x80] sm:$0xff]
      %v1202 = vld [vmem:[#allocation3 + $0x88] sm:$0xff]
      %v1203 = vld [vmem:[#allocation3 + $0x90] sm:$0xff]
      %v1204 = vld [vmem:[#allocation3 + $0x98] sm:$0xff]
      %v1205 = vld [vmem:[#allocation3 + $0xa0] sm:$0xff]
      %v1206 = vld [vmem:[#allocation3 + $0xa8] sm:$0xff]
      %v1207 = vld [vmem:[#allocation3 + $0xb0] sm:$0xff]
      %v1208 = vld [vmem:[#allocation3 + $0xb8] sm:$0xff]
      %v1209 = vld [vmem:[#allocation3 + $0xc0] sm:$0xff]
      %v1210 = vld [vmem:[#allocation3 + $0xc8] sm:$0xff]
      %v1211 = vld [vmem:[#allocation3 + $0xd0] sm:$0xff]
      %v1212 = vld [vmem:[#allocation3 + $0xd8] sm:$0xff]
      %v1213 = vld [vmem:[#allocation3 + $0xe0] sm:$0xff]
      %v1214 = vld [vmem:[#allocation3 + $0xe8] sm:$0xff]
      %v1215 = vld [vmem:[#allocation3 + $0xf0] sm:$0xff]
      %v1216 = vld [vmem:[#allocation3 + $0xf8] sm:$0xff]
      %v1217 = vld [vmem:[#allocation3 + $0x100] sm:$0xff]
      %v1218 = vld [vmem:[#allocation3 + $0x108] sm:$0xff]
      %v1219 = vld [vmem:[#allocation3 + $0x110] sm:$0xff]
      %v1220 = vld [vmem:[#allocation3 + $0x118] sm:$0xff]
      %v1221 = vld [vmem:[#allocation3 + $0x120] sm:$0xff]
      %v1222 = vld [vmem:[#allocation3 + $0x128] sm:$0xff]
      %v1223 = vld [vmem:[#allocation3 + $0x130] sm:$0xff]
      %v1224 = vld [vmem:[#allocation3 + $0x138] sm:$0xff]
      %v1225 = vld [vmem:[#allocation3 + $0x140] sm:$0xff]
      %v1226 = vld [vmem:[#allocation3 + $0x148] sm:$0xff]
      %v1227 = vld [vmem:[#allocation3 + $0x150] sm:$0xff]
      %v1228 = vld [vmem:[#allocation3 + $0x158] sm:$0xff]
      %v1229 = vld [vmem:[#allocation3 + $0x160] sm:$0xff]
      %v1230 = vld [vmem:[#allocation3 + $0x168] sm:$0xff]
      %v1231 = vld [vmem:[#allocation3 + $0x170] sm:$0xff]
      %v1232 = vld [vmem:[#allocation3 + $0x178] sm:$0xff]
      %v1233 = vld [vmem:[#allocation3 + $0x180] sm:$0xff]
      %v1234 = vld [vmem:[#allocation3 + $0x188] sm:$0xff]
      %v1235 = vld [vmem:[#allocation3 + $0x190] sm:$0xff]
      %v1236 = vld [vmem:[#allocation3 + $0x198] sm:$0xff]
      %v1237 = vld [vmem:[#allocation3 + $0x1a0] sm:$0xff]
      %v1238 = vld [vmem:[#allocation3 + $0x1a8] sm:$0xff]
      %v1239 = vld [vmem:[#allocation3 + $0x1b0] sm:$0xff]
      %v1240 = vld [vmem:[#allocation3 + $0x1b8] sm:$0xff]
      %v1241 = vld [vmem:[#allocation3 + $0x1c0] sm:$0xff]
      %v1242 = vld [vmem:[#allocation3 + $0x1c8] sm:$0xff]
      %v1243 = vld [vmem:[#allocation3 + $0x1d0] sm:$0xff]
      %v1244 = vld [vmem:[#allocation3 + $0x1d8] sm:$0xff]
      %v1245 = vld [vmem:[#allocation3 + $0x1e0] sm:$0xff]
      %v1246 = vld [vmem:[#allocation3 + $0x1e8] sm:$0xff]
      %v1247 = vld [vmem:[#allocation3 + $0x1f0] sm:$0xff]
      %v1248 = vld [vmem:[#allocation3 + $0x1f8] sm:$0xff]
      %v1249 = vld [vmem:[#allocation3 + $0x200] sm:$0xff]
      %v1250 = vld [vmem:[#allocation3 + $0x208] sm:$0xff]
      %v1251 = vld [vmem:[#allocation3 + $0x210] sm:$0xff]
      %v1252 = vld [vmem:[#allocation3 + $0x218] sm:$0xff]
      %v1253 = vld [vmem:[#allocation3 + $0x220] sm:$0xff]
      %v1254 = vld [vmem:[#allocation3 + $0x228] sm:$0xff]
      %v1255 = vld [vmem:[#allocation3 + $0x230] sm:$0xff]
      %v1256 = vld [vmem:[#allocation3 + $0x238] sm:$0xff]
      %vm1257 = vcmask 261120
      %v1259 = vsel %vm1257, %v1175, 0
      %v1262 = vsel %vm1257, %v1178, 0
      %v1265 = vsel %vm1257, %v1181, 0
      %v1268 = vsel %vm1257, %v1184, 0
      %1270 = vmatprep.subr.mxu0 %v1216
      %1271 = vmatpush1.msra.mxu0 %v1215
      %1272 = vmatprep.subr.mxu0 %v1214
      %1273 = vmatpush1.msra.mxu0 %v1213
      %1274 = vmatprep.subr.mxu0 %v1212
      %1275 = vmatpush1.msra.mxu0 %v1211
      %1276 = vmatprep.subr.mxu0 %v1210
      %1277 = vmatpush1.msra.mxu0 %v1209
      %1278 = vmatprep.subr.mxu0 %v1208
      %1279 = vmatpush1.msra.mxu0 %v1207
      %1280 = vmatprep.subr.mxu0 %v1206
      %1281 = vmatpush1.msra.mxu0 %v1205
      %1282 = vmatprep.subr.mxu0 %v1204
      %1283 = vmatpush1.msra.mxu0 %v1203
      %1284 = vmatprep.subr.mxu0 %v1202
      %1285 = vmatpush1.msra.mxu0 %v1201
      %1286 = vmatprep.subr.mxu0 %v1200
      %1287 = vmatpush1.msra.mxu0 %v1199
      %1288 = vmatprep.subr.mxu0 %v1198
      %1289 = vmatpush1.msra.mxu0 %v1197
      %1290 = vmatprep.subr.mxu0 %v1196
      %1291 = vmatpush1.msra.mxu0 %v1195
      %1292 = vmatprep.subr.mxu0 %v1194
      %1293 = vmatpush1.msra.mxu0 %v1193
      %1294 = vmatprep.subr.mxu0 %v1192
      %1295 = vmatpush1.msra.mxu0 %v1191
      %1296 = vmatprep.subr.mxu0 %v1190
      %1297 = vmatpush1.msra.mxu0 %v1189
      %1298 = vmatprep.subr.mxu0 %v1188
      %1299 = vmatpush1.msra.mxu0 %v1187
      %1300 = vmatprep.subr.mxu0 %v1186
      %1301 = vmatpush1.msra.mxu0 %v1185
      %1302 = vmatprep.subr.mxu0 %v1248
      %1303 = vmatpush2.msra.mxu0 %v1247
      %1304 = vmatprep.subr.mxu0 %v1246
      %1305 = vmatpush2.msra.mxu0 %v1245
      %1306 = vmatprep.subr.mxu0 %v1244
      %1307 = vmatpush2.msra.mxu0 %v1243
      %1308 = vmatprep.subr.mxu0 %v1242
      %1309 = vmatpush2.msra.mxu0 %v1241
      %1310 = vmatprep.subr.mxu0 %v1240
      %1311 = vmatpush2.msra.mxu0 %v1239
      %1312 = vmatprep.subr.mxu0 %v1238
      %1313 = vmatpush2.msra.mxu0 %v1237
      %1314 = vmatprep.subr.mxu0 %v1236
      %1315 = vmatpush2.msra.mxu0 %v1235
      %1316 = vmatprep.subr.mxu0 %v1234
      %1317 = vmatpush2.msra.mxu0 %v1233
      %1318 = vmatprep.subr.mxu0 %v1232
      %1319 = vmatpush2.msra.mxu0 %v1231
      %1320 = vmatprep.subr.mxu0 %v1230
      %1321 = vmatpush2.msra.mxu0 %v1229
      %1322 = vmatprep.subr.mxu0 %v1228
      %1323 = vmatpush2.msra.mxu0 %v1227
      %1324 = vmatprep.subr.mxu0 %v1226
      %1325 = vmatpush2.msra.mxu0 %v1225
      %1326 = vmatprep.subr.mxu0 %v1224
      %1327 = vmatpush2.msra.mxu0 %v1223
      %1328 = vmatprep.subr.mxu0 %v1222
      %1329 = vmatpush2.msra.mxu0 %v1221
      %1330 = vmatprep.subr.mxu0 %v1220
      %1331 = vmatpush2.msra.mxu0 %v1219
      %1332 = vmatprep.subr.mxu0 %v1218
      %1333 = vmatpush2.msra.mxu0 %v1217
      %1334 = vmatprep.mubr.f32.mxu0 %v1174
      %1335 = vmatmul.mubr.f32.gmra.mxu0 %v1173
      %v1336 = vpop.f32.mrf.mxu0
      %v1337 = vadd.f32 0.0, %v1336
      %v1338 = vpop.f32.mrf.mxu0
      %v1339 = vadd.f32 0.0, %v1338
      %1340 = vmatprep.mubr.f32.mxu0 %v1177
      %1341 = vmatmul.mubr.f32.gmra.mxu0 %v1176
      %v1342 = vpop.f32.mrf.mxu0
      %v1343 = vadd.f32 0.0, %v1342
      %v1344 = vpop.f32.mrf.mxu0
      %v1345 = vadd.f32 0.0, %v1344
      %1346 = vmatprep.mubr.f32.mxu0 %v1180
      %1347 = vmatmul.mubr.f32.gmra.mxu0 %v1179
      %v1348 = vpop.f32.mrf.mxu0
      %v1349 = vadd.f32 0.0, %v1348
      %v1350 = vpop.f32.mrf.mxu0
      %v1351 = vadd.f32 0.0, %v1350
      %1352 = vmatprep.mubr.f32.mxu0 %v1183
      %1353 = vmatmul.mubr.f32.gmra.mxu0 %v1182
      %v1354 = vpop.f32.mrf.mxu0
      %v1355 = vadd.f32 0.0, %v1354
      %v1356 = vpop.f32.mrf.mxu0
      %v1357 = vadd.f32 0.0, %v1356
      %1358 = vdwg.mxu0
      %1359 = vmatprep.subr.mxu0 0.0
      %1360 = vmatpush1.msra.mxu0 0.0
      %1361 = vmatprep.subr.mxu0 0.0
      %1362 = vmatpush1.msra.mxu0 0.0
      %1363 = vmatprep.subr.mxu0 0.0
      %1364 = vmatpush1.msra.mxu0 0.0
      %1365 = vmatprep.subr.mxu0 0.0
      %1366 = vmatpush1.msra.mxu0 0.0
      %1367 = vmatprep.subr.mxu0 0.0
      %1368 = vmatpush1.msra.mxu0 0.0
      %1369 = vmatprep.subr.mxu0 0.0
      %1370 = vmatpush1.msra.mxu0 0.0
      %1371 = vmatprep.subr.mxu0 0.0
      %1372 = vmatpush1.msra.mxu0 0.0
      %1373 = vmatprep.subr.mxu0 0.0
      %1374 = vmatpush1.msra.mxu0 0.0
      %1375 = vmatprep.subr.mxu0 0.0
      %1376 = vmatpush1.msra.mxu0 0.0
      %1377 = vmatprep.subr.mxu0 0.0
      %1378 = vmatpush1.msra.mxu0 0.0
      %1379 = vmatprep.subr.mxu0 0.0
      %1380 = vmatpush1.msra.mxu0 0.0
      %1381 = vmatprep.subr.mxu0 0.0
      %1382 = vmatpush1.msra.mxu0 0.0
      %1383 = vmatprep.subr.mxu0 %v1256
      %1384 = vmatpush1.msra.mxu0 %v1255
      %1385 = vmatprep.subr.mxu0 %v1254
      %1386 = vmatpush1.msra.mxu0 %v1253
      %1387 = vmatprep.subr.mxu0 %v1252
      %1388 = vmatpush1.msra.mxu0 %v1251
      %1389 = vmatprep.subr.mxu0 %v1250
      %1390 = vmatpush1.msra.mxu0 %v1249
      %1391 = vmatprep.subr.mxu0 0.0
      %1392 = vmatpush2.msra.mxu0 0.0
      %1393 = vmatprep.subr.mxu0 0.0
      %1394 = vmatpush2.msra.mxu0 0.0
      %1395 = vmatprep.subr.mxu0 0.0
      %1396 = vmatpush2.msra.mxu0 0.0
      %1397 = vmatprep.subr.mxu0 0.0
      %1398 = vmatpush2.msra.mxu0 0.0
      %1399 = vmatprep.subr.mxu0 0.0
      %1400 = vmatpush2.msra.mxu0 0.0
      %1401 = vmatprep.subr.mxu0 0.0
      %1402 = vmatpush2.msra.mxu0 0.0
      %1403 = vmatprep.subr.mxu0 0.0
      %1404 = vmatpush2.msra.mxu0 0.0
      %1405 = vmatprep.subr.mxu0 0.0
      %1406 = vmatpush2.msra.mxu0 0.0
      %1407 = vmatprep.subr.mxu0 0.0
      %1408 = vmatpush2.msra.mxu0 0.0
      %1409 = vmatprep.subr.mxu0 0.0
      %1410 = vmatpush2.msra.mxu0 0.0
      %1411 = vmatprep.subr.mxu0 0.0
      %1412 = vmatpush2.msra.mxu0 0.0
      %1413 = vmatprep.subr.mxu0 0.0
      %1414 = vmatpush2.msra.mxu0 0.0
      %1415 = vmatprep.subr.mxu0 0.0
      %1416 = vmatpush2.msra.mxu0 0.0
      %1417 = vmatprep.subr.mxu0 0.0
      %1418 = vmatpush2.msra.mxu0 0.0
      %1419 = vmatprep.subr.mxu0 0.0
      %1420 = vmatpush2.msra.mxu0 0.0
      %1421 = vmatprep.subr.mxu0 0.0
      %1422 = vmatpush2.msra.mxu0 0.0
      %1423 = vmatprep.mubr.f32.mxu0 0.0
      %1424 = vmatmul.mubr.f32.gmra.mxu0 %v1259
      %v1425 = vpop.f32.mrf.mxu0
      %v1426 = vadd.f32 %v1337, %v1425
      %v1427 = vpop.f32.mrf.mxu0
      %v1428 = vadd.f32 %v1339, %v1427
      %1429 = vmatprep.mubr.f32.mxu0 0.0
      %1430 = vmatmul.mubr.f32.gmra.mxu0 %v1262
      %v1431 = vpop.f32.mrf.mxu0
      %v1432 = vadd.f32 %v1343, %v1431
      %v1433 = vpop.f32.mrf.mxu0
      %v1434 = vadd.f32 %v1345, %v1433
      %1435 = vmatprep.mubr.f32.mxu0 0.0
      %1436 = vmatmul.mubr.f32.gmra.mxu0 %v1265
      %v1437 = vpop.f32.mrf.mxu0
      %v1438 = vadd.f32 %v1349, %v1437
      %v1439 = vpop.f32.mrf.mxu0
      %v1440 = vadd.f32 %v1351, %v1439
      %1441 = vmatprep.mubr.f32.mxu0 0.0
      %1442 = vmatmul.mubr.f32.gmra.mxu0 %v1268
      %v1443 = vpop.f32.mrf.mxu0
      %v1444 = vadd.f32 %v1355, %v1443
      %v1445 = vpop.f32.mrf.mxu0
      %v1446 = vadd.f32 %v1357, %v1445
      %1447 = vdwg.mxu0
      %v1448 = vxor.u32 %v1426, 2147483648
      %v1449 = vxor.u32 %v1428, 2147483648
      %v1450 = vxor.u32 %v1432, 2147483648
      %v1451 = vxor.u32 %v1434, 2147483648
      %v1452 = vxor.u32 %v1438, 2147483648
      %v1453 = vxor.u32 %v1440, 2147483648
      %v1454 = vxor.u32 %v1444, 2147483648
      %v1455 = vxor.u32 %v1446, 2147483648
      %v1456 = vmul.f32 %v1448, 1.442695
      %v1457 = vpow.pop %v1456
      %v1458 = vmul.f32 %v1449, 1.442695
      %v1459 = vpow.pop %v1458
      %v1460 = vmul.f32 %v1450, 1.442695
      %v1461 = vpow.pop %v1460
      %v1462 = vmul.f32 %v1451, 1.442695
      %v1463 = vpow.pop %v1462
      %v1464 = vmul.f32 %v1452, 1.442695
      %v1465 = vpow.pop %v1464
      %v1466 = vmul.f32 %v1453, 1.442695
      %v1467 = vpow.pop %v1466
      %v1468 = vmul.f32 %v1454, 1.442695
      %v1469 = vpow.pop %v1468
      %v1470 = vmul.f32 %v1455, 1.442695
      %v1471 = vpow.pop %v1470
      %v1472 = vadd.f32 %v1457, 1.0
      %v1473 = vadd.f32 %v1459, 1.0
      %v1474 = vadd.f32 %v1461, 1.0
      %v1475 = vadd.f32 %v1463, 1.0
      %v1476 = vadd.f32 %v1465, 1.0
      %v1477 = vadd.f32 %v1467, 1.0
      %v1478 = vadd.f32 %v1469, 1.0
      %v1479 = vadd.f32 %v1471, 1.0
      %v1480 = vrcp.pop %v1472
      %v1481 = vmul.f32 1.0, %v1480
      %v1482 = vrcp.pop %v1473
      %v1483 = vmul.f32 1.0, %v1482
      %v1484 = vrcp.pop %v1474
      %v1485 = vmul.f32 1.0, %v1484
      %v1486 = vrcp.pop %v1475
      %v1487 = vmul.f32 1.0, %v1486
      %v1488 = vrcp.pop %v1476
      %v1489 = vmul.f32 1.0, %v1488
      %v1490 = vrcp.pop %v1477
      %v1491 = vmul.f32 1.0, %v1490
      %v1492 = vrcp.pop %v1478
      %v1493 = vmul.f32 1.0, %v1492
      %v1494 = vrcp.pop %v1479
      %v1495 = vmul.f32 1.0, %v1494
      %v1496 = vmul.f32 %v1489, %v409
      %v1497 = vmul.f32 %v1491, %v410
      %v1498 = vmul.f32 %v1493, %v411
      %v1499 = vmul.f32 %v1495, %v412
      %1504 = vrot.lane.b32.xlu0 %v1496, 34
      %v1505 = vpop.permute.xlu0 %1504
      %1506 = vrot.lane.b32.xlu0 %v1497, 34
      %v1507 = vpop.permute.xlu0 %1506
      %1508 = vrot.lane.b32.xlu0 %v1498, 34
      %v1509 = vpop.permute.xlu0 %1508
      %1510 = vrot.lane.b32.xlu0 %v1499, 34
      %v1511 = vpop.permute.xlu0 %1510
      %v1512 = vsel %vm423, %v1505, %v1507
      %v1513 = vsel %vm423, %v1509, %v1511
      %1520 = vst.msk [vmem:[#allocation2] sm:$0xff] %vm818, %v1505
      %1521 = vst [vmem:[#allocation2 + $0x8] sm:$0xff] %v1512
      %1522 = vst.msk [vmem:[#allocation2 + $0x10] sm:$0xff] %vm423, %v1507
      %1523 = vst.msk [vmem:[#allocation2 + $0x18] sm:$0xff] %vm818, %v1509
      %1524 = vst [vmem:[#allocation2 + $0x20] sm:$0xff] %v1513
      %1525 = vst.msk [vmem:[#allocation2 + $0x28] sm:$0xff] %vm423, %v1511
      %v1526 = vld [vmem:[#allocation2] sm:$0xff]
      %v1527 = vld [vmem:[#allocation2 + $0x8] sm:$0xff]
      %v1528 = vld [vmem:[#allocation2 + $0x10] sm:$0xff]
      %v1529 = vld [vmem:[#allocation2 + $0x18] sm:$0xff]
      %v1530 = vld [vmem:[#allocation2 + $0x20] sm:$0xff]
      %v1531 = vld [vmem:[#allocation2 + $0x28] sm:$0xff]
      %1538 = vrot.lane.b32.xlu0 %v1526, 111
      %v1539 = vpop.permute.xlu0 %1538
      %1540 = vrot.lane.b32.xlu0 %v1527, 111
      %v1541 = vpop.permute.xlu0 %1540
      %1542 = vrot.lane.b32.xlu0 %v1528, 111
      %v1543 = vpop.permute.xlu0 %1542
      %1544 = vrot.lane.b32.xlu0 %v1529, 111
      %v1545 = vpop.permute.xlu0 %1544
      %1546 = vrot.lane.b32.xlu0 %v1530, 111
      %v1547 = vpop.permute.xlu0 %1546
      %1548 = vrot.lane.b32.xlu0 %v1531, 111
      %v1549 = vpop.permute.xlu0 %1548
      %v1550 = vsel %vm461, %v1539, %v1541
      %v1551 = vsel %vm461, %v1541, %v1543
      %v1552 = vsel %vm461, %v1545, %v1547
      %v1553 = vsel %vm461, %v1547, %v1549
      %v1558 = vsel %vm441, %v1550, 0.0
      %v1559 = vsel %vm442, %v1551, 0.0
      %v1560 = vsel %vm441, %v1552, 0.0
      %v1561 = vsel %vm442, %v1553, 0.0
      %1562 = vst [vmem:[#allocation3 + $0x120] sm:$0xff] %v1558
      %1563 = vst [vmem:[#allocation3 + $0x128] sm:$0xff] %v1559
      %1564 = vst [vmem:[#allocation3 + $0x130] sm:$0xff] %v1560
      %1565 = vst [vmem:[#allocation3 + $0x138] sm:$0xff] %v1561
      %v1566 = vld [vmem:[#allocation2] sm:$0xff]
      %v1567 = vld [vmem:[#allocation2 + $0x8] sm:$0xff]
      %v1568 = vld [vmem:[#allocation2 + $0x10] sm:$0xff]
      %v1569 = vld [vmem:[#allocation2 + $0x18] sm:$0xff]
      %v1570 = vld [vmem:[#allocation2 + $0x20] sm:$0xff]
      %v1571 = vld [vmem:[#allocation2 + $0x28] sm:$0xff]
      %1578 = vrot.lane.b32.xlu0 %v1566, 110
      %v1579 = vpop.permute.xlu0 %1578
      %1580 = vrot.lane.b32.xlu0 %v1567, 110
      %v1581 = vpop.permute.xlu0 %1580
      %1582 = vrot.lane.b32.xlu0 %v1568, 110
      %v1583 = vpop.permute.xlu0 %1582
      %1584 = vrot.lane.b32.xlu0 %v1569, 110
      %v1585 = vpop.permute.xlu0 %1584
      %1586 = vrot.lane.b32.xlu0 %v1570, 110
      %v1587 = vpop.permute.xlu0 %1586
      %1588 = vrot.lane.b32.xlu0 %v1571, 110
      %v1589 = vpop.permute.xlu0 %1588
      %v1590 = vsel %vm502, %v1579, %v1581
      %v1591 = vsel %vm502, %v1581, %v1583
      %v1592 = vsel %vm502, %v1585, %v1587
      %v1593 = vsel %vm502, %v1587, %v1589
      %1598 = vst [vmem:[#allocation3 + $0x140] sm:$0xff] %v1590
      %1599 = vst [vmem:[#allocation3 + $0x148] sm:$0xff] %v1591
      %1600 = vst [vmem:[#allocation3 + $0x150] sm:$0xff] %v1592
      %1601 = vst [vmem:[#allocation3 + $0x158] sm:$0xff] %v1593
      %v1602 = vld [vmem:[#allocation2] sm:$0xff]
      %v1603 = vld [vmem:[#allocation2 + $0x8] sm:$0xff]
      %v1604 = vld [vmem:[#allocation2 + $0x10] sm:$0xff]
      %v1605 = vld [vmem:[#allocation2 + $0x18] sm:$0xff]
      %v1606 = vld [vmem:[#allocation2 + $0x20] sm:$0xff]
      %v1607 = vld [vmem:[#allocation2 + $0x28] sm:$0xff]
      %1614 = vrot.lane.b32.xlu0 %v1602, 109
      %v1615 = vpop.permute.xlu0 %1614
      %1616 = vrot.lane.b32.xlu0 %v1603, 109
      %v1617 = vpop.permute.xlu0 %1616
      %1618 = vrot.lane.b32.xlu0 %v1604, 109
      %v1619 = vpop.permute.xlu0 %1618
      %1620 = vrot.lane.b32.xlu0 %v1605, 109
      %v1621 = vpop.permute.xlu0 %1620
      %1622 = vrot.lane.b32.xlu0 %v1606, 109
      %v1623 = vpop.permute.xlu0 %1622
      %1624 = vrot.lane.b32.xlu0 %v1607, 109
      %v1625 = vpop.permute.xlu0 %1624
      %v1626 = vsel %vm543, %v1615, %v1617
      %v1627 = vsel %vm543, %v1617, %v1619
      %v1628 = vsel %vm543, %v1621, %v1623
      %v1629 = vsel %vm543, %v1623, %v1625
      %v1634 = vsel %vm523, %v1626, 0.0
      %v1635 = vsel %vm524, %v1627, 0.0
      %v1636 = vsel %vm523, %v1628, 0.0
      %v1637 = vsel %vm524, %v1629, 0.0
      %1638 = vst [vmem:[#allocation3 + $0x160] sm:$0xff] %v1634
      %1639 = vst [vmem:[#allocation3 + $0x168] sm:$0xff] %v1635
      %1640 = vst [vmem:[#allocation3 + $0x170] sm:$0xff] %v1636
      %1641 = vst [vmem:[#allocation3 + $0x178] sm:$0xff] %v1637
      %v1642 = vld [vmem:[#allocation2] sm:$0xff]
      %v1643 = vld [vmem:[#allocation2 + $0x8] sm:$0xff]
      %v1644 = vld [vmem:[#allocation2 + $0x10] sm:$0xff]
      %v1645 = vld [vmem:[#allocation2 + $0x18] sm:$0xff]
      %v1646 = vld [vmem:[#allocation2 + $0x20] sm:$0xff]
      %v1647 = vld [vmem:[#allocation2 + $0x28] sm:$0xff]
      %1654 = vrot.lane.b32.xlu0 %v1642, 95
      %v1655 = vpop.permute.xlu0 %1654
      %1656 = vrot.lane.b32.xlu0 %v1643, 95
      %v1657 = vpop.permute.xlu0 %1656
      %1658 = vrot.lane.b32.xlu0 %v1644, 95
      %v1659 = vpop.permute.xlu0 %1658
      %1660 = vrot.lane.b32.xlu0 %v1645, 95
      %v1661 = vpop.permute.xlu0 %1660
      %1662 = vrot.lane.b32.xlu0 %v1646, 95
      %v1663 = vpop.permute.xlu0 %1662
      %1664 = vrot.lane.b32.xlu0 %v1647, 95
      %v1665 = vpop.permute.xlu0 %1664
      %v1666 = vsel %vm584, %v1655, %v1657
      %v1667 = vsel %vm584, %v1657, %v1659
      %v1668 = vsel %vm584, %v1661, %v1663
      %v1669 = vsel %vm584, %v1663, %v1665
      %v1674 = vsel %vm441, %v1666, 0.0
      %v1675 = vsel %vm442, %v1667, 0.0
      %v1676 = vsel %vm441, %v1668, 0.0
      %v1677 = vsel %vm442, %v1669, 0.0
      %1678 = vst [vmem:[#allocation3 + $0x180] sm:$0xff] %v1674
      %1679 = vst [vmem:[#allocation3 + $0x188] sm:$0xff] %v1675
      %1680 = vst [vmem:[#allocation3 + $0x190] sm:$0xff] %v1676
      %1681 = vst [vmem:[#allocation3 + $0x198] sm:$0xff] %v1677
      %v1682 = vld [vmem:[#allocation2] sm:$0xff]
      %v1683 = vld [vmem:[#allocation2 + $0x8] sm:$0xff]
      %v1684 = vld [vmem:[#allocation2 + $0x10] sm:$0xff]
      %v1685 = vld [vmem:[#allocation2 + $0x18] sm:$0xff]
      %v1686 = vld [vmem:[#allocation2 + $0x20] sm:$0xff]
      %v1687 = vld [vmem:[#allocation2 + $0x28] sm:$0xff]
      %1694 = vrot.lane.b32.xlu0 %v1682, 94
      %v1695 = vpop.permute.xlu0 %1694
      %1696 = vrot.lane.b32.xlu0 %v1683, 94
      %v1697 = vpop.permute.xlu0 %1696
      %1698 = vrot.lane.b32.xlu0 %v1684, 94
      %v1699 = vpop.permute.xlu0 %1698
      %1700 = vrot.lane.b32.xlu0 %v1685, 94
      %v1701 = vpop.permute.xlu0 %1700
      %1702 = vrot.lane.b32.xlu0 %v1686, 94
      %v1703 = vpop.permute.xlu0 %1702
      %1704 = vrot.lane.b32.xlu0 %v1687, 94
      %v1705 = vpop.permute.xlu0 %1704
      %v1706 = vsel %vm625, %v1695, %v1697
      %v1707 = vsel %vm625, %v1697, %v1699
      %v1708 = vsel %vm625, %v1701, %v1703
      %v1709 = vsel %vm625, %v1703, %v1705
      %1714 = vst [vmem:[#allocation3 + $0x1a0] sm:$0xff] %v1706
      %1715 = vst [vmem:[#allocation3 + $0x1a8] sm:$0xff] %v1707
      %1716 = vst [vmem:[#allocation3 + $0x1b0] sm:$0xff] %v1708
      %1717 = vst [vmem:[#allocation3 + $0x1b8] sm:$0xff] %v1709
      %v1718 = vld [vmem:[#allocation2] sm:$0xff]
      %v1719 = vld [vmem:[#allocation2 + $0x8] sm:$0xff]
      %v1720 = vld [vmem:[#allocation2 + $0x10] sm:$0xff]
      %v1721 = vld [vmem:[#allocation2 + $0x18] sm:$0xff]
      %v1722 = vld [vmem:[#allocation2 + $0x20] sm:$0xff]
      %v1723 = vld [vmem:[#allocation2 + $0x28] sm:$0xff]
      %1730 = vrot.lane.b32.xlu0 %v1718, 93
      %v1731 = vpop.permute.xlu0 %1730
      %1732 = vrot.lane.b32.xlu0 %v1719, 93
      %v1733 = vpop.permute.xlu0 %1732
      %1734 = vrot.lane.b32.xlu0 %v1720, 93
      %v1735 = vpop.permute.xlu0 %1734
      %1736 = vrot.lane.b32.xlu0 %v1721, 93
      %v1737 = vpop.permute.xlu0 %1736
      %1738 = vrot.lane.b32.xlu0 %v1722, 93
      %v1739 = vpop.permute.xlu0 %1738
      %1740 = vrot.lane.b32.xlu0 %v1723, 93
      %v1741 = vpop.permute.xlu0 %1740
      %v1742 = vsel %vm662, %v1731, %v1733
      %v1743 = vsel %vm662, %v1733, %v1735
      %v1744 = vsel %vm662, %v1737, %v1739
      %v1745 = vsel %vm662, %v1739, %v1741
      %v1750 = vsel %vm523, %v1742, 0.0
      %v1751 = vsel %vm524, %v1743, 0.0
      %v1752 = vsel %vm523, %v1744, 0.0
      %v1753 = vsel %vm524, %v1745, 0.0
      %1754 = vst [vmem:[#allocation3 + $0x1c0] sm:$0xff] %v1750
      %1755 = vst [vmem:[#allocation3 + $0x1c8] sm:$0xff] %v1751
      %1756 = vst [vmem:[#allocation3 + $0x1d0] sm:$0xff] %v1752
      %1757 = vst [vmem:[#allocation3 + $0x1d8] sm:$0xff] %v1753
      %v1758 = vld [vmem:[#allocation2] sm:$0xff]
      %v1759 = vld [vmem:[#allocation2 + $0x8] sm:$0xff]
      %v1760 = vld [vmem:[#allocation2 + $0x10] sm:$0xff]
      %v1761 = vld [vmem:[#allocation2 + $0x18] sm:$0xff]
      %v1762 = vld [vmem:[#allocation2 + $0x20] sm:$0xff]
      %v1763 = vld [vmem:[#allocation2 + $0x28] sm:$0xff]
      %1770 = vrot.lane.b32.xlu0 %v1758, 79
      %v1771 = vpop.permute.xlu0 %1770
      %1772 = vrot.lane.b32.xlu0 %v1759, 79
      %v1773 = vpop.permute.xlu0 %1772
      %1774 = vrot.lane.b32.xlu0 %v1760, 79
      %v1775 = vpop.permute.xlu0 %1774
      %1776 = vrot.lane.b32.xlu0 %v1761, 79
      %v1777 = vpop.permute.xlu0 %1776
      %1778 = vrot.lane.b32.xlu0 %v1762, 79
      %v1779 = vpop.permute.xlu0 %1778
      %1780 = vrot.lane.b32.xlu0 %v1763, 79
      %v1781 = vpop.permute.xlu0 %1780
      %v1782 = vsel %vm703, %v1771, %v1773
      %v1783 = vsel %vm703, %v1773, %v1775
      %v1784 = vsel %vm703, %v1777, %v1779
      %v1785 = vsel %vm703, %v1779, %v1781
      %v1790 = vsel %vm441, %v1782, 0.0
      %v1791 = vsel %vm442, %v1783, 0.0
      %v1792 = vsel %vm441, %v1784, 0.0
      %v1793 = vsel %vm442, %v1785, 0.0
      %1794 = vst [vmem:[#allocation3 + $0x1e0] sm:$0xff] %v1790
      %1795 = vst [vmem:[#allocation3 + $0x1e8] sm:$0xff] %v1791
      %1796 = vst [vmem:[#allocation3 + $0x1f0] sm:$0xff] %v1792
      %1797 = vst [vmem:[#allocation3 + $0x1f8] sm:$0xff] %v1793
      %v1798 = vld [vmem:[#allocation2] sm:$0xff]
      %v1799 = vld [vmem:[#allocation2 + $0x8] sm:$0xff]
      %v1800 = vld [vmem:[#allocation2 + $0x10] sm:$0xff]
      %v1801 = vld [vmem:[#allocation2 + $0x18] sm:$0xff]
      %v1802 = vld [vmem:[#allocation2 + $0x20] sm:$0xff]
      %v1803 = vld [vmem:[#allocation2 + $0x28] sm:$0xff]
      %1810 = vrot.lane.b32.xlu0 %v1798, 78
      %v1811 = vpop.permute.xlu0 %1810
      %1812 = vrot.lane.b32.xlu0 %v1799, 78
      %v1813 = vpop.permute.xlu0 %1812
      %1814 = vrot.lane.b32.xlu0 %v1800, 78
      %v1815 = vpop.permute.xlu0 %1814
      %1816 = vrot.lane.b32.xlu0 %v1801, 78
      %v1817 = vpop.permute.xlu0 %1816
      %1818 = vrot.lane.b32.xlu0 %v1802, 78
      %v1819 = vpop.permute.xlu0 %1818
      %1820 = vrot.lane.b32.xlu0 %v1803, 78
      %v1821 = vpop.permute.xlu0 %1820
      %v1822 = vsel %vm744, %v1811, %v1813
      %v1823 = vsel %vm744, %v1813, %v1815
      %v1824 = vsel %vm744, %v1817, %v1819
      %v1825 = vsel %vm744, %v1819, %v1821
      %1830 = vst [vmem:[#allocation3 + $0x200] sm:$0xff] %v1822
      %1831 = vst [vmem:[#allocation3 + $0x208] sm:$0xff] %v1823
      %1832 = vst [vmem:[#allocation3 + $0x210] sm:$0xff] %v1824
      %1833 = vst [vmem:[#allocation3 + $0x218] sm:$0xff] %v1825
      %v1834 = vld [vmem:[#allocation2] sm:$0xff]
      %v1835 = vld [vmem:[#allocation2 + $0x8] sm:$0xff]
      %v1836 = vld [vmem:[#allocation2 + $0x10] sm:$0xff]
      %v1837 = vld [vmem:[#allocation2 + $0x18] sm:$0xff]
      %v1838 = vld [vmem:[#allocation2 + $0x20] sm:$0xff]
      %v1839 = vld [vmem:[#allocation2 + $0x28] sm:$0xff]
      %1846 = vrot.lane.b32.xlu0 %v1834, 77
      %v1847 = vpop.permute.xlu0 %1846
      %1848 = vrot.lane.b32.xlu0 %v1835, 77
      %v1849 = vpop.permute.xlu0 %1848
      %1850 = vrot.lane.b32.xlu0 %v1836, 77
      %v1851 = vpop.permute.xlu0 %1850
      %1852 = vrot.lane.b32.xlu0 %v1837, 77
      %v1853 = vpop.permute.xlu0 %1852
      %1854 = vrot.lane.b32.xlu0 %v1838, 77
      %v1855 = vpop.permute.xlu0 %1854
      %1856 = vrot.lane.b32.xlu0 %v1839, 77
      %v1857 = vpop.permute.xlu0 %1856
      %v1858 = vsel %vm781, %v1847, %v1849
      %v1859 = vsel %vm781, %v1849, %v1851
      %v1860 = vsel %vm781, %v1853, %v1855
      %v1861 = vsel %vm781, %v1855, %v1857
      %v1866 = vsel %vm523, %v1858, 0.0
      %v1867 = vsel %vm524, %v1859, 0.0
      %v1868 = vsel %vm523, %v1860, 0.0
      %v1869 = vsel %vm524, %v1861, 0.0
      %1870 = vst [vmem:[#allocation3 + $0x220] sm:$0xff] %v1866
      %1871 = vst [vmem:[#allocation3 + $0x228] sm:$0xff] %v1867
      %1872 = vst [vmem:[#allocation3 + $0x230] sm:$0xff] %v1868
      %1873 = vst [vmem:[#allocation3 + $0x238] sm:$0xff] %v1869
      %v1874 = vld [vmem:[%s3] sm:$0xff]
      %v1875 = vld [vmem:[%s3 + $0x8] sm:$0xff]
      %v1876 = vld [vmem:[%s3 + $0x10] sm:$0xff]
      %v1877 = vld [vmem:[%s3 + $0x18] sm:$0xff]
      %v1878 = vld [vmem:[%s3 + $0x20] sm:$0xff]
      %v1879 = vld [vmem:[%s3 + $0x28] sm:$0xff]
      %v1880 = vld [vmem:[#allocation3] sm:$0xff]
      %v1881 = vld [vmem:[#allocation3 + $0x8] sm:$0xff]
      %v1882 = vld [vmem:[#allocation3 + $0x10] sm:$0xff]
      %v1883 = vld [vmem:[#allocation3 + $0x18] sm:$0xff]
      %v1884 = vld [vmem:[#allocation3 + $0x20] sm:$0xff]
      %v1885 = vld [vmem:[#allocation3 + $0x28] sm:$0xff]
      %v1886 = vld [vmem:[#allocation3 + $0x30] sm:$0xff]
      %v1887 = vld [vmem:[#allocation3 + $0x38] sm:$0xff]
      %v1888 = vld [vmem:[#allocation3 + $0x40] sm:$0xff]
      %v1889 = vld [vmem:[#allocation3 + $0x48] sm:$0xff]
      %v1890 = vld [vmem:[#allocation3 + $0x50] sm:$0xff]
      %v1891 = vld [vmem:[#allocation3 + $0x58] sm:$0xff]
      %v1892 = vld [vmem:[#allocation3 + $0x60] sm:$0xff]
      %v1893 = vld [vmem:[#allocation3 + $0x68] sm:$0xff]
      %v1894 = vld [vmem:[#allocation3 + $0x70] sm:$0xff]
      %v1895 = vld [vmem:[#allocation3 + $0x78] sm:$0xff]
      %v1896 = vld [vmem:[#allocation3 + $0x80] sm:$0xff]
      %v1897 = vld [vmem:[#allocation3 + $0x88] sm:$0xff]
      %v1898 = vld [vmem:[#allocation3 + $0x90] sm:$0xff]
      %v1899 = vld [vmem:[#allocation3 + $0x98] sm:$0xff]
      %v1900 = vld [vmem:[#allocation3 + $0xa0] sm:$0xff]
      %v1901 = vld [vmem:[#allocation3 + $0xa8] sm:$0xff]
      %v1902 = vld [vmem:[#allocation3 + $0xb0] sm:$0xff]
      %v1903 = vld [vmem:[#allocation3 + $0xb8] sm:$0xff]
      %v1904 = vld [vmem:[#allocation3 + $0xc0] sm:$0xff]
      %v1905 = vld [vmem:[#allocation3 + $0xc8] sm:$0xff]
      %v1906 = vld [vmem:[#allocation3 + $0xd0] sm:$0xff]
      %v1907 = vld [vmem:[#allocation3 + $0xd8] sm:$0xff]
      %v1908 = vld [vmem:[#allocation3 + $0xe0] sm:$0xff]
      %v1909 = vld [vmem:[#allocation3 + $0xe8] sm:$0xff]
      %v1910 = vld [vmem:[#allocation3 + $0xf0] sm:$0xff]
      %v1911 = vld [vmem:[#allocation3 + $0xf8] sm:$0xff]
      %v1912 = vld [vmem:[#allocation3 + $0x100] sm:$0xff]
      %v1913 = vld [vmem:[#allocation3 + $0x108] sm:$0xff]
      %v1914 = vld [vmem:[#allocation3 + $0x110] sm:$0xff]
      %v1915 = vld [vmem:[#allocation3 + $0x118] sm:$0xff]
      %v1916 = vld [vmem:[#allocation3 + $0x120] sm:$0xff]
      %v1917 = vld [vmem:[#allocation3 + $0x128] sm:$0xff]
      %v1918 = vld [vmem:[#allocation3 + $0x130] sm:$0xff]
      %v1919 = vld [vmem:[#allocation3 + $0x138] sm:$0xff]
      %v1920 = vld [vmem:[#allocation3 + $0x140] sm:$0xff]
      %v1921 = vld [vmem:[#allocation3 + $0x148] sm:$0xff]
      %v1922 = vld [vmem:[#allocation3 + $0x150] sm:$0xff]
      %v1923 = vld [vmem:[#allocation3 + $0x158] sm:$0xff]
      %v1924 = vld [vmem:[#allocation3 + $0x160] sm:$0xff]
      %v1925 = vld [vmem:[#allocation3 + $0x168] sm:$0xff]
      %v1926 = vld [vmem:[#allocation3 + $0x170] sm:$0xff]
      %v1927 = vld [vmem:[#allocation3 + $0x178] sm:$0xff]
      %v1928 = vld [vmem:[#allocation3 + $0x180] sm:$0xff]
      %v1929 = vld [vmem:[#allocation3 + $0x188] sm:$0xff]
      %v1930 = vld [vmem:[#allocation3 + $0x190] sm:$0xff]
      %v1931 = vld [vmem:[#allocation3 + $0x198] sm:$0xff]
      %v1932 = vld [vmem:[#allocation3 + $0x1a0] sm:$0xff]
      %v1933 = vld [vmem:[#allocation3 + $0x1a8] sm:$0xff]
      %v1934 = vld [vmem:[#allocation3 + $0x1b0] sm:$0xff]
      %v1935 = vld [vmem:[#allocation3 + $0x1b8] sm:$0xff]
      %v1936 = vld [vmem:[#allocation3 + $0x1c0] sm:$0xff]
      %v1937 = vld [vmem:[#allocation3 + $0x1c8] sm:$0xff]
      %v1938 = vld [vmem:[#allocation3 + $0x1d0] sm:$0xff]
      %v1939 = vld [vmem:[#allocation3 + $0x1d8] sm:$0xff]
      %v1940 = vld [vmem:[#allocation3 + $0x1e0] sm:$0xff]
      %v1941 = vld [vmem:[#allocation3 + $0x1e8] sm:$0xff]
      %v1942 = vld [vmem:[#allocation3 + $0x1f0] sm:$0xff]
      %v1943 = vld [vmem:[#allocation3 + $0x1f8] sm:$0xff]
      %v1944 = vld [vmem:[#allocation3 + $0x200] sm:$0xff]
      %v1945 = vld [vmem:[#allocation3 + $0x208] sm:$0xff]
      %v1946 = vld [vmem:[#allocation3 + $0x210] sm:$0xff]
      %v1947 = vld [vmem:[#allocation3 + $0x218] sm:$0xff]
      %v1948 = vld [vmem:[#allocation3 + $0x220] sm:$0xff]
      %v1949 = vld [vmem:[#allocation3 + $0x228] sm:$0xff]
      %v1950 = vld [vmem:[#allocation3 + $0x230] sm:$0xff]
      %v1951 = vld [vmem:[#allocation3 + $0x238] sm:$0xff]
      %v1953 = vsel %vm1257, %v1876, 0
      %v1956 = vsel %vm1257, %v1879, 0
      %1958 = vmatprep.subr.mxu0 %v1911
      %1959 = vmatpush1.msra.mxu0 %v1910
      %1960 = vmatprep.subr.mxu0 %v1909
      %1961 = vmatpush1.msra.mxu0 %v1908
      %1962 = vmatprep.subr.mxu0 %v1907
      %1963 = vmatpush1.msra.mxu0 %v1906
      %1964 = vmatprep.subr.mxu0 %v1905
      %1965 = vmatpush1.msra.mxu0 %v1904
      %1966 = vmatprep.subr.mxu0 %v1903
      %1967 = vmatpush1.msra.mxu0 %v1902
      %1968 = vmatprep.subr.mxu0 %v1901
      %1969 = vmatpush1.msra.mxu0 %v1900
      %1970 = vmatprep.subr.mxu0 %v1899
      %1971 = vmatpush1.msra.mxu0 %v1898
      %1972 = vmatprep.subr.mxu0 %v1897
      %1973 = vmatpush1.msra.mxu0 %v1896
      %1974 = vmatprep.subr.mxu0 %v1895
      %1975 = vmatpush1.msra.mxu0 %v1894
      %1976 = vmatprep.subr.mxu0 %v1893
      %1977 = vmatpush1.msra.mxu0 %v1892
      %1978 = vmatprep.subr.mxu0 %v1891
      %1979 = vmatpush1.msra.mxu0 %v1890
      %1980 = vmatprep.subr.mxu0 %v1889
      %1981 = vmatpush1.msra.mxu0 %v1888
      %1982 = vmatprep.subr.mxu0 %v1887
      %1983 = vmatpush1.msra.mxu0 %v1886
      %1984 = vmatprep.subr.mxu0 %v1885
      %1985 = vmatpush1.msra.mxu0 %v1884
      %1986 = vmatprep.subr.mxu0 %v1883
      %1987 = vmatpush1.msra.mxu0 %v1882
      %1988 = vmatprep.subr.mxu0 %v1881
      %1989 = vmatpush1.msra.mxu0 %v1880
      %1990 = vmatprep.subr.mxu0 %v1943
      %1991 = vmatpush2.msra.mxu0 %v1942
      %1992 = vmatprep.subr.mxu0 %v1941
      %1993 = vmatpush2.msra.mxu0 %v1940
      %1994 = vmatprep.subr.mxu0 %v1939
      %1995 = vmatpush2.msra.mxu0 %v1938
      %1996 = vmatprep.subr.mxu0 %v1937
      %1997 = vmatpush2.msra.mxu0 %v1936
      %1998 = vmatprep.subr.mxu0 %v1935
      %1999 = vmatpush2.msra.mxu0 %v1934
      %2000 = vmatprep.subr.mxu0 %v1933
      %2001 = vmatpush2.msra.mxu0 %v1932
      %2002 = vmatprep.subr.mxu0 %v1931
      %2003 = vmatpush2.msra.mxu0 %v1930
      %2004 = vmatprep.subr.mxu0 %v1929
      %2005 = vmatpush2.msra.mxu0 %v1928
      %2006 = vmatprep.subr.mxu0 %v1927
      %2007 = vmatpush2.msra.mxu0 %v1926
      %2008 = vmatprep.subr.mxu0 %v1925
      %2009 = vmatpush2.msra.mxu0 %v1924
      %2010 = vmatprep.subr.mxu0 %v1923
      %2011 = vmatpush2.msra.mxu0 %v1922
      %2012 = vmatprep.subr.mxu0 %v1921
      %2013 = vmatpush2.msra.mxu0 %v1920
      %2014 = vmatprep.subr.mxu0 %v1919
      %2015 = vmatpush2.msra.mxu0 %v1918
      %2016 = vmatprep.subr.mxu0 %v1917
      %2017 = vmatpush2.msra.mxu0 %v1916
      %2018 = vmatprep.subr.mxu0 %v1915
      %2019 = vmatpush2.msra.mxu0 %v1914
      %2020 = vmatprep.subr.mxu0 %v1913
      %2021 = vmatpush2.msra.mxu0 %v1912
      %2022 = vmatprep.mubr.f32.mxu0 %v1875
      %2023 = vmatmul.mubr.f32.gmra.mxu0 %v1874
      %v2024 = vpop.f32.mrf.mxu0
      %v2025 = vadd.f32 0.0, %v2024
      %v2026 = vpop.f32.mrf.mxu0
      %v2027 = vadd.f32 0.0, %v2026
      %2028 = vmatprep.mubr.f32.mxu0 %v1878
      %2029 = vmatmul.mubr.f32.gmra.mxu0 %v1877
      %v2030 = vpop.f32.mrf.mxu0
      %v2031 = vadd.f32 0.0, %v2030
      %v2032 = vpop.f32.mrf.mxu0
      %v2033 = vadd.f32 0.0, %v2032
      %2034 = vdwg.mxu0
      %2035 = vmatprep.subr.mxu0 0.0
      %2036 = vmatpush1.msra.mxu0 0.0
      %2037 = vmatprep.subr.mxu0 0.0
      %2038 = vmatpush1.msra.mxu0 0.0
      %2039 = vmatprep.subr.mxu0 0.0
      %2040 = vmatpush1.msra.mxu0 0.0
      %2041 = vmatprep.subr.mxu0 0.0
      %2042 = vmatpush1.msra.mxu0 0.0
      %2043 = vmatprep.subr.mxu0 0.0
      %2044 = vmatpush1.msra.mxu0 0.0
      %2045 = vmatprep.subr.mxu0 0.0
      %2046 = vmatpush1.msra.mxu0 0.0
      %2047 = vmatprep.subr.mxu0 0.0
      %2048 = vmatpush1.msra.mxu0 0.0
      %2049 = vmatprep.subr.mxu0 0.0
      %2050 = vmatpush1.msra.mxu0 0.0
      %2051 = vmatprep.subr.mxu0 0.0
      %2052 = vmatpush1.msra.mxu0 0.0
      %2053 = vmatprep.subr.mxu0 0.0
      %2054 = vmatpush1.msra.mxu0 0.0
      %2055 = vmatprep.subr.mxu0 0.0
      %2056 = vmatpush1.msra.mxu0 0.0
      %2057 = vmatprep.subr.mxu0 0.0
      %2058 = vmatpush1.msra.mxu0 0.0
      %2059 = vmatprep.subr.mxu0 %v1951
      %2060 = vmatpush1.msra.mxu0 %v1950
      %2061 = vmatprep.subr.mxu0 %v1949
      %2062 = vmatpush1.msra.mxu0 %v1948
      %2063 = vmatprep.subr.mxu0 %v1947
      %2064 = vmatpush1.msra.mxu0 %v1946
      %2065 = vmatprep.subr.mxu0 %v1945
      %2066 = vmatpush1.msra.mxu0 %v1944
      %2067 = vmatprep.subr.mxu0 0.0
      %2068 = vmatpush2.msra.mxu0 0.0
      %2069 = vmatprep.subr.mxu0 0.0
      %2070 = vmatpush2.msra.mxu0 0.0
      %2071 = vmatprep.subr.mxu0 0.0
      %2072 = vmatpush2.msra.mxu0 0.0
      %2073 = vmatprep.subr.mxu0 0.0
      %2074 = vmatpush2.msra.mxu0 0.0
      %2075 = vmatprep.subr.mxu0 0.0
      %2076 = vmatpush2.msra.mxu0 0.0
      %2077 = vmatprep.subr.mxu0 0.0
      %2078 = vmatpush2.msra.mxu0 0.0
      %2079 = vmatprep.subr.mxu0 0.0
      %2080 = vmatpush2.msra.mxu0 0.0
      %2081 = vmatprep.subr.mxu0 0.0
      %2082 = vmatpush2.msra.mxu0 0.0
      %2083 = vmatprep.subr.mxu0 0.0
      %2084 = vmatpush2.msra.mxu0 0.0
      %2085 = vmatprep.subr.mxu0 0.0
      %2086 = vmatpush2.msra.mxu0 0.0
      %2087 = vmatprep.subr.mxu0 0.0
      %2088 = vmatpush2.msra.mxu0 0.0
      %2089 = vmatprep.subr.mxu0 0.0
      %2090 = vmatpush2.msra.mxu0 0.0
      %2091 = vmatprep.subr.mxu0 0.0
      %2092 = vmatpush2.msra.mxu0 0.0
      %2093 = vmatprep.subr.mxu0 0.0
      %2094 = vmatpush2.msra.mxu0 0.0
      %2095 = vmatprep.subr.mxu0 0.0
      %2096 = vmatpush2.msra.mxu0 0.0
      %2097 = vmatprep.subr.mxu0 0.0
      %2098 = vmatpush2.msra.mxu0 0.0
      %2099 = vmatprep.mubr.f32.mxu0 0.0
      %2100 = vmatmul.mubr.f32.gmra.mxu0 %v1953
      %v2101 = vpop.f32.mrf.mxu0
      %v2102 = vadd.f32 %v2025, %v2101
      %v2103 = vpop.f32.mrf.mxu0
      %v2104 = vadd.f32 %v2027, %v2103
      %2105 = vmatprep.mubr.f32.mxu0 0.0
      %2106 = vmatmul.mubr.f32.gmra.mxu0 %v1956
      %v2107 = vpop.f32.mrf.mxu0
      %v2108 = vadd.f32 %v2031, %v2107
      %v2109 = vpop.f32.mrf.mxu0
      %v2110 = vadd.f32 %v2033, %v2109
      %2111 = vdwg.mxu0
      %v2112 = vtanh.pop %v2102
      %v2113 = vtanh.pop %v2104
      %v2114 = vtanh.pop %v2108
      %v2115 = vtanh.pop %v2110
      %v2116 = vsub.f32 1.0, %v1481
      %v2117 = vsub.f32 1.0, %v1483
      %v2118 = vsub.f32 1.0, %v1485
      %v2119 = vsub.f32 1.0, %v1487
      %v2120 = vmul.f32 %v2116, %v409
      %v2121 = vmul.f32 %v2117, %v410
      %v2122 = vmul.f32 %v2118, %v411
      %v2123 = vmul.f32 %v2119, %v412
      %v2124 = vmul.f32 %v1481, %v2112
      %v2125 = vmul.f32 %v1483, %v2113
      %v2126 = vmul.f32 %v1485, %v2114
      %v2127 = vmul.f32 %v1487, %v2115
      %v2128 = vadd.f32 %v2120, %v2124
      %v2129 = vadd.f32 %v2121, %v2125
      %v2130 = vadd.f32 %v2122, %v2126
      %v2131 = vadd.f32 %v2123, %v2127
      %2136 = vrot.lane.b32.xlu0 %v2128, 34
      %v2137 = vpop.permute.xlu0 %2136
      %2138 = vrot.lane.b32.xlu0 %v2129, 34
      %v2139 = vpop.permute.xlu0 %2138
      %2140 = vrot.lane.b32.xlu0 %v2130, 34
      %v2141 = vpop.permute.xlu0 %2140
      %2142 = vrot.lane.b32.xlu0 %v2131, 34
      %v2143 = vpop.permute.xlu0 %2142
      %v2144 = vsel %vm423, %v2137, %v2139
      %v2145 = vsel %vm423, %v2141, %v2143
      %2152 = vst.msk [vmem:[#allocation2] sm:$0xff] %vm818, %v2137
      %2153 = vst [vmem:[#allocation2 + $0x8] sm:$0xff] %v2144
      %2154 = vst.msk [vmem:[#allocation2 + $0x10] sm:$0xff] %vm423, %v2139
      %2155 = vst.msk [vmem:[#allocation2 + $0x18] sm:$0xff] %vm818, %v2141
      %2156 = vst [vmem:[#allocation2 + $0x20] sm:$0xff] %v2145
      %2157 = vst.msk [vmem:[#allocation2 + $0x28] sm:$0xff] %vm423, %v2143
      %v2158 = vld [vmem:[#allocation2] sm:$0xff]
      %v2159 = vld [vmem:[#allocation2 + $0x8] sm:$0xff]
      %v2160 = vld [vmem:[#allocation2 + $0x18] sm:$0xff]
      %v2161 = vld [vmem:[#allocation2 + $0x20] sm:$0xff]
      %v2162 = vsel %vm400, 1, 0
      %v2163 = vsel %vm401, 1, 0
      %vm2164 = vcmp.eq.s32.totalorder %v2162, 1
      %vm2165 = vcmp.eq.s32.totalorder %v2163, 1
      %v2166 = vsel %vm2164, %v2158, 0.0
      %v2167 = vsel %vm2165, %v2159, 0.0
      %v2168 = vsel %vm2164, %v2160, 0.0
      %v2169 = vsel %vm2165, %v2161, 0.0
      %2170 = vst [vmem:[#allocation3] sm:$0xff] %v2166
      %2171 = vst [vmem:[#allocation3 + $0x8] sm:$0xff] %v2167
      %2172 = vst [vmem:[#allocation3 + $0x10] sm:$0xff] %v2168
      %2173 = vst [vmem:[#allocation3 + $0x18] sm:$0xff] %v2169
      %v2174 = vld [vmem:[#allocation2] sm:$0xff]
      %v2175 = vld [vmem:[#allocation2 + $0x8] sm:$0xff]
      %v2176 = vld [vmem:[#allocation2 + $0x10] sm:$0xff]
      %v2177 = vld [vmem:[#allocation2 + $0x18] sm:$0xff]
      %v2178 = vld [vmem:[#allocation2 + $0x20] sm:$0xff]
      %v2179 = vld [vmem:[#allocation2 + $0x28] sm:$0xff]
      %2186 = vrot.lane.b32.xlu0 %v2174, 127
      %v2187 = vpop.permute.xlu0 %2186
      %2188 = vrot.lane.b32.xlu0 %v2175, 127
      %v2189 = vpop.permute.xlu0 %2188
      %2190 = vrot.lane.b32.xlu0 %v2176, 127
      %v2191 = vpop.permute.xlu0 %2190
      %2192 = vrot.lane.b32.xlu0 %v2177, 127
      %v2193 = vpop.permute.xlu0 %2192
      %2194 = vrot.lane.b32.xlu0 %v2178, 127
      %v2195 = vpop.permute.xlu0 %2194
      %2196 = vrot.lane.b32.xlu0 %v2179, 127
      %v2197 = vpop.permute.xlu0 %2196
      %vm2198 = vcmask 1039360
      %v2199 = vsel %vm2198, %v2187, %v2189
      %v2200 = vsel %vm2198, %v2189, %v2191
      %v2201 = vsel %vm2198, %v2193, %v2195
      %v2202 = vsel %vm2198, %v2195, %v2197
      %v2207 = vsel %vm441, %v2199, 0.0
      %v2208 = vsel %vm442, %v2200, 0.0
      %v2209 = vsel %vm441, %v2201, 0.0
      %v2210 = vsel %vm442, %v2202, 0.0
      %2211 = vst [vmem:[#allocation3 + $0x20] sm:$0xff] %v2207
      %2212 = vst [vmem:[#allocation3 + $0x28] sm:$0xff] %v2208
      %2213 = vst [vmem:[#allocation3 + $0x30] sm:$0xff] %v2209
      %2214 = vst [vmem:[#allocation3 + $0x38] sm:$0xff] %v2210
      %v2215 = vld [vmem:[#allocation2] sm:$0xff]
      %v2216 = vld [vmem:[#allocation2 + $0x8] sm:$0xff]
      %v2217 = vld [vmem:[#allocation2 + $0x10] sm:$0xff]
      %v2218 = vld [vmem:[#allocation2 + $0x18] sm:$0xff]
      %v2219 = vld [vmem:[#allocation2 + $0x20] sm:$0xff]
      %v2220 = vld [vmem:[#allocation2 + $0x28] sm:$0xff]
      %2227 = vrot.lane.b32.xlu0 %v2215, 126
      %v2228 = vpop.permute.xlu0 %2227
      %2229 = vrot.lane.b32.xlu0 %v2216, 126
      %v2230 = vpop.permute.xlu0 %2229
      %2231 = vrot.lane.b32.xlu0 %v2217, 126
      %v2232 = vpop.permute.xlu0 %2231
      %2233 = vrot.lane.b32.xlu0 %v2218, 126
      %v2234 = vpop.permute.xlu0 %2233
      %2235 = vrot.lane.b32.xlu0 %v2219, 126
      %v2236 = vpop.permute.xlu0 %2235
      %2237 = vrot.lane.b32.xlu0 %v2220, 126
      %v2238 = vpop.permute.xlu0 %2237
      %vm2239 = vcmask 1031168
      %v2240 = vsel %vm2239, %v2228, %v2230
      %v2241 = vsel %vm2239, %v2230, %v2232
      %v2242 = vsel %vm2239, %v2234, %v2236
      %v2243 = vsel %vm2239, %v2236, %v2238
      %2248 = vst [vmem:[#allocation3 + $0x40] sm:$0xff] %v2240
      %2249 = vst [vmem:[#allocation3 + $0x48] sm:$0xff] %v2241
      %2250 = vst [vmem:[#allocation3 + $0x50] sm:$0xff] %v2242
      %2251 = vst [vmem:[#allocation3 + $0x58] sm:$0xff] %v2243
      %v2252 = vld [vmem:[#allocation2] sm:$0xff]
      %v2253 = vld [vmem:[#allocation2 + $0x8] sm:$0xff]
      %v2254 = vld [vmem:[#allocation2 + $0x10] sm:$0xff]
      %v2255 = vld [vmem:[#allocation2 + $0x18] sm:$0xff]
      %v2256 = vld [vmem:[#allocation2 + $0x20] sm:$0xff]
      %v2257 = vld [vmem:[#allocation2 + $0x28] sm:$0xff]
      %2264 = vrot.lane.b32.xlu0 %v2252, 125
      %v2265 = vpop.permute.xlu0 %2264
      %2266 = vrot.lane.b32.xlu0 %v2253, 125
      %v2267 = vpop.permute.xlu0 %2266
      %2268 = vrot.lane.b32.xlu0 %v2254, 125
      %v2269 = vpop.permute.xlu0 %2268
      %2270 = vrot.lane.b32.xlu0 %v2255, 125
      %v2271 = vpop.permute.xlu0 %2270
      %2272 = vrot.lane.b32.xlu0 %v2256, 125
      %v2273 = vpop.permute.xlu0 %2272
      %2274 = vrot.lane.b32.xlu0 %v2257, 125
      %v2275 = vpop.permute.xlu0 %2274
      %vm2276 = vcmask 1022976
      %v2277 = vsel %vm2276, %v2265, %v2267
      %v2278 = vsel %vm2276, %v2267, %v2269
      %v2279 = vsel %vm2276, %v2271, %v2273
      %v2280 = vsel %vm2276, %v2273, %v2275
      %v2285 = vsel %vm523, %v2277, 0.0
      %v2286 = vsel %vm524, %v2278, 0.0
      %v2287 = vsel %vm523, %v2279, 0.0
      %v2288 = vsel %vm524, %v2280, 0.0
      %2289 = vst [vmem:[#allocation3 + $0x60] sm:$0xff] %v2285
      %2290 = vst [vmem:[#allocation3 + $0x68] sm:$0xff] %v2286
      %2291 = vst [vmem:[#allocation3 + $0x70] sm:$0xff] %v2287
      %2292 = vst [vmem:[#allocation3 + $0x78] sm:$0xff] %v2288
      %v2293 = vld [vmem:[#allocation2] sm:$0xff]
      %v2294 = vld [vmem:[#allocation2 + $0x8] sm:$0xff]
      %v2295 = vld [vmem:[#allocation2 + $0x10] sm:$0xff]
      %v2296 = vld [vmem:[#allocation2 + $0x18] sm:$0xff]
      %v2297 = vld [vmem:[#allocation2 + $0x20] sm:$0xff]
      %v2298 = vld [vmem:[#allocation2 + $0x28] sm:$0xff]
      %v2299 = vsel %vm406, 1, 0
      %v2300 = vsel %vm407, 1, 0
      %vm2301 = vcmp.eq.s32.totalorder %v2299, 1
      %vm2302 = vcmp.eq.s32.totalorder %v2300, 1
      %2309 = vrot.lane.b32.xlu0 %v2293, 124
      %v2310 = vpop.permute.xlu0 %2309
      %2311 = vrot.lane.b32.xlu0 %v2294, 124
      %v2312 = vpop.permute.xlu0 %2311
      %2313 = vrot.lane.b32.xlu0 %v2295, 124
      %v2314 = vpop.permute.xlu0 %2313
      %2315 = vrot.lane.b32.xlu0 %v2296, 124
      %v2316 = vpop.permute.xlu0 %2315
      %2317 = vrot.lane.b32.xlu0 %v2297, 124
      %v2318 = vpop.permute.xlu0 %2317
      %2319 = vrot.lane.b32.xlu0 %v2298, 124
      %v2320 = vpop.permute.xlu0 %2319
      %vm2321 = vcmask 1014784
      %v2322 = vsel %vm2321, %v2310, %v2312
      %v2323 = vsel %vm2321, %v2312, %v2314
      %v2324 = vsel %vm2321, %v2316, %v2318
      %v2325 = vsel %vm2321, %v2318, %v2320
      %v2330 = vsel %vm2301, %v2322, 0.0
      %v2331 = vsel %vm2302, %v2323, 0.0
      %v2332 = vsel %vm2301, %v2324, 0.0
      %v2333 = vsel %vm2302, %v2325, 0.0
      %2334 = vst [vmem:[#allocation3 + $0x80] sm:$0xff] %v2330
      %2335 = vst [vmem:[#allocation3 + $0x88] sm:$0xff] %v2331
      %2336 = vst [vmem:[#allocation3 + $0x90] sm:$0xff] %v2332
      %2337 = vst [vmem:[#allocation3 + $0x98] sm:$0xff] %v2333
      %v2338 = vld [vmem:[#allocation2] sm:$0xff]
      %v2339 = vld [vmem:[#allocation2 + $0x8] sm:$0xff]
      %v2340 = vld [vmem:[#allocation2 + $0x10] sm:$0xff]
      %v2341 = vld [vmem:[#allocation2 + $0x18] sm:$0xff]
      %v2342 = vld [vmem:[#allocation2 + $0x20] sm:$0xff]
      %v2343 = vld [vmem:[#allocation2 + $0x28] sm:$0xff]
      %2350 = vrot.lane.b32.xlu0 %v2338, 112
      %v2351 = vpop.permute.xlu0 %2350
      %2352 = vrot.lane.b32.xlu0 %v2339, 112
      %v2353 = vpop.permute.xlu0 %2352
      %2354 = vrot.lane.b32.xlu0 %v2340, 112
      %v2355 = vpop.permute.xlu0 %2354
      %2356 = vrot.lane.b32.xlu0 %v2341, 112
      %v2357 = vpop.permute.xlu0 %2356
      %2358 = vrot.lane.b32.xlu0 %v2342, 112
      %v2359 = vpop.permute.xlu0 %2358
      %2360 = vrot.lane.b32.xlu0 %v2343, 112
      %v2361 = vpop.permute.xlu0 %2360
      %vm2362 = vcmask 916480
      %v2363 = vsel %vm2362, %v2351, %v2353
      %v2364 = vsel %vm2362, %v2353, %v2355
      %v2365 = vsel %vm2362, %v2357, %v2359
      %v2366 = vsel %vm2362, %v2359, %v2361
      %v2371 = vsel %vm2164, %v2363, 0.0
      %v2372 = vsel %vm2165, %v2364, 0.0
      %v2373 = vsel %vm2164, %v2365, 0.0
      %v2374 = vsel %vm2165, %v2366, 0.0
      %2375 = vst [vmem:[#allocation3 + $0xa0] sm:$0xff] %v2371
      %2376 = vst [vmem:[#allocation3 + $0xa8] sm:$0xff] %v2372
      %2377 = vst [vmem:[#allocation3 + $0xb0] sm:$0xff] %v2373
      %2378 = vst [vmem:[#allocation3 + $0xb8] sm:$0xff] %v2374
      %v2379 = vld [vmem:[#allocation2] sm:$0xff]
      %v2380 = vld [vmem:[#allocation2 + $0x8] sm:$0xff]
      %v2381 = vld [vmem:[#allocation2 + $0x10] sm:$0xff]
      %v2382 = vld [vmem:[#allocation2 + $0x18] sm:$0xff]
      %v2383 = vld [vmem:[#allocation2 + $0x20] sm:$0xff]
      %v2384 = vld [vmem:[#allocation2 + $0x28] sm:$0xff]
      %2391 = vrot.lane.b32.xlu0 %v2379, 111
      %v2392 = vpop.permute.xlu0 %2391
      %2393 = vrot.lane.b32.xlu0 %v2380, 111
      %v2394 = vpop.permute.xlu0 %2393
      %2395 = vrot.lane.b32.xlu0 %v2381, 111
      %v2396 = vpop.permute.xlu0 %2395
      %2397 = vrot.lane.b32.xlu0 %v2382, 111
      %v2398 = vpop.permute.xlu0 %2397
      %2399 = vrot.lane.b32.xlu0 %v2383, 111
      %v2400 = vpop.permute.xlu0 %2399
      %2401 = vrot.lane.b32.xlu0 %v2384, 111
      %v2402 = vpop.permute.xlu0 %2401
      %v2403 = vsel %vm461, %v2392, %v2394
      %v2404 = vsel %vm461, %v2394, %v2396
      %v2405 = vsel %vm461, %v2398, %v2400
      %v2406 = vsel %vm461, %v2400, %v2402
      %v2411 = vsel %vm441, %v2403, 0.0
      %v2412 = vsel %vm442, %v2404, 0.0
      %v2413 = vsel %vm441, %v2405, 0.0
      %v2414 = vsel %vm442, %v2406, 0.0
      %2415 = vst [vmem:[#allocation3 + $0xc0] sm:$0xff] %v2411
      %2416 = vst [vmem:[#allocation3 + $0xc8] sm:$0xff] %v2412
      %2417 = vst [vmem:[#allocation3 + $0xd0] sm:$0xff] %v2413
      %2418 = vst [vmem:[#allocation3 + $0xd8] sm:$0xff] %v2414
      %v2419 = vld [vmem:[#allocation2] sm:$0xff]
      %v2420 = vld [vmem:[#allocation2 + $0x8] sm:$0xff]
      %v2421 = vld [vmem:[#allocation2 + $0x10] sm:$0xff]
      %v2422 = vld [vmem:[#allocation2 + $0x18] sm:$0xff]
      %v2423 = vld [vmem:[#allocation2 + $0x20] sm:$0xff]
      %v2424 = vld [vmem:[#allocation2 + $0x28] sm:$0xff]
      %2431 = vrot.lane.b32.xlu0 %v2419, 110
      %v2432 = vpop.permute.xlu0 %2431
      %2433 = vrot.lane.b32.xlu0 %v2420, 110
      %v2434 = vpop.permute.xlu0 %2433
      %2435 = vrot.lane.b32.xlu0 %v2421, 110
      %v2436 = vpop.permute.xlu0 %2435
      %2437 = vrot.lane.b32.xlu0 %v2422, 110
      %v2438 = vpop.permute.xlu0 %2437
      %2439 = vrot.lane.b32.xlu0 %v2423, 110
      %v2440 = vpop.permute.xlu0 %2439
      %2441 = vrot.lane.b32.xlu0 %v2424, 110
      %v2442 = vpop.permute.xlu0 %2441
      %v2443 = vsel %vm502, %v2432, %v2434
      %v2444 = vsel %vm502, %v2434, %v2436
      %v2445 = vsel %vm502, %v2438, %v2440
      %v2446 = vsel %vm502, %v2440, %v2442
      %2451 = vst [vmem:[#allocation3 + $0xe0] sm:$0xff] %v2443
      %2452 = vst [vmem:[#allocation3 + $0xe8] sm:$0xff] %v2444
      %2453 = vst [vmem:[#allocation3 + $0xf0] sm:$0xff] %v2445
      %2454 = vst [vmem:[#allocation3 + $0xf8] sm:$0xff] %v2446
      %v2455 = vld [vmem:[#allocation2] sm:$0xff]
      %v2456 = vld [vmem:[#allocation2 + $0x8] sm:$0xff]
      %v2457 = vld [vmem:[#allocation2 + $0x10] sm:$0xff]
      %v2458 = vld [vmem:[#allocation2 + $0x18] sm:$0xff]
      %v2459 = vld [vmem:[#allocation2 + $0x20] sm:$0xff]
      %v2460 = vld [vmem:[#allocation2 + $0x28] sm:$0xff]
      %2467 = vrot.lane.b32.xlu0 %v2455, 109
      %v2468 = vpop.permute.xlu0 %2467
      %2469 = vrot.lane.b32.xlu0 %v2456, 109
      %v2470 = vpop.permute.xlu0 %2469
      %2471 = vrot.lane.b32.xlu0 %v2457, 109
      %v2472 = vpop.permute.xlu0 %2471
      %2473 = vrot.lane.b32.xlu0 %v2458, 109
      %v2474 = vpop.permute.xlu0 %2473
      %2475 = vrot.lane.b32.xlu0 %v2459, 109
      %v2476 = vpop.permute.xlu0 %2475
      %2477 = vrot.lane.b32.xlu0 %v2460, 109
      %v2478 = vpop.permute.xlu0 %2477
      %v2479 = vsel %vm543, %v2468, %v2470
      %v2480 = vsel %vm543, %v2470, %v2472
      %v2481 = vsel %vm543, %v2474, %v2476
      %v2482 = vsel %vm543, %v2476, %v2478
      %v2487 = vsel %vm523, %v2479, 0.0
      %v2488 = vsel %vm524, %v2480, 0.0
      %v2489 = vsel %vm523, %v2481, 0.0
      %v2490 = vsel %vm524, %v2482, 0.0
      %2491 = vst [vmem:[#allocation3 + $0x100] sm:$0xff] %v2487
      %2492 = vst [vmem:[#allocation3 + $0x108] sm:$0xff] %v2488
      %2493 = vst [vmem:[#allocation3 + $0x110] sm:$0xff] %v2489
      %2494 = vst [vmem:[#allocation3 + $0x118] sm:$0xff] %v2490
      %v2495 = vld [vmem:[#allocation2] sm:$0xff]
      %v2496 = vld [vmem:[#allocation2 + $0x8] sm:$0xff]
      %v2497 = vld [vmem:[#allocation2 + $0x10] sm:$0xff]
      %v2498 = vld [vmem:[#allocation2 + $0x18] sm:$0xff]
      %v2499 = vld [vmem:[#allocation2 + $0x20] sm:$0xff]
      %v2500 = vld [vmem:[#allocation2 + $0x28] sm:$0xff]
      %2507 = vrot.lane.b32.xlu0 %v2495, 108
      %v2508 = vpop.permute.xlu0 %2507
      %2509 = vrot.lane.b32.xlu0 %v2496, 108
      %v2510 = vpop.permute.xlu0 %2509
      %2511 = vrot.lane.b32.xlu0 %v2497, 108
      %v2512 = vpop.permute.xlu0 %2511
      %2513 = vrot.lane.b32.xlu0 %v2498, 108
      %v2514 = vpop.permute.xlu0 %2513
      %2515 = vrot.lane.b32.xlu0 %v2499, 108
      %v2516 = vpop.permute.xlu0 %2515
      %2517 = vrot.lane.b32.xlu0 %v2500, 108
      %v2518 = vpop.permute.xlu0 %2517
      %vm2519 = vcmask 883712
      %v2520 = vsel %vm2519, %v2508, %v2510
      %v2521 = vsel %vm2519, %v2510, %v2512
      %v2522 = vsel %vm2519, %v2514, %v2516
      %v2523 = vsel %vm2519, %v2516, %v2518
      %v2528 = vsel %vm2301, %v2520, 0.0
      %v2529 = vsel %vm2302, %v2521, 0.0
      %v2530 = vsel %vm2301, %v2522, 0.0
      %v2531 = vsel %vm2302, %v2523, 0.0
      %2532 = vst [vmem:[#allocation3 + $0x120] sm:$0xff] %v2528
      %2533 = vst [vmem:[#allocation3 + $0x128] sm:$0xff] %v2529
      %2534 = vst [vmem:[#allocation3 + $0x130] sm:$0xff] %v2530
      %2535 = vst [vmem:[#allocation3 + $0x138] sm:$0xff] %v2531
      %v2536 = vld [vmem:[#allocation2] sm:$0xff]
      %v2537 = vld [vmem:[#allocation2 + $0x8] sm:$0xff]
      %v2538 = vld [vmem:[#allocation2 + $0x10] sm:$0xff]
      %v2539 = vld [vmem:[#allocation2 + $0x18] sm:$0xff]
      %v2540 = vld [vmem:[#allocation2 + $0x20] sm:$0xff]
      %v2541 = vld [vmem:[#allocation2 + $0x28] sm:$0xff]
      %2548 = vrot.lane.b32.xlu0 %v2536, 96
      %v2549 = vpop.permute.xlu0 %2548
      %2550 = vrot.lane.b32.xlu0 %v2537, 96
      %v2551 = vpop.permute.xlu0 %2550
      %2552 = vrot.lane.b32.xlu0 %v2538, 96
      %v2553 = vpop.permute.xlu0 %2552
      %2554 = vrot.lane.b32.xlu0 %v2539, 96
      %v2555 = vpop.permute.xlu0 %2554
      %2556 = vrot.lane.b32.xlu0 %v2540, 96
      %v2557 = vpop.permute.xlu0 %2556
      %2558 = vrot.lane.b32.xlu0 %v2541, 96
      %v2559 = vpop.permute.xlu0 %2558
      %vm2560 = vcmask 785408
      %v2561 = vsel %vm2560, %v2549, %v2551
      %v2562 = vsel %vm2560, %v2551, %v2553
      %v2563 = vsel %vm2560, %v2555, %v2557
      %v2564 = vsel %vm2560, %v2557, %v2559
      %v2569 = vsel %vm2164, %v2561, 0.0
      %v2570 = vsel %vm2165, %v2562, 0.0
      %v2571 = vsel %vm2164, %v2563, 0.0
      %v2572 = vsel %vm2165, %v2564, 0.0
      %2573 = vst [vmem:[#allocation3 + $0x140] sm:$0xff] %v2569
      %2574 = vst [vmem:[#allocation3 + $0x148] sm:$0xff] %v2570
      %2575 = vst [vmem:[#allocation3 + $0x150] sm:$0xff] %v2571
      %2576 = vst [vmem:[#allocation3 + $0x158] sm:$0xff] %v2572
      %v2577 = vld [vmem:[#allocation2] sm:$0xff]
      %v2578 = vld [vmem:[#allocation2 + $0x8] sm:$0xff]
      %v2579 = vld [vmem:[#allocation2 + $0x10] sm:$0xff]
      %v2580 = vld [vmem:[#allocation2 + $0x18] sm:$0xff]
      %v2581 = vld [vmem:[#allocation2 + $0x20] sm:$0xff]
      %v2582 = vld [vmem:[#allocation2 + $0x28] sm:$0xff]
      %2589 = vrot.lane.b32.xlu0 %v2577, 95
      %v2590 = vpop.permute.xlu0 %2589
      %2591 = vrot.lane.b32.xlu0 %v2578, 95
      %v2592 = vpop.permute.xlu0 %2591
      %2593 = vrot.lane.b32.xlu0 %v2579, 95
      %v2594 = vpop.permute.xlu0 %2593
      %2595 = vrot.lane.b32.xlu0 %v2580, 95
      %v2596 = vpop.permute.xlu0 %2595
      %2597 = vrot.lane.b32.xlu0 %v2581, 95
      %v2598 = vpop.permute.xlu0 %2597
      %2599 = vrot.lane.b32.xlu0 %v2582, 95
      %v2600 = vpop.permute.xlu0 %2599
      %v2601 = vsel %vm584, %v2590, %v2592
      %v2602 = vsel %vm584, %v2592, %v2594
      %v2603 = vsel %vm584, %v2596, %v2598
      %v2604 = vsel %vm584, %v2598, %v2600
      %v2609 = vsel %vm441, %v2601, 0.0
      %v2610 = vsel %vm442, %v2602, 0.0
      %v2611 = vsel %vm441, %v2603, 0.0
      %v2612 = vsel %vm442, %v2604, 0.0
      %2613 = vst [vmem:[#allocation3 + $0x160] sm:$0xff] %v2609
      %2614 = vst [vmem:[#allocation3 + $0x168] sm:$0xff] %v2610
      %2615 = vst [vmem:[#allocation3 + $0x170] sm:$0xff] %v2611
      %2616 = vst [vmem:[#allocation3 + $0x178] sm:$0xff] %v2612
      %v2617 = vld [vmem:[#allocation2] sm:$0xff]
      %v2618 = vld [vmem:[#allocation2 + $0x8] sm:$0xff]
      %v2619 = vld [vmem:[#allocation2 + $0x10] sm:$0xff]
      %v2620 = vld [vmem:[#allocation2 + $0x18] sm:$0xff]
      %v2621 = vld [vmem:[#allocation2 + $0x20] sm:$0xff]
      %v2622 = vld [vmem:[#allocation2 + $0x28] sm:$0xff]
      %2629 = vrot.lane.b32.xlu0 %v2617, 94
      %v2630 = vpop.permute.xlu0 %2629
      %2631 = vrot.lane.b32.xlu0 %v2618, 94
      %v2632 = vpop.permute.xlu0 %2631
      %2633 = vrot.lane.b32.xlu0 %v2619, 94
      %v2634 = vpop.permute.xlu0 %2633
      %2635 = vrot.lane.b32.xlu0 %v2620, 94
      %v2636 = vpop.permute.xlu0 %2635
      %2637 = vrot.lane.b32.xlu0 %v2621, 94
      %v2638 = vpop.permute.xlu0 %2637
      %2639 = vrot.lane.b32.xlu0 %v2622, 94
      %v2640 = vpop.permute.xlu0 %2639
      %v2641 = vsel %vm625, %v2630, %v2632
      %v2642 = vsel %vm625, %v2632, %v2634
      %v2643 = vsel %vm625, %v2636, %v2638
      %v2644 = vsel %vm625, %v2638, %v2640
      %2649 = vst [vmem:[#allocation3 + $0x180] sm:$0xff] %v2641
      %2650 = vst [vmem:[#allocation3 + $0x188] sm:$0xff] %v2642
      %2651 = vst [vmem:[#allocation3 + $0x190] sm:$0xff] %v2643
      %2652 = vst [vmem:[#allocation3 + $0x198] sm:$0xff] %v2644
      %v2653 = vld [vmem:[#allocation2] sm:$0xff]
      %v2654 = vld [vmem:[#allocation2 + $0x8] sm:$0xff]
      %v2655 = vld [vmem:[#allocation2 + $0x10] sm:$0xff]
      %v2656 = vld [vmem:[#allocation2 + $0x18] sm:$0xff]
      %v2657 = vld [vmem:[#allocation2 + $0x20] sm:$0xff]
      %v2658 = vld [vmem:[#allocation2 + $0x28] sm:$0xff]
      %2665 = vrot.lane.b32.xlu0 %v2653, 93
      %v2666 = vpop.permute.xlu0 %2665
      %2667 = vrot.lane.b32.xlu0 %v2654, 93
      %v2668 = vpop.permute.xlu0 %2667
      %2669 = vrot.lane.b32.xlu0 %v2655, 93
      %v2670 = vpop.permute.xlu0 %2669
      %2671 = vrot.lane.b32.xlu0 %v2656, 93
      %v2672 = vpop.permute.xlu0 %2671
      %2673 = vrot.lane.b32.xlu0 %v2657, 93
      %v2674 = vpop.permute.xlu0 %2673
      %2675 = vrot.lane.b32.xlu0 %v2658, 93
      %v2676 = vpop.permute.xlu0 %2675
      %v2677 = vsel %vm662, %v2666, %v2668
      %v2678 = vsel %vm662, %v2668, %v2670
      %v2679 = vsel %vm662, %v2672, %v2674
      %v2680 = vsel %vm662, %v2674, %v2676
      %v2685 = vsel %vm523, %v2677, 0.0
      %v2686 = vsel %vm524, %v2678, 0.0
      %v2687 = vsel %vm523, %v2679, 0.0
      %v2688 = vsel %vm524, %v2680, 0.0
      %2689 = vst [vmem:[#allocation3 + $0x1a0] sm:$0xff] %v2685
      %2690 = vst [vmem:[#allocation3 + $0x1a8] sm:$0xff] %v2686
      %2691 = vst [vmem:[#allocation3 + $0x1b0] sm:$0xff] %v2687
      %2692 = vst [vmem:[#allocation3 + $0x1b8] sm:$0xff] %v2688
      %v2693 = vld [vmem:[#allocation2] sm:$0xff]
      %v2694 = vld [vmem:[#allocation2 + $0x8] sm:$0xff]
      %v2695 = vld [vmem:[#allocation2 + $0x10] sm:$0xff]
      %v2696 = vld [vmem:[#allocation2 + $0x18] sm:$0xff]
      %v2697 = vld [vmem:[#allocation2 + $0x20] sm:$0xff]
      %v2698 = vld [vmem:[#allocation2 + $0x28] sm:$0xff]
      %2705 = vrot.lane.b32.xlu0 %v2693, 92
      %v2706 = vpop.permute.xlu0 %2705
      %2707 = vrot.lane.b32.xlu0 %v2694, 92
      %v2708 = vpop.permute.xlu0 %2707
      %2709 = vrot.lane.b32.xlu0 %v2695, 92
      %v2710 = vpop.permute.xlu0 %2709
      %2711 = vrot.lane.b32.xlu0 %v2696, 92
      %v2712 = vpop.permute.xlu0 %2711
      %2713 = vrot.lane.b32.xlu0 %v2697, 92
      %v2714 = vpop.permute.xlu0 %2713
      %2715 = vrot.lane.b32.xlu0 %v2698, 92
      %v2716 = vpop.permute.xlu0 %2715
      %vm2717 = vcmask 752640
      %v2718 = vsel %vm2717, %v2706, %v2708
      %v2719 = vsel %vm2717, %v2708, %v2710
      %v2720 = vsel %vm2717, %v2712, %v2714
      %v2721 = vsel %vm2717, %v2714, %v2716
      %v2726 = vsel %vm2301, %v2718, 0.0
      %v2727 = vsel %vm2302, %v2719, 0.0
      %v2728 = vsel %vm2301, %v2720, 0.0
      %v2729 = vsel %vm2302, %v2721, 0.0
      %2730 = vst [vmem:[#allocation3 + $0x1c0] sm:$0xff] %v2726
      %2731 = vst [vmem:[#allocation3 + $0x1c8] sm:$0xff] %v2727
      %2732 = vst [vmem:[#allocation3 + $0x1d0] sm:$0xff] %v2728
      %2733 = vst [vmem:[#allocation3 + $0x1d8] sm:$0xff] %v2729
      %v2734 = vld [vmem:[#allocation2] sm:$0xff]
      %v2735 = vld [vmem:[#allocation2 + $0x8] sm:$0xff]
      %v2736 = vld [vmem:[#allocation2 + $0x10] sm:$0xff]
      %v2737 = vld [vmem:[#allocation2 + $0x18] sm:$0xff]
      %v2738 = vld [vmem:[#allocation2 + $0x20] sm:$0xff]
      %v2739 = vld [vmem:[#allocation2 + $0x28] sm:$0xff]
      %2746 = vrot.lane.b32.xlu0 %v2734, 80
      %v2747 = vpop.permute.xlu0 %2746
      %2748 = vrot.lane.b32.xlu0 %v2735, 80
      %v2749 = vpop.permute.xlu0 %2748
      %2750 = vrot.lane.b32.xlu0 %v2736, 80
      %v2751 = vpop.permute.xlu0 %2750
      %2752 = vrot.lane.b32.xlu0 %v2737, 80
      %v2753 = vpop.permute.xlu0 %2752
      %2754 = vrot.lane.b32.xlu0 %v2738, 80
      %v2755 = vpop.permute.xlu0 %2754
      %2756 = vrot.lane.b32.xlu0 %v2739, 80
      %v2757 = vpop.permute.xlu0 %2756
      %vm2758 = vcmask 654336
      %v2759 = vsel %vm2758, %v2747, %v2749
      %v2760 = vsel %vm2758, %v2749, %v2751
      %v2761 = vsel %vm2758, %v2753, %v2755
      %v2762 = vsel %vm2758, %v2755, %v2757
      %v2767 = vsel %vm2164, %v2759, 0.0
      %v2768 = vsel %vm2165, %v2760, 0.0
      %v2769 = vsel %vm2164, %v2761, 0.0
      %v2770 = vsel %vm2165, %v2762, 0.0
      %2771 = vst [vmem:[#allocation3 + $0x1e0] sm:$0xff] %v2767
      %2772 = vst [vmem:[#allocation3 + $0x1e8] sm:$0xff] %v2768
      %2773 = vst [vmem:[#allocation3 + $0x1f0] sm:$0xff] %v2769
      %2774 = vst [vmem:[#allocation3 + $0x1f8] sm:$0xff] %v2770
      %v2775 = vld [vmem:[#allocation2] sm:$0xff]
      %v2776 = vld [vmem:[#allocation2 + $0x8] sm:$0xff]
      %v2777 = vld [vmem:[#allocation2 + $0x10] sm:$0xff]
      %v2778 = vld [vmem:[#allocation2 + $0x18] sm:$0xff]
      %v2779 = vld [vmem:[#allocation2 + $0x20] sm:$0xff]
      %v2780 = vld [vmem:[#allocation2 + $0x28] sm:$0xff]
      %2787 = vrot.lane.b32.xlu0 %v2775, 79
      %v2788 = vpop.permute.xlu0 %2787
      %2789 = vrot.lane.b32.xlu0 %v2776, 79
      %v2790 = vpop.permute.xlu0 %2789
      %2791 = vrot.lane.b32.xlu0 %v2777, 79
      %v2792 = vpop.permute.xlu0 %2791
      %2793 = vrot.lane.b32.xlu0 %v2778, 79
      %v2794 = vpop.permute.xlu0 %2793
      %2795 = vrot.lane.b32.xlu0 %v2779, 79
      %v2796 = vpop.permute.xlu0 %2795
      %2797 = vrot.lane.b32.xlu0 %v2780, 79
      %v2798 = vpop.permute.xlu0 %2797
      %v2799 = vsel %vm703, %v2788, %v2790
      %v2800 = vsel %vm703, %v2790, %v2792
      %v2801 = vsel %vm703, %v2794, %v2796
      %v2802 = vsel %vm703, %v2796, %v2798
      %v2807 = vsel %vm441, %v2799, 0.0
      %v2808 = vsel %vm442, %v2800, 0.0
      %v2809 = vsel %vm441, %v2801, 0.0
      %v2810 = vsel %vm442, %v2802, 0.0
      %2811 = vst [vmem:[#allocation3 + $0x200] sm:$0xff] %v2807
      %2812 = vst [vmem:[#allocation3 + $0x208] sm:$0xff] %v2808
      %2813 = vst [vmem:[#allocation3 + $0x210] sm:$0xff] %v2809
      %2814 = vst [vmem:[#allocation3 + $0x218] sm:$0xff] %v2810
      %v2815 = vld [vmem:[#allocation2] sm:$0xff]
      %v2816 = vld [vmem:[#allocation2 + $0x8] sm:$0xff]
      %v2817 = vld [vmem:[#allocation2 + $0x10] sm:$0xff]
      %v2818 = vld [vmem:[#allocation2 + $0x18] sm:$0xff]
      %v2819 = vld [vmem:[#allocation2 + $0x20] sm:$0xff]
      %v2820 = vld [vmem:[#allocation2 + $0x28] sm:$0xff]
      %2827 = vrot.lane.b32.xlu0 %v2815, 78
      %v2828 = vpop.permute.xlu0 %2827
      %2829 = vrot.lane.b32.xlu0 %v2816, 78
      %v2830 = vpop.permute.xlu0 %2829
      %2831 = vrot.lane.b32.xlu0 %v2817, 78
      %v2832 = vpop.permute.xlu0 %2831
      %2833 = vrot.lane.b32.xlu0 %v2818, 78
      %v2834 = vpop.permute.xlu0 %2833
      %2835 = vrot.lane.b32.xlu0 %v2819, 78
      %v2836 = vpop.permute.xlu0 %2835
      %2837 = vrot.lane.b32.xlu0 %v2820, 78
      %v2838 = vpop.permute.xlu0 %2837
      %v2839 = vsel %vm744, %v2828, %v2830
      %v2840 = vsel %vm744, %v2830, %v2832
      %v2841 = vsel %vm744, %v2834, %v2836
      %v2842 = vsel %vm744, %v2836, %v2838
      %2847 = vst [vmem:[#allocation3 + $0x220] sm:$0xff] %v2839
      %2848 = vst [vmem:[#allocation3 + $0x228] sm:$0xff] %v2840
      %2849 = vst [vmem:[#allocation3 + $0x230] sm:$0xff] %v2841
      %2850 = vst [vmem:[#allocation3 + $0x238] sm:$0xff] %v2842
      %v2851 = vld [vmem:[#allocation2] sm:$0xff]
      %v2852 = vld [vmem:[#allocation2 + $0x8] sm:$0xff]
      %v2853 = vld [vmem:[#allocation2 + $0x10] sm:$0xff]
      %v2854 = vld [vmem:[#allocation2 + $0x18] sm:$0xff]
      %v2855 = vld [vmem:[#allocation2 + $0x20] sm:$0xff]
      %v2856 = vld [vmem:[#allocation2 + $0x28] sm:$0xff]
      %2863 = vrot.lane.b32.xlu0 %v2851, 77
      %v2864 = vpop.permute.xlu0 %2863
      %2865 = vrot.lane.b32.xlu0 %v2852, 77
      %v2866 = vpop.permute.xlu0 %2865
      %2867 = vrot.lane.b32.xlu0 %v2853, 77
      %v2868 = vpop.permute.xlu0 %2867
      %2869 = vrot.lane.b32.xlu0 %v2854, 77
      %v2870 = vpop.permute.xlu0 %2869
      %2871 = vrot.lane.b32.xlu0 %v2855, 77
      %v2872 = vpop.permute.xlu0 %2871
      %2873 = vrot.lane.b32.xlu0 %v2856, 77
      %v2874 = vpop.permute.xlu0 %2873
      %v2875 = vsel %vm781, %v2864, %v2866
      %v2876 = vsel %vm781, %v2866, %v2868
      %v2877 = vsel %vm781, %v2870, %v2872
      %v2878 = vsel %vm781, %v2872, %v2874
      %v2883 = vsel %vm523, %v2875, 0.0
      %v2884 = vsel %vm524, %v2876, 0.0
      %v2885 = vsel %vm523, %v2877, 0.0
      %v2886 = vsel %vm524, %v2878, 0.0
      %2887 = vst [vmem:[#allocation3 + $0x240] sm:$0xff] %v2883
      %2888 = vst [vmem:[#allocation3 + $0x248] sm:$0xff] %v2884
      %2889 = vst [vmem:[#allocation3 + $0x250] sm:$0xff] %v2885
      %2890 = vst [vmem:[#allocation3 + $0x258] sm:$0xff] %v2886
      %v2891 = vld [vmem:[#allocation2] sm:$0xff]
      %v2892 = vld [vmem:[#allocation2 + $0x8] sm:$0xff]
      %v2893 = vld [vmem:[#allocation2 + $0x10] sm:$0xff]
      %v2894 = vld [vmem:[#allocation2 + $0x18] sm:$0xff]
      %v2895 = vld [vmem:[#allocation2 + $0x20] sm:$0xff]
      %v2896 = vld [vmem:[#allocation2 + $0x28] sm:$0xff]
      %2903 = vrot.lane.b32.xlu0 %v2891, 76
      %v2904 = vpop.permute.xlu0 %2903
      %2905 = vrot.lane.b32.xlu0 %v2892, 76
      %v2906 = vpop.permute.xlu0 %2905
      %2907 = vrot.lane.b32.xlu0 %v2893, 76
      %v2908 = vpop.permute.xlu0 %2907
      %2909 = vrot.lane.b32.xlu0 %v2894, 76
      %v2910 = vpop.permute.xlu0 %2909
      %2911 = vrot.lane.b32.xlu0 %v2895, 76
      %v2912 = vpop.permute.xlu0 %2911
      %2913 = vrot.lane.b32.xlu0 %v2896, 76
      %v2914 = vpop.permute.xlu0 %2913
      %vm2915 = vcmask 621568
      %v2916 = vsel %vm2915, %v2904, %v2906
      %v2917 = vsel %vm2915, %v2906, %v2908
      %v2918 = vsel %vm2915, %v2910, %v2912
      %v2919 = vsel %vm2915, %v2912, %v2914
      %v2924 = vsel %vm2301, %v2916, 0.0
      %v2925 = vsel %vm2302, %v2917, 0.0
      %v2926 = vsel %vm2301, %v2918, 0.0
      %v2927 = vsel %vm2302, %v2919, 0.0
      %2928 = vst [vmem:[#allocation3 + $0x260] sm:$0xff] %v2924
      %2929 = vst [vmem:[#allocation3 + $0x268] sm:$0xff] %v2925
      %2930 = vst [vmem:[#allocation3 + $0x270] sm:$0xff] %v2926
      %2931 = vst [vmem:[#allocation3 + $0x278] sm:$0xff] %v2927
      %v2932 = vld [vmem:[#allocation2] sm:$0xff]
      %v2933 = vld [vmem:[#allocation2 + $0x8] sm:$0xff]
      %v2934 = vld [vmem:[#allocation2 + $0x10] sm:$0xff]
      %v2935 = vld [vmem:[#allocation2 + $0x18] sm:$0xff]
      %v2936 = vld [vmem:[#allocation2 + $0x20] sm:$0xff]
      %v2937 = vld [vmem:[#allocation2 + $0x28] sm:$0xff]
      %2944 = vrot.lane.b32.xlu0 %v2932, 64
      %v2945 = vpop.permute.xlu0 %2944
      %2946 = vrot.lane.b32.xlu0 %v2933, 64
      %v2947 = vpop.permute.xlu0 %2946
      %2948 = vrot.lane.b32.xlu0 %v2934, 64
      %v2949 = vpop.permute.xlu0 %2948
      %2950 = vrot.lane.b32.xlu0 %v2935, 64
      %v2951 = vpop.permute.xlu0 %2950
      %2952 = vrot.lane.b32.xlu0 %v2936, 64
      %v2953 = vpop.permute.xlu0 %2952
      %2954 = vrot.lane.b32.xlu0 %v2937, 64
      %v2955 = vpop.permute.xlu0 %2954
      %vm2956 = vcmask 523264
      %v2957 = vsel %vm2956, %v2945, %v2947
      %v2958 = vsel %vm2956, %v2947, %v2949
      %v2959 = vsel %vm2956, %v2951, %v2953
      %v2960 = vsel %vm2956, %v2953, %v2955
      %v2965 = vsel %vm2164, %v2957, 0.0
      %v2966 = vsel %vm2165, %v2958, 0.0
      %v2967 = vsel %vm2164, %v2959, 0.0
      %v2968 = vsel %vm2165, %v2960, 0.0
      %2969 = vst [vmem:[#allocation3 + $0x280] sm:$0xff] %v2965
      %2970 = vst [vmem:[#allocation3 + $0x288] sm:$0xff] %v2966
      %2971 = vst [vmem:[#allocation3 + $0x290] sm:$0xff] %v2967
      %2972 = vst [vmem:[#allocation3 + $0x298] sm:$0xff] %v2968
      %v2973 = vld [vmem:[#allocation2] sm:$0xff]
      %v2974 = vld [vmem:[#allocation2 + $0x8] sm:$0xff]
      %v2975 = vld [vmem:[#allocation2 + $0x10] sm:$0xff]
      %v2976 = vld [vmem:[#allocation2 + $0x18] sm:$0xff]
      %v2977 = vld [vmem:[#allocation2 + $0x20] sm:$0xff]
      %v2978 = vld [vmem:[#allocation2 + $0x28] sm:$0xff]
      %2985 = vrot.lane.b32.xlu0 %v2973, 63
      %v2986 = vpop.permute.xlu0 %2985
      %2987 = vrot.lane.b32.xlu0 %v2974, 63
      %v2988 = vpop.permute.xlu0 %2987
      %2989 = vrot.lane.b32.xlu0 %v2975, 63
      %v2990 = vpop.permute.xlu0 %2989
      %2991 = vrot.lane.b32.xlu0 %v2976, 63
      %v2992 = vpop.permute.xlu0 %2991
      %2993 = vrot.lane.b32.xlu0 %v2977, 63
      %v2994 = vpop.permute.xlu0 %2993
      %2995 = vrot.lane.b32.xlu0 %v2978, 63
      %v2996 = vpop.permute.xlu0 %2995
      %vm2997 = vcmask 515072
      %v2998 = vsel %vm2997, %v2986, %v2988
      %v2999 = vsel %vm2997, %v2988, %v2990
      %v3000 = vsel %vm2997, %v2992, %v2994
      %v3001 = vsel %vm2997, %v2994, %v2996
      %v3006 = vsel %vm441, %v2998, 0.0
      %v3007 = vsel %vm442, %v2999, 0.0
      %v3008 = vsel %vm441, %v3000, 0.0
      %v3009 = vsel %vm442, %v3001, 0.0
      %3010 = vst [vmem:[#allocation3 + $0x2a0] sm:$0xff] %v3006
      %3011 = vst [vmem:[#allocation3 + $0x2a8] sm:$0xff] %v3007
      %3012 = vst [vmem:[#allocation3 + $0x2b0] sm:$0xff] %v3008
      %3013 = vst [vmem:[#allocation3 + $0x2b8] sm:$0xff] %v3009
      %v3014 = vld [vmem:[#allocation2] sm:$0xff]
      %v3015 = vld [vmem:[#allocation2 + $0x8] sm:$0xff]
      %v3016 = vld [vmem:[#allocation2 + $0x10] sm:$0xff]
      %v3017 = vld [vmem:[#allocation2 + $0x18] sm:$0xff]
      %v3018 = vld [vmem:[#allocation2 + $0x20] sm:$0xff]
      %v3019 = vld [vmem:[#allocation2 + $0x28] sm:$0xff]
      %3026 = vrot.lane.b32.xlu0 %v3014, 62
      %v3027 = vpop.permute.xlu0 %3026
      %3028 = vrot.lane.b32.xlu0 %v3015, 62
      %v3029 = vpop.permute.xlu0 %3028
      %3030 = vrot.lane.b32.xlu0 %v3016, 62
      %v3031 = vpop.permute.xlu0 %3030
      %3032 = vrot.lane.b32.xlu0 %v3017, 62
      %v3033 = vpop.permute.xlu0 %3032
      %3034 = vrot.lane.b32.xlu0 %v3018, 62
      %v3035 = vpop.permute.xlu0 %3034
      %3036 = vrot.lane.b32.xlu0 %v3019, 62
      %v3037 = vpop.permute.xlu0 %3036
      %vm3038 = vcmask 506880
      %v3039 = vsel %vm3038, %v3027, %v3029
      %v3040 = vsel %vm3038, %v3029, %v3031
      %v3041 = vsel %vm3038, %v3033, %v3035
      %v3042 = vsel %vm3038, %v3035, %v3037
      %3047 = vst [vmem:[#allocation3 + $0x2c0] sm:$0xff] %v3039
      %3048 = vst [vmem:[#allocation3 + $0x2c8] sm:$0xff] %v3040
      %3049 = vst [vmem:[#allocation3 + $0x2d0] sm:$0xff] %v3041
      %3050 = vst [vmem:[#allocation3 + $0x2d8] sm:$0xff] %v3042
      %v3051 = vld [vmem:[#allocation2] sm:$0xff]
      %v3052 = vld [vmem:[#allocation2 + $0x8] sm:$0xff]
      %v3053 = vld [vmem:[#allocation2 + $0x10] sm:$0xff]
      %v3054 = vld [vmem:[#allocation2 + $0x18] sm:$0xff]
      %v3055 = vld [vmem:[#allocation2 + $0x20] sm:$0xff]
      %v3056 = vld [vmem:[#allocation2 + $0x28] sm:$0xff]
      %3063 = vrot.lane.b32.xlu0 %v3051, 61
      %v3064 = vpop.permute.xlu0 %3063
      %3065 = vrot.lane.b32.xlu0 %v3052, 61
      %v3066 = vpop.permute.xlu0 %3065
      %3067 = vrot.lane.b32.xlu0 %v3053, 61
      %v3068 = vpop.permute.xlu0 %3067
      %3069 = vrot.lane.b32.xlu0 %v3054, 61
      %v3070 = vpop.permute.xlu0 %3069
      %3071 = vrot.lane.b32.xlu0 %v3055, 61
      %v3072 = vpop.permute.xlu0 %3071
      %3073 = vrot.lane.b32.xlu0 %v3056, 61
      %v3074 = vpop.permute.xlu0 %3073
      %vm3075 = vcmask 498688
      %v3076 = vsel %vm3075, %v3064, %v3066
      %v3077 = vsel %vm3075, %v3066, %v3068
      %v3078 = vsel %vm3075, %v3070, %v3072
      %v3079 = vsel %vm3075, %v3072, %v3074
      %v3084 = vsel %vm523, %v3076, 0.0
      %v3085 = vsel %vm524, %v3077, 0.0
      %v3086 = vsel %vm523, %v3078, 0.0
      %v3087 = vsel %vm524, %v3079, 0.0
      %3088 = vst [vmem:[#allocation3 + $0x2e0] sm:$0xff] %v3084
      %3089 = vst [vmem:[#allocation3 + $0x2e8] sm:$0xff] %v3085
      %3090 = vst [vmem:[#allocation3 + $0x2f0] sm:$0xff] %v3086
      %3091 = vst [vmem:[#allocation3 + $0x2f8] sm:$0xff] %v3087
      %v3092 = vld [vmem:[#allocation2] sm:$0xff]
      %v3093 = vld [vmem:[#allocation2 + $0x8] sm:$0xff]
      %v3094 = vld [vmem:[#allocation2 + $0x10] sm:$0xff]
      %v3095 = vld [vmem:[#allocation2 + $0x18] sm:$0xff]
      %v3096 = vld [vmem:[#allocation2 + $0x20] sm:$0xff]
      %v3097 = vld [vmem:[#allocation2 + $0x28] sm:$0xff]
      %3104 = vrot.lane.b32.xlu0 %v3092, 60
      %v3105 = vpop.permute.xlu0 %3104
      %3106 = vrot.lane.b32.xlu0 %v3093, 60
      %v3107 = vpop.permute.xlu0 %3106
      %3108 = vrot.lane.b32.xlu0 %v3094, 60
      %v3109 = vpop.permute.xlu0 %3108
      %3110 = vrot.lane.b32.xlu0 %v3095, 60
      %v3111 = vpop.permute.xlu0 %3110
      %3112 = vrot.lane.b32.xlu0 %v3096, 60
      %v3113 = vpop.permute.xlu0 %3112
      %3114 = vrot.lane.b32.xlu0 %v3097, 60
      %v3115 = vpop.permute.xlu0 %3114
      %vm3116 = vcmask 490496
      %v3117 = vsel %vm3116, %v3105, %v3107
      %v3118 = vsel %vm3116, %v3107, %v3109
      %v3119 = vsel %vm3116, %v3111, %v3113
      %v3120 = vsel %vm3116, %v3113, %v3115
      %v3125 = vsel %vm2301, %v3117, 0.0
      %v3126 = vsel %vm2302, %v3118, 0.0
      %v3127 = vsel %vm2301, %v3119, 0.0
      %v3128 = vsel %vm2302, %v3120, 0.0
      %3129 = vst [vmem:[#allocation3 + $0x300] sm:$0xff] %v3125
      %3130 = vst [vmem:[#allocation3 + $0x308] sm:$0xff] %v3126
      %3131 = vst [vmem:[#allocation3 + $0x310] sm:$0xff] %v3127
      %3132 = vst [vmem:[#allocation3 + $0x318] sm:$0xff] %v3128
      %v3133 = vld [vmem:[%s4] sm:$0xff]
      %v3134 = vld [vmem:[%s4 + $0x8] sm:$0xff]
      %v3135 = vld [vmem:[%s4 + $0x10] sm:$0xff]
      %v3136 = vld [vmem:[%s4 + $0x18] sm:$0xff]
      %v3137 = vld [vmem:[%s4 + $0x20] sm:$0xff]
      %v3138 = vld [vmem:[%s4 + $0x28] sm:$0xff]
      %v3139 = vld [vmem:[%s4 + $0x30] sm:$0xff]
      %v3140 = vld [vmem:[%s4 + $0x38] sm:$0xff]
      %v3141 = vld [vmem:[#allocation3] sm:$0xff]
      %v3142 = vld [vmem:[#allocation3 + $0x8] sm:$0xff]
      %v3143 = vld [vmem:[#allocation3 + $0x10] sm:$0xff]
      %v3144 = vld [vmem:[#allocation3 + $0x18] sm:$0xff]
      %v3145 = vld [vmem:[#allocation3 + $0x20] sm:$0xff]
      %v3146 = vld [vmem:[#allocation3 + $0x28] sm:$0xff]
      %v3147 = vld [vmem:[#allocation3 + $0x30] sm:$0xff]
      %v3148 = vld [vmem:[#allocation3 + $0x38] sm:$0xff]
      %v3149 = vld [vmem:[#allocation3 + $0x40] sm:$0xff]
      %v3150 = vld [vmem:[#allocation3 + $0x48] sm:$0xff]
      %v3151 = vld [vmem:[#allocation3 + $0x50] sm:$0xff]
      %v3152 = vld [vmem:[#allocation3 + $0x58] sm:$0xff]
      %v3153 = vld [vmem:[#allocation3 + $0x60] sm:$0xff]
      %v3154 = vld [vmem:[#allocation3 + $0x68] sm:$0xff]
      %v3155 = vld [vmem:[#allocation3 + $0x70] sm:$0xff]
      %v3156 = vld [vmem:[#allocation3 + $0x78] sm:$0xff]
      %v3157 = vld [vmem:[#allocation3 + $0x80] sm:$0xff]
      %v3158 = vld [vmem:[#allocation3 + $0x88] sm:$0xff]
      %v3159 = vld [vmem:[#allocation3 + $0x90] sm:$0xff]
      %v3160 = vld [vmem:[#allocation3 + $0x98] sm:$0xff]
      %v3161 = vld [vmem:[#allocation3 + $0xa0] sm:$0xff]
      %v3162 = vld [vmem:[#allocation3 + $0xa8] sm:$0xff]
      %v3163 = vld [vmem:[#allocation3 + $0xb0] sm:$0xff]
      %v3164 = vld [vmem:[#allocation3 + $0xb8] sm:$0xff]
      %v3165 = vld [vmem:[#allocation3 + $0xc0] sm:$0xff]
      %v3166 = vld [vmem:[#allocation3 + $0xc8] sm:$0xff]
      %v3167 = vld [vmem:[#allocation3 + $0xd0] sm:$0xff]
      %v3168 = vld [vmem:[#allocation3 + $0xd8] sm:$0xff]
      %v3169 = vld [vmem:[#allocation3 + $0xe0] sm:$0xff]
      %v3170 = vld [vmem:[#allocation3 + $0xe8] sm:$0xff]
      %v3171 = vld [vmem:[#allocation3 + $0xf0] sm:$0xff]
      %v3172 = vld [vmem:[#allocation3 + $0xf8] sm:$0xff]
      %v3173 = vld [vmem:[#allocation3 + $0x100] sm:$0xff]
      %v3174 = vld [vmem:[#allocation3 + $0x108] sm:$0xff]
      %v3175 = vld [vmem:[#allocation3 + $0x110] sm:$0xff]
      %v3176 = vld [vmem:[#allocation3 + $0x118] sm:$0xff]
      %v3177 = vld [vmem:[#allocation3 + $0x120] sm:$0xff]
      %v3178 = vld [vmem:[#allocation3 + $0x128] sm:$0xff]
      %v3179 = vld [vmem:[#allocation3 + $0x130] sm:$0xff]
      %v3180 = vld [vmem:[#allocation3 + $0x138] sm:$0xff]
      %v3181 = vld [vmem:[#allocation3 + $0x140] sm:$0xff]
      %v3182 = vld [vmem:[#allocation3 + $0x148] sm:$0xff]
      %v3183 = vld [vmem:[#allocation3 + $0x150] sm:$0xff]
      %v3184 = vld [vmem:[#allocation3 + $0x158] sm:$0xff]
      %v3185 = vld [vmem:[#allocation3 + $0x160] sm:$0xff]
      %v3186 = vld [vmem:[#allocation3 + $0x168] sm:$0xff]
      %v3187 = vld [vmem:[#allocation3 + $0x170] sm:$0xff]
      %v3188 = vld [vmem:[#allocation3 + $0x178] sm:$0xff]
      %v3189 = vld [vmem:[#allocation3 + $0x180] sm:$0xff]
      %v3190 = vld [vmem:[#allocation3 + $0x188] sm:$0xff]
      %v3191 = vld [vmem:[#allocation3 + $0x190] sm:$0xff]
      %v3192 = vld [vmem:[#allocation3 + $0x198] sm:$0xff]
      %v3193 = vld [vmem:[#allocation3 + $0x1a0] sm:$0xff]
      %v3194 = vld [vmem:[#allocation3 + $0x1a8] sm:$0xff]
      %v3195 = vld [vmem:[#allocation3 + $0x1b0] sm:$0xff]
      %v3196 = vld [vmem:[#allocation3 + $0x1b8] sm:$0xff]
      %v3197 = vld [vmem:[#allocation3 + $0x1c0] sm:$0xff]
      %v3198 = vld [vmem:[#allocation3 + $0x1c8] sm:$0xff]
      %v3199 = vld [vmem:[#allocation3 + $0x1d0] sm:$0xff]
      %v3200 = vld [vmem:[#allocation3 + $0x1d8] sm:$0xff]
      %v3201 = vld [vmem:[#allocation3 + $0x1e0] sm:$0xff]
      %v3202 = vld [vmem:[#allocation3 + $0x1e8] sm:$0xff]
      %v3203 = vld [vmem:[#allocation3 + $0x1f0] sm:$0xff]
      %v3204 = vld [vmem:[#allocation3 + $0x1f8] sm:$0xff]
      %v3205 = vld [vmem:[#allocation3 + $0x200] sm:$0xff]
      %v3206 = vld [vmem:[#allocation3 + $0x208] sm:$0xff]
      %v3207 = vld [vmem:[#allocation3 + $0x210] sm:$0xff]
      %v3208 = vld [vmem:[#allocation3 + $0x218] sm:$0xff]
      %v3209 = vld [vmem:[#allocation3 + $0x220] sm:$0xff]
      %v3210 = vld [vmem:[#allocation3 + $0x228] sm:$0xff]
      %v3211 = vld [vmem:[#allocation3 + $0x230] sm:$0xff]
      %v3212 = vld [vmem:[#allocation3 + $0x238] sm:$0xff]
      %v3213 = vld [vmem:[#allocation3 + $0x240] sm:$0xff]
      %v3214 = vld [vmem:[#allocation3 + $0x248] sm:$0xff]
      %v3215 = vld [vmem:[#allocation3 + $0x250] sm:$0xff]
      %v3216 = vld [vmem:[#allocation3 + $0x258] sm:$0xff]
      %v3217 = vld [vmem:[#allocation3 + $0x260] sm:$0xff]
      %v3218 = vld [vmem:[#allocation3 + $0x268] sm:$0xff]
      %v3219 = vld [vmem:[#allocation3 + $0x270] sm:$0xff]
      %v3220 = vld [vmem:[#allocation3 + $0x278] sm:$0xff]
      %v3221 = vld [vmem:[#allocation3 + $0x280] sm:$0xff]
      %v3222 = vld [vmem:[#allocation3 + $0x288] sm:$0xff]
      %v3223 = vld [vmem:[#allocation3 + $0x290] sm:$0xff]
      %v3224 = vld [vmem:[#allocation3 + $0x298] sm:$0xff]
      %v3225 = vld [vmem:[#allocation3 + $0x2a0] sm:$0xff]
      %v3226 = vld [vmem:[#allocation3 + $0x2a8] sm:$0xff]
      %v3227 = vld [vmem:[#allocation3 + $0x2b0] sm:$0xff]
      %v3228 = vld [vmem:[#allocation3 + $0x2b8] sm:$0xff]
      %v3229 = vld [vmem:[#allocation3 + $0x2c0] sm:$0xff]
      %v3230 = vld [vmem:[#allocation3 + $0x2c8] sm:$0xff]
      %v3231 = vld [vmem:[#allocation3 + $0x2d0] sm:$0xff]
      %v3232 = vld [vmem:[#allocation3 + $0x2d8] sm:$0xff]
      %v3233 = vld [vmem:[#allocation3 + $0x2e0] sm:$0xff]
      %v3234 = vld [vmem:[#allocation3 + $0x2e8] sm:$0xff]
      %v3235 = vld [vmem:[#allocation3 + $0x2f0] sm:$0xff]
      %v3236 = vld [vmem:[#allocation3 + $0x2f8] sm:$0xff]
      %v3237 = vld [vmem:[#allocation3 + $0x300] sm:$0xff]
      %v3238 = vld [vmem:[#allocation3 + $0x308] sm:$0xff]
      %v3239 = vld [vmem:[#allocation3 + $0x310] sm:$0xff]
      %v3240 = vld [vmem:[#allocation3 + $0x318] sm:$0xff]
      %vm3241 = vcmask 130048
      %v3243 = vsel %vm3241, %v3136, 0
      %v3246 = vsel %vm3241, %v3140, 0
      %3248 = vmatprep.subr.mxu0 %v3172
      %3249 = vmatpush1.msra.mxu0 %v3171
      %3250 = vmatprep.subr.mxu0 %v3170
      %3251 = vmatpush1.msra.mxu0 %v3169
      %3252 = vmatprep.subr.mxu0 %v3168
      %3253 = vmatpush1.msra.mxu0 %v3167
      %3254 = vmatprep.subr.mxu0 %v3166
      %3255 = vmatpush1.msra.mxu0 %v3165
      %3256 = vmatprep.subr.mxu0 %v3164
      %3257 = vmatpush1.msra.mxu0 %v3163
      %3258 = vmatprep.subr.mxu0 %v3162
      %3259 = vmatpush1.msra.mxu0 %v3161
      %3260 = vmatprep.subr.mxu0 %v3160
      %3261 = vmatpush1.msra.mxu0 %v3159
      %3262 = vmatprep.subr.mxu0 %v3158
      %3263 = vmatpush1.msra.mxu0 %v3157
      %3264 = vmatprep.subr.mxu0 %v3156
      %3265 = vmatpush1.msra.mxu0 %v3155
      %3266 = vmatprep.subr.mxu0 %v3154
      %3267 = vmatpush1.msra.mxu0 %v3153
      %3268 = vmatprep.subr.mxu0 %v3152
      %3269 = vmatpush1.msra.mxu0 %v3151
      %3270 = vmatprep.subr.mxu0 %v3150
      %3271 = vmatpush1.msra.mxu0 %v3149
      %3272 = vmatprep.subr.mxu0 %v3148
      %3273 = vmatpush1.msra.mxu0 %v3147
      %3274 = vmatprep.subr.mxu0 %v3146
      %3275 = vmatpush1.msra.mxu0 %v3145
      %3276 = vmatprep.subr.mxu0 %v3144
      %3277 = vmatpush1.msra.mxu0 %v3143
      %3278 = vmatprep.subr.mxu0 %v3142
      %3279 = vmatpush1.msra.mxu0 %v3141
      %3280 = vmatprep.subr.mxu0 %v3204
      %3281 = vmatpush2.msra.mxu0 %v3203
      %3282 = vmatprep.subr.mxu0 %v3202
      %3283 = vmatpush2.msra.mxu0 %v3201
      %3284 = vmatprep.subr.mxu0 %v3200
      %3285 = vmatpush2.msra.mxu0 %v3199
      %3286 = vmatprep.subr.mxu0 %v3198
      %3287 = vmatpush2.msra.mxu0 %v3197
      %3288 = vmatprep.subr.mxu0 %v3196
      %3289 = vmatpush2.msra.mxu0 %v3195
      %3290 = vmatprep.subr.mxu0 %v3194
      %3291 = vmatpush2.msra.mxu0 %v3193
      %3292 = vmatprep.subr.mxu0 %v3192
      %3293 = vmatpush2.msra.mxu0 %v3191
      %3294 = vmatprep.subr.mxu0 %v3190
      %3295 = vmatpush2.msra.mxu0 %v3189
      %3296 = vmatprep.subr.mxu0 %v3188
      %3297 = vmatpush2.msra.mxu0 %v3187
      %3298 = vmatprep.subr.mxu0 %v3186
      %3299 = vmatpush2.msra.mxu0 %v3185
      %3300 = vmatprep.subr.mxu0 %v3184
      %3301 = vmatpush2.msra.mxu0 %v3183
      %3302 = vmatprep.subr.mxu0 %v3182
      %3303 = vmatpush2.msra.mxu0 %v3181
      %3304 = vmatprep.subr.mxu0 %v3180
      %3305 = vmatpush2.msra.mxu0 %v3179
      %3306 = vmatprep.subr.mxu0 %v3178
      %3307 = vmatpush2.msra.mxu0 %v3177
      %3308 = vmatprep.subr.mxu0 %v3176
      %3309 = vmatpush2.msra.mxu0 %v3175
      %3310 = vmatprep.subr.mxu0 %v3174
      %3311 = vmatpush2.msra.mxu0 %v3173
      %3312 = vmatprep.mubr.f32.mxu0 %v3134
      %3313 = vmatmul.mubr.f32.gmra.mxu0 %v3133
      %v3314 = vpop.f32.mrf.mxu0
      %v3315 = vadd.f32 0.0, %v3314
      %v3316 = vpop.f32.mrf.mxu0
      %v3317 = vadd.f32 0.0, %v3316
      %3318 = vmatprep.mubr.f32.mxu0 %v3138
      %3319 = vmatmul.mubr.f32.gmra.mxu0 %v3137
      %v3320 = vpop.f32.mrf.mxu0
      %v3321 = vadd.f32 0.0, %v3320
      %v3322 = vpop.f32.mrf.mxu0
      %v3323 = vadd.f32 0.0, %v3322
      %3324 = vdwg.mxu0
      %3325 = vmatprep.subr.mxu0 %v3236
      %3326 = vmatpush1.msra.mxu0 %v3235
      %3327 = vmatprep.subr.mxu0 %v3234
      %3328 = vmatpush1.msra.mxu0 %v3233
      %3329 = vmatprep.subr.mxu0 %v3232
      %3330 = vmatpush1.msra.mxu0 %v3231
      %3331 = vmatprep.subr.mxu0 %v3230
      %3332 = vmatpush1.msra.mxu0 %v3229
      %3333 = vmatprep.subr.mxu0 %v3228
      %3334 = vmatpush1.msra.mxu0 %v3227
      %3335 = vmatprep.subr.mxu0 %v3226
      %3336 = vmatpush1.msra.mxu0 %v3225
      %3337 = vmatprep.subr.mxu0 %v3224
      %3338 = vmatpush1.msra.mxu0 %v3223
      %3339 = vmatprep.subr.mxu0 %v3222
      %3340 = vmatpush1.msra.mxu0 %v3221
      %3341 = vmatprep.subr.mxu0 %v3220
      %3342 = vmatpush1.msra.mxu0 %v3219
      %3343 = vmatprep.subr.mxu0 %v3218
      %3344 = vmatpush1.msra.mxu0 %v3217
      %3345 = vmatprep.subr.mxu0 %v3216
      %3346 = vmatpush1.msra.mxu0 %v3215
      %3347 = vmatprep.subr.mxu0 %v3214
      %3348 = vmatpush1.msra.mxu0 %v3213
      %3349 = vmatprep.subr.mxu0 %v3212
      %3350 = vmatpush1.msra.mxu0 %v3211
      %3351 = vmatprep.subr.mxu0 %v3210
      %3352 = vmatpush1.msra.mxu0 %v3209
      %3353 = vmatprep.subr.mxu0 %v3208
      %3354 = vmatpush1.msra.mxu0 %v3207
      %3355 = vmatprep.subr.mxu0 %v3206
      %3356 = vmatpush1.msra.mxu0 %v3205
      %3357 = vmatprep.subr.mxu0 0.0
      %3358 = vmatpush2.msra.mxu0 0.0
      %3359 = vmatprep.subr.mxu0 0.0
      %3360 = vmatpush2.msra.mxu0 0.0
      %3361 = vmatprep.subr.mxu0 0.0
      %3362 = vmatpush2.msra.mxu0 0.0
      %3363 = vmatprep.subr.mxu0 0.0
      %3364 = vmatpush2.msra.mxu0 0.0
      %3365 = vmatprep.subr.mxu0 0.0
      %3366 = vmatpush2.msra.mxu0 0.0
      %3367 = vmatprep.subr.mxu0 0.0
      %3368 = vmatpush2.msra.mxu0 0.0
      %3369 = vmatprep.subr.mxu0 0.0
      %3370 = vmatpush2.msra.mxu0 0.0
      %3371 = vmatprep.subr.mxu0 0.0
      %3372 = vmatpush2.msra.mxu0 0.0
      %3373 = vmatprep.subr.mxu0 0.0
      %3374 = vmatpush2.msra.mxu0 0.0
      %3375 = vmatprep.subr.mxu0 0.0
      %3376 = vmatpush2.msra.mxu0 0.0
      %3377 = vmatprep.subr.mxu0 0.0
      %3378 = vmatpush2.msra.mxu0 0.0
      %3379 = vmatprep.subr.mxu0 0.0
      %3380 = vmatpush2.msra.mxu0 0.0
      %3381 = vmatprep.subr.mxu0 0.0
      %3382 = vmatpush2.msra.mxu0 0.0
      %3383 = vmatprep.subr.mxu0 0.0
      %3384 = vmatpush2.msra.mxu0 0.0
      %3385 = vmatprep.subr.mxu0 %v3240
      %3386 = vmatpush2.msra.mxu0 %v3239
      %3387 = vmatprep.subr.mxu0 %v3238
      %3388 = vmatpush2.msra.mxu0 %v3237
      %3389 = vmatprep.mubr.f32.mxu0 %v3243
      %3390 = vmatmul.mubr.f32.gmra.mxu0 %v3135
      %v3391 = vpop.f32.mrf.mxu0
      %v3392 = vadd.f32 %v3315, %v3391
      %v3393 = vpop.f32.mrf.mxu0
      %v3394 = vadd.f32 %v3317, %v3393
      %3395 = vmatprep.mubr.f32.mxu0 %v3246
      %3396 = vmatmul.mubr.f32.gmra.mxu0 %v3139
      %v3397 = vpop.f32.mrf.mxu0
      %v3398 = vadd.f32 %v3321, %v3397
      %v3399 = vpop.f32.mrf.mxu0
      %v3400 = vadd.f32 %v3323, %v3399
      %3401 = vdwg.mxu0
      %v3402 = vtanh.pop %v3392
      %v3403 = vtanh.pop %v3394
      %v3404 = vtanh.pop %v3398
      %v3405 = vtanh.pop %v3400
      %3410 = vrot.lane.b32.xlu0 %v3402, 34
      %v3411 = vpop.permute.xlu0 %3410
      %3412 = vrot.lane.b32.xlu0 %v3403, 34
      %v3413 = vpop.permute.xlu0 %3412
      %3414 = vrot.lane.b32.xlu0 %v3404, 34
      %v3415 = vpop.permute.xlu0 %3414
      %3416 = vrot.lane.b32.xlu0 %v3405, 34
      %v3417 = vpop.permute.xlu0 %3416
      %v3418 = vsel %vm423, %v3411, %v3413
      %v3419 = vsel %vm423, %v3415, %v3417
      %3426 = vst.msk [vmem:[#allocation2] sm:$0xff] %vm818, %v3411
      %3427 = vst [vmem:[#allocation2 + $0x8] sm:$0xff] %v3418
      %3428 = vst.msk [vmem:[#allocation2 + $0x10] sm:$0xff] %vm423, %v3413
      %3429 = vst.msk [vmem:[#allocation2 + $0x18] sm:$0xff] %vm818, %v3415
      %3430 = vst [vmem:[#allocation2 + $0x20] sm:$0xff] %v3419
      %3431 = vst.msk [vmem:[#allocation2 + $0x28] sm:$0xff] %vm423, %v3417
      %v3432 = vld [vmem:[#allocation2] sm:$0xff]
      %v3433 = vld [vmem:[#allocation2 + $0x8] sm:$0xff]
      %v3434 = vld [vmem:[#allocation2 + $0x10] sm:$0xff]
      %v3435 = vld [vmem:[#allocation2 + $0x18] sm:$0xff]
      %v3436 = vld [vmem:[#allocation2 + $0x20] sm:$0xff]
      %v3437 = vld [vmem:[#allocation2 + $0x28] sm:$0xff]
      %3444 = vrot.lane.b32.xlu0 %v3432, 111
      %v3445 = vpop.permute.xlu0 %3444
      %3446 = vrot.lane.b32.xlu0 %v3433, 111
      %v3447 = vpop.permute.xlu0 %3446
      %3448 = vrot.lane.b32.xlu0 %v3434, 111
      %v3449 = vpop.permute.xlu0 %3448
      %3450 = vrot.lane.b32.xlu0 %v3435, 111
      %v3451 = vpop.permute.xlu0 %3450
      %3452 = vrot.lane.b32.xlu0 %v3436, 111
      %v3453 = vpop.permute.xlu0 %3452
      %3454 = vrot.lane.b32.xlu0 %v3437, 111
      %v3455 = vpop.permute.xlu0 %3454
      %v3456 = vsel %vm461, %v3445, %v3447
      %v3457 = vsel %vm461, %v3447, %v3449
      %v3458 = vsel %vm461, %v3451, %v3453
      %v3459 = vsel %vm461, %v3453, %v3455
      %v3464 = vsel %vm441, %v3456, 0.0
      %v3465 = vsel %vm442, %v3457, 0.0
      %v3466 = vsel %vm441, %v3458, 0.0
      %v3467 = vsel %vm442, %v3459, 0.0
      %3468 = vst [vmem:[#allocation3] sm:$0xff] %v3464
      %3469 = vst [vmem:[#allocation3 + $0x8] sm:$0xff] %v3465
      %3470 = vst [vmem:[#allocation3 + $0x10] sm:$0xff] %v3466
      %3471 = vst [vmem:[#allocation3 + $0x18] sm:$0xff] %v3467
      %v3472 = vld [vmem:[#allocation2] sm:$0xff]
      %v3473 = vld [vmem:[#allocation2 + $0x8] sm:$0xff]
      %v3474 = vld [vmem:[#allocation2 + $0x10] sm:$0xff]
      %v3475 = vld [vmem:[#allocation2 + $0x18] sm:$0xff]
      %v3476 = vld [vmem:[#allocation2 + $0x20] sm:$0xff]
      %v3477 = vld [vmem:[#allocation2 + $0x28] sm:$0xff]
      %3484 = vrot.lane.b32.xlu0 %v3472, 110
      %v3485 = vpop.permute.xlu0 %3484
      %3486 = vrot.lane.b32.xlu0 %v3473, 110
      %v3487 = vpop.permute.xlu0 %3486
      %3488 = vrot.lane.b32.xlu0 %v3474, 110
      %v3489 = vpop.permute.xlu0 %3488
      %3490 = vrot.lane.b32.xlu0 %v3475, 110
      %v3491 = vpop.permute.xlu0 %3490
      %3492 = vrot.lane.b32.xlu0 %v3476, 110
      %v3493 = vpop.permute.xlu0 %3492
      %3494 = vrot.lane.b32.xlu0 %v3477, 110
      %v3495 = vpop.permute.xlu0 %3494
      %v3496 = vsel %vm502, %v3485, %v3487
      %v3497 = vsel %vm502, %v3487, %v3489
      %v3498 = vsel %vm502, %v3491, %v3493
      %v3499 = vsel %vm502, %v3493, %v3495
      %3504 = vst [vmem:[#allocation3 + $0x20] sm:$0xff] %v3496
      %3505 = vst [vmem:[#allocation3 + $0x28] sm:$0xff] %v3497
      %3506 = vst [vmem:[#allocation3 + $0x30] sm:$0xff] %v3498
      %3507 = vst [vmem:[#allocation3 + $0x38] sm:$0xff] %v3499
      %v3508 = vld [vmem:[#allocation2] sm:$0xff]
      %v3509 = vld [vmem:[#allocation2 + $0x8] sm:$0xff]
      %v3510 = vld [vmem:[#allocation2 + $0x10] sm:$0xff]
      %v3511 = vld [vmem:[#allocation2 + $0x18] sm:$0xff]
      %v3512 = vld [vmem:[#allocation2 + $0x20] sm:$0xff]
      %v3513 = vld [vmem:[#allocation2 + $0x28] sm:$0xff]
      %3520 = vrot.lane.b32.xlu0 %v3508, 109
      %v3521 = vpop.permute.xlu0 %3520
      %3522 = vrot.lane.b32.xlu0 %v3509, 109
      %v3523 = vpop.permute.xlu0 %3522
      %3524 = vrot.lane.b32.xlu0 %v3510, 109
      %v3525 = vpop.permute.xlu0 %3524
      %3526 = vrot.lane.b32.xlu0 %v3511, 109
      %v3527 = vpop.permute.xlu0 %3526
      %3528 = vrot.lane.b32.xlu0 %v3512, 109
      %v3529 = vpop.permute.xlu0 %3528
      %3530 = vrot.lane.b32.xlu0 %v3513, 109
      %v3531 = vpop.permute.xlu0 %3530
      %v3532 = vsel %vm543, %v3521, %v3523
      %v3533 = vsel %vm543, %v3523, %v3525
      %v3534 = vsel %vm543, %v3527, %v3529
      %v3535 = vsel %vm543, %v3529, %v3531
      %v3540 = vsel %vm523, %v3532, 0.0
      %v3541 = vsel %vm524, %v3533, 0.0
      %v3542 = vsel %vm523, %v3534, 0.0
      %v3543 = vsel %vm524, %v3535, 0.0
      %3544 = vst [vmem:[#allocation3 + $0x40] sm:$0xff] %v3540
      %3545 = vst [vmem:[#allocation3 + $0x48] sm:$0xff] %v3541
      %3546 = vst [vmem:[#allocation3 + $0x50] sm:$0xff] %v3542
      %3547 = vst [vmem:[#allocation3 + $0x58] sm:$0xff] %v3543
      %v3548 = vld [vmem:[#allocation2] sm:$0xff]
      %v3549 = vld [vmem:[#allocation2 + $0x8] sm:$0xff]
      %v3550 = vld [vmem:[#allocation2 + $0x10] sm:$0xff]
      %v3551 = vld [vmem:[#allocation2 + $0x18] sm:$0xff]
      %v3552 = vld [vmem:[#allocation2 + $0x20] sm:$0xff]
      %v3553 = vld [vmem:[#allocation2 + $0x28] sm:$0xff]
      %3560 = vrot.lane.b32.xlu0 %v3548, 95
      %v3561 = vpop.permute.xlu0 %3560
      %3562 = vrot.lane.b32.xlu0 %v3549, 95
      %v3563 = vpop.permute.xlu0 %3562
      %3564 = vrot.lane.b32.xlu0 %v3550, 95
      %v3565 = vpop.permute.xlu0 %3564
      %3566 = vrot.lane.b32.xlu0 %v3551, 95
      %v3567 = vpop.permute.xlu0 %3566
      %3568 = vrot.lane.b32.xlu0 %v3552, 95
      %v3569 = vpop.permute.xlu0 %3568
      %3570 = vrot.lane.b32.xlu0 %v3553, 95
      %v3571 = vpop.permute.xlu0 %3570
      %v3572 = vsel %vm584, %v3561, %v3563
      %v3573 = vsel %vm584, %v3563, %v3565
      %v3574 = vsel %vm584, %v3567, %v3569
      %v3575 = vsel %vm584, %v3569, %v3571
      %v3580 = vsel %vm441, %v3572, 0.0
      %v3581 = vsel %vm442, %v3573, 0.0
      %v3582 = vsel %vm441, %v3574, 0.0
      %v3583 = vsel %vm442, %v3575, 0.0
      %3584 = vst [vmem:[#allocation3 + $0x60] sm:$0xff] %v3580
      %3585 = vst [vmem:[#allocation3 + $0x68] sm:$0xff] %v3581
      %3586 = vst [vmem:[#allocation3 + $0x70] sm:$0xff] %v3582
      %3587 = vst [vmem:[#allocation3 + $0x78] sm:$0xff] %v3583
      %v3588 = vld [vmem:[#allocation2] sm:$0xff]
      %v3589 = vld [vmem:[#allocation2 + $0x8] sm:$0xff]
      %v3590 = vld [vmem:[#allocation2 + $0x10] sm:$0xff]
      %v3591 = vld [vmem:[#allocation2 + $0x18] sm:$0xff]
      %v3592 = vld [vmem:[#allocation2 + $0x20] sm:$0xff]
      %v3593 = vld [vmem:[#allocation2 + $0x28] sm:$0xff]
      %3600 = vrot.lane.b32.xlu0 %v3588, 94
      %v3601 = vpop.permute.xlu0 %3600
      %3602 = vrot.lane.b32.xlu0 %v3589, 94
      %v3603 = vpop.permute.xlu0 %3602
      %3604 = vrot.lane.b32.xlu0 %v3590, 94
      %v3605 = vpop.permute.xlu0 %3604
      %3606 = vrot.lane.b32.xlu0 %v3591, 94
      %v3607 = vpop.permute.xlu0 %3606
      %3608 = vrot.lane.b32.xlu0 %v3592, 94
      %v3609 = vpop.permute.xlu0 %3608
      %3610 = vrot.lane.b32.xlu0 %v3593, 94
      %v3611 = vpop.permute.xlu0 %3610
      %v3612 = vsel %vm625, %v3601, %v3603
      %v3613 = vsel %vm625, %v3603, %v3605
      %v3614 = vsel %vm625, %v3607, %v3609
      %v3615 = vsel %vm625, %v3609, %v3611
      %3620 = vst [vmem:[#allocation3 + $0x80] sm:$0xff] %v3612
      %3621 = vst [vmem:[#allocation3 + $0x88] sm:$0xff] %v3613
      %3622 = vst [vmem:[#allocation3 + $0x90] sm:$0xff] %v3614
      %3623 = vst [vmem:[#allocation3 + $0x98] sm:$0xff] %v3615
      %v3624 = vld [vmem:[#allocation2] sm:$0xff]
      %v3625 = vld [vmem:[#allocation2 + $0x8] sm:$0xff]
      %v3626 = vld [vmem:[#allocation2 + $0x10] sm:$0xff]
      %v3627 = vld [vmem:[#allocation2 + $0x18] sm:$0xff]
      %v3628 = vld [vmem:[#allocation2 + $0x20] sm:$0xff]
      %v3629 = vld [vmem:[#allocation2 + $0x28] sm:$0xff]
      %3636 = vrot.lane.b32.xlu0 %v3624, 93
      %v3637 = vpop.permute.xlu0 %3636
      %3638 = vrot.lane.b32.xlu0 %v3625, 93
      %v3639 = vpop.permute.xlu0 %3638
      %3640 = vrot.lane.b32.xlu0 %v3626, 93
      %v3641 = vpop.permute.xlu0 %3640
      %3642 = vrot.lane.b32.xlu0 %v3627, 93
      %v3643 = vpop.permute.xlu0 %3642
      %3644 = vrot.lane.b32.xlu0 %v3628, 93
      %v3645 = vpop.permute.xlu0 %3644
      %3646 = vrot.lane.b32.xlu0 %v3629, 93
      %v3647 = vpop.permute.xlu0 %3646
      %v3648 = vsel %vm662, %v3637, %v3639
      %v3649 = vsel %vm662, %v3639, %v3641
      %v3650 = vsel %vm662, %v3643, %v3645
      %v3651 = vsel %vm662, %v3645, %v3647
      %v3656 = vsel %vm523, %v3648, 0.0
      %v3657 = vsel %vm524, %v3649, 0.0
      %v3658 = vsel %vm523, %v3650, 0.0
      %v3659 = vsel %vm524, %v3651, 0.0
      %3660 = vst [vmem:[#allocation3 + $0xa0] sm:$0xff] %v3656
      %3661 = vst [vmem:[#allocation3 + $0xa8] sm:$0xff] %v3657
      %3662 = vst [vmem:[#allocation3 + $0xb0] sm:$0xff] %v3658
      %3663 = vst [vmem:[#allocation3 + $0xb8] sm:$0xff] %v3659
      %v3664 = vld [vmem:[#allocation2] sm:$0xff]
      %v3665 = vld [vmem:[#allocation2 + $0x8] sm:$0xff]
      %v3666 = vld [vmem:[#allocation2 + $0x10] sm:$0xff]
      %v3667 = vld [vmem:[#allocation2 + $0x18] sm:$0xff]
      %v3668 = vld [vmem:[#allocation2 + $0x20] sm:$0xff]
      %v3669 = vld [vmem:[#allocation2 + $0x28] sm:$0xff]
      %3676 = vrot.lane.b32.xlu0 %v3664, 79
      %v3677 = vpop.permute.xlu0 %3676
      %3678 = vrot.lane.b32.xlu0 %v3665, 79
      %v3679 = vpop.permute.xlu0 %3678
      %3680 = vrot.lane.b32.xlu0 %v3666, 79
      %v3681 = vpop.permute.xlu0 %3680
      %3682 = vrot.lane.b32.xlu0 %v3667, 79
      %v3683 = vpop.permute.xlu0 %3682
      %3684 = vrot.lane.b32.xlu0 %v3668, 79
      %v3685 = vpop.permute.xlu0 %3684
      %3686 = vrot.lane.b32.xlu0 %v3669, 79
      %v3687 = vpop.permute.xlu0 %3686
      %v3688 = vsel %vm703, %v3677, %v3679
      %v3689 = vsel %vm703, %v3679, %v3681
      %v3690 = vsel %vm703, %v3683, %v3685
      %v3691 = vsel %vm703, %v3685, %v3687
      %v3696 = vsel %vm441, %v3688, 0.0
      %v3697 = vsel %vm442, %v3689, 0.0
      %v3698 = vsel %vm441, %v3690, 0.0
      %v3699 = vsel %vm442, %v3691, 0.0
      %3700 = vst [vmem:[#allocation3 + $0xc0] sm:$0xff] %v3696
      %3701 = vst [vmem:[#allocation3 + $0xc8] sm:$0xff] %v3697
      %3702 = vst [vmem:[#allocation3 + $0xd0] sm:$0xff] %v3698
      %3703 = vst [vmem:[#allocation3 + $0xd8] sm:$0xff] %v3699
      %v3704 = vld [vmem:[#allocation2] sm:$0xff]
      %v3705 = vld [vmem:[#allocation2 + $0x8] sm:$0xff]
      %v3706 = vld [vmem:[#allocation2 + $0x10] sm:$0xff]
      %v3707 = vld [vmem:[#allocation2 + $0x18] sm:$0xff]
      %v3708 = vld [vmem:[#allocation2 + $0x20] sm:$0xff]
      %v3709 = vld [vmem:[#allocation2 + $0x28] sm:$0xff]
      %3716 = vrot.lane.b32.xlu0 %v3704, 78
      %v3717 = vpop.permute.xlu0 %3716
      %3718 = vrot.lane.b32.xlu0 %v3705, 78
      %v3719 = vpop.permute.xlu0 %3718
      %3720 = vrot.lane.b32.xlu0 %v3706, 78
      %v3721 = vpop.permute.xlu0 %3720
      %3722 = vrot.lane.b32.xlu0 %v3707, 78
      %v3723 = vpop.permute.xlu0 %3722
      %3724 = vrot.lane.b32.xlu0 %v3708, 78
      %v3725 = vpop.permute.xlu0 %3724
      %3726 = vrot.lane.b32.xlu0 %v3709, 78
      %v3727 = vpop.permute.xlu0 %3726
      %v3728 = vsel %vm744, %v3717, %v3719
      %v3729 = vsel %vm744, %v3719, %v3721
      %v3730 = vsel %vm744, %v3723, %v3725
      %v3731 = vsel %vm744, %v3725, %v3727
      %3736 = vst [vmem:[#allocation3 + $0xe0] sm:$0xff] %v3728
      %3737 = vst [vmem:[#allocation3 + $0xe8] sm:$0xff] %v3729
      %3738 = vst [vmem:[#allocation3 + $0xf0] sm:$0xff] %v3730
      %3739 = vst [vmem:[#allocation3 + $0xf8] sm:$0xff] %v3731
      %v3740 = vld [vmem:[#allocation2] sm:$0xff]
      %v3741 = vld [vmem:[#allocation2 + $0x8] sm:$0xff]
      %v3742 = vld [vmem:[#allocation2 + $0x10] sm:$0xff]
      %v3743 = vld [vmem:[#allocation2 + $0x18] sm:$0xff]
      %v3744 = vld [vmem:[#allocation2 + $0x20] sm:$0xff]
      %v3745 = vld [vmem:[#allocation2 + $0x28] sm:$0xff]
      %3752 = vrot.lane.b32.xlu0 %v3740, 77
      %v3753 = vpop.permute.xlu0 %3752
      %3754 = vrot.lane.b32.xlu0 %v3741, 77
      %v3755 = vpop.permute.xlu0 %3754
      %3756 = vrot.lane.b32.xlu0 %v3742, 77
      %v3757 = vpop.permute.xlu0 %3756
      %3758 = vrot.lane.b32.xlu0 %v3743, 77
      %v3759 = vpop.permute.xlu0 %3758
      %3760 = vrot.lane.b32.xlu0 %v3744, 77
      %v3761 = vpop.permute.xlu0 %3760
      %3762 = vrot.lane.b32.xlu0 %v3745, 77
      %v3763 = vpop.permute.xlu0 %3762
      %v3764 = vsel %vm781, %v3753, %v3755
      %v3765 = vsel %vm781, %v3755, %v3757
      %v3766 = vsel %vm781, %v3759, %v3761
      %v3767 = vsel %vm781, %v3761, %v3763
      %v3772 = vsel %vm523, %v3764, 0.0
      %v3773 = vsel %vm524, %v3765, 0.0
      %v3774 = vsel %vm523, %v3766, 0.0
      %v3775 = vsel %vm524, %v3767, 0.0
      %3776 = vst [vmem:[#allocation3 + $0x100] sm:$0xff] %v3772
      %3777 = vst [vmem:[#allocation3 + $0x108] sm:$0xff] %v3773
      %3778 = vst [vmem:[#allocation3 + $0x110] sm:$0xff] %v3774
      %3779 = vst [vmem:[#allocation3 + $0x118] sm:$0xff] %v3775
      %3784 = vrot.lane.b32.xlu0 %v413, 34
      %v3785 = vpop.permute.xlu0 %3784
      %3786 = vrot.lane.b32.xlu0 %v414, 34
      %v3787 = vpop.permute.xlu0 %3786
      %3788 = vrot.lane.b32.xlu0 %v415, 34
      %v3789 = vpop.permute.xlu0 %3788
      %3790 = vrot.lane.b32.xlu0 %v416, 34
      %v3791 = vpop.permute.xlu0 %3790
      %v3792 = vsel %vm423, %v3785, %v3787
      %v3793 = vsel %vm423, %v3789, %v3791
      %3800 = vst.msk [vmem:[#allocation2] sm:$0xff] %vm818, %v3785
      %3801 = vst [vmem:[#allocation2 + $0x8] sm:$0xff] %v3792
      %3802 = vst.msk [vmem:[#allocation2 + $0x10] sm:$0xff] %vm423, %v3787
      %3803 = vst.msk [vmem:[#allocation2 + $0x18] sm:$0xff] %vm818, %v3789
      %3804 = vst [vmem:[#allocation2 + $0x20] sm:$0xff] %v3793
      %3805 = vst.msk [vmem:[#allocation2 + $0x28] sm:$0xff] %vm423, %v3791
      %v3806 = vld [vmem:[#allocation2] sm:$0xff]
      %v3807 = vld [vmem:[#allocation2 + $0x8] sm:$0xff]
      %v3808 = vld [vmem:[#allocation2 + $0x10] sm:$0xff]
      %v3809 = vld [vmem:[#allocation2 + $0x18] sm:$0xff]
      %v3810 = vld [vmem:[#allocation2 + $0x20] sm:$0xff]
      %v3811 = vld [vmem:[#allocation2 + $0x28] sm:$0xff]
      %3818 = vrot.lane.b32.xlu0 %v3806, 111
      %v3819 = vpop.permute.xlu0 %3818
      %3820 = vrot.lane.b32.xlu0 %v3807, 111
      %v3821 = vpop.permute.xlu0 %3820
      %3822 = vrot.lane.b32.xlu0 %v3808, 111
      %v3823 = vpop.permute.xlu0 %3822
      %3824 = vrot.lane.b32.xlu0 %v3809, 111
      %v3825 = vpop.permute.xlu0 %3824
      %3826 = vrot.lane.b32.xlu0 %v3810, 111
      %v3827 = vpop.permute.xlu0 %3826
      %3828 = vrot.lane.b32.xlu0 %v3811, 111
      %v3829 = vpop.permute.xlu0 %3828
      %v3830 = vsel %vm461, %v3819, %v3821
      %v3831 = vsel %vm461, %v3821, %v3823
      %v3832 = vsel %vm461, %v3825, %v3827
      %v3833 = vsel %vm461, %v3827, %v3829
      %v3838 = vsel %vm441, %v3830, 0.0
      %v3839 = vsel %vm442, %v3831, 0.0
      %v3840 = vsel %vm441, %v3832, 0.0
      %v3841 = vsel %vm442, %v3833, 0.0
      %3842 = vst [vmem:[#allocation3 + $0x120] sm:$0xff] %v3838
      %3843 = vst [vmem:[#allocation3 + $0x128] sm:$0xff] %v3839
      %3844 = vst [vmem:[#allocation3 + $0x130] sm:$0xff] %v3840
      %3845 = vst [vmem:[#allocation3 + $0x138] sm:$0xff] %v3841
      %v3846 = vld [vmem:[#allocation2] sm:$0xff]
      %v3847 = vld [vmem:[#allocation2 + $0x8] sm:$0xff]
      %v3848 = vld [vmem:[#allocation2 + $0x10] sm:$0xff]
      %v3849 = vld [vmem:[#allocation2 + $0x18] sm:$0xff]
      %v3850 = vld [vmem:[#allocation2 + $0x20] sm:$0xff]
      %v3851 = vld [vmem:[#allocation2 + $0x28] sm:$0xff]
      %3858 = vrot.lane.b32.xlu0 %v3846, 110
      %v3859 = vpop.permute.xlu0 %3858
      %3860 = vrot.lane.b32.xlu0 %v3847, 110
      %v3861 = vpop.permute.xlu0 %3860
      %3862 = vrot.lane.b32.xlu0 %v3848, 110
      %v3863 = vpop.permute.xlu0 %3862
      %3864 = vrot.lane.b32.xlu0 %v3849, 110
      %v3865 = vpop.permute.xlu0 %3864
      %3866 = vrot.lane.b32.xlu0 %v3850, 110
      %v3867 = vpop.permute.xlu0 %3866
      %3868 = vrot.lane.b32.xlu0 %v3851, 110
      %v3869 = vpop.permute.xlu0 %3868
      %v3870 = vsel %vm502, %v3859, %v3861
      %v3871 = vsel %vm502, %v3861, %v3863
      %v3872 = vsel %vm502, %v3865, %v3867
      %v3873 = vsel %vm502, %v3867, %v3869
      %3878 = vst [vmem:[#allocation3 + $0x140] sm:$0xff] %v3870
      %3879 = vst [vmem:[#allocation3 + $0x148] sm:$0xff] %v3871
      %3880 = vst [vmem:[#allocation3 + $0x150] sm:$0xff] %v3872
      %3881 = vst [vmem:[#allocation3 + $0x158] sm:$0xff] %v3873
      %v3882 = vld [vmem:[#allocation2] sm:$0xff]
      %v3883 = vld [vmem:[#allocation2 + $0x8] sm:$0xff]
      %v3884 = vld [vmem:[#allocation2 + $0x10] sm:$0xff]
      %v3885 = vld [vmem:[#allocation2 + $0x18] sm:$0xff]
      %v3886 = vld [vmem:[#allocation2 + $0x20] sm:$0xff]
      %v3887 = vld [vmem:[#allocation2 + $0x28] sm:$0xff]
      %3894 = vrot.lane.b32.xlu0 %v3882, 109
      %v3895 = vpop.permute.xlu0 %3894
      %3896 = vrot.lane.b32.xlu0 %v3883, 109
      %v3897 = vpop.permute.xlu0 %3896
      %3898 = vrot.lane.b32.xlu0 %v3884, 109
      %v3899 = vpop.permute.xlu0 %3898
      %3900 = vrot.lane.b32.xlu0 %v3885, 109
      %v3901 = vpop.permute.xlu0 %3900
      %3902 = vrot.lane.b32.xlu0 %v3886, 109
      %v3903 = vpop.permute.xlu0 %3902
      %3904 = vrot.lane.b32.xlu0 %v3887, 109
      %v3905 = vpop.permute.xlu0 %3904
      %v3906 = vsel %vm543, %v3895, %v3897
      %v3907 = vsel %vm543, %v3897, %v3899
      %v3908 = vsel %vm543, %v3901, %v3903
      %v3909 = vsel %vm543, %v3903, %v3905
      %v3914 = vsel %vm523, %v3906, 0.0
      %v3915 = vsel %vm524, %v3907, 0.0
      %v3916 = vsel %vm523, %v3908, 0.0
      %v3917 = vsel %vm524, %v3909, 0.0
      %3918 = vst [vmem:[#allocation3 + $0x160] sm:$0xff] %v3914
      %3919 = vst [vmem:[#allocation3 + $0x168] sm:$0xff] %v3915
      %3920 = vst [vmem:[#allocation3 + $0x170] sm:$0xff] %v3916
      %3921 = vst [vmem:[#allocation3 + $0x178] sm:$0xff] %v3917
      %v3922 = vld [vmem:[#allocation2] sm:$0xff]
      %v3923 = vld [vmem:[#allocation2 + $0x8] sm:$0xff]
      %v3924 = vld [vmem:[#allocation2 + $0x10] sm:$0xff]
      %v3925 = vld [vmem:[#allocation2 + $0x18] sm:$0xff]
      %v3926 = vld [vmem:[#allocation2 + $0x20] sm:$0xff]
      %v3927 = vld [vmem:[#allocation2 + $0x28] sm:$0xff]
      %3934 = vrot.lane.b32.xlu0 %v3922, 95
      %v3935 = vpop.permute.xlu0 %3934
      %3936 = vrot.lane.b32.xlu0 %v3923, 95
      %v3937 = vpop.permute.xlu0 %3936
      %3938 = vrot.lane.b32.xlu0 %v3924, 95
      %v3939 = vpop.permute.xlu0 %3938
      %3940 = vrot.lane.b32.xlu0 %v3925, 95
      %v3941 = vpop.permute.xlu0 %3940
      %3942 = vrot.lane.b32.xlu0 %v3926, 95
      %v3943 = vpop.permute.xlu0 %3942
      %3944 = vrot.lane.b32.xlu0 %v3927, 95
      %v3945 = vpop.permute.xlu0 %3944
      %v3946 = vsel %vm584, %v3935, %v3937
      %v3947 = vsel %vm584, %v3937, %v3939
      %v3948 = vsel %vm584, %v3941, %v3943
      %v3949 = vsel %vm584, %v3943, %v3945
      %v3954 = vsel %vm441, %v3946, 0.0
      %v3955 = vsel %vm442, %v3947, 0.0
      %v3956 = vsel %vm441, %v3948, 0.0
      %v3957 = vsel %vm442, %v3949, 0.0
      %3958 = vst [vmem:[#allocation3 + $0x180] sm:$0xff] %v3954
      %3959 = vst [vmem:[#allocation3 + $0x188] sm:$0xff] %v3955
      %3960 = vst [vmem:[#allocation3 + $0x190] sm:$0xff] %v3956
      %3961 = vst [vmem:[#allocation3 + $0x198] sm:$0xff] %v3957
      %v3962 = vld [vmem:[#allocation2] sm:$0xff]
      %v3963 = vld [vmem:[#allocation2 + $0x8] sm:$0xff]
      %v3964 = vld [vmem:[#allocation2 + $0x10] sm:$0xff]
      %v3965 = vld [vmem:[#allocation2 + $0x18] sm:$0xff]
      %v3966 = vld [vmem:[#allocation2 + $0x20] sm:$0xff]
      %v3967 = vld [vmem:[#allocation2 + $0x28] sm:$0xff]
      %3974 = vrot.lane.b32.xlu0 %v3962, 94
      %v3975 = vpop.permute.xlu0 %3974
      %3976 = vrot.lane.b32.xlu0 %v3963, 94
      %v3977 = vpop.permute.xlu0 %3976
      %3978 = vrot.lane.b32.xlu0 %v3964, 94
      %v3979 = vpop.permute.xlu0 %3978
      %3980 = vrot.lane.b32.xlu0 %v3965, 94
      %v3981 = vpop.permute.xlu0 %3980
      %3982 = vrot.lane.b32.xlu0 %v3966, 94
      %v3983 = vpop.permute.xlu0 %3982
      %3984 = vrot.lane.b32.xlu0 %v3967, 94
      %v3985 = vpop.permute.xlu0 %3984
      %v3986 = vsel %vm625, %v3975, %v3977
      %v3987 = vsel %vm625, %v3977, %v3979
      %v3988 = vsel %vm625, %v3981, %v3983
      %v3989 = vsel %vm625, %v3983, %v3985
      %3994 = vst [vmem:[#allocation3 + $0x1a0] sm:$0xff] %v3986
      %3995 = vst [vmem:[#allocation3 + $0x1a8] sm:$0xff] %v3987
      %3996 = vst [vmem:[#allocation3 + $0x1b0] sm:$0xff] %v3988
      %3997 = vst [vmem:[#allocation3 + $0x1b8] sm:$0xff] %v3989
      %v3998 = vld [vmem:[#allocation2] sm:$0xff]
      %v3999 = vld [vmem:[#allocation2 + $0x8] sm:$0xff]
      %v4000 = vld [vmem:[#allocation2 + $0x10] sm:$0xff]
      %v4001 = vld [vmem:[#allocation2 + $0x18] sm:$0xff]
      %v4002 = vld [vmem:[#allocation2 + $0x20] sm:$0xff]
      %v4003 = vld [vmem:[#allocation2 + $0x28] sm:$0xff]
      %4010 = vrot.lane.b32.xlu0 %v3998, 93
      %v4011 = vpop.permute.xlu0 %4010
      %4012 = vrot.lane.b32.xlu0 %v3999, 93
      %v4013 = vpop.permute.xlu0 %4012
      %4014 = vrot.lane.b32.xlu0 %v4000, 93
      %v4015 = vpop.permute.xlu0 %4014
      %4016 = vrot.lane.b32.xlu0 %v4001, 93
      %v4017 = vpop.permute.xlu0 %4016
      %4018 = vrot.lane.b32.xlu0 %v4002, 93
      %v4019 = vpop.permute.xlu0 %4018
      %4020 = vrot.lane.b32.xlu0 %v4003, 93
      %v4021 = vpop.permute.xlu0 %4020
      %v4022 = vsel %vm662, %v4011, %v4013
      %v4023 = vsel %vm662, %v4013, %v4015
      %v4024 = vsel %vm662, %v4017, %v4019
      %v4025 = vsel %vm662, %v4019, %v4021
      %v4030 = vsel %vm523, %v4022, 0.0
      %v4031 = vsel %vm524, %v4023, 0.0
      %v4032 = vsel %vm523, %v4024, 0.0
      %v4033 = vsel %vm524, %v4025, 0.0
      %4034 = vst [vmem:[#allocation3 + $0x1c0] sm:$0xff] %v4030
      %4035 = vst [vmem:[#allocation3 + $0x1c8] sm:$0xff] %v4031
      %4036 = vst [vmem:[#allocation3 + $0x1d0] sm:$0xff] %v4032
      %4037 = vst [vmem:[#allocation3 + $0x1d8] sm:$0xff] %v4033
      %v4038 = vld [vmem:[#allocation2] sm:$0xff]
      %v4039 = vld [vmem:[#allocation2 + $0x8] sm:$0xff]
      %v4040 = vld [vmem:[#allocation2 + $0x10] sm:$0xff]
      %v4041 = vld [vmem:[#allocation2 + $0x18] sm:$0xff]
      %v4042 = vld [vmem:[#allocation2 + $0x20] sm:$0xff]
      %v4043 = vld [vmem:[#allocation2 + $0x28] sm:$0xff]
      %4050 = vrot.lane.b32.xlu0 %v4038, 79
      %v4051 = vpop.permute.xlu0 %4050
      %4052 = vrot.lane.b32.xlu0 %v4039, 79
      %v4053 = vpop.permute.xlu0 %4052
      %4054 = vrot.lane.b32.xlu0 %v4040, 79
      %v4055 = vpop.permute.xlu0 %4054
      %4056 = vrot.lane.b32.xlu0 %v4041, 79
      %v4057 = vpop.permute.xlu0 %4056
      %4058 = vrot.lane.b32.xlu0 %v4042, 79
      %v4059 = vpop.permute.xlu0 %4058
      %4060 = vrot.lane.b32.xlu0 %v4043, 79
      %v4061 = vpop.permute.xlu0 %4060
      %v4062 = vsel %vm703, %v4051, %v4053
      %v4063 = vsel %vm703, %v4053, %v4055
      %v4064 = vsel %vm703, %v4057, %v4059
      %v4065 = vsel %vm703, %v4059, %v4061
      %v4070 = vsel %vm441, %v4062, 0.0
      %v4071 = vsel %vm442, %v4063, 0.0
      %v4072 = vsel %vm441, %v4064, 0.0
      %v4073 = vsel %vm442, %v4065, 0.0
      %4074 = vst [vmem:[#allocation3 + $0x1e0] sm:$0xff] %v4070
      %4075 = vst [vmem:[#allocation3 + $0x1e8] sm:$0xff] %v4071
      %4076 = vst [vmem:[#allocation3 + $0x1f0] sm:$0xff] %v4072
      %4077 = vst [vmem:[#allocation3 + $0x1f8] sm:$0xff] %v4073
      %v4078 = vld [vmem:[#allocation2] sm:$0xff]
      %v4079 = vld [vmem:[#allocation2 + $0x8] sm:$0xff]
      %v4080 = vld [vmem:[#allocation2 + $0x10] sm:$0xff]
      %v4081 = vld [vmem:[#allocation2 + $0x18] sm:$0xff]
      %v4082 = vld [vmem:[#allocation2 + $0x20] sm:$0xff]
      %v4083 = vld [vmem:[#allocation2 + $0x28] sm:$0xff]
      %4090 = vrot.lane.b32.xlu0 %v4078, 78
      %v4091 = vpop.permute.xlu0 %4090
      %4092 = vrot.lane.b32.xlu0 %v4079, 78
      %v4093 = vpop.permute.xlu0 %4092
      %4094 = vrot.lane.b32.xlu0 %v4080, 78
      %v4095 = vpop.permute.xlu0 %4094
      %4096 = vrot.lane.b32.xlu0 %v4081, 78
      %v4097 = vpop.permute.xlu0 %4096
      %4098 = vrot.lane.b32.xlu0 %v4082, 78
      %v4099 = vpop.permute.xlu0 %4098
      %4100 = vrot.lane.b32.xlu0 %v4083, 78
      %v4101 = vpop.permute.xlu0 %4100
      %v4102 = vsel %vm744, %v4091, %v4093
      %v4103 = vsel %vm744, %v4093, %v4095
      %v4104 = vsel %vm744, %v4097, %v4099
      %v4105 = vsel %vm744, %v4099, %v4101
      %4110 = vst [vmem:[#allocation3 + $0x200] sm:$0xff] %v4102
      %4111 = vst [vmem:[#allocation3 + $0x208] sm:$0xff] %v4103
      %4112 = vst [vmem:[#allocation3 + $0x210] sm:$0xff] %v4104
      %4113 = vst [vmem:[#allocation3 + $0x218] sm:$0xff] %v4105
      %v4114 = vld [vmem:[#allocation2] sm:$0xff]
      %v4115 = vld [vmem:[#allocation2 + $0x8] sm:$0xff]
      %v4116 = vld [vmem:[#allocation2 + $0x10] sm:$0xff]
      %v4117 = vld [vmem:[#allocation2 + $0x18] sm:$0xff]
      %v4118 = vld [vmem:[#allocation2 + $0x20] sm:$0xff]
      %v4119 = vld [vmem:[#allocation2 + $0x28] sm:$0xff]
      %4126 = vrot.lane.b32.xlu0 %v4114, 77
      %v4127 = vpop.permute.xlu0 %4126
      %4128 = vrot.lane.b32.xlu0 %v4115, 77
      %v4129 = vpop.permute.xlu0 %4128
      %4130 = vrot.lane.b32.xlu0 %v4116, 77
      %v4131 = vpop.permute.xlu0 %4130
      %4132 = vrot.lane.b32.xlu0 %v4117, 77
      %v4133 = vpop.permute.xlu0 %4132
      %4134 = vrot.lane.b32.xlu0 %v4118, 77
      %v4135 = vpop.permute.xlu0 %4134
      %4136 = vrot.lane.b32.xlu0 %v4119, 77
      %v4137 = vpop.permute.xlu0 %4136
      %v4138 = vsel %vm781, %v4127, %v4129
      %v4139 = vsel %vm781, %v4129, %v4131
      %v4140 = vsel %vm781, %v4133, %v4135
      %v4141 = vsel %vm781, %v4135, %v4137
      %v4146 = vsel %vm523, %v4138, 0.0
      %v4147 = vsel %vm524, %v4139, 0.0
      %v4148 = vsel %vm523, %v4140, 0.0
      %v4149 = vsel %vm524, %v4141, 0.0
      %4150 = vst [vmem:[#allocation3 + $0x220] sm:$0xff] %v4146
      %4151 = vst [vmem:[#allocation3 + $0x228] sm:$0xff] %v4147
      %4152 = vst [vmem:[#allocation3 + $0x230] sm:$0xff] %v4148
      %4153 = vst [vmem:[#allocation3 + $0x238] sm:$0xff] %v4149
      %v4154 = vld [vmem:[%s5] sm:$0xff]
      %v4155 = vld [vmem:[%s5 + $0x8] sm:$0xff]
      %v4156 = vld [vmem:[%s5 + $0x10] sm:$0xff]
      %v4157 = vld [vmem:[%s5 + $0x18] sm:$0xff]
      %v4158 = vld [vmem:[%s5 + $0x20] sm:$0xff]
      %v4159 = vld [vmem:[%s5 + $0x28] sm:$0xff]
      %v4160 = vld [vmem:[%s5 + $0x30] sm:$0xff]
      %v4161 = vld [vmem:[%s5 + $0x38] sm:$0xff]
      %v4162 = vld [vmem:[%s5 + $0x40] sm:$0xff]
      %v4163 = vld [vmem:[%s5 + $0x48] sm:$0xff]
      %v4164 = vld [vmem:[%s5 + $0x50] sm:$0xff]
      %v4165 = vld [vmem:[%s5 + $0x58] sm:$0xff]
      %v4166 = vld [vmem:[#allocation3] sm:$0xff]
      %v4167 = vld [vmem:[#allocation3 + $0x8] sm:$0xff]
      %v4168 = vld [vmem:[#allocation3 + $0x10] sm:$0xff]
      %v4169 = vld [vmem:[#allocation3 + $0x18] sm:$0xff]
      %v4170 = vld [vmem:[#allocation3 + $0x20] sm:$0xff]
      %v4171 = vld [vmem:[#allocation3 + $0x28] sm:$0xff]
      %v4172 = vld [vmem:[#allocation3 + $0x30] sm:$0xff]
      %v4173 = vld [vmem:[#allocation3 + $0x38] sm:$0xff]
      %v4174 = vld [vmem:[#allocation3 + $0x40] sm:$0xff]
      %v4175 = vld [vmem:[#allocation3 + $0x48] sm:$0xff]
      %v4176 = vld [vmem:[#allocation3 + $0x50] sm:$0xff]
      %v4177 = vld [vmem:[#allocation3 + $0x58] sm:$0xff]
      %v4178 = vld [vmem:[#allocation3 + $0x60] sm:$0xff]
      %v4179 = vld [vmem:[#allocation3 + $0x68] sm:$0xff]
      %v4180 = vld [vmem:[#allocation3 + $0x70] sm:$0xff]
      %v4181 = vld [vmem:[#allocation3 + $0x78] sm:$0xff]
      %v4182 = vld [vmem:[#allocation3 + $0x80] sm:$0xff]
      %v4183 = vld [vmem:[#allocation3 + $0x88] sm:$0xff]
      %v4184 = vld [vmem:[#allocation3 + $0x90] sm:$0xff]
      %v4185 = vld [vmem:[#allocation3 + $0x98] sm:$0xff]
      %v4186 = vld [vmem:[#allocation3 + $0xa0] sm:$0xff]
      %v4187 = vld [vmem:[#allocation3 + $0xa8] sm:$0xff]
      %v4188 = vld [vmem:[#allocation3 + $0xb0] sm:$0xff]
      %v4189 = vld [vmem:[#allocation3 + $0xb8] sm:$0xff]
      %v4190 = vld [vmem:[#allocation3 + $0xc0] sm:$0xff]
      %v4191 = vld [vmem:[#allocation3 + $0xc8] sm:$0xff]
      %v4192 = vld [vmem:[#allocation3 + $0xd0] sm:$0xff]
      %v4193 = vld [vmem:[#allocation3 + $0xd8] sm:$0xff]
      %v4194 = vld [vmem:[#allocation3 + $0xe0] sm:$0xff]
      %v4195 = vld [vmem:[#allocation3 + $0xe8] sm:$0xff]
      %v4196 = vld [vmem:[#allocation3 + $0xf0] sm:$0xff]
      %v4197 = vld [vmem:[#allocation3 + $0xf8] sm:$0xff]
      %v4198 = vld [vmem:[#allocation3 + $0x100] sm:$0xff]
      %v4199 = vld [vmem:[#allocation3 + $0x108] sm:$0xff]
      %v4200 = vld [vmem:[#allocation3 + $0x110] sm:$0xff]
      %v4201 = vld [vmem:[#allocation3 + $0x118] sm:$0xff]
      %v4202 = vld [vmem:[#allocation3 + $0x120] sm:$0xff]
      %v4203 = vld [vmem:[#allocation3 + $0x128] sm:$0xff]
      %v4204 = vld [vmem:[#allocation3 + $0x130] sm:$0xff]
      %v4205 = vld [vmem:[#allocation3 + $0x138] sm:$0xff]
      %v4206 = vld [vmem:[#allocation3 + $0x140] sm:$0xff]
      %v4207 = vld [vmem:[#allocation3 + $0x148] sm:$0xff]
      %v4208 = vld [vmem:[#allocation3 + $0x150] sm:$0xff]
      %v4209 = vld [vmem:[#allocation3 + $0x158] sm:$0xff]
      %v4210 = vld [vmem:[#allocation3 + $0x160] sm:$0xff]
      %v4211 = vld [vmem:[#allocation3 + $0x168] sm:$0xff]
      %v4212 = vld [vmem:[#allocation3 + $0x170] sm:$0xff]
      %v4213 = vld [vmem:[#allocation3 + $0x178] sm:$0xff]
      %v4214 = vld [vmem:[#allocation3 + $0x180] sm:$0xff]
      %v4215 = vld [vmem:[#allocation3 + $0x188] sm:$0xff]
      %v4216 = vld [vmem:[#allocation3 + $0x190] sm:$0xff]
      %v4217 = vld [vmem:[#allocation3 + $0x198] sm:$0xff]
      %v4218 = vld [vmem:[#allocation3 + $0x1a0] sm:$0xff]
      %v4219 = vld [vmem:[#allocation3 + $0x1a8] sm:$0xff]
      %v4220 = vld [vmem:[#allocation3 + $0x1b0] sm:$0xff]
      %v4221 = vld [vmem:[#allocation3 + $0x1b8] sm:$0xff]
      %v4222 = vld [vmem:[#allocation3 + $0x1c0] sm:$0xff]
      %v4223 = vld [vmem:[#allocation3 + $0x1c8] sm:$0xff]
      %v4224 = vld [vmem:[#allocation3 + $0x1d0] sm:$0xff]
      %v4225 = vld [vmem:[#allocation3 + $0x1d8] sm:$0xff]
      %v4226 = vld [vmem:[#allocation3 + $0x1e0] sm:$0xff]
      %v4227 = vld [vmem:[#allocation3 + $0x1e8] sm:$0xff]
      %v4228 = vld [vmem:[#allocation3 + $0x1f0] sm:$0xff]
      %v4229 = vld [vmem:[#allocation3 + $0x1f8] sm:$0xff]
      %v4230 = vld [vmem:[#allocation3 + $0x200] sm:$0xff]
      %v4231 = vld [vmem:[#allocation3 + $0x208] sm:$0xff]
      %v4232 = vld [vmem:[#allocation3 + $0x210] sm:$0xff]
      %v4233 = vld [vmem:[#allocation3 + $0x218] sm:$0xff]
      %v4234 = vld [vmem:[#allocation3 + $0x220] sm:$0xff]
      %v4235 = vld [vmem:[#allocation3 + $0x228] sm:$0xff]
      %v4236 = vld [vmem:[#allocation3 + $0x230] sm:$0xff]
      %v4237 = vld [vmem:[#allocation3 + $0x238] sm:$0xff]
      %v4239 = vsel %vm1257, %v4156, 0
      %v4242 = vsel %vm1257, %v4159, 0
      %v4245 = vsel %vm1257, %v4162, 0
      %v4248 = vsel %vm1257, %v4165, 0
      %4250 = vmatprep.subr.mxu0 %v4197
      %4251 = vmatpush1.msra.mxu0 %v4196
      %4252 = vmatprep.subr.mxu0 %v4195
      %4253 = vmatpush1.msra.mxu0 %v4194
      %4254 = vmatprep.subr.mxu0 %v4193
      %4255 = vmatpush1.msra.mxu0 %v4192
      %4256 = vmatprep.subr.mxu0 %v4191
      %4257 = vmatpush1.msra.mxu0 %v4190
      %4258 = vmatprep.subr.mxu0 %v4189
      %4259 = vmatpush1.msra.mxu0 %v4188
      %4260 = vmatprep.subr.mxu0 %v4187
      %4261 = vmatpush1.msra.mxu0 %v4186
      %4262 = vmatprep.subr.mxu0 %v4185
      %4263 = vmatpush1.msra.mxu0 %v4184
      %4264 = vmatprep.subr.mxu0 %v4183
      %4265 = vmatpush1.msra.mxu0 %v4182
      %4266 = vmatprep.subr.mxu0 %v4181
      %4267 = vmatpush1.msra.mxu0 %v4180
      %4268 = vmatprep.subr.mxu0 %v4179
      %4269 = vmatpush1.msra.mxu0 %v4178
      %4270 = vmatprep.subr.mxu0 %v4177
      %4271 = vmatpush1.msra.mxu0 %v4176
      %4272 = vmatprep.subr.mxu0 %v4175
      %4273 = vmatpush1.msra.mxu0 %v4174
      %4274 = vmatprep.subr.mxu0 %v4173
      %4275 = vmatpush1.msra.mxu0 %v4172
      %4276 = vmatprep.subr.mxu0 %v4171
      %4277 = vmatpush1.msra.mxu0 %v4170
      %4278 = vmatprep.subr.mxu0 %v4169
      %4279 = vmatpush1.msra.mxu0 %v4168
      %4280 = vmatprep.subr.mxu0 %v4167
      %4281 = vmatpush1.msra.mxu0 %v4166
      %4282 = vmatprep.subr.mxu0 %v4229
      %4283 = vmatpush2.msra.mxu0 %v4228
      %4284 = vmatprep.subr.mxu0 %v4227
      %4285 = vmatpush2.msra.mxu0 %v4226
      %4286 = vmatprep.subr.mxu0 %v4225
      %4287 = vmatpush2.msra.mxu0 %v4224
      %4288 = vmatprep.subr.mxu0 %v4223
      %4289 = vmatpush2.msra.mxu0 %v4222
      %4290 = vmatprep.subr.mxu0 %v4221
      %4291 = vmatpush2.msra.mxu0 %v4220
      %4292 = vmatprep.subr.mxu0 %v4219
      %4293 = vmatpush2.msra.mxu0 %v4218
      %4294 = vmatprep.subr.mxu0 %v4217
      %4295 = vmatpush2.msra.mxu0 %v4216
      %4296 = vmatprep.subr.mxu0 %v4215
      %4297 = vmatpush2.msra.mxu0 %v4214
      %4298 = vmatprep.subr.mxu0 %v4213
      %4299 = vmatpush2.msra.mxu0 %v4212
      %4300 = vmatprep.subr.mxu0 %v4211
      %4301 = vmatpush2.msra.mxu0 %v4210
      %4302 = vmatprep.subr.mxu0 %v4209
      %4303 = vmatpush2.msra.mxu0 %v4208
      %4304 = vmatprep.subr.mxu0 %v4207
      %4305 = vmatpush2.msra.mxu0 %v4206
      %4306 = vmatprep.subr.mxu0 %v4205
      %4307 = vmatpush2.msra.mxu0 %v4204
      %4308 = vmatprep.subr.mxu0 %v4203
      %4309 = vmatpush2.msra.mxu0 %v4202
      %4310 = vmatprep.subr.mxu0 %v4201
      %4311 = vmatpush2.msra.mxu0 %v4200
      %4312 = vmatprep.subr.mxu0 %v4199
      %4313 = vmatpush2.msra.mxu0 %v4198
      %4314 = vmatprep.mubr.f32.mxu0 %v4155
      %4315 = vmatmul.mubr.f32.gmra.mxu0 %v4154
      %v4316 = vpop.f32.mrf.mxu0
      %v4317 = vadd.f32 0.0, %v4316
      %v4318 = vpop.f32.mrf.mxu0
      %v4319 = vadd.f32 0.0, %v4318
      %4320 = vmatprep.mubr.f32.mxu0 %v4158
      %4321 = vmatmul.mubr.f32.gmra.mxu0 %v4157
      %v4322 = vpop.f32.mrf.mxu0
      %v4323 = vadd.f32 0.0, %v4322
      %v4324 = vpop.f32.mrf.mxu0
      %v4325 = vadd.f32 0.0, %v4324
      %4326 = vmatprep.mubr.f32.mxu0 %v4161
      %4327 = vmatmul.mubr.f32.gmra.mxu0 %v4160
      %v4328 = vpop.f32.mrf.mxu0
      %v4329 = vadd.f32 0.0, %v4328
      %v4330 = vpop.f32.mrf.mxu0
      %v4331 = vadd.f32 0.0, %v4330
      %4332 = vmatprep.mubr.f32.mxu0 %v4164
      %4333 = vmatmul.mubr.f32.gmra.mxu0 %v4163
      %v4334 = vpop.f32.mrf.mxu0
      %v4335 = vadd.f32 0.0, %v4334
      %v4336 = vpop.f32.mrf.mxu0
      %v4337 = vadd.f32 0.0, %v4336
      %4338 = vdwg.mxu0
      %4339 = vmatprep.subr.mxu0 0.0
      %4340 = vmatpush1.msra.mxu0 0.0
      %4341 = vmatprep.subr.mxu0 0.0
      %4342 = vmatpush1.msra.mxu0 0.0
      %4343 = vmatprep.subr.mxu0 0.0
      %4344 = vmatpush1.msra.mxu0 0.0
      %4345 = vmatprep.subr.mxu0 0.0
      %4346 = vmatpush1.msra.mxu0 0.0
      %4347 = vmatprep.subr.mxu0 0.0
      %4348 = vmatpush1.msra.mxu0 0.0
      %4349 = vmatprep.subr.mxu0 0.0
      %4350 = vmatpush1.msra.mxu0 0.0
      %4351 = vmatprep.subr.mxu0 0.0
      %4352 = vmatpush1.msra.mxu0 0.0
      %4353 = vmatprep.subr.mxu0 0.0
      %4354 = vmatpush1.msra.mxu0 0.0
      %4355 = vmatprep.subr.mxu0 0.0
      %4356 = vmatpush1.msra.mxu0 0.0
      %4357 = vmatprep.subr.mxu0 0.0
      %4358 = vmatpush1.msra.mxu0 0.0
      %4359 = vmatprep.subr.mxu0 0.0
      %4360 = vmatpush1.msra.mxu0 0.0
      %4361 = vmatprep.subr.mxu0 0.0
      %4362 = vmatpush1.msra.mxu0 0.0
      %4363 = vmatprep.subr.mxu0 %v4237
      %4364 = vmatpush1.msra.mxu0 %v4236
      %4365 = vmatprep.subr.mxu0 %v4235
      %4366 = vmatpush1.msra.mxu0 %v4234
      %4367 = vmatprep.subr.mxu0 %v4233
      %4368 = vmatpush1.msra.mxu0 %v4232
      %4369 = vmatprep.subr.mxu0 %v4231
      %4370 = vmatpush1.msra.mxu0 %v4230
      %4371 = vmatprep.subr.mxu0 0.0
      %4372 = vmatpush2.msra.mxu0 0.0
      %4373 = vmatprep.subr.mxu0 0.0
      %4374 = vmatpush2.msra.mxu0 0.0
      %4375 = vmatprep.subr.mxu0 0.0
      %4376 = vmatpush2.msra.mxu0 0.0
      %4377 = vmatprep.subr.mxu0 0.0
      %4378 = vmatpush2.msra.mxu0 0.0
      %4379 = vmatprep.subr.mxu0 0.0
      %4380 = vmatpush2.msra.mxu0 0.0
      %4381 = vmatprep.subr.mxu0 0.0
      %4382 = vmatpush2.msra.mxu0 0.0
      %4383 = vmatprep.subr.mxu0 0.0
      %4384 = vmatpush2.msra.mxu0 0.0
      %4385 = vmatprep.subr.mxu0 0.0
      %4386 = vmatpush2.msra.mxu0 0.0
      %4387 = vmatprep.subr.mxu0 0.0
      %4388 = vmatpush2.msra.mxu0 0.0
      %4389 = vmatprep.subr.mxu0 0.0
      %4390 = vmatpush2.msra.mxu0 0.0
      %4391 = vmatprep.subr.mxu0 0.0
      %4392 = vmatpush2.msra.mxu0 0.0
      %4393 = vmatprep.subr.mxu0 0.0
      %4394 = vmatpush2.msra.mxu0 0.0
      %4395 = vmatprep.subr.mxu0 0.0
      %4396 = vmatpush2.msra.mxu0 0.0
      %4397 = vmatprep.subr.mxu0 0.0
      %4398 = vmatpush2.msra.mxu0 0.0
      %4399 = vmatprep.subr.mxu0 0.0
      %4400 = vmatpush2.msra.mxu0 0.0
      %4401 = vmatprep.subr.mxu0 0.0
      %4402 = vmatpush2.msra.mxu0 0.0
      %4403 = vmatprep.mubr.f32.mxu0 0.0
      %4404 = vmatmul.mubr.f32.gmra.mxu0 %v4239
      %v4405 = vpop.f32.mrf.mxu0
      %v4406 = vadd.f32 %v4317, %v4405
      %v4407 = vpop.f32.mrf.mxu0
      %v4408 = vadd.f32 %v4319, %v4407
      %4409 = vmatprep.mubr.f32.mxu0 0.0
      %4410 = vmatmul.mubr.f32.gmra.mxu0 %v4242
      %v4411 = vpop.f32.mrf.mxu0
      %v4412 = vadd.f32 %v4323, %v4411
      %v4413 = vpop.f32.mrf.mxu0
      %v4414 = vadd.f32 %v4325, %v4413
      %4415 = vmatprep.mubr.f32.mxu0 0.0
      %4416 = vmatmul.mubr.f32.gmra.mxu0 %v4245
      %v4417 = vpop.f32.mrf.mxu0
      %v4418 = vadd.f32 %v4329, %v4417
      %v4419 = vpop.f32.mrf.mxu0
      %v4420 = vadd.f32 %v4331, %v4419
      %4421 = vmatprep.mubr.f32.mxu0 0.0
      %4422 = vmatmul.mubr.f32.gmra.mxu0 %v4248
      %v4423 = vpop.f32.mrf.mxu0
      %v4424 = vadd.f32 %v4335, %v4423
      %v4425 = vpop.f32.mrf.mxu0
      %v4426 = vadd.f32 %v4337, %v4425
      %4427 = vdwg.mxu0
      %v4428 = vxor.u32 %v4406, 2147483648
      %v4429 = vxor.u32 %v4408, 2147483648
      %v4430 = vxor.u32 %v4412, 2147483648
      %v4431 = vxor.u32 %v4414, 2147483648
      %v4432 = vxor.u32 %v4418, 2147483648
      %v4433 = vxor.u32 %v4420, 2147483648
      %v4434 = vxor.u32 %v4424, 2147483648
      %v4435 = vxor.u32 %v4426, 2147483648
      %v4436 = vmul.f32 %v4428, 1.442695
      %v4437 = vpow.pop %v4436
      %v4438 = vmul.f32 %v4429, 1.442695
      %v4439 = vpow.pop %v4438
      %v4440 = vmul.f32 %v4430, 1.442695
      %v4441 = vpow.pop %v4440
      %v4442 = vmul.f32 %v4431, 1.442695
      %v4443 = vpow.pop %v4442
      %v4444 = vmul.f32 %v4432, 1.442695
      %v4445 = vpow.pop %v4444
      %v4446 = vmul.f32 %v4433, 1.442695
      %v4447 = vpow.pop %v4446
      %v4448 = vmul.f32 %v4434, 1.442695
      %v4449 = vpow.pop %v4448
      %v4450 = vmul.f32 %v4435, 1.442695
      %v4451 = vpow.pop %v4450
      %v4452 = vadd.f32 %v4437, 1.0
      %v4453 = vadd.f32 %v4439, 1.0
      %v4454 = vadd.f32 %v4441, 1.0
      %v4455 = vadd.f32 %v4443, 1.0
      %v4456 = vadd.f32 %v4445, 1.0
      %v4457 = vadd.f32 %v4447, 1.0
      %v4458 = vadd.f32 %v4449, 1.0
      %v4459 = vadd.f32 %v4451, 1.0
      %v4460 = vrcp.pop %v4452
      %v4461 = vmul.f32 1.0, %v4460
      %v4462 = vrcp.pop %v4453
      %v4463 = vmul.f32 1.0, %v4462
      %v4464 = vrcp.pop %v4454
      %v4465 = vmul.f32 1.0, %v4464
      %v4466 = vrcp.pop %v4455
      %v4467 = vmul.f32 1.0, %v4466
      %v4468 = vrcp.pop %v4456
      %v4469 = vmul.f32 1.0, %v4468
      %v4470 = vrcp.pop %v4457
      %v4471 = vmul.f32 1.0, %v4470
      %v4472 = vrcp.pop %v4458
      %v4473 = vmul.f32 1.0, %v4472
      %v4474 = vrcp.pop %v4459
      %v4475 = vmul.f32 1.0, %v4474
      %v4476 = vmul.f32 %v4469, %v413
      %v4477 = vmul.f32 %v4471, %v414
      %v4478 = vmul.f32 %v4473, %v415
      %v4479 = vmul.f32 %v4475, %v416
      %4484 = vrot.lane.b32.xlu0 %v4476, 34
      %v4485 = vpop.permute.xlu0 %4484
      %4486 = vrot.lane.b32.xlu0 %v4477, 34
      %v4487 = vpop.permute.xlu0 %4486
      %4488 = vrot.lane.b32.xlu0 %v4478, 34
      %v4489 = vpop.permute.xlu0 %4488
      %4490 = vrot.lane.b32.xlu0 %v4479, 34
      %v4491 = vpop.permute.xlu0 %4490
      %v4492 = vsel %vm423, %v4485, %v4487
      %v4493 = vsel %vm423, %v4489, %v4491
      %4500 = vst.msk [vmem:[#allocation2] sm:$0xff] %vm818, %v4485
      %4501 = vst [vmem:[#allocation2 + $0x8] sm:$0xff] %v4492
      %4502 = vst.msk [vmem:[#allocation2 + $0x10] sm:$0xff] %vm423, %v4487
      %4503 = vst.msk [vmem:[#allocation2 + $0x18] sm:$0xff] %vm818, %v4489
      %4504 = vst [vmem:[#allocation2 + $0x20] sm:$0xff] %v4493
      %4505 = vst.msk [vmem:[#allocation2 + $0x28] sm:$0xff] %vm423, %v4491
      %v4506 = vld [vmem:[#allocation2] sm:$0xff]
      %v4507 = vld [vmem:[#allocation2 + $0x8] sm:$0xff]
      %v4508 = vld [vmem:[#allocation2 + $0x10] sm:$0xff]
      %v4509 = vld [vmem:[#allocation2 + $0x18] sm:$0xff]
      %v4510 = vld [vmem:[#allocation2 + $0x20] sm:$0xff]
      %v4511 = vld [vmem:[#allocation2 + $0x28] sm:$0xff]
      %4518 = vrot.lane.b32.xlu0 %v4506, 111
      %v4519 = vpop.permute.xlu0 %4518
      %4520 = vrot.lane.b32.xlu0 %v4507, 111
      %v4521 = vpop.permute.xlu0 %4520
      %4522 = vrot.lane.b32.xlu0 %v4508, 111
      %v4523 = vpop.permute.xlu0 %4522
      %4524 = vrot.lane.b32.xlu0 %v4509, 111
      %v4525 = vpop.permute.xlu0 %4524
      %4526 = vrot.lane.b32.xlu0 %v4510, 111
      %v4527 = vpop.permute.xlu0 %4526
      %4528 = vrot.lane.b32.xlu0 %v4511, 111
      %v4529 = vpop.permute.xlu0 %4528
      %v4530 = vsel %vm461, %v4519, %v4521
      %v4531 = vsel %vm461, %v4521, %v4523
      %v4532 = vsel %vm461, %v4525, %v4527
      %v4533 = vsel %vm461, %v4527, %v4529
      %v4538 = vsel %vm441, %v4530, 0.0
      %v4539 = vsel %vm442, %v4531, 0.0
      %v4540 = vsel %vm441, %v4532, 0.0
      %v4541 = vsel %vm442, %v4533, 0.0
      %4542 = vst [vmem:[#allocation3 + $0x120] sm:$0xff] %v4538
      %4543 = vst [vmem:[#allocation3 + $0x128] sm:$0xff] %v4539
      %4544 = vst [vmem:[#allocation3 + $0x130] sm:$0xff] %v4540
      %4545 = vst [vmem:[#allocation3 + $0x138] sm:$0xff] %v4541
      %v4546 = vld [vmem:[#allocation2] sm:$0xff]
      %v4547 = vld [vmem:[#allocation2 + $0x8] sm:$0xff]
      %v4548 = vld [vmem:[#allocation2 + $0x10] sm:$0xff]
      %v4549 = vld [vmem:[#allocation2 + $0x18] sm:$0xff]
      %v4550 = vld [vmem:[#allocation2 + $0x20] sm:$0xff]
      %v4551 = vld [vmem:[#allocation2 + $0x28] sm:$0xff]
      %4558 = vrot.lane.b32.xlu0 %v4546, 110
      %v4559 = vpop.permute.xlu0 %4558
      %4560 = vrot.lane.b32.xlu0 %v4547, 110
      %v4561 = vpop.permute.xlu0 %4560
      %4562 = vrot.lane.b32.xlu0 %v4548, 110
      %v4563 = vpop.permute.xlu0 %4562
      %4564 = vrot.lane.b32.xlu0 %v4549, 110
      %v4565 = vpop.permute.xlu0 %4564
      %4566 = vrot.lane.b32.xlu0 %v4550, 110
      %v4567 = vpop.permute.xlu0 %4566
      %4568 = vrot.lane.b32.xlu0 %v4551, 110
      %v4569 = vpop.permute.xlu0 %4568
      %v4570 = vsel %vm502, %v4559, %v4561
      %v4571 = vsel %vm502, %v4561, %v4563
      %v4572 = vsel %vm502, %v4565, %v4567
      %v4573 = vsel %vm502, %v4567, %v4569
      %4578 = vst [vmem:[#allocation3 + $0x140] sm:$0xff] %v4570
      %4579 = vst [vmem:[#allocation3 + $0x148] sm:$0xff] %v4571
      %4580 = vst [vmem:[#allocation3 + $0x150] sm:$0xff] %v4572
      %4581 = vst [vmem:[#allocation3 + $0x158] sm:$0xff] %v4573
      %v4582 = vld [vmem:[#allocation2] sm:$0xff]
      %v4583 = vld [vmem:[#allocation2 + $0x8] sm:$0xff]
      %v4584 = vld [vmem:[#allocation2 + $0x10] sm:$0xff]
      %v4585 = vld [vmem:[#allocation2 + $0x18] sm:$0xff]
      %v4586 = vld [vmem:[#allocation2 + $0x20] sm:$0xff]
      %v4587 = vld [vmem:[#allocation2 + $0x28] sm:$0xff]
      %4594 = vrot.lane.b32.xlu0 %v4582, 109
      %v4595 = vpop.permute.xlu0 %4594
      %4596 = vrot.lane.b32.xlu0 %v4583, 109
      %v4597 = vpop.permute.xlu0 %4596
      %4598 = vrot.lane.b32.xlu0 %v4584, 109
      %v4599 = vpop.permute.xlu0 %4598
      %4600 = vrot.lane.b32.xlu0 %v4585, 109
      %v4601 = vpop.permute.xlu0 %4600
      %4602 = vrot.lane.b32.xlu0 %v4586, 109
      %v4603 = vpop.permute.xlu0 %4602
      %4604 = vrot.lane.b32.xlu0 %v4587, 109
      %v4605 = vpop.permute.xlu0 %4604
      %v4606 = vsel %vm543, %v4595, %v4597
      %v4607 = vsel %vm543, %v4597, %v4599
      %v4608 = vsel %vm543, %v4601, %v4603
      %v4609 = vsel %vm543, %v4603, %v4605
      %v4614 = vsel %vm523, %v4606, 0.0
      %v4615 = vsel %vm524, %v4607, 0.0
      %v4616 = vsel %vm523, %v4608, 0.0
      %v4617 = vsel %vm524, %v4609, 0.0
      %4618 = vst [vmem:[#allocation3 + $0x160] sm:$0xff] %v4614
      %4619 = vst [vmem:[#allocation3 + $0x168] sm:$0xff] %v4615
      %4620 = vst [vmem:[#allocation3 + $0x170] sm:$0xff] %v4616
      %4621 = vst [vmem:[#allocation3 + $0x178] sm:$0xff] %v4617
      %v4622 = vld [vmem:[#allocation2] sm:$0xff]
      %v4623 = vld [vmem:[#allocation2 + $0x8] sm:$0xff]
      %v4624 = vld [vmem:[#allocation2 + $0x10] sm:$0xff]
      %v4625 = vld [vmem:[#allocation2 + $0x18] sm:$0xff]
      %v4626 = vld [vmem:[#allocation2 + $0x20] sm:$0xff]
      %v4627 = vld [vmem:[#allocation2 + $0x28] sm:$0xff]
      %4634 = vrot.lane.b32.xlu0 %v4622, 95
      %v4635 = vpop.permute.xlu0 %4634
      %4636 = vrot.lane.b32.xlu0 %v4623, 95
      %v4637 = vpop.permute.xlu0 %4636
      %4638 = vrot.lane.b32.xlu0 %v4624, 95
      %v4639 = vpop.permute.xlu0 %4638
      %4640 = vrot.lane.b32.xlu0 %v4625, 95
      %v4641 = vpop.permute.xlu0 %4640
      %4642 = vrot.lane.b32.xlu0 %v4626, 95
      %v4643 = vpop.permute.xlu0 %4642
      %4644 = vrot.lane.b32.xlu0 %v4627, 95
      %v4645 = vpop.permute.xlu0 %4644
      %v4646 = vsel %vm584, %v4635, %v4637
      %v4647 = vsel %vm584, %v4637, %v4639
      %v4648 = vsel %vm584, %v4641, %v4643
      %v4649 = vsel %vm584, %v4643, %v4645
      %v4654 = vsel %vm441, %v4646, 0.0
      %v4655 = vsel %vm442, %v4647, 0.0
      %v4656 = vsel %vm441, %v4648, 0.0
      %v4657 = vsel %vm442, %v4649, 0.0
      %4658 = vst [vmem:[#allocation3 + $0x180] sm:$0xff] %v4654
      %4659 = vst [vmem:[#allocation3 + $0x188] sm:$0xff] %v4655
      %4660 = vst [vmem:[#allocation3 + $0x190] sm:$0xff] %v4656
      %4661 = vst [vmem:[#allocation3 + $0x198] sm:$0xff] %v4657
      %v4662 = vld [vmem:[#allocation2] sm:$0xff]
      %v4663 = vld [vmem:[#allocation2 + $0x8] sm:$0xff]
      %v4664 = vld [vmem:[#allocation2 + $0x10] sm:$0xff]
      %v4665 = vld [vmem:[#allocation2 + $0x18] sm:$0xff]
      %v4666 = vld [vmem:[#allocation2 + $0x20] sm:$0xff]
      %v4667 = vld [vmem:[#allocation2 + $0x28] sm:$0xff]
      %4674 = vrot.lane.b32.xlu0 %v4662, 94
      %v4675 = vpop.permute.xlu0 %4674
      %4676 = vrot.lane.b32.xlu0 %v4663, 94
      %v4677 = vpop.permute.xlu0 %4676
      %4678 = vrot.lane.b32.xlu0 %v4664, 94
      %v4679 = vpop.permute.xlu0 %4678
      %4680 = vrot.lane.b32.xlu0 %v4665, 94
      %v4681 = vpop.permute.xlu0 %4680
      %4682 = vrot.lane.b32.xlu0 %v4666, 94
      %v4683 = vpop.permute.xlu0 %4682
      %4684 = vrot.lane.b32.xlu0 %v4667, 94
      %v4685 = vpop.permute.xlu0 %4684
      %v4686 = vsel %vm625, %v4675, %v4677
      %v4687 = vsel %vm625, %v4677, %v4679
      %v4688 = vsel %vm625, %v4681, %v4683
      %v4689 = vsel %vm625, %v4683, %v4685
      %4694 = vst [vmem:[#allocation3 + $0x1a0] sm:$0xff] %v4686
      %4695 = vst [vmem:[#allocation3 + $0x1a8] sm:$0xff] %v4687
      %4696 = vst [vmem:[#allocation3 + $0x1b0] sm:$0xff] %v4688
      %4697 = vst [vmem:[#allocation3 + $0x1b8] sm:$0xff] %v4689
      %v4698 = vld [vmem:[#allocation2] sm:$0xff]
      %v4699 = vld [vmem:[#allocation2 + $0x8] sm:$0xff]
      %v4700 = vld [vmem:[#allocation2 + $0x10] sm:$0xff]
      %v4701 = vld [vmem:[#allocation2 + $0x18] sm:$0xff]
      %v4702 = vld [vmem:[#allocation2 + $0x20] sm:$0xff]
      %v4703 = vld [vmem:[#allocation2 + $0x28] sm:$0xff]
      %4710 = vrot.lane.b32.xlu0 %v4698, 93
      %v4711 = vpop.permute.xlu0 %4710
      %4712 = vrot.lane.b32.xlu0 %v4699, 93
      %v4713 = vpop.permute.xlu0 %4712
      %4714 = vrot.lane.b32.xlu0 %v4700, 93
      %v4715 = vpop.permute.xlu0 %4714
      %4716 = vrot.lane.b32.xlu0 %v4701, 93
      %v4717 = vpop.permute.xlu0 %4716
      %4718 = vrot.lane.b32.xlu0 %v4702, 93
      %v4719 = vpop.permute.xlu0 %4718
      %4720 = vrot.lane.b32.xlu0 %v4703, 93
      %v4721 = vpop.permute.xlu0 %4720
      %v4722 = vsel %vm662, %v4711, %v4713
      %v4723 = vsel %vm662, %v4713, %v4715
      %v4724 = vsel %vm662, %v4717, %v4719
      %v4725 = vsel %vm662, %v4719, %v4721
      %v4730 = vsel %vm523, %v4722, 0.0
      %v4731 = vsel %vm524, %v4723, 0.0
      %v4732 = vsel %vm523, %v4724, 0.0
      %v4733 = vsel %vm524, %v4725, 0.0
      %4734 = vst [vmem:[#allocation3 + $0x1c0] sm:$0xff] %v4730
      %4735 = vst [vmem:[#allocation3 + $0x1c8] sm:$0xff] %v4731
      %4736 = vst [vmem:[#allocation3 + $0x1d0] sm:$0xff] %v4732
      %4737 = vst [vmem:[#allocation3 + $0x1d8] sm:$0xff] %v4733
      %v4738 = vld [vmem:[#allocation2] sm:$0xff]
      %v4739 = vld [vmem:[#allocation2 + $0x8] sm:$0xff]
      %v4740 = vld [vmem:[#allocation2 + $0x10] sm:$0xff]
      %v4741 = vld [vmem:[#allocation2 + $0x18] sm:$0xff]
      %v4742 = vld [vmem:[#allocation2 + $0x20] sm:$0xff]
      %v4743 = vld [vmem:[#allocation2 + $0x28] sm:$0xff]
      %4750 = vrot.lane.b32.xlu0 %v4738, 79
      %v4751 = vpop.permute.xlu0 %4750
      %4752 = vrot.lane.b32.xlu0 %v4739, 79
      %v4753 = vpop.permute.xlu0 %4752
      %4754 = vrot.lane.b32.xlu0 %v4740, 79
      %v4755 = vpop.permute.xlu0 %4754
      %4756 = vrot.lane.b32.xlu0 %v4741, 79
      %v4757 = vpop.permute.xlu0 %4756
      %4758 = vrot.lane.b32.xlu0 %v4742, 79
      %v4759 = vpop.permute.xlu0 %4758
      %4760 = vrot.lane.b32.xlu0 %v4743, 79
      %v4761 = vpop.permute.xlu0 %4760
      %v4762 = vsel %vm703, %v4751, %v4753
      %v4763 = vsel %vm703, %v4753, %v4755
      %v4764 = vsel %vm703, %v4757, %v4759
      %v4765 = vsel %vm703, %v4759, %v4761
      %v4770 = vsel %vm441, %v4762, 0.0
      %v4771 = vsel %vm442, %v4763, 0.0
      %v4772 = vsel %vm441, %v4764, 0.0
      %v4773 = vsel %vm442, %v4765, 0.0
      %4774 = vst [vmem:[#allocation3 + $0x1e0] sm:$0xff] %v4770
      %4775 = vst [vmem:[#allocation3 + $0x1e8] sm:$0xff] %v4771
      %4776 = vst [vmem:[#allocation3 + $0x1f0] sm:$0xff] %v4772
      %4777 = vst [vmem:[#allocation3 + $0x1f8] sm:$0xff] %v4773
      %v4778 = vld [vmem:[#allocation2] sm:$0xff]
      %v4779 = vld [vmem:[#allocation2 + $0x8] sm:$0xff]
      %v4780 = vld [vmem:[#allocation2 + $0x10] sm:$0xff]
      %v4781 = vld [vmem:[#allocation2 + $0x18] sm:$0xff]
      %v4782 = vld [vmem:[#allocation2 + $0x20] sm:$0xff]
      %v4783 = vld [vmem:[#allocation2 + $0x28] sm:$0xff]
      %4790 = vrot.lane.b32.xlu0 %v4778, 78
      %v4791 = vpop.permute.xlu0 %4790
      %4792 = vrot.lane.b32.xlu0 %v4779, 78
      %v4793 = vpop.permute.xlu0 %4792
      %4794 = vrot.lane.b32.xlu0 %v4780, 78
      %v4795 = vpop.permute.xlu0 %4794
      %4796 = vrot.lane.b32.xlu0 %v4781, 78
      %v4797 = vpop.permute.xlu0 %4796
      %4798 = vrot.lane.b32.xlu0 %v4782, 78
      %v4799 = vpop.permute.xlu0 %4798
      %4800 = vrot.lane.b32.xlu0 %v4783, 78
      %v4801 = vpop.permute.xlu0 %4800
      %v4802 = vsel %vm744, %v4791, %v4793
      %v4803 = vsel %vm744, %v4793, %v4795
      %v4804 = vsel %vm744, %v4797, %v4799
      %v4805 = vsel %vm744, %v4799, %v4801
      %4810 = vst [vmem:[#allocation3 + $0x200] sm:$0xff] %v4802
      %4811 = vst [vmem:[#allocation3 + $0x208] sm:$0xff] %v4803
      %4812 = vst [vmem:[#allocation3 + $0x210] sm:$0xff] %v4804
      %4813 = vst [vmem:[#allocation3 + $0x218] sm:$0xff] %v4805
      %v4814 = vld [vmem:[#allocation2] sm:$0xff]
      %v4815 = vld [vmem:[#allocation2 + $0x8] sm:$0xff]
      %v4816 = vld [vmem:[#allocation2 + $0x10] sm:$0xff]
      %v4817 = vld [vmem:[#allocation2 + $0x18] sm:$0xff]
      %v4818 = vld [vmem:[#allocation2 + $0x20] sm:$0xff]
      %v4819 = vld [vmem:[#allocation2 + $0x28] sm:$0xff]
      %4826 = vrot.lane.b32.xlu0 %v4814, 77
      %v4827 = vpop.permute.xlu0 %4826
      %4828 = vrot.lane.b32.xlu0 %v4815, 77
      %v4829 = vpop.permute.xlu0 %4828
      %4830 = vrot.lane.b32.xlu0 %v4816, 77
      %v4831 = vpop.permute.xlu0 %4830
      %4832 = vrot.lane.b32.xlu0 %v4817, 77
      %v4833 = vpop.permute.xlu0 %4832
      %4834 = vrot.lane.b32.xlu0 %v4818, 77
      %v4835 = vpop.permute.xlu0 %4834
      %4836 = vrot.lane.b32.xlu0 %v4819, 77
      %v4837 = vpop.permute.xlu0 %4836
      %v4838 = vsel %vm781, %v4827, %v4829
      %v4839 = vsel %vm781, %v4829, %v4831
      %v4840 = vsel %vm781, %v4833, %v4835
      %v4841 = vsel %vm781, %v4835, %v4837
      %v4846 = vsel %vm523, %v4838, 0.0
      %v4847 = vsel %vm524, %v4839, 0.0
      %v4848 = vsel %vm523, %v4840, 0.0
      %v4849 = vsel %vm524, %v4841, 0.0
      %4850 = vst [vmem:[#allocation3 + $0x220] sm:$0xff] %v4846
      %4851 = vst [vmem:[#allocation3 + $0x228] sm:$0xff] %v4847
      %4852 = vst [vmem:[#allocation3 + $0x230] sm:$0xff] %v4848
      %4853 = vst [vmem:[#allocation3 + $0x238] sm:$0xff] %v4849
      %v4854 = vld [vmem:[%s6] sm:$0xff]
      %v4855 = vld [vmem:[%s6 + $0x8] sm:$0xff]
      %v4856 = vld [vmem:[%s6 + $0x10] sm:$0xff]
      %v4857 = vld [vmem:[%s6 + $0x18] sm:$0xff]
      %v4858 = vld [vmem:[%s6 + $0x20] sm:$0xff]
      %v4859 = vld [vmem:[%s6 + $0x28] sm:$0xff]
      %v4860 = vld [vmem:[#allocation3] sm:$0xff]
      %v4861 = vld [vmem:[#allocation3 + $0x8] sm:$0xff]
      %v4862 = vld [vmem:[#allocation3 + $0x10] sm:$0xff]
      %v4863 = vld [vmem:[#allocation3 + $0x18] sm:$0xff]
      %v4864 = vld [vmem:[#allocation3 + $0x20] sm:$0xff]
      %v4865 = vld [vmem:[#allocation3 + $0x28] sm:$0xff]
      %v4866 = vld [vmem:[#allocation3 + $0x30] sm:$0xff]
      %v4867 = vld [vmem:[#allocation3 + $0x38] sm:$0xff]
      %v4868 = vld [vmem:[#allocation3 + $0x40] sm:$0xff]
      %v4869 = vld [vmem:[#allocation3 + $0x48] sm:$0xff]
      %v4870 = vld [vmem:[#allocation3 + $0x50] sm:$0xff]
      %v4871 = vld [vmem:[#allocation3 + $0x58] sm:$0xff]
      %v4872 = vld [vmem:[#allocation3 + $0x60] sm:$0xff]
      %v4873 = vld [vmem:[#allocation3 + $0x68] sm:$0xff]
      %v4874 = vld [vmem:[#allocation3 + $0x70] sm:$0xff]
      %v4875 = vld [vmem:[#allocation3 + $0x78] sm:$0xff]
      %v4876 = vld [vmem:[#allocation3 + $0x80] sm:$0xff]
      %v4877 = vld [vmem:[#allocation3 + $0x88] sm:$0xff]
      %v4878 = vld [vmem:[#allocation3 + $0x90] sm:$0xff]
      %v4879 = vld [vmem:[#allocation3 + $0x98] sm:$0xff]
      %v4880 = vld [vmem:[#allocation3 + $0xa0] sm:$0xff]
      %v4881 = vld [vmem:[#allocation3 + $0xa8] sm:$0xff]
      %v4882 = vld [vmem:[#allocation3 + $0xb0] sm:$0xff]
      %v4883 = vld [vmem:[#allocation3 + $0xb8] sm:$0xff]
      %v4884 = vld [vmem:[#allocation3 + $0xc0] sm:$0xff]
      %v4885 = vld [vmem:[#allocation3 + $0xc8] sm:$0xff]
      %v4886 = vld [vmem:[#allocation3 + $0xd0] sm:$0xff]
      %v4887 = vld [vmem:[#allocation3 + $0xd8] sm:$0xff]
      %v4888 = vld [vmem:[#allocation3 + $0xe0] sm:$0xff]
      %v4889 = vld [vmem:[#allocation3 + $0xe8] sm:$0xff]
      %v4890 = vld [vmem:[#allocation3 + $0xf0] sm:$0xff]
      %v4891 = vld [vmem:[#allocation3 + $0xf8] sm:$0xff]
      %v4892 = vld [vmem:[#allocation3 + $0x100] sm:$0xff]
      %v4893 = vld [vmem:[#allocation3 + $0x108] sm:$0xff]
      %v4894 = vld [vmem:[#allocation3 + $0x110] sm:$0xff]
      %v4895 = vld [vmem:[#allocation3 + $0x118] sm:$0xff]
      %v4896 = vld [vmem:[#allocation3 + $0x120] sm:$0xff]
      %v4897 = vld [vmem:[#allocation3 + $0x128] sm:$0xff]
      %v4898 = vld [vmem:[#allocation3 + $0x130] sm:$0xff]
      %v4899 = vld [vmem:[#allocation3 + $0x138] sm:$0xff]
      %v4900 = vld [vmem:[#allocation3 + $0x140] sm:$0xff]
      %v4901 = vld [vmem:[#allocation3 + $0x148] sm:$0xff]
      %v4902 = vld [vmem:[#allocation3 + $0x150] sm:$0xff]
      %v4903 = vld [vmem:[#allocation3 + $0x158] sm:$0xff]
      %v4904 = vld [vmem:[#allocation3 + $0x160] sm:$0xff]
      %v4905 = vld [vmem:[#allocation3 + $0x168] sm:$0xff]
      %v4906 = vld [vmem:[#allocation3 + $0x170] sm:$0xff]
      %v4907 = vld [vmem:[#allocation3 + $0x178] sm:$0xff]
      %v4908 = vld [vmem:[#allocation3 + $0x180] sm:$0xff]
      %v4909 = vld [vmem:[#allocation3 + $0x188] sm:$0xff]
      %v4910 = vld [vmem:[#allocation3 + $0x190] sm:$0xff]
      %v4911 = vld [vmem:[#allocation3 + $0x198] sm:$0xff]
      %v4912 = vld [vmem:[#allocation3 + $0x1a0] sm:$0xff]
      %v4913 = vld [vmem:[#allocation3 + $0x1a8] sm:$0xff]
      %v4914 = vld [vmem:[#allocation3 + $0x1b0] sm:$0xff]
      %v4915 = vld [vmem:[#allocation3 + $0x1b8] sm:$0xff]
      %v4916 = vld [vmem:[#allocation3 + $0x1c0] sm:$0xff]
      %v4917 = vld [vmem:[#allocation3 + $0x1c8] sm:$0xff]
      %v4918 = vld [vmem:[#allocation3 + $0x1d0] sm:$0xff]
      %v4919 = vld [vmem:[#allocation3 + $0x1d8] sm:$0xff]
      %v4920 = vld [vmem:[#allocation3 + $0x1e0] sm:$0xff]
      %v4921 = vld [vmem:[#allocation3 + $0x1e8] sm:$0xff]
      %v4922 = vld [vmem:[#allocation3 + $0x1f0] sm:$0xff]
      %v4923 = vld [vmem:[#allocation3 + $0x1f8] sm:$0xff]
      %v4924 = vld [vmem:[#allocation3 + $0x200] sm:$0xff]
      %v4925 = vld [vmem:[#allocation3 + $0x208] sm:$0xff]
      %v4926 = vld [vmem:[#allocation3 + $0x210] sm:$0xff]
      %v4927 = vld [vmem:[#allocation3 + $0x218] sm:$0xff]
      %v4928 = vld [vmem:[#allocation3 + $0x220] sm:$0xff]
      %v4929 = vld [vmem:[#allocation3 + $0x228] sm:$0xff]
      %v4930 = vld [vmem:[#allocation3 + $0x230] sm:$0xff]
      %v4931 = vld [vmem:[#allocation3 + $0x238] sm:$0xff]
      %v4933 = vsel %vm1257, %v4856, 0
      %v4936 = vsel %vm1257, %v4859, 0
      %4938 = vmatprep.subr.mxu0 %v4891
      %4939 = vmatpush1.msra.mxu0 %v4890
      %4940 = vmatprep.subr.mxu0 %v4889
      %4941 = vmatpush1.msra.mxu0 %v4888
      %4942 = vmatprep.subr.mxu0 %v4887
      %4943 = vmatpush1.msra.mxu0 %v4886
      %4944 = vmatprep.subr.mxu0 %v4885
      %4945 = vmatpush1.msra.mxu0 %v4884
      %4946 = vmatprep.subr.mxu0 %v4883
      %4947 = vmatpush1.msra.mxu0 %v4882
      %4948 = vmatprep.subr.mxu0 %v4881
      %4949 = vmatpush1.msra.mxu0 %v4880
      %4950 = vmatprep.subr.mxu0 %v4879
      %4951 = vmatpush1.msra.mxu0 %v4878
      %4952 = vmatprep.subr.mxu0 %v4877
      %4953 = vmatpush1.msra.mxu0 %v4876
      %4954 = vmatprep.subr.mxu0 %v4875
      %4955 = vmatpush1.msra.mxu0 %v4874
      %4956 = vmatprep.subr.mxu0 %v4873
      %4957 = vmatpush1.msra.mxu0 %v4872
      %4958 = vmatprep.subr.mxu0 %v4871
      %4959 = vmatpush1.msra.mxu0 %v4870
      %4960 = vmatprep.subr.mxu0 %v4869
      %4961 = vmatpush1.msra.mxu0 %v4868
      %4962 = vmatprep.subr.mxu0 %v4867
      %4963 = vmatpush1.msra.mxu0 %v4866
      %4964 = vmatprep.subr.mxu0 %v4865
      %4965 = vmatpush1.msra.mxu0 %v4864
      %4966 = vmatprep.subr.mxu0 %v4863
      %4967 = vmatpush1.msra.mxu0 %v4862
      %4968 = vmatprep.subr.mxu0 %v4861
      %4969 = vmatpush1.msra.mxu0 %v4860
      %4970 = vmatprep.subr.mxu0 %v4923
      %4971 = vmatpush2.msra.mxu0 %v4922
      %4972 = vmatprep.subr.mxu0 %v4921
      %4973 = vmatpush2.msra.mxu0 %v4920
      %4974 = vmatprep.subr.mxu0 %v4919
      %4975 = vmatpush2.msra.mxu0 %v4918
      %4976 = vmatprep.subr.mxu0 %v4917
      %4977 = vmatpush2.msra.mxu0 %v4916
      %4978 = vmatprep.subr.mxu0 %v4915
      %4979 = vmatpush2.msra.mxu0 %v4914
      %4980 = vmatprep.subr.mxu0 %v4913
      %4981 = vmatpush2.msra.mxu0 %v4912
      %4982 = vmatprep.subr.mxu0 %v4911
      %4983 = vmatpush2.msra.mxu0 %v4910
      %4984 = vmatprep.subr.mxu0 %v4909
      %4985 = vmatpush2.msra.mxu0 %v4908
      %4986 = vmatprep.subr.mxu0 %v4907
      %4987 = vmatpush2.msra.mxu0 %v4906
      %4988 = vmatprep.subr.mxu0 %v4905
      %4989 = vmatpush2.msra.mxu0 %v4904
      %4990 = vmatprep.subr.mxu0 %v4903
      %4991 = vmatpush2.msra.mxu0 %v4902
      %4992 = vmatprep.subr.mxu0 %v4901
      %4993 = vmatpush2.msra.mxu0 %v4900
      %4994 = vmatprep.subr.mxu0 %v4899
      %4995 = vmatpush2.msra.mxu0 %v4898
      %4996 = vmatprep.subr.mxu0 %v4897
      %4997 = vmatpush2.msra.mxu0 %v4896
      %4998 = vmatprep.subr.mxu0 %v4895
      %4999 = vmatpush2.msra.mxu0 %v4894
      %5000 = vmatprep.subr.mxu0 %v4893
      %5001 = vmatpush2.msra.mxu0 %v4892
      %5002 = vmatprep.mubr.f32.mxu0 %v4855
      %5003 = vmatmul.mubr.f32.gmra.mxu0 %v4854
      %v5004 = vpop.f32.mrf.mxu0
      %v5005 = vadd.f32 0.0, %v5004
      %v5006 = vpop.f32.mrf.mxu0
      %v5007 = vadd.f32 0.0, %v5006
      %5008 = vmatprep.mubr.f32.mxu0 %v4858
      %5009 = vmatmul.mubr.f32.gmra.mxu0 %v4857
      %v5010 = vpop.f32.mrf.mxu0
      %v5011 = vadd.f32 0.0, %v5010
      %v5012 = vpop.f32.mrf.mxu0
      %v5013 = vadd.f32 0.0, %v5012
      %5014 = vdwg.mxu0
      %5015 = vmatprep.subr.mxu0 0.0
      %5016 = vmatpush1.msra.mxu0 0.0
      %5017 = vmatprep.subr.mxu0 0.0
      %5018 = vmatpush1.msra.mxu0 0.0
      %5019 = vmatprep.subr.mxu0 0.0
      %5020 = vmatpush1.msra.mxu0 0.0
      %5021 = vmatprep.subr.mxu0 0.0
      %5022 = vmatpush1.msra.mxu0 0.0
      %5023 = vmatprep.subr.mxu0 0.0
      %5024 = vmatpush1.msra.mxu0 0.0
      %5025 = vmatprep.subr.mxu0 0.0
      %5026 = vmatpush1.msra.mxu0 0.0
      %5027 = vmatprep.subr.mxu0 0.0
      %5028 = vmatpush1.msra.mxu0 0.0
      %5029 = vmatprep.subr.mxu0 0.0
      %5030 = vmatpush1.msra.mxu0 0.0
      %5031 = vmatprep.subr.mxu0 0.0
      %5032 = vmatpush1.msra.mxu0 0.0
      %5033 = vmatprep.subr.mxu0 0.0
      %5034 = vmatpush1.msra.mxu0 0.0
      %5035 = vmatprep.subr.mxu0 0.0
      %5036 = vmatpush1.msra.mxu0 0.0
      %5037 = vmatprep.subr.mxu0 0.0
      %5038 = vmatpush1.msra.mxu0 0.0
      %5039 = vmatprep.subr.mxu0 %v4931
      %5040 = vmatpush1.msra.mxu0 %v4930
      %5041 = vmatprep.subr.mxu0 %v4929
      %5042 = vmatpush1.msra.mxu0 %v4928
      %5043 = vmatprep.subr.mxu0 %v4927
      %5044 = vmatpush1.msra.mxu0 %v4926
      %5045 = vmatprep.subr.mxu0 %v4925
      %5046 = vmatpush1.msra.mxu0 %v4924
      %5047 = vmatprep.subr.mxu0 0.0
      %5048 = vmatpush2.msra.mxu0 0.0
      %5049 = vmatprep.subr.mxu0 0.0
      %5050 = vmatpush2.msra.mxu0 0.0
      %5051 = vmatprep.subr.mxu0 0.0
      %5052 = vmatpush2.msra.mxu0 0.0
      %5053 = vmatprep.subr.mxu0 0.0
      %5054 = vmatpush2.msra.mxu0 0.0
      %5055 = vmatprep.subr.mxu0 0.0
      %5056 = vmatpush2.msra.mxu0 0.0
      %5057 = vmatprep.subr.mxu0 0.0
      %5058 = vmatpush2.msra.mxu0 0.0
      %5059 = vmatprep.subr.mxu0 0.0
      %5060 = vmatpush2.msra.mxu0 0.0
      %5061 = vmatprep.subr.mxu0 0.0
      %5062 = vmatpush2.msra.mxu0 0.0
      %5063 = vmatprep.subr.mxu0 0.0
      %5064 = vmatpush2.msra.mxu0 0.0
      %5065 = vmatprep.subr.mxu0 0.0
      %5066 = vmatpush2.msra.mxu0 0.0
      %5067 = vmatprep.subr.mxu0 0.0
      %5068 = vmatpush2.msra.mxu0 0.0
      %5069 = vmatprep.subr.mxu0 0.0
      %5070 = vmatpush2.msra.mxu0 0.0
      %5071 = vmatprep.subr.mxu0 0.0
      %5072 = vmatpush2.msra.mxu0 0.0
      %5073 = vmatprep.subr.mxu0 0.0
      %5074 = vmatpush2.msra.mxu0 0.0
      %5075 = vmatprep.subr.mxu0 0.0
      %5076 = vmatpush2.msra.mxu0 0.0
      %5077 = vmatprep.subr.mxu0 0.0
      %5078 = vmatpush2.msra.mxu0 0.0
      %5079 = vmatprep.mubr.f32.mxu0 0.0
      %5080 = vmatmul.mubr.f32.gmra.mxu0 %v4933
      %v5081 = vpop.f32.mrf.mxu0
      %v5082 = vadd.f32 %v5005, %v5081
      %v5083 = vpop.f32.mrf.mxu0
      %v5084 = vadd.f32 %v5007, %v5083
      %5085 = vmatprep.mubr.f32.mxu0 0.0
      %5086 = vmatmul.mubr.f32.gmra.mxu0 %v4936
      %v5087 = vpop.f32.mrf.mxu0
      %v5088 = vadd.f32 %v5011, %v5087
      %v5089 = vpop.f32.mrf.mxu0
      %v5090 = vadd.f32 %v5013, %v5089
      %5091 = vdwg.mxu0
      %v5092 = vtanh.pop %v5082
      %v5093 = vtanh.pop %v5084
      %v5094 = vtanh.pop %v5088
      %v5095 = vtanh.pop %v5090
      %v5096 = vsub.f32 1.0, %v4461
      %v5097 = vsub.f32 1.0, %v4463
      %v5098 = vsub.f32 1.0, %v4465
      %v5099 = vsub.f32 1.0, %v4467
      %v5100 = vmul.f32 %v5096, %v413
      %v5101 = vmul.f32 %v5097, %v414
      %v5102 = vmul.f32 %v5098, %v415
      %v5103 = vmul.f32 %v5099, %v416
      %v5104 = vmul.f32 %v4461, %v5092
      %v5105 = vmul.f32 %v4463, %v5093
      %v5106 = vmul.f32 %v4465, %v5094
      %v5107 = vmul.f32 %v4467, %v5095
      %v5108 = vadd.f32 %v5100, %v5104
      %v5109 = vadd.f32 %v5101, %v5105
      %v5110 = vadd.f32 %v5102, %v5106
      %v5111 = vadd.f32 %v5103, %v5107
      %5116 = vrot.lane.b32.xlu0 %v5108, 34
      %v5117 = vpop.permute.xlu0 %5116
      %5118 = vrot.lane.b32.xlu0 %v5109, 34
      %v5119 = vpop.permute.xlu0 %5118
      %5120 = vrot.lane.b32.xlu0 %v5110, 34
      %v5121 = vpop.permute.xlu0 %5120
      %5122 = vrot.lane.b32.xlu0 %v5111, 34
      %v5123 = vpop.permute.xlu0 %5122
      %v5124 = vsel %vm423, %v5117, %v5119
      %v5125 = vsel %vm423, %v5121, %v5123
      %5132 = vst.msk [vmem:[#allocation2] sm:$0xff] %vm818, %v5117
      %5133 = vst [vmem:[#allocation2 + $0x8] sm:$0xff] %v5124
      %5134 = vst.msk [vmem:[#allocation2 + $0x10] sm:$0xff] %vm423, %v5119
      %5135 = vst.msk [vmem:[#allocation2 + $0x18] sm:$0xff] %vm818, %v5121
      %5136 = vst [vmem:[#allocation2 + $0x20] sm:$0xff] %v5125
      %5137 = vst.msk [vmem:[#allocation2 + $0x28] sm:$0xff] %vm423, %v5123
      %v5138 = vld [vmem:[#allocation2] sm:$0xff]
      %v5139 = vld [vmem:[#allocation2 + $0x8] sm:$0xff]
      %v5140 = vld [vmem:[#allocation2 + $0x18] sm:$0xff]
      %v5141 = vld [vmem:[#allocation2 + $0x20] sm:$0xff]
      %v5142 = vsel %vm2164, %v5138, 0.0
      %v5143 = vsel %vm2165, %v5139, 0.0
      %v5144 = vsel %vm2164, %v5140, 0.0
      %v5145 = vsel %vm2165, %v5141, 0.0
      %5146 = vst [vmem:[#allocation3] sm:$0xff] %v5142
      %5147 = vst [vmem:[#allocation3 + $0x8] sm:$0xff] %v5143
      %5148 = vst [vmem:[#allocation3 + $0x10] sm:$0xff] %v5144
      %5149 = vst [vmem:[#allocation3 + $0x18] sm:$0xff] %v5145
      %v5150 = vld [vmem:[#allocation2] sm:$0xff]
      %v5151 = vld [vmem:[#allocation2 + $0x8] sm:$0xff]
      %v5152 = vld [vmem:[#allocation2 + $0x10] sm:$0xff]
      %v5153 = vld [vmem:[#allocation2 + $0x18] sm:$0xff]
      %v5154 = vld [vmem:[#allocation2 + $0x20] sm:$0xff]
      %v5155 = vld [vmem:[#allocation2 + $0x28] sm:$0xff]
      %5162 = vrot.lane.b32.xlu0 %v5150, 127
      %v5163 = vpop.permute.xlu0 %5162
      %5164 = vrot.lane.b32.xlu0 %v5151, 127
      %v5165 = vpop.permute.xlu0 %5164
      %5166 = vrot.lane.b32.xlu0 %v5152, 127
      %v5167 = vpop.permute.xlu0 %5166
      %5168 = vrot.lane.b32.xlu0 %v5153, 127
      %v5169 = vpop.permute.xlu0 %5168
      %5170 = vrot.lane.b32.xlu0 %v5154, 127
      %v5171 = vpop.permute.xlu0 %5170
      %5172 = vrot.lane.b32.xlu0 %v5155, 127
      %v5173 = vpop.permute.xlu0 %5172
      %v5174 = vsel %vm2198, %v5163, %v5165
      %v5175 = vsel %vm2198, %v5165, %v5167
      %v5176 = vsel %vm2198, %v5169, %v5171
      %v5177 = vsel %vm2198, %v5171, %v5173
      %v5182 = vsel %vm441, %v5174, 0.0
      %v5183 = vsel %vm442, %v5175, 0.0
      %v5184 = vsel %vm441, %v5176, 0.0
      %v5185 = vsel %vm442, %v5177, 0.0
      %5186 = vst [vmem:[#allocation3 + $0x20] sm:$0xff] %v5182
      %5187 = vst [vmem:[#allocation3 + $0x28] sm:$0xff] %v5183
      %5188 = vst [vmem:[#allocation3 + $0x30] sm:$0xff] %v5184
      %5189 = vst [vmem:[#allocation3 + $0x38] sm:$0xff] %v5185
      %v5190 = vld [vmem:[#allocation2] sm:$0xff]
      %v5191 = vld [vmem:[#allocation2 + $0x8] sm:$0xff]
      %v5192 = vld [vmem:[#allocation2 + $0x10] sm:$0xff]
      %v5193 = vld [vmem:[#allocation2 + $0x18] sm:$0xff]
      %v5194 = vld [vmem:[#allocation2 + $0x20] sm:$0xff]
      %v5195 = vld [vmem:[#allocation2 + $0x28] sm:$0xff]
      %5202 = vrot.lane.b32.xlu0 %v5190, 126
      %v5203 = vpop.permute.xlu0 %5202
      %5204 = vrot.lane.b32.xlu0 %v5191, 126
      %v5205 = vpop.permute.xlu0 %5204
      %5206 = vrot.lane.b32.xlu0 %v5192, 126
      %v5207 = vpop.permute.xlu0 %5206
      %5208 = vrot.lane.b32.xlu0 %v5193, 126
      %v5209 = vpop.permute.xlu0 %5208
      %5210 = vrot.lane.b32.xlu0 %v5194, 126
      %v5211 = vpop.permute.xlu0 %5210
      %5212 = vrot.lane.b32.xlu0 %v5195, 126
      %v5213 = vpop.permute.xlu0 %5212
      %v5214 = vsel %vm2239, %v5203, %v5205
      %v5215 = vsel %vm2239, %v5205, %v5207
      %v5216 = vsel %vm2239, %v5209, %v5211
      %v5217 = vsel %vm2239, %v5211, %v5213
      %5222 = vst [vmem:[#allocation3 + $0x40] sm:$0xff] %v5214
      %5223 = vst [vmem:[#allocation3 + $0x48] sm:$0xff] %v5215
      %5224 = vst [vmem:[#allocation3 + $0x50] sm:$0xff] %v5216
      %5225 = vst [vmem:[#allocation3 + $0x58] sm:$0xff] %v5217
      %v5226 = vld [vmem:[#allocation2] sm:$0xff]
      %v5227 = vld [vmem:[#allocation2 + $0x8] sm:$0xff]
      %v5228 = vld [vmem:[#allocation2 + $0x10] sm:$0xff]
      %v5229 = vld [vmem:[#allocation2 + $0x18] sm:$0xff]
      %v5230 = vld [vmem:[#allocation2 + $0x20] sm:$0xff]
      %v5231 = vld [vmem:[#allocation2 + $0x28] sm:$0xff]
      %5238 = vrot.lane.b32.xlu0 %v5226, 125
      %v5239 = vpop.permute.xlu0 %5238
      %5240 = vrot.lane.b32.xlu0 %v5227, 125
      %v5241 = vpop.permute.xlu0 %5240
      %5242 = vrot.lane.b32.xlu0 %v5228, 125
      %v5243 = vpop.permute.xlu0 %5242
      %5244 = vrot.lane.b32.xlu0 %v5229, 125
      %v5245 = vpop.permute.xlu0 %5244
      %5246 = vrot.lane.b32.xlu0 %v5230, 125
      %v5247 = vpop.permute.xlu0 %5246
      %5248 = vrot.lane.b32.xlu0 %v5231, 125
      %v5249 = vpop.permute.xlu0 %5248
      %v5250 = vsel %vm2276, %v5239, %v5241
      %v5251 = vsel %vm2276, %v5241, %v5243
      %v5252 = vsel %vm2276, %v5245, %v5247
      %v5253 = vsel %vm2276, %v5247, %v5249
      %v5258 = vsel %vm523, %v5250, 0.0
      %v5259 = vsel %vm524, %v5251, 0.0
      %v5260 = vsel %vm523, %v5252, 0.0
      %v5261 = vsel %vm524, %v5253, 0.0
      %5262 = vst [vmem:[#allocation3 + $0x60] sm:$0xff] %v5258
      %5263 = vst [vmem:[#allocation3 + $0x68] sm:$0xff] %v5259
      %5264 = vst [vmem:[#allocation3 + $0x70] sm:$0xff] %v5260
      %5265 = vst [vmem:[#allocation3 + $0x78] sm:$0xff] %v5261
      %v5266 = vld [vmem:[#allocation2] sm:$0xff]
      %v5267 = vld [vmem:[#allocation2 + $0x8] sm:$0xff]
      %v5268 = vld [vmem:[#allocation2 + $0x10] sm:$0xff]
      %v5269 = vld [vmem:[#allocation2 + $0x18] sm:$0xff]
      %v5270 = vld [vmem:[#allocation2 + $0x20] sm:$0xff]
      %v5271 = vld [vmem:[#allocation2 + $0x28] sm:$0xff]
      %5278 = vrot.lane.b32.xlu0 %v5266, 124
      %v5279 = vpop.permute.xlu0 %5278
      %5280 = vrot.lane.b32.xlu0 %v5267, 124
      %v5281 = vpop.permute.xlu0 %5280
      %5282 = vrot.lane.b32.xlu0 %v5268, 124
      %v5283 = vpop.permute.xlu0 %5282
      %5284 = vrot.lane.b32.xlu0 %v5269, 124
      %v5285 = vpop.permute.xlu0 %5284
      %5286 = vrot.lane.b32.xlu0 %v5270, 124
      %v5287 = vpop.permute.xlu0 %5286
      %5288 = vrot.lane.b32.xlu0 %v5271, 124
      %v5289 = vpop.permute.xlu0 %5288
      %v5290 = vsel %vm2321, %v5279, %v5281
      %v5291 = vsel %vm2321, %v5281, %v5283
      %v5292 = vsel %vm2321, %v5285, %v5287
      %v5293 = vsel %vm2321, %v5287, %v5289
      %v5298 = vsel %vm2301, %v5290, 0.0
      %v5299 = vsel %vm2302, %v5291, 0.0
      %v5300 = vsel %vm2301, %v5292, 0.0
      %v5301 = vsel %vm2302, %v5293, 0.0
      %5302 = vst [vmem:[#allocation3 + $0x80] sm:$0xff] %v5298
      %5303 = vst [vmem:[#allocation3 + $0x88] sm:$0xff] %v5299
      %5304 = vst [vmem:[#allocation3 + $0x90] sm:$0xff] %v5300
      %5305 = vst [vmem:[#allocation3 + $0x98] sm:$0xff] %v5301
      %v5306 = vld [vmem:[#allocation2] sm:$0xff]
      %v5307 = vld [vmem:[#allocation2 + $0x8] sm:$0xff]
      %v5308 = vld [vmem:[#allocation2 + $0x10] sm:$0xff]
      %v5309 = vld [vmem:[#allocation2 + $0x18] sm:$0xff]
      %v5310 = vld [vmem:[#allocation2 + $0x20] sm:$0xff]
      %v5311 = vld [vmem:[#allocation2 + $0x28] sm:$0xff]
      %5318 = vrot.lane.b32.xlu0 %v5306, 112
      %v5319 = vpop.permute.xlu0 %5318
      %5320 = vrot.lane.b32.xlu0 %v5307, 112
      %v5321 = vpop.permute.xlu0 %5320
      %5322 = vrot.lane.b32.xlu0 %v5308, 112
      %v5323 = vpop.permute.xlu0 %5322
      %5324 = vrot.lane.b32.xlu0 %v5309, 112
      %v5325 = vpop.permute.xlu0 %5324
      %5326 = vrot.lane.b32.xlu0 %v5310, 112
      %v5327 = vpop.permute.xlu0 %5326
      %5328 = vrot.lane.b32.xlu0 %v5311, 112
      %v5329 = vpop.permute.xlu0 %5328
      %v5330 = vsel %vm2362, %v5319, %v5321
      %v5331 = vsel %vm2362, %v5321, %v5323
      %v5332 = vsel %vm2362, %v5325, %v5327
      %v5333 = vsel %vm2362, %v5327, %v5329
      %v5338 = vsel %vm2164, %v5330, 0.0
      %v5339 = vsel %vm2165, %v5331, 0.0
      %v5340 = vsel %vm2164, %v5332, 0.0
      %v5341 = vsel %vm2165, %v5333, 0.0
      %5342 = vst [vmem:[#allocation3 + $0xa0] sm:$0xff] %v5338
      %5343 = vst [vmem:[#allocation3 + $0xa8] sm:$0xff] %v5339
      %5344 = vst [vmem:[#allocation3 + $0xb0] sm:$0xff] %v5340
      %5345 = vst [vmem:[#allocation3 + $0xb8] sm:$0xff] %v5341
      %v5346 = vld [vmem:[#allocation2] sm:$0xff]
      %v5347 = vld [vmem:[#allocation2 + $0x8] sm:$0xff]
      %v5348 = vld [vmem:[#allocation2 + $0x10] sm:$0xff]
      %v5349 = vld [vmem:[#allocation2 + $0x18] sm:$0xff]
      %v5350 = vld [vmem:[#allocation2 + $0x20] sm:$0xff]
      %v5351 = vld [vmem:[#allocation2 + $0x28] sm:$0xff]
      %5358 = vrot.lane.b32.xlu0 %v5346, 111
      %v5359 = vpop.permute.xlu0 %5358
      %5360 = vrot.lane.b32.xlu0 %v5347, 111
      %v5361 = vpop.permute.xlu0 %5360
      %5362 = vrot.lane.b32.xlu0 %v5348, 111
      %v5363 = vpop.permute.xlu0 %5362
      %5364 = vrot.lane.b32.xlu0 %v5349, 111
      %v5365 = vpop.permute.xlu0 %5364
      %5366 = vrot.lane.b32.xlu0 %v5350, 111
      %v5367 = vpop.permute.xlu0 %5366
      %5368 = vrot.lane.b32.xlu0 %v5351, 111
      %v5369 = vpop.permute.xlu0 %5368
      %v5370 = vsel %vm461, %v5359, %v5361
      %v5371 = vsel %vm461, %v5361, %v5363
      %v5372 = vsel %vm461, %v5365, %v5367
      %v5373 = vsel %vm461, %v5367, %v5369
      %v5378 = vsel %vm441, %v5370, 0.0
      %v5379 = vsel %vm442, %v5371, 0.0
      %v5380 = vsel %vm441, %v5372, 0.0
      %v5381 = vsel %vm442, %v5373, 0.0
      %5382 = vst [vmem:[#allocation3 + $0xc0] sm:$0xff] %v5378
      %5383 = vst [vmem:[#allocation3 + $0xc8] sm:$0xff] %v5379
      %5384 = vst [vmem:[#allocation3 + $0xd0] sm:$0xff] %v5380
      %5385 = vst [vmem:[#allocation3 + $0xd8] sm:$0xff] %v5381
      %v5386 = vld [vmem:[#allocation2] sm:$0xff]
      %v5387 = vld [vmem:[#allocation2 + $0x8] sm:$0xff]
      %v5388 = vld [vmem:[#allocation2 + $0x10] sm:$0xff]
      %v5389 = vld [vmem:[#allocation2 + $0x18] sm:$0xff]
      %v5390 = vld [vmem:[#allocation2 + $0x20] sm:$0xff]
      %v5391 = vld [vmem:[#allocation2 + $0x28] sm:$0xff]
      %5398 = vrot.lane.b32.xlu0 %v5386, 110
      %v5399 = vpop.permute.xlu0 %5398
      %5400 = vrot.lane.b32.xlu0 %v5387, 110
      %v5401 = vpop.permute.xlu0 %5400
      %5402 = vrot.lane.b32.xlu0 %v5388, 110
      %v5403 = vpop.permute.xlu0 %5402
      %5404 = vrot.lane.b32.xlu0 %v5389, 110
      %v5405 = vpop.permute.xlu0 %5404
      %5406 = vrot.lane.b32.xlu0 %v5390, 110
      %v5407 = vpop.permute.xlu0 %5406
      %5408 = vrot.lane.b32.xlu0 %v5391, 110
      %v5409 = vpop.permute.xlu0 %5408
      %v5410 = vsel %vm502, %v5399, %v5401
      %v5411 = vsel %vm502, %v5401, %v5403
      %v5412 = vsel %vm502, %v5405, %v5407
      %v5413 = vsel %vm502, %v5407, %v5409
      %5418 = vst [vmem:[#allocation3 + $0xe0] sm:$0xff] %v5410
      %5419 = vst [vmem:[#allocation3 + $0xe8] sm:$0xff] %v5411
      %5420 = vst [vmem:[#allocation3 + $0xf0] sm:$0xff] %v5412
      %5421 = vst [vmem:[#allocation3 + $0xf8] sm:$0xff] %v5413
      %v5422 = vld [vmem:[#allocation2] sm:$0xff]
      %v5423 = vld [vmem:[#allocation2 + $0x8] sm:$0xff]
      %v5424 = vld [vmem:[#allocation2 + $0x10] sm:$0xff]
      %v5425 = vld [vmem:[#allocation2 + $0x18] sm:$0xff]
      %v5426 = vld [vmem:[#allocation2 + $0x20] sm:$0xff]
      %v5427 = vld [vmem:[#allocation2 + $0x28] sm:$0xff]
      %5434 = vrot.lane.b32.xlu0 %v5422, 109
      %v5435 = vpop.permute.xlu0 %5434
      %5436 = vrot.lane.b32.xlu0 %v5423, 109
      %v5437 = vpop.permute.xlu0 %5436
      %5438 = vrot.lane.b32.xlu0 %v5424, 109
      %v5439 = vpop.permute.xlu0 %5438
      %5440 = vrot.lane.b32.xlu0 %v5425, 109
      %v5441 = vpop.permute.xlu0 %5440
      %5442 = vrot.lane.b32.xlu0 %v5426, 109
      %v5443 = vpop.permute.xlu0 %5442
      %5444 = vrot.lane.b32.xlu0 %v5427, 109
      %v5445 = vpop.permute.xlu0 %5444
      %v5446 = vsel %vm543, %v5435, %v5437
      %v5447 = vsel %vm543, %v5437, %v5439
      %v5448 = vsel %vm543, %v5441, %v5443
      %v5449 = vsel %vm543, %v5443, %v5445
      %v5454 = vsel %vm523, %v5446, 0.0
      %v5455 = vsel %vm524, %v5447, 0.0
      %v5456 = vsel %vm523, %v5448, 0.0
      %v5457 = vsel %vm524, %v5449, 0.0
      %5458 = vst [vmem:[#allocation3 + $0x100] sm:$0xff] %v5454
      %5459 = vst [vmem:[#allocation3 + $0x108] sm:$0xff] %v5455
      %5460 = vst [vmem:[#allocation3 + $0x110] sm:$0xff] %v5456
      %5461 = vst [vmem:[#allocation3 + $0x118] sm:$0xff] %v5457
      %v5462 = vld [vmem:[#allocation2] sm:$0xff]
      %v5463 = vld [vmem:[#allocation2 + $0x8] sm:$0xff]
      %v5464 = vld [vmem:[#allocation2 + $0x10] sm:$0xff]
      %v5465 = vld [vmem:[#allocation2 + $0x18] sm:$0xff]
      %v5466 = vld [vmem:[#allocation2 + $0x20] sm:$0xff]
      %v5467 = vld [vmem:[#allocation2 + $0x28] sm:$0xff]
      %5474 = vrot.lane.b32.xlu0 %v5462, 108
      %v5475 = vpop.permute.xlu0 %5474
      %5476 = vrot.lane.b32.xlu0 %v5463, 108
      %v5477 = vpop.permute.xlu0 %5476
      %5478 = vrot.lane.b32.xlu0 %v5464, 108
      %v5479 = vpop.permute.xlu0 %5478
      %5480 = vrot.lane.b32.xlu0 %v5465, 108
      %v5481 = vpop.permute.xlu0 %5480
      %5482 = vrot.lane.b32.xlu0 %v5466, 108
      %v5483 = vpop.permute.xlu0 %5482
      %5484 = vrot.lane.b32.xlu0 %v5467, 108
      %v5485 = vpop.permute.xlu0 %5484
      %v5486 = vsel %vm2519, %v5475, %v5477
      %v5487 = vsel %vm2519, %v5477, %v5479
      %v5488 = vsel %vm2519, %v5481, %v5483
      %v5489 = vsel %vm2519, %v5483, %v5485
      %v5494 = vsel %vm2301, %v5486, 0.0
      %v5495 = vsel %vm2302, %v5487, 0.0
      %v5496 = vsel %vm2301, %v5488, 0.0
      %v5497 = vsel %vm2302, %v5489, 0.0
      %5498 = vst [vmem:[#allocation3 + $0x120] sm:$0xff] %v5494
      %5499 = vst [vmem:[#allocation3 + $0x128] sm:$0xff] %v5495
      %5500 = vst [vmem:[#allocation3 + $0x130] sm:$0xff] %v5496
      %5501 = vst [vmem:[#allocation3 + $0x138] sm:$0xff] %v5497
      %v5502 = vld [vmem:[#allocation2] sm:$0xff]
      %v5503 = vld [vmem:[#allocation2 + $0x8] sm:$0xff]
      %v5504 = vld [vmem:[#allocation2 + $0x10] sm:$0xff]
      %v5505 = vld [vmem:[#allocation2 + $0x18] sm:$0xff]
      %v5506 = vld [vmem:[#allocation2 + $0x20] sm:$0xff]
      %v5507 = vld [vmem:[#allocation2 + $0x28] sm:$0xff]
      %5514 = vrot.lane.b32.xlu0 %v5502, 96
      %v5515 = vpop.permute.xlu0 %5514
      %5516 = vrot.lane.b32.xlu0 %v5503, 96
      %v5517 = vpop.permute.xlu0 %5516
      %5518 = vrot.lane.b32.xlu0 %v5504, 96
      %v5519 = vpop.permute.xlu0 %5518
      %5520 = vrot.lane.b32.xlu0 %v5505, 96
      %v5521 = vpop.permute.xlu0 %5520
      %5522 = vrot.lane.b32.xlu0 %v5506, 96
      %v5523 = vpop.permute.xlu0 %5522
      %5524 = vrot.lane.b32.xlu0 %v5507, 96
      %v5525 = vpop.permute.xlu0 %5524
      %v5526 = vsel %vm2560, %v5515, %v5517
      %v5527 = vsel %vm2560, %v5517, %v5519
      %v5528 = vsel %vm2560, %v5521, %v5523
      %v5529 = vsel %vm2560, %v5523, %v5525
      %v5534 = vsel %vm2164, %v5526, 0.0
      %v5535 = vsel %vm2165, %v5527, 0.0
      %v5536 = vsel %vm2164, %v5528, 0.0
      %v5537 = vsel %vm2165, %v5529, 0.0
      %5538 = vst [vmem:[#allocation3 + $0x140] sm:$0xff] %v5534
      %5539 = vst [vmem:[#allocation3 + $0x148] sm:$0xff] %v5535
      %5540 = vst [vmem:[#allocation3 + $0x150] sm:$0xff] %v5536
      %5541 = vst [vmem:[#allocation3 + $0x158] sm:$0xff] %v5537
      %v5542 = vld [vmem:[#allocation2] sm:$0xff]
      %v5543 = vld [vmem:[#allocation2 + $0x8] sm:$0xff]
      %v5544 = vld [vmem:[#allocation2 + $0x10] sm:$0xff]
      %v5545 = vld [vmem:[#allocation2 + $0x18] sm:$0xff]
      %v5546 = vld [vmem:[#allocation2 + $0x20] sm:$0xff]
      %v5547 = vld [vmem:[#allocation2 + $0x28] sm:$0xff]
      %5554 = vrot.lane.b32.xlu0 %v5542, 95
      %v5555 = vpop.permute.xlu0 %5554
      %5556 = vrot.lane.b32.xlu0 %v5543, 95
      %v5557 = vpop.permute.xlu0 %5556
      %5558 = vrot.lane.b32.xlu0 %v5544, 95
      %v5559 = vpop.permute.xlu0 %5558
      %5560 = vrot.lane.b32.xlu0 %v5545, 95
      %v5561 = vpop.permute.xlu0 %5560
      %5562 = vrot.lane.b32.xlu0 %v5546, 95
      %v5563 = vpop.permute.xlu0 %5562
      %5564 = vrot.lane.b32.xlu0 %v5547, 95
      %v5565 = vpop.permute.xlu0 %5564
      %v5566 = vsel %vm584, %v5555, %v5557
      %v5567 = vsel %vm584, %v5557, %v5559
      %v5568 = vsel %vm584, %v5561, %v5563
      %v5569 = vsel %vm584, %v5563, %v5565
      %v5574 = vsel %vm441, %v5566, 0.0
      %v5575 = vsel %vm442, %v5567, 0.0
      %v5576 = vsel %vm441, %v5568, 0.0
      %v5577 = vsel %vm442, %v5569, 0.0
      %5578 = vst [vmem:[#allocation3 + $0x160] sm:$0xff] %v5574
      %5579 = vst [vmem:[#allocation3 + $0x168] sm:$0xff] %v5575
      %5580 = vst [vmem:[#allocation3 + $0x170] sm:$0xff] %v5576
      %5581 = vst [vmem:[#allocation3 + $0x178] sm:$0xff] %v5577
      %v5582 = vld [vmem:[#allocation2] sm:$0xff]
      %v5583 = vld [vmem:[#allocation2 + $0x8] sm:$0xff]
      %v5584 = vld [vmem:[#allocation2 + $0x10] sm:$0xff]
      %v5585 = vld [vmem:[#allocation2 + $0x18] sm:$0xff]
      %v5586 = vld [vmem:[#allocation2 + $0x20] sm:$0xff]
      %v5587 = vld [vmem:[#allocation2 + $0x28] sm:$0xff]
      %5594 = vrot.lane.b32.xlu0 %v5582, 94
      %v5595 = vpop.permute.xlu0 %5594
      %5596 = vrot.lane.b32.xlu0 %v5583, 94
      %v5597 = vpop.permute.xlu0 %5596
      %5598 = vrot.lane.b32.xlu0 %v5584, 94
      %v5599 = vpop.permute.xlu0 %5598
      %5600 = vrot.lane.b32.xlu0 %v5585, 94
      %v5601 = vpop.permute.xlu0 %5600
      %5602 = vrot.lane.b32.xlu0 %v5586, 94
      %v5603 = vpop.permute.xlu0 %5602
      %5604 = vrot.lane.b32.xlu0 %v5587, 94
      %v5605 = vpop.permute.xlu0 %5604
      %v5606 = vsel %vm625, %v5595, %v5597
      %v5607 = vsel %vm625, %v5597, %v5599
      %v5608 = vsel %vm625, %v5601, %v5603
      %v5609 = vsel %vm625, %v5603, %v5605
      %5614 = vst [vmem:[#allocation3 + $0x180] sm:$0xff] %v5606
      %5615 = vst [vmem:[#allocation3 + $0x188] sm:$0xff] %v5607
      %5616 = vst [vmem:[#allocation3 + $0x190] sm:$0xff] %v5608
      %5617 = vst [vmem:[#allocation3 + $0x198] sm:$0xff] %v5609
      %v5618 = vld [vmem:[#allocation2] sm:$0xff]
      %v5619 = vld [vmem:[#allocation2 + $0x8] sm:$0xff]
      %v5620 = vld [vmem:[#allocation2 + $0x10] sm:$0xff]
      %v5621 = vld [vmem:[#allocation2 + $0x18] sm:$0xff]
      %v5622 = vld [vmem:[#allocation2 + $0x20] sm:$0xff]
      %v5623 = vld [vmem:[#allocation2 + $0x28] sm:$0xff]
      %5630 = vrot.lane.b32.xlu0 %v5618, 93
      %v5631 = vpop.permute.xlu0 %5630
      %5632 = vrot.lane.b32.xlu0 %v5619, 93
      %v5633 = vpop.permute.xlu0 %5632
      %5634 = vrot.lane.b32.xlu0 %v5620, 93
      %v5635 = vpop.permute.xlu0 %5634
      %5636 = vrot.lane.b32.xlu0 %v5621, 93
      %v5637 = vpop.permute.xlu0 %5636
      %5638 = vrot.lane.b32.xlu0 %v5622, 93
      %v5639 = vpop.permute.xlu0 %5638
      %5640 = vrot.lane.b32.xlu0 %v5623, 93
      %v5641 = vpop.permute.xlu0 %5640
      %v5642 = vsel %vm662, %v5631, %v5633
      %v5643 = vsel %vm662, %v5633, %v5635
      %v5644 = vsel %vm662, %v5637, %v5639
      %v5645 = vsel %vm662, %v5639, %v5641
      %v5650 = vsel %vm523, %v5642, 0.0
      %v5651 = vsel %vm524, %v5643, 0.0
      %v5652 = vsel %vm523, %v5644, 0.0
      %v5653 = vsel %vm524, %v5645, 0.0
      %5654 = vst [vmem:[#allocation3 + $0x1a0] sm:$0xff] %v5650
      %5655 = vst [vmem:[#allocation3 + $0x1a8] sm:$0xff] %v5651
      %5656 = vst [vmem:[#allocation3 + $0x1b0] sm:$0xff] %v5652
      %5657 = vst [vmem:[#allocation3 + $0x1b8] sm:$0xff] %v5653
      %v5658 = vld [vmem:[#allocation2] sm:$0xff]
      %v5659 = vld [vmem:[#allocation2 + $0x8] sm:$0xff]
      %v5660 = vld [vmem:[#allocation2 + $0x10] sm:$0xff]
      %v5661 = vld [vmem:[#allocation2 + $0x18] sm:$0xff]
      %v5662 = vld [vmem:[#allocation2 + $0x20] sm:$0xff]
      %v5663 = vld [vmem:[#allocation2 + $0x28] sm:$0xff]
      %5670 = vrot.lane.b32.xlu0 %v5658, 92
      %v5671 = vpop.permute.xlu0 %5670
      %5672 = vrot.lane.b32.xlu0 %v5659, 92
      %v5673 = vpop.permute.xlu0 %5672
      %5674 = vrot.lane.b32.xlu0 %v5660, 92
      %v5675 = vpop.permute.xlu0 %5674
      %5676 = vrot.lane.b32.xlu0 %v5661, 92
      %v5677 = vpop.permute.xlu0 %5676
      %5678 = vrot.lane.b32.xlu0 %v5662, 92
      %v5679 = vpop.permute.xlu0 %5678
      %5680 = vrot.lane.b32.xlu0 %v5663, 92
      %v5681 = vpop.permute.xlu0 %5680
      %v5682 = vsel %vm2717, %v5671, %v5673
      %v5683 = vsel %vm2717, %v5673, %v5675
      %v5684 = vsel %vm2717, %v5677, %v5679
      %v5685 = vsel %vm2717, %v5679, %v5681
      %v5690 = vsel %vm2301, %v5682, 0.0
      %v5691 = vsel %vm2302, %v5683, 0.0
      %v5692 = vsel %vm2301, %v5684, 0.0
      %v5693 = vsel %vm2302, %v5685, 0.0
      %5694 = vst [vmem:[#allocation3 + $0x1c0] sm:$0xff] %v5690
      %5695 = vst [vmem:[#allocation3 + $0x1c8] sm:$0xff] %v5691
      %5696 = vst [vmem:[#allocation3 + $0x1d0] sm:$0xff] %v5692
      %5697 = vst [vmem:[#allocation3 + $0x1d8] sm:$0xff] %v5693
      %v5698 = vld [vmem:[#allocation2] sm:$0xff]
      %v5699 = vld [vmem:[#allocation2 + $0x8] sm:$0xff]
      %v5700 = vld [vmem:[#allocation2 + $0x10] sm:$0xff]
      %v5701 = vld [vmem:[#allocation2 + $0x18] sm:$0xff]
      %v5702 = vld [vmem:[#allocation2 + $0x20] sm:$0xff]
      %v5703 = vld [vmem:[#allocation2 + $0x28] sm:$0xff]
      %5710 = vrot.lane.b32.xlu0 %v5698, 80
      %v5711 = vpop.permute.xlu0 %5710
      %5712 = vrot.lane.b32.xlu0 %v5699, 80
      %v5713 = vpop.permute.xlu0 %5712
      %5714 = vrot.lane.b32.xlu0 %v5700, 80
      %v5715 = vpop.permute.xlu0 %5714
      %5716 = vrot.lane.b32.xlu0 %v5701, 80
      %v5717 = vpop.permute.xlu0 %5716
      %5718 = vrot.lane.b32.xlu0 %v5702, 80
      %v5719 = vpop.permute.xlu0 %5718
      %5720 = vrot.lane.b32.xlu0 %v5703, 80
      %v5721 = vpop.permute.xlu0 %5720
      %v5722 = vsel %vm2758, %v5711, %v5713
      %v5723 = vsel %vm2758, %v5713, %v5715
      %v5724 = vsel %vm2758, %v5717, %v5719
      %v5725 = vsel %vm2758, %v5719, %v5721
      %v5730 = vsel %vm2164, %v5722, 0.0
      %v5731 = vsel %vm2165, %v5723, 0.0
      %v5732 = vsel %vm2164, %v5724, 0.0
      %v5733 = vsel %vm2165, %v5725, 0.0
      %5734 = vst [vmem:[#allocation3 + $0x1e0] sm:$0xff] %v5730
      %5735 = vst [vmem:[#allocation3 + $0x1e8] sm:$0xff] %v5731
      %5736 = vst [vmem:[#allocation3 + $0x1f0] sm:$0xff] %v5732
      %5737 = vst [vmem:[#allocation3 + $0x1f8] sm:$0xff] %v5733
      %v5738 = vld [vmem:[#allocation2] sm:$0xff]
      %v5739 = vld [vmem:[#allocation2 + $0x8] sm:$0xff]
      %v5740 = vld [vmem:[#allocation2 + $0x10] sm:$0xff]
      %v5741 = vld [vmem:[#allocation2 + $0x18] sm:$0xff]
      %v5742 = vld [vmem:[#allocation2 + $0x20] sm:$0xff]
      %v5743 = vld [vmem:[#allocation2 + $0x28] sm:$0xff]
      %5750 = vrot.lane.b32.xlu0 %v5738, 79
      %v5751 = vpop.permute.xlu0 %5750
      %5752 = vrot.lane.b32.xlu0 %v5739, 79
      %v5753 = vpop.permute.xlu0 %5752
      %5754 = vrot.lane.b32.xlu0 %v5740, 79
      %v5755 = vpop.permute.xlu0 %5754
      %5756 = vrot.lane.b32.xlu0 %v5741, 79
      %v5757 = vpop.permute.xlu0 %5756
      %5758 = vrot.lane.b32.xlu0 %v5742, 79
      %v5759 = vpop.permute.xlu0 %5758
      %5760 = vrot.lane.b32.xlu0 %v5743, 79
      %v5761 = vpop.permute.xlu0 %5760
      %v5762 = vsel %vm703, %v5751, %v5753
      %v5763 = vsel %vm703, %v5753, %v5755
      %v5764 = vsel %vm703, %v5757, %v5759
      %v5765 = vsel %vm703, %v5759, %v5761
      %v5770 = vsel %vm441, %v5762, 0.0
      %v5771 = vsel %vm442, %v5763, 0.0
      %v5772 = vsel %vm441, %v5764, 0.0
      %v5773 = vsel %vm442, %v5765, 0.0
      %5774 = vst [vmem:[#allocation3 + $0x200] sm:$0xff] %v5770
      %5775 = vst [vmem:[#allocation3 + $0x208] sm:$0xff] %v5771
      %5776 = vst [vmem:[#allocation3 + $0x210] sm:$0xff] %v5772
      %5777 = vst [vmem:[#allocation3 + $0x218] sm:$0xff] %v5773
      %v5778 = vld [vmem:[#allocation2] sm:$0xff]
      %v5779 = vld [vmem:[#allocation2 + $0x8] sm:$0xff]
      %v5780 = vld [vmem:[#allocation2 + $0x10] sm:$0xff]
      %v5781 = vld [vmem:[#allocation2 + $0x18] sm:$0xff]
      %v5782 = vld [vmem:[#allocation2 + $0x20] sm:$0xff]
      %v5783 = vld [vmem:[#allocation2 + $0x28] sm:$0xff]
      %5790 = vrot.lane.b32.xlu0 %v5778, 78
      %v5791 = vpop.permute.xlu0 %5790
      %5792 = vrot.lane.b32.xlu0 %v5779, 78
      %v5793 = vpop.permute.xlu0 %5792
      %5794 = vrot.lane.b32.xlu0 %v5780, 78
      %v5795 = vpop.permute.xlu0 %5794
      %5796 = vrot.lane.b32.xlu0 %v5781, 78
      %v5797 = vpop.permute.xlu0 %5796
      %5798 = vrot.lane.b32.xlu0 %v5782, 78
      %v5799 = vpop.permute.xlu0 %5798
      %5800 = vrot.lane.b32.xlu0 %v5783, 78
      %v5801 = vpop.permute.xlu0 %5800
      %v5802 = vsel %vm744, %v5791, %v5793
      %v5803 = vsel %vm744, %v5793, %v5795
      %v5804 = vsel %vm744, %v5797, %v5799
      %v5805 = vsel %vm744, %v5799, %v5801
      %5810 = vst [vmem:[#allocation3 + $0x220] sm:$0xff] %v5802
      %5811 = vst [vmem:[#allocation3 + $0x228] sm:$0xff] %v5803
      %5812 = vst [vmem:[#allocation3 + $0x230] sm:$0xff] %v5804
      %5813 = vst [vmem:[#allocation3 + $0x238] sm:$0xff] %v5805
      %v5814 = vld [vmem:[#allocation2] sm:$0xff]
      %v5815 = vld [vmem:[#allocation2 + $0x8] sm:$0xff]
      %v5816 = vld [vmem:[#allocation2 + $0x10] sm:$0xff]
      %v5817 = vld [vmem:[#allocation2 + $0x18] sm:$0xff]
      %v5818 = vld [vmem:[#allocation2 + $0x20] sm:$0xff]
      %v5819 = vld [vmem:[#allocation2 + $0x28] sm:$0xff]
      %5826 = vrot.lane.b32.xlu0 %v5814, 77
      %v5827 = vpop.permute.xlu0 %5826
      %5828 = vrot.lane.b32.xlu0 %v5815, 77
      %v5829 = vpop.permute.xlu0 %5828
      %5830 = vrot.lane.b32.xlu0 %v5816, 77
      %v5831 = vpop.permute.xlu0 %5830
      %5832 = vrot.lane.b32.xlu0 %v5817, 77
      %v5833 = vpop.permute.xlu0 %5832
      %5834 = vrot.lane.b32.xlu0 %v5818, 77
      %v5835 = vpop.permute.xlu0 %5834
      %5836 = vrot.lane.b32.xlu0 %v5819, 77
      %v5837 = vpop.permute.xlu0 %5836
      %v5838 = vsel %vm781, %v5827, %v5829
      %v5839 = vsel %vm781, %v5829, %v5831
      %v5840 = vsel %vm781, %v5833, %v5835
      %v5841 = vsel %vm781, %v5835, %v5837
      %v5846 = vsel %vm523, %v5838, 0.0
      %v5847 = vsel %vm524, %v5839, 0.0
      %v5848 = vsel %vm523, %v5840, 0.0
      %v5849 = vsel %vm524, %v5841, 0.0
      %5850 = vst [vmem:[#allocation3 + $0x240] sm:$0xff] %v5846
      %5851 = vst [vmem:[#allocation3 + $0x248] sm:$0xff] %v5847
      %5852 = vst [vmem:[#allocation3 + $0x250] sm:$0xff] %v5848
      %5853 = vst [vmem:[#allocation3 + $0x258] sm:$0xff] %v5849
      %v5854 = vld [vmem:[#allocation2] sm:$0xff]
      %v5855 = vld [vmem:[#allocation2 + $0x8] sm:$0xff]
      %v5856 = vld [vmem:[#allocation2 + $0x10] sm:$0xff]
      %v5857 = vld [vmem:[#allocation2 + $0x18] sm:$0xff]
      %v5858 = vld [vmem:[#allocation2 + $0x20] sm:$0xff]
      %v5859 = vld [vmem:[#allocation2 + $0x28] sm:$0xff]
      %5866 = vrot.lane.b32.xlu0 %v5854, 76
      %v5867 = vpop.permute.xlu0 %5866
      %5868 = vrot.lane.b32.xlu0 %v5855, 76
      %v5869 = vpop.permute.xlu0 %5868
      %5870 = vrot.lane.b32.xlu0 %v5856, 76
      %v5871 = vpop.permute.xlu0 %5870
      %5872 = vrot.lane.b32.xlu0 %v5857, 76
      %v5873 = vpop.permute.xlu0 %5872
      %5874 = vrot.lane.b32.xlu0 %v5858, 76
      %v5875 = vpop.permute.xlu0 %5874
      %5876 = vrot.lane.b32.xlu0 %v5859, 76
      %v5877 = vpop.permute.xlu0 %5876
      %v5878 = vsel %vm2915, %v5867, %v5869
      %v5879 = vsel %vm2915, %v5869, %v5871
      %v5880 = vsel %vm2915, %v5873, %v5875
      %v5881 = vsel %vm2915, %v5875, %v5877
      %v5886 = vsel %vm2301, %v5878, 0.0
      %v5887 = vsel %vm2302, %v5879, 0.0
      %v5888 = vsel %vm2301, %v5880, 0.0
      %v5889 = vsel %vm2302, %v5881, 0.0
      %5890 = vst [vmem:[#allocation3 + $0x260] sm:$0xff] %v5886
      %5891 = vst [vmem:[#allocation3 + $0x268] sm:$0xff] %v5887
      %5892 = vst [vmem:[#allocation3 + $0x270] sm:$0xff] %v5888
      %5893 = vst [vmem:[#allocation3 + $0x278] sm:$0xff] %v5889
      %v5894 = vld [vmem:[#allocation2] sm:$0xff]
      %v5895 = vld [vmem:[#allocation2 + $0x8] sm:$0xff]
      %v5896 = vld [vmem:[#allocation2 + $0x10] sm:$0xff]
      %v5897 = vld [vmem:[#allocation2 + $0x18] sm:$0xff]
      %v5898 = vld [vmem:[#allocation2 + $0x20] sm:$0xff]
      %v5899 = vld [vmem:[#allocation2 + $0x28] sm:$0xff]
      %5906 = vrot.lane.b32.xlu0 %v5894, 64
      %v5907 = vpop.permute.xlu0 %5906
      %5908 = vrot.lane.b32.xlu0 %v5895, 64
      %v5909 = vpop.permute.xlu0 %5908
      %5910 = vrot.lane.b32.xlu0 %v5896, 64
      %v5911 = vpop.permute.xlu0 %5910
      %5912 = vrot.lane.b32.xlu0 %v5897, 64
      %v5913 = vpop.permute.xlu0 %5912
      %5914 = vrot.lane.b32.xlu0 %v5898, 64
      %v5915 = vpop.permute.xlu0 %5914
      %5916 = vrot.lane.b32.xlu0 %v5899, 64
      %v5917 = vpop.permute.xlu0 %5916
      %v5918 = vsel %vm2956, %v5907, %v5909
      %v5919 = vsel %vm2956, %v5909, %v5911
      %v5920 = vsel %vm2956, %v5913, %v5915
      %v5921 = vsel %vm2956, %v5915, %v5917
      %v5926 = vsel %vm2164, %v5918, 0.0
      %v5927 = vsel %vm2165, %v5919, 0.0
      %v5928 = vsel %vm2164, %v5920, 0.0
      %v5929 = vsel %vm2165, %v5921, 0.0
      %5930 = vst [vmem:[#allocation3 + $0x280] sm:$0xff] %v5926
      %5931 = vst [vmem:[#allocation3 + $0x288] sm:$0xff] %v5927
      %5932 = vst [vmem:[#allocation3 + $0x290] sm:$0xff] %v5928
      %5933 = vst [vmem:[#allocation3 + $0x298] sm:$0xff] %v5929
      %v5934 = vld [vmem:[#allocation2] sm:$0xff]
      %v5935 = vld [vmem:[#allocation2 + $0x8] sm:$0xff]
      %v5936 = vld [vmem:[#allocation2 + $0x10] sm:$0xff]
      %v5937 = vld [vmem:[#allocation2 + $0x18] sm:$0xff]
      %v5938 = vld [vmem:[#allocation2 + $0x20] sm:$0xff]
      %v5939 = vld [vmem:[#allocation2 + $0x28] sm:$0xff]
      %5946 = vrot.lane.b32.xlu0 %v5934, 63
      %v5947 = vpop.permute.xlu0 %5946
      %5948 = vrot.lane.b32.xlu0 %v5935, 63
      %v5949 = vpop.permute.xlu0 %5948
      %5950 = vrot.lane.b32.xlu0 %v5936, 63
      %v5951 = vpop.permute.xlu0 %5950
      %5952 = vrot.lane.b32.xlu0 %v5937, 63
      %v5953 = vpop.permute.xlu0 %5952
      %5954 = vrot.lane.b32.xlu0 %v5938, 63
      %v5955 = vpop.permute.xlu0 %5954
      %5956 = vrot.lane.b32.xlu0 %v5939, 63
      %v5957 = vpop.permute.xlu0 %5956
      %v5958 = vsel %vm2997, %v5947, %v5949
      %v5959 = vsel %vm2997, %v5949, %v5951
      %v5960 = vsel %vm2997, %v5953, %v5955
      %v5961 = vsel %vm2997, %v5955, %v5957
      %v5966 = vsel %vm441, %v5958, 0.0
      %v5967 = vsel %vm442, %v5959, 0.0
      %v5968 = vsel %vm441, %v5960, 0.0
      %v5969 = vsel %vm442, %v5961, 0.0
      %5970 = vst [vmem:[#allocation3 + $0x2a0] sm:$0xff] %v5966
      %5971 = vst [vmem:[#allocation3 + $0x2a8] sm:$0xff] %v5967
      %5972 = vst [vmem:[#allocation3 + $0x2b0] sm:$0xff] %v5968
      %5973 = vst [vmem:[#allocation3 + $0x2b8] sm:$0xff] %v5969
      %v5974 = vld [vmem:[#allocation2] sm:$0xff]
      %v5975 = vld [vmem:[#allocation2 + $0x8] sm:$0xff]
      %v5976 = vld [vmem:[#allocation2 + $0x10] sm:$0xff]
      %v5977 = vld [vmem:[#allocation2 + $0x18] sm:$0xff]
      %v5978 = vld [vmem:[#allocation2 + $0x20] sm:$0xff]
      %v5979 = vld [vmem:[#allocation2 + $0x28] sm:$0xff]
      %5986 = vrot.lane.b32.xlu0 %v5974, 62
      %v5987 = vpop.permute.xlu0 %5986
      %5988 = vrot.lane.b32.xlu0 %v5975, 62
      %v5989 = vpop.permute.xlu0 %5988
      %5990 = vrot.lane.b32.xlu0 %v5976, 62
      %v5991 = vpop.permute.xlu0 %5990
      %5992 = vrot.lane.b32.xlu0 %v5977, 62
      %v5993 = vpop.permute.xlu0 %5992
      %5994 = vrot.lane.b32.xlu0 %v5978, 62
      %v5995 = vpop.permute.xlu0 %5994
      %5996 = vrot.lane.b32.xlu0 %v5979, 62
      %v5997 = vpop.permute.xlu0 %5996
      %v5998 = vsel %vm3038, %v5987, %v5989
      %v5999 = vsel %vm3038, %v5989, %v5991
      %v6000 = vsel %vm3038, %v5993, %v5995
      %v6001 = vsel %vm3038, %v5995, %v5997
      %6006 = vst [vmem:[#allocation3 + $0x2c0] sm:$0xff] %v5998
      %6007 = vst [vmem:[#allocation3 + $0x2c8] sm:$0xff] %v5999
      %6008 = vst [vmem:[#allocation3 + $0x2d0] sm:$0xff] %v6000
      %6009 = vst [vmem:[#allocation3 + $0x2d8] sm:$0xff] %v6001
      %v6010 = vld [vmem:[#allocation2] sm:$0xff]
      %v6011 = vld [vmem:[#allocation2 + $0x8] sm:$0xff]
      %v6012 = vld [vmem:[#allocation2 + $0x10] sm:$0xff]
      %v6013 = vld [vmem:[#allocation2 + $0x18] sm:$0xff]
      %v6014 = vld [vmem:[#allocation2 + $0x20] sm:$0xff]
      %v6015 = vld [vmem:[#allocation2 + $0x28] sm:$0xff]
      %6022 = vrot.lane.b32.xlu0 %v6010, 61
      %v6023 = vpop.permute.xlu0 %6022
      %6024 = vrot.lane.b32.xlu0 %v6011, 61
      %v6025 = vpop.permute.xlu0 %6024
      %6026 = vrot.lane.b32.xlu0 %v6012, 61
      %v6027 = vpop.permute.xlu0 %6026
      %6028 = vrot.lane.b32.xlu0 %v6013, 61
      %v6029 = vpop.permute.xlu0 %6028
      %6030 = vrot.lane.b32.xlu0 %v6014, 61
      %v6031 = vpop.permute.xlu0 %6030
      %6032 = vrot.lane.b32.xlu0 %v6015, 61
      %v6033 = vpop.permute.xlu0 %6032
      %v6034 = vsel %vm3075, %v6023, %v6025
      %v6035 = vsel %vm3075, %v6025, %v6027
      %v6036 = vsel %vm3075, %v6029, %v6031
      %v6037 = vsel %vm3075, %v6031, %v6033
      %v6042 = vsel %vm523, %v6034, 0.0
      %v6043 = vsel %vm524, %v6035, 0.0
      %v6044 = vsel %vm523, %v6036, 0.0
      %v6045 = vsel %vm524, %v6037, 0.0
      %6046 = vst [vmem:[#allocation3 + $0x2e0] sm:$0xff] %v6042
      %6047 = vst [vmem:[#allocation3 + $0x2e8] sm:$0xff] %v6043
      %6048 = vst [vmem:[#allocation3 + $0x2f0] sm:$0xff] %v6044
      %6049 = vst [vmem:[#allocation3 + $0x2f8] sm:$0xff] %v6045
      %v6050 = vld [vmem:[#allocation2] sm:$0xff]
      %v6051 = vld [vmem:[#allocation2 + $0x8] sm:$0xff]
      %v6052 = vld [vmem:[#allocation2 + $0x10] sm:$0xff]
      %v6053 = vld [vmem:[#allocation2 + $0x18] sm:$0xff]
      %v6054 = vld [vmem:[#allocation2 + $0x20] sm:$0xff]
      %v6055 = vld [vmem:[#allocation2 + $0x28] sm:$0xff]
      %6062 = vrot.lane.b32.xlu0 %v6050, 60
      %v6063 = vpop.permute.xlu0 %6062
      %6064 = vrot.lane.b32.xlu0 %v6051, 60
      %v6065 = vpop.permute.xlu0 %6064
      %6066 = vrot.lane.b32.xlu0 %v6052, 60
      %v6067 = vpop.permute.xlu0 %6066
      %6068 = vrot.lane.b32.xlu0 %v6053, 60
      %v6069 = vpop.permute.xlu0 %6068
      %6070 = vrot.lane.b32.xlu0 %v6054, 60
      %v6071 = vpop.permute.xlu0 %6070
      %6072 = vrot.lane.b32.xlu0 %v6055, 60
      %v6073 = vpop.permute.xlu0 %6072
      %v6074 = vsel %vm3116, %v6063, %v6065
      %v6075 = vsel %vm3116, %v6065, %v6067
      %v6076 = vsel %vm3116, %v6069, %v6071
      %v6077 = vsel %vm3116, %v6071, %v6073
      %v6082 = vsel %vm2301, %v6074, 0.0
      %v6083 = vsel %vm2302, %v6075, 0.0
      %v6084 = vsel %vm2301, %v6076, 0.0
      %v6085 = vsel %vm2302, %v6077, 0.0
      %6086 = vst [vmem:[#allocation3 + $0x300] sm:$0xff] %v6082
      %6087 = vst [vmem:[#allocation3 + $0x308] sm:$0xff] %v6083
      %6088 = vst [vmem:[#allocation3 + $0x310] sm:$0xff] %v6084
      %6089 = vst [vmem:[#allocation3 + $0x318] sm:$0xff] %v6085
      %v6090 = vld [vmem:[%s7] sm:$0xff]
      %v6091 = vld [vmem:[%s7 + $0x8] sm:$0xff]
      %v6092 = vld [vmem:[#allocation3] sm:$0xff]
      %v6093 = vld [vmem:[#allocation3 + $0x8] sm:$0xff]
      %v6094 = vld [vmem:[#allocation3 + $0x10] sm:$0xff]
      %v6095 = vld [vmem:[#allocation3 + $0x18] sm:$0xff]
      %v6096 = vld [vmem:[#allocation3 + $0x20] sm:$0xff]
      %v6097 = vld [vmem:[#allocation3 + $0x28] sm:$0xff]
      %v6098 = vld [vmem:[#allocation3 + $0x30] sm:$0xff]
      %v6099 = vld [vmem:[#allocation3 + $0x38] sm:$0xff]
      %v6100 = vld [vmem:[#allocation3 + $0x40] sm:$0xff]
      %v6101 = vld [vmem:[#allocation3 + $0x48] sm:$0xff]
      %v6102 = vld [vmem:[#allocation3 + $0x50] sm:$0xff]
      %v6103 = vld [vmem:[#allocation3 + $0x58] sm:$0xff]
      %v6104 = vld [vmem:[#allocation3 + $0x60] sm:$0xff]
      %v6105 = vld [vmem:[#allocation3 + $0x68] sm:$0xff]
      %v6106 = vld [vmem:[#allocation3 + $0x70] sm:$0xff]
      %v6107 = vld [vmem:[#allocation3 + $0x78] sm:$0xff]
      %v6108 = vld [vmem:[#allocation3 + $0x80] sm:$0xff]
      %v6109 = vld [vmem:[#allocation3 + $0x88] sm:$0xff]
      %v6110 = vld [vmem:[#allocation3 + $0x90] sm:$0xff]
      %v6111 = vld [vmem:[#allocation3 + $0x98] sm:$0xff]
      %v6112 = vld [vmem:[#allocation3 + $0xa0] sm:$0xff]
      %v6113 = vld [vmem:[#allocation3 + $0xa8] sm:$0xff]
      %v6114 = vld [vmem:[#allocation3 + $0xb0] sm:$0xff]
      %v6115 = vld [vmem:[#allocation3 + $0xb8] sm:$0xff]
      %v6116 = vld [vmem:[#allocation3 + $0xc0] sm:$0xff]
      %v6117 = vld [vmem:[#allocation3 + $0xc8] sm:$0xff]
      %v6118 = vld [vmem:[#allocation3 + $0xd0] sm:$0xff]
      %v6119 = vld [vmem:[#allocation3 + $0xd8] sm:$0xff]
      %v6120 = vld [vmem:[#allocation3 + $0xe0] sm:$0xff]
      %v6121 = vld [vmem:[#allocation3 + $0xe8] sm:$0xff]
      %v6122 = vld [vmem:[#allocation3 + $0xf0] sm:$0xff]
      %v6123 = vld [vmem:[#allocation3 + $0xf8] sm:$0xff]
      %v6124 = vld [vmem:[#allocation3 + $0x100] sm:$0xff]
      %v6125 = vld [vmem:[#allocation3 + $0x108] sm:$0xff]
      %v6126 = vld [vmem:[#allocation3 + $0x110] sm:$0xff]
      %v6127 = vld [vmem:[#allocation3 + $0x118] sm:$0xff]
      %v6128 = vld [vmem:[#allocation3 + $0x120] sm:$0xff]
      %v6129 = vld [vmem:[#allocation3 + $0x128] sm:$0xff]
      %v6130 = vld [vmem:[#allocation3 + $0x130] sm:$0xff]
      %v6131 = vld [vmem:[#allocation3 + $0x138] sm:$0xff]
      %v6132 = vld [vmem:[#allocation3 + $0x140] sm:$0xff]
      %v6133 = vld [vmem:[#allocation3 + $0x148] sm:$0xff]
      %v6134 = vld [vmem:[#allocation3 + $0x150] sm:$0xff]
      %v6135 = vld [vmem:[#allocation3 + $0x158] sm:$0xff]
      %v6136 = vld [vmem:[#allocation3 + $0x160] sm:$0xff]
      %v6137 = vld [vmem:[#allocation3 + $0x168] sm:$0xff]
      %v6138 = vld [vmem:[#allocation3 + $0x170] sm:$0xff]
      %v6139 = vld [vmem:[#allocation3 + $0x178] sm:$0xff]
      %v6140 = vld [vmem:[#allocation3 + $0x180] sm:$0xff]
      %v6141 = vld [vmem:[#allocation3 + $0x188] sm:$0xff]
      %v6142 = vld [vmem:[#allocation3 + $0x190] sm:$0xff]
      %v6143 = vld [vmem:[#allocation3 + $0x198] sm:$0xff]
      %v6144 = vld [vmem:[#allocation3 + $0x1a0] sm:$0xff]
      %v6145 = vld [vmem:[#allocation3 + $0x1a8] sm:$0xff]
      %v6146 = vld [vmem:[#allocation3 + $0x1b0] sm:$0xff]
      %v6147 = vld [vmem:[#allocation3 + $0x1b8] sm:$0xff]
      %v6148 = vld [vmem:[#allocation3 + $0x1c0] sm:$0xff]
      %v6149 = vld [vmem:[#allocation3 + $0x1c8] sm:$0xff]
      %v6150 = vld [vmem:[#allocation3 + $0x1d0] sm:$0xff]
      %v6151 = vld [vmem:[#allocation3 + $0x1d8] sm:$0xff]
      %v6152 = vld [vmem:[#allocation3 + $0x1e0] sm:$0xff]
      %v6153 = vld [vmem:[#allocation3 + $0x1e8] sm:$0xff]
      %v6154 = vld [vmem:[#allocation3 + $0x1f0] sm:$0xff]
      %v6155 = vld [vmem:[#allocation3 + $0x1f8] sm:$0xff]
      %v6156 = vld [vmem:[#allocation3 + $0x200] sm:$0xff]
      %v6157 = vld [vmem:[#allocation3 + $0x208] sm:$0xff]
      %v6158 = vld [vmem:[#allocation3 + $0x210] sm:$0xff]
      %v6159 = vld [vmem:[#allocation3 + $0x218] sm:$0xff]
      %v6160 = vld [vmem:[#allocation3 + $0x220] sm:$0xff]
      %v6161 = vld [vmem:[#allocation3 + $0x228] sm:$0xff]
      %v6162 = vld [vmem:[#allocation3 + $0x230] sm:$0xff]
      %v6163 = vld [vmem:[#allocation3 + $0x238] sm:$0xff]
      %v6164 = vld [vmem:[#allocation3 + $0x240] sm:$0xff]
      %v6165 = vld [vmem:[#allocation3 + $0x248] sm:$0xff]
      %v6166 = vld [vmem:[#allocation3 + $0x250] sm:$0xff]
      %v6167 = vld [vmem:[#allocation3 + $0x258] sm:$0xff]
      %v6168 = vld [vmem:[#allocation3 + $0x260] sm:$0xff]
      %v6169 = vld [vmem:[#allocation3 + $0x268] sm:$0xff]
      %v6170 = vld [vmem:[#allocation3 + $0x270] sm:$0xff]
      %v6171 = vld [vmem:[#allocation3 + $0x278] sm:$0xff]
      %v6172 = vld [vmem:[#allocation3 + $0x280] sm:$0xff]
      %v6173 = vld [vmem:[#allocation3 + $0x288] sm:$0xff]
      %v6174 = vld [vmem:[#allocation3 + $0x290] sm:$0xff]
      %v6175 = vld [vmem:[#allocation3 + $0x298] sm:$0xff]
      %v6176 = vld [vmem:[#allocation3 + $0x2a0] sm:$0xff]
      %v6177 = vld [vmem:[#allocation3 + $0x2a8] sm:$0xff]
      %v6178 = vld [vmem:[#allocation3 + $0x2b0] sm:$0xff]
      %v6179 = vld [vmem:[#allocation3 + $0x2b8] sm:$0xff]
      %v6180 = vld [vmem:[#allocation3 + $0x2c0] sm:$0xff]
      %v6181 = vld [vmem:[#allocation3 + $0x2c8] sm:$0xff]
      %v6182 = vld [vmem:[#allocation3 + $0x2d0] sm:$0xff]
      %v6183 = vld [vmem:[#allocation3 + $0x2d8] sm:$0xff]
      %v6184 = vld [vmem:[#allocation3 + $0x2e0] sm:$0xff]
      %v6185 = vld [vmem:[#allocation3 + $0x2e8] sm:$0xff]
      %v6186 = vld [vmem:[#allocation3 + $0x2f0] sm:$0xff]
      %v6187 = vld [vmem:[#allocation3 + $0x2f8] sm:$0xff]
      %v6188 = vld [vmem:[#allocation3 + $0x300] sm:$0xff]
      %v6189 = vld [vmem:[#allocation3 + $0x308] sm:$0xff]
      %v6190 = vld [vmem:[#allocation3 + $0x310] sm:$0xff]
      %v6191 = vld [vmem:[#allocation3 + $0x318] sm:$0xff]
      %v6194 = vcombine.high %v6090, %v6090
      %v6195 = vcombine.high %v6091, %v6091
      %v6197 = vsel %vm3241, %v6195, 0
      %6199 = vmatprep.subr.mxu0 %v6123
      %6200 = vmatpush1.msra.mxu0 %v6122
      %6201 = vmatprep.subr.mxu0 %v6121
      %6202 = vmatpush1.msra.mxu0 %v6120
      %6203 = vmatprep.subr.mxu0 %v6119
      %6204 = vmatpush1.msra.mxu0 %v6118
      %6205 = vmatprep.subr.mxu0 %v6117
      %6206 = vmatpush1.msra.mxu0 %v6116
      %6207 = vmatprep.subr.mxu0 %v6115
      %6208 = vmatpush1.msra.mxu0 %v6114
      %6209 = vmatprep.subr.mxu0 %v6113
      %6210 = vmatpush1.msra.mxu0 %v6112
      %6211 = vmatprep.subr.mxu0 %v6111
      %6212 = vmatpush1.msra.mxu0 %v6110
      %6213 = vmatprep.subr.mxu0 %v6109
      %6214 = vmatpush1.msra.mxu0 %v6108
      %6215 = vmatprep.subr.mxu0 %v6107
      %6216 = vmatpush1.msra.mxu0 %v6106
      %6217 = vmatprep.subr.mxu0 %v6105
      %6218 = vmatpush1.msra.mxu0 %v6104
      %6219 = vmatprep.subr.mxu0 %v6103
      %6220 = vmatpush1.msra.mxu0 %v6102
      %6221 = vmatprep.subr.mxu0 %v6101
      %6222 = vmatpush1.msra.mxu0 %v6100
      %6223 = vmatprep.subr.mxu0 %v6099
      %6224 = vmatpush1.msra.mxu0 %v6098
      %6225 = vmatprep.subr.mxu0 %v6097
      %6226 = vmatpush1.msra.mxu0 %v6096
      %6227 = vmatprep.subr.mxu0 %v6095
      %6228 = vmatpush1.msra.mxu0 %v6094
      %6229 = vmatprep.subr.mxu0 %v6093
      %6230 = vmatpush1.msra.mxu0 %v6092
      %6231 = vmatprep.subr.mxu0 %v6155
      %6232 = vmatpush2.msra.mxu0 %v6154
      %6233 = vmatprep.subr.mxu0 %v6153
      %6234 = vmatpush2.msra.mxu0 %v6152
      %6235 = vmatprep.subr.mxu0 %v6151
      %6236 = vmatpush2.msra.mxu0 %v6150
      %6237 = vmatprep.subr.mxu0 %v6149
      %6238 = vmatpush2.msra.mxu0 %v6148
      %6239 = vmatprep.subr.mxu0 %v6147
      %6240 = vmatpush2.msra.mxu0 %v6146
      %6241 = vmatprep.subr.mxu0 %v6145
      %6242 = vmatpush2.msra.mxu0 %v6144
      %6243 = vmatprep.subr.mxu0 %v6143
      %6244 = vmatpush2.msra.mxu0 %v6142
      %6245 = vmatprep.subr.mxu0 %v6141
      %6246 = vmatpush2.msra.mxu0 %v6140
      %6247 = vmatprep.subr.mxu0 %v6139
      %6248 = vmatpush2.msra.mxu0 %v6138
      %6249 = vmatprep.subr.mxu0 %v6137
      %6250 = vmatpush2.msra.mxu0 %v6136
      %6251 = vmatprep.subr.mxu0 %v6135
      %6252 = vmatpush2.msra.mxu0 %v6134
      %6253 = vmatprep.subr.mxu0 %v6133
      %6254 = vmatpush2.msra.mxu0 %v6132
      %6255 = vmatprep.subr.mxu0 %v6131
      %6256 = vmatpush2.msra.mxu0 %v6130
      %6257 = vmatprep.subr.mxu0 %v6129
      %6258 = vmatpush2.msra.mxu0 %v6128
      %6259 = vmatprep.subr.mxu0 %v6127
      %6260 = vmatpush2.msra.mxu0 %v6126
      %6261 = vmatprep.subr.mxu0 %v6125
      %6262 = vmatpush2.msra.mxu0 %v6124
      %6263 = vmatprep.mubr.f32.mxu0 %v6194
      %6264 = vmatmul.mubr.f32.gmra.mxu0 %v6090
      %v6265 = vpop.f32.mrf.mxu0
      %v6266 = vadd.f32 0.0, %v6265
      %v6267 = vpop.f32.mrf.mxu0
      %v6268 = vadd.f32 0.0, %v6267
      %6269 = vdwg.mxu0
      %6270 = vmatprep.subr.mxu0 %v6187
      %6271 = vmatpush1.msra.mxu0 %v6186
      %6272 = vmatprep.subr.mxu0 %v6185
      %6273 = vmatpush1.msra.mxu0 %v6184
      %6274 = vmatprep.subr.mxu0 %v6183
      %6275 = vmatpush1.msra.mxu0 %v6182
      %6276 = vmatprep.subr.mxu0 %v6181
      %6277 = vmatpush1.msra.mxu0 %v6180
      %6278 = vmatprep.subr.mxu0 %v6179
      %6279 = vmatpush1.msra.mxu0 %v6178
      %6280 = vmatprep.subr.mxu0 %v6177
      %6281 = vmatpush1.msra.mxu0 %v6176
      %6282 = vmatprep.subr.mxu0 %v6175
      %6283 = vmatpush1.msra.mxu0 %v6174
      %6284 = vmatprep.subr.mxu0 %v6173
      %6285 = vmatpush1.msra.mxu0 %v6172
      %6286 = vmatprep.subr.mxu0 %v6171
      %6287 = vmatpush1.msra.mxu0 %v6170
      %6288 = vmatprep.subr.mxu0 %v6169
      %6289 = vmatpush1.msra.mxu0 %v6168
      %6290 = vmatprep.subr.mxu0 %v6167
      %6291 = vmatpush1.msra.mxu0 %v6166
      %6292 = vmatprep.subr.mxu0 %v6165
      %6293 = vmatpush1.msra.mxu0 %v6164
      %6294 = vmatprep.subr.mxu0 %v6163
      %6295 = vmatpush1.msra.mxu0 %v6162
      %6296 = vmatprep.subr.mxu0 %v6161
      %6297 = vmatpush1.msra.mxu0 %v6160
      %6298 = vmatprep.subr.mxu0 %v6159
      %6299 = vmatpush1.msra.mxu0 %v6158
      %6300 = vmatprep.subr.mxu0 %v6157
      %6301 = vmatpush1.msra.mxu0 %v6156
      %6302 = vmatprep.subr.mxu0 0.0
      %6303 = vmatpush2.msra.mxu0 0.0
      %6304 = vmatprep.subr.mxu0 0.0
      %6305 = vmatpush2.msra.mxu0 0.0
      %6306 = vmatprep.subr.mxu0 0.0
      %6307 = vmatpush2.msra.mxu0 0.0
      %6308 = vmatprep.subr.mxu0 0.0
      %6309 = vmatpush2.msra.mxu0 0.0
      %6310 = vmatprep.subr.mxu0 0.0
      %6311 = vmatpush2.msra.mxu0 0.0
      %6312 = vmatprep.subr.mxu0 0.0
      %6313 = vmatpush2.msra.mxu0 0.0
      %6314 = vmatprep.subr.mxu0 0.0
      %6315 = vmatpush2.msra.mxu0 0.0
      %6316 = vmatprep.subr.mxu0 0.0
      %6317 = vmatpush2.msra.mxu0 0.0
      %6318 = vmatprep.subr.mxu0 0.0
      %6319 = vmatpush2.msra.mxu0 0.0
      %6320 = vmatprep.subr.mxu0 0.0
      %6321 = vmatpush2.msra.mxu0 0.0
      %6322 = vmatprep.subr.mxu0 0.0
      %6323 = vmatpush2.msra.mxu0 0.0
      %6324 = vmatprep.subr.mxu0 0.0
      %6325 = vmatpush2.msra.mxu0 0.0
      %6326 = vmatprep.subr.mxu0 0.0
      %6327 = vmatpush2.msra.mxu0 0.0
      %6328 = vmatprep.subr.mxu0 0.0
      %6329 = vmatpush2.msra.mxu0 0.0
      %6330 = vmatprep.subr.mxu0 %v6191
      %6331 = vmatpush2.msra.mxu0 %v6190
      %6332 = vmatprep.subr.mxu0 %v6189
      %6333 = vmatpush2.msra.mxu0 %v6188
      %6334 = vmatprep.mubr.f32.mxu0 %v6197
      %6335 = vmatmul.mubr.f32.gmra.mxu0 %v6091
      %v6336 = vpop.f32.mrf.mxu0
      %v6337 = vadd.f32 %v6266, %v6336
      %v6338 = vpop.f32.mrf.mxu0
      %v6339 = vadd.f32 %v6268, %v6338
      %6340 = vdwg.mxu0
      %v6343 = vcombine.low %v6337, %v6339
      %6345 = vst [vmem:[%s360] sm:$0xff] %v6343
      %6346 = vst [vmem:[%s365] sm:$0xff] %v5108
      %6347 = vst [vmem:[%s365 + $0x8] sm:$0xff] %v5109
      %6348 = vst [vmem:[%s365 + $0x10] sm:$0xff] %v5110
      %6349 = vst [vmem:[%s365 + $0x18] sm:$0xff] %v5111
      %p6350 = scmp.lt.s32.totalorder %s21, 1
      %s6351 = scalar_select %p6350, %s21, 1
      %s6352 = smul.addr %s6351, 2
      %s6353 = smul.addr %s6352, 4
      %s6354 = scalar_lea.vmem %s8, %s6353
      %p6355 = scmp.lt.s32.totalorder %s21, 1
      %s6356 = scalar_select %p6355, %s21, 1
      %s6357 = smul.addr %s6356, 4
      %s6358 = smul.addr %s6357, 8
      %s6359 = scalar_lea.vmem %s9, %s6358
      // Predicated region
      $region53: #{gru_block_forward.1} parent=51 // pred_check
        %p6360 = pneg %p217
      $region54: #{gru_block_forward.1} parent=51 // pred_check_branch
        %6362 = sbr.rel (%p6360) target = $region56
      $region55: #{gru_block_forward.1} parent=51 // pred_region
        _
      $region56: #{gru_block_forward.1} parent=51 // pred_fallthru
        _
      // Predicated region
      $region57: #{gru_block_forward.1} parent=51 // pred_check
        %p6363 = pneg %p243
      $region58: #{gru_block_forward.1} parent=51 // pred_check_branch
        %6365 = sbr.rel (%p6363) target = $region60
      $region59: #{gru_block_forward.1} parent=51 // pred_region
        _
      $region60: #{gru_block_forward.1} parent=51 // pred_fallthru
        _
    $region52: #{gru_block_forward.1} parent=5 // pred_fallthru
      _
    %p6366 = scmp.le.s32.totalorder 2, %s16
    // Predicated region
    $region61: #{gru_block_forward.1} parent=5 // pred_check
      %p6367 = pneg %p6366
    $region62: #{gru_block_forward.1} parent=5 // pred_check_branch
      %6369 = sbr.rel (%p6367) target = $region64
    $region63: #{gru_block_forward.1} parent=5 // pred_region
      %s6370 = ssub.s32 %s16, 2
      // Predicated region
      $region65: #{gru_block_forward.1} parent=63 // pred_check
        %p6371 = pneg %p223
      $region66: #{gru_block_forward.1} parent=63 // pred_check_branch
        %6373 = sbr.rel (%p6371) target = $region68
      $region67: #{gru_block_forward.1} parent=63 // pred_region
        %p6374 = scmp.lt.s32.totalorder %s22, 1
        %s6375 = scalar_select %p6374, %s22, 1
        %s6376 = smul.addr %s6375, 2
        %s6377 = smul.addr %s6376, 4
        %s6378 = scalar_lea.vmem %s8, %s6377
      $region68: #{gru_block_forward.1} parent=63 // pred_fallthru
        _
      // Predicated region
      $region69: #{gru_block_forward.1} parent=63 // pred_check
        %p6379 = pneg %p249
      $region70: #{gru_block_forward.1} parent=63 // pred_check_branch
        %6381 = sbr.rel (%p6379) target = $region72
      $region71: #{gru_block_forward.1} parent=63 // pred_region
        %p6382 = scmp.lt.s32.totalorder %s22, 1
        %s6383 = scalar_select %p6382, %s22, 1
        %s6384 = smul.addr %s6383, 4
        %s6385 = smul.addr %s6384, 8
        %s6386 = scalar_lea.vmem %s9, %s6385
      $region72: #{gru_block_forward.1} parent=63 // pred_fallthru
        _
    $region64: #{gru_block_forward.1} parent=5 // pred_fallthru
      _
  $region6: #{gru_block_forward.1} parent=0 // loop_footer
    %s20 = sadd.s32 1, %s16
  $region7: #{gru_block_forward.1} parent=0 // loop_footer_branch
    %15 = sbr.rel target = $region3
  $region8: #{gru_block_forward.1} parent=0 // loop_exit
    _

</llo_original>
